<compile_context>
chip_gen: v7x
topology: tpu7x:2x2x1
jax: 0.10.0
libtpu: 0.0.40
codegen_flags: <defaults>
</compile_context>

<pallas_src>
import math

import jax
import jax.numpy as jnp
from jax import lax
from jax.experimental import pallas as pl
from jax.experimental.pallas import tpu as pltpu

D_FEAT = 768      # Whisper-small encoder dim (matches nn.BatchNorm1d(768))
D_MODEL = 256     # config.dim_transformer
N_HEAD = 4        # config.nhead_transformer
N_LAYERS = 4      # config.nlayers_transformer
D_FF = 1024       # FFN width (4 * d_model)
HEAD_DIM = D_MODEL // N_HEAD
LN_EPS = 1e-5
BN_EPS = 1e-5
NEG_INF = -1e30   # finite "minus infinity" (avoids exp(-inf - -inf) = NaN)


def _vmem_limit_bytes():
    # Generation-dependent scoped-VMEM limit: ~100 MiB on v5e/v6e (128 MiB
    # physical), ~51 MiB on v7x (64 MiB physical); conservative fallback.
    try:
        cap = getattr(pltpu.get_tpu_info(), "vmem_capacity_bytes", None)
        if cap:
            return int(min(int(cap * 0.8), 100 * 1024 * 1024))
    except Exception:
        pass
    return 48 * 1024 * 1024


VMEM_LIMIT = _vmem_limit_bytes()


def _round_up(n, m):
    return ((n + m - 1) // m) * m


def _pick_block(t, candidates):
    for c in candidates:
        if t % c == 0:
            return c
    return t


def _layer_norm(h, g, b):
    mu = jnp.mean(h, axis=-1, keepdims=True)
    var = jnp.mean((h - mu) ** 2, axis=-1, keepdims=True)
    return (h - mu) * jax.lax.rsqrt(var + LN_EPS) * g + b


# ---------------------------------------------------------------------------
# Encoder stack kernel (BN-folded projection + pos-enc + 4 transformer layers)
# ---------------------------------------------------------------------------
def _make_stack_kernel(t_pad, t_real, chunk, kv_blk):
    n_chunks = t_pad // chunk
    n_kv = t_pad // kv_blk
    scale = 1.0 / math.sqrt(HEAD_DIM)
    masked = t_real < t_pad

    def kernel(feats_ref, wp_ref, bp_ref, pe_ref,
               wqkv_ref, bqkv_ref, wo_ref, bo_ref,
               ln1g_ref, ln1b_ref, w1_ref, b1_ref, w2_ref, b2_ref,
               ln2g_ref, ln2b_ref,
               o_ref,
               h_ref, qkv_ref, ctx_ref):
        layer = pl.program_id(1)

        # ---- layer 0 only: fused BN-folded 768->256 projection + pos-enc ----
        @pl.when(layer == 0)
        def _():
            def proj_body(c, carry):
                r = pl.multiple_of(c * chunk, chunk)
                xb = feats_ref[0, pl.ds(r, chunk), :].astype(jnp.bfloat16)
                y = jnp.dot(xb, wp_ref[...], preferred_element_type=jnp.float32)
                h_ref[pl.ds(r, chunk), :] = (
                    y + bp_ref[...] + pe_ref[pl.ds(r, chunk), :])
                return carry
            lax.fori_loop(0, n_chunks, proj_body, 0)

        # ---- fused QKV projection, stored bf16 in VMEM scratch ----
        def qkv_body(c, carry):
            r = pl.multiple_of(c * chunk, chunk)
            xb = h_ref[pl.ds(r, chunk), :].astype(jnp.bfloat16)
            y = jnp.dot(xb, wqkv_ref[0],
                        preferred_element_type=jnp.float32) + bqkv_ref[0]
            qkv_ref[pl.ds(r, chunk), :] = y.astype(jnp.bfloat16)
            return carry
        lax.fori_loop(0, n_chunks, qkv_body, 0)

        # ---- flash attention: fori_loop over KV blocks, online softmax ----
        # KV blocks are the OUTER loop so each (kv_blk, 256) K/V slab is loaded
        # once for all 4 heads; per-head slices are static 64-lane value slices
        # (dynamic lane slicing is avoided on purpose).  The big (T, kv_blk)
        # logits/p tiles live only inside the fori_loop body.
        q_all = qkv_ref[:, pl.ds(0, D_MODEL)]            # (T, 256) bf16

        def _head_init():
            return (jnp.full((t_pad, 1), NEG_INF, jnp.float32),
                    jnp.zeros((t_pad, 1), jnp.float32),
                    jnp.zeros((t_pad, HEAD_DIM), jnp.float32))

        def kv_body(kb, carry):
            ks = pl.multiple_of(kb * kv_blk, kv_blk)
            k_rows = qkv_ref[pl.ds(ks, kv_blk), pl.ds(D_MODEL, D_MODEL)]
            v_rows = qkv_ref[pl.ds(ks, kv_blk), pl.ds(2 * D_MODEL, D_MODEL)]
            if masked:
                col = lax.broadcasted_iota(jnp.int32, (1, kv_blk), 1) + ks
                keymask = col < t_real
            new = []
            for head in range(N_HEAD):
                s = head * HEAD_DIM
                m, l, acc = carry[head]
                qh = q_all[:, s:s + HEAD_DIM]
                kh = k_rows[:, s:s + HEAD_DIM]
                vh = v_rows[:, s:s + HEAD_DIM]
                logits = lax.dot_general(
                    qh, kh, (((1,), (1,)), ((), ())),
                    preferred_element_type=jnp.float32) * scale
                if masked:
                    logits = jnp.where(keymask, logits, NEG_INF)
                m_new = jnp.maximum(m, jnp.max(logits, axis=-1, keepdims=True))
                alpha = jnp.exp(m - m_new)
                p = jnp.exp(logits - m_new)
                l_new = alpha * l + jnp.sum(p, axis=-1, keepdims=True)
                acc_new = alpha * acc + jnp.dot(
                    p.astype(jnp.bfloat16), vh,
                    preferred_element_type=jnp.float32)
                new.append((m_new, l_new, acc_new))
            return tuple(new)

        heads = lax.fori_loop(0, n_kv, kv_body,
                              tuple(_head_init() for _ in range(N_HEAD)))

        # Per-head contexts into a (T, 256) buffer at static lane offsets, so
        # the output projection becomes ONE K=256 matmul.
        for head in range(N_HEAD):
            s = head * HEAD_DIM
            _, l, acc = heads[head]
            ctx_ref[:, pl.ds(s, HEAD_DIM)] = (
                acc * pl.reciprocal(l, approx=True)).astype(jnp.bfloat16)

        # ---- W_o + residual + LN1 + FFN + residual + LN2, in row chunks ----
        def out_body(c, carry):
            r = pl.multiple_of(c * chunk, chunk)
            x_c = h_ref[pl.ds(r, chunk), :]              # (chunk, 256) f32
            attn = jnp.dot(ctx_ref[pl.ds(r, chunk), :], wo_ref[0],
                           preferred_element_type=jnp.float32) + bo_ref[0]
            h1 = _layer_norm(x_c + attn, ln1g_ref[0], ln1b_ref[0])
            ff = jnp.dot(h1.astype(jnp.bfloat16), w1_ref[0],
                         preferred_element_type=jnp.float32) + b1_ref[0]
            ff = jnp.maximum(ff, 0.0).astype(jnp.bfloat16)
            ff = jnp.dot(ff, w2_ref[0],
                         preferred_element_type=jnp.float32) + b2_ref[0]
            h2 = _layer_norm(h1 + ff, ln2g_ref[0], ln2b_ref[0])
            h_ref[pl.ds(r, chunk), :] = h2
            return carry
        lax.fori_loop(0, n_chunks, out_body, 0)

        @pl.when(layer == pl.num_programs(1) - 1)
        def _():
            o_ref[...] = h_ref[...][None].astype(o_ref.dtype)

    return kernel


# ---------------------------------------------------------------------------
# PoolAttFF + sigmoid kernel
# ---------------------------------------------------------------------------
def _make_pool_kernel(t_pad, t_real):
    masked = t_real < t_pad

    def kernel(x_ref, w1_ref, b1_ref, w2_ref, b2_ref, w3_ref, b3_ref, o_ref):
        x = x_ref[0]                                                  # (T, D) bf16
        h = jnp.dot(x, w1_ref[...],
                    preferred_element_type=jnp.float32) + b1_ref[...]
        h = jnp.maximum(h, 0.0)                                       # (T, 2D)
        # N=1 output: VPU multiply + lane reduction instead of an MXU matmul.
        att = jnp.sum(h * w2_ref[...], axis=-1, keepdims=True) + b2_ref[...]
        if masked:
            row = lax.broadcasted_iota(jnp.int32, (t_pad, 1), 0)
            att = jnp.where(row < t_real, att, NEG_INF)
        # softmax over the time axis (== att.transpose(2,1); softmax(dim=2))
        att = att - jnp.max(att, axis=0, keepdims=True)
        att = jnp.exp(att)
        att = att * pl.reciprocal(jnp.sum(att, axis=0, keepdims=True),
                                  approx=True)
        pooled = jnp.sum(att * x.astype(jnp.float32), axis=0, keepdims=True)
        y = jnp.sum(pooled * w3_ref[...], axis=-1, keepdims=True) + b3_ref[...]
        y = 1.0 / (1.0 + jnp.exp(-y))                 # exact sigmoid
        o_ref[...] = y.reshape(1, 1, 1).astype(o_ref.dtype)

    return kernel


# ---------------------------------------------------------------------------
# Pallas wrappers
# ---------------------------------------------------------------------------
_STACK_PARAM_ORDER = ("wqkv", "bqkv", "wo", "bo", "ln1_g", "ln1_b",
                      "w_ff1", "b_ff1", "w_ff2", "b_ff2", "ln2_g", "ln2_b")


def encoder_stack(feats_pad, w_eff, b_eff, pos_enc, sp, t_real):
    B, t_pad, _ = feats_pad.shape
    chunk = _pick_block(t_pad, (512, 256, 128))
    kv_blk = _pick_block(t_pad, (256, 128))
    weights = [sp[k] for k in _STACK_PARAM_ORDER]
    w_specs = [pl.BlockSpec((1,) + a.shape[1:], lambda b, l: (l, 0, 0))
               for a in weights]
    kernel = _make_stack_kernel(t_pad, t_real, chunk, kv_blk)
    return pl.pallas_call(
        kernel,
        out_shape=jax.ShapeDtypeStruct((B, t_pad, D_MODEL), jnp.bfloat16),
        grid=(B, N_LAYERS),
        in_specs=[
            pl.BlockSpec((1, t_pad, D_FEAT), lambda b, l: (b, 0, 0)),   # feats
            pl.BlockSpec((D_FEAT, D_MODEL), lambda b, l: (0, 0)),        # w_eff
            pl.BlockSpec((1, D_MODEL), lambda b, l: (0, 0)),             # b_eff
            pl.BlockSpec((t_pad, D_MODEL), lambda b, l: (0, 0)),         # pos-enc
        ] + w_specs,
        out_specs=pl.BlockSpec((1, t_pad, D_MODEL), lambda b, l: (b, 0, 0)),
        scratch_shapes=[
            pltpu.VMEM((t_pad, D_MODEL), jnp.float32),        # resident activation
            pltpu.VMEM((t_pad, 3 * D_MODEL), jnp.bfloat16),   # fused QKV
            pltpu.VMEM((t_pad, D_MODEL), jnp.bfloat16),       # per-head contexts
        ],
        compiler_params=pltpu.CompilerParams(
            dimension_semantics=("parallel", "arbitrary"),
            vmem_limit_bytes=VMEM_LIMIT),
    )(feats_pad, w_eff, b_eff, pos_enc, *weights)


def pool_att_ff(x, pp, t_real):
    B, t_pad, D = x.shape
    weights = [pp[k] for k in ("w1", "b1", "w2", "b2", "w3", "b3")]
    kernel = _make_pool_kernel(t_pad, t_real)
    out = pl.pallas_call(
        kernel,
        out_shape=jax.ShapeDtypeStruct((B, 1, 1), jnp.float32),
        grid=(B,),
        in_specs=[pl.BlockSpec((1, t_pad, D), lambda b: (b, 0, 0))]
                 + [pl.BlockSpec(a.shape, lambda b: (0, 0)) for a in weights],
        out_specs=pl.BlockSpec((1, 1, 1), lambda b: (b, 0, 0)),
        compiler_params=pltpu.CompilerParams(
            dimension_semantics=("parallel",),
            vmem_limit_bytes=VMEM_LIMIT),
    )(x, *weights)
    return out.reshape(B, 1)


# ---------------------------------------------------------------------------
# Parameters & forward
# ---------------------------------------------------------------------------
def sinusoidal_pos_encoding(T, D):
    pos = jnp.arange(T, dtype=jnp.float32)[:, None]
    i = jnp.arange(0, D, 2, dtype=jnp.float32)
    div = jnp.exp(-math.log(10000.0) * i / D)
    pe = jnp.zeros((T, D), jnp.float32)
    pe = pe.at[:, 0::2].set(jnp.sin(pos * div))
    pe = pe.at[:, 1::2].set(jnp.cos(pos * div))
    return pe


def init_params(key):
    ks = iter(jax.random.split(key, 64))

    def w(shape, scale=0.02):
        return scale * jax.random.normal(next(ks), shape, dtype=jnp.float32)

    return {
        "bn_gamma": 1.0 + w((1, D_FEAT), 0.01),
        "bn_beta": w((1, D_FEAT), 0.01),
        "bn_mean": w((1, D_FEAT), 0.1),
        "bn_var": 1.0 + jnp.abs(w((1, D_FEAT), 0.1)),
        "w_proj": w((D_FEAT, D_MODEL)),   # f32 master; BN folded + bf16 at call time
        "b_proj": w((1, D_MODEL), 0.01),
        "stack": {
            # All four layers stacked on a leading layer axis; MXU weights bf16.
            "wqkv": w((N_LAYERS, D_MODEL, 3 * D_MODEL)).astype(jnp.bfloat16),
            "bqkv": w((N_LAYERS, 1, 3 * D_MODEL), 0.01),
            "wo": w((N_LAYERS, D_MODEL, D_MODEL)).astype(jnp.bfloat16),
            "bo": w((N_LAYERS, 1, D_MODEL), 0.01),
            "ln1_g": jnp.ones((N_LAYERS, 1, D_MODEL), jnp.float32),
            "ln1_b": jnp.zeros((N_LAYERS, 1, D_MODEL), jnp.float32),
            "w_ff1": w((N_LAYERS, D_MODEL, D_FF)).astype(jnp.bfloat16),
            "b_ff1": w((N_LAYERS, 1, D_FF), 0.01),
            "w_ff2": w((N_LAYERS, D_FF, D_MODEL)).astype(jnp.bfloat16),
            "b_ff2": w((N_LAYERS, 1, D_MODEL), 0.01),
            "ln2_g": jnp.ones((N_LAYERS, 1, D_MODEL), jnp.float32),
            "ln2_b": jnp.zeros((N_LAYERS, 1, D_MODEL), jnp.float32),
        },
        "pool": {
            "w1": w((D_MODEL, 2 * D_MODEL)).astype(jnp.bfloat16),
            "b1": w((1, 2 * D_MODEL), 0.01),
            "w2": w((1, 2 * D_MODEL)),     # row vector (VPU path) == linear2.weight
            "b2": w((1, 1), 0.01),
            "w3": w((1, D_MODEL)),         # row vector == linear3.weight
            "b3": w((1, 1), 0.01),
        },
    }


def forward(feats, params):
    """feats: (B, T, 768) Whisper-encoder features.  Returns (B, 1) in (0,1)."""
    B, T, _ = feats.shape
    t_pad = _round_up(T, 128)                      # clean (8,128) tiles + masking
    if t_pad != T:
        feats = jnp.pad(feats, ((0, 0), (0, t_pad - T), (0, 0)))
    pos_enc = sinusoidal_pos_encoding(t_pad, D_MODEL)

    # Fold eval-mode BatchNorm1d(768) into the 768->256 projection (exact).
    scale = params["bn_gamma"] * jax.lax.rsqrt(params["bn_var"] + BN_EPS)   # (1,768)
    shift = params["bn_beta"] - params["bn_mean"] * scale                   # (1,768)
    w_eff = (params["w_proj"] * scale.reshape(-1, 1)).astype(jnp.bfloat16)  # (768,256)
    b_eff = params["b_proj"] + shift @ params["w_proj"]                     # (1,256)

    x = encoder_stack(feats, w_eff, b_eff, pos_enc, params["stack"], T)
    return pool_att_ff(x, params["pool"], T)


if __name__ == "__main__":
    key = jax.random.PRNGKey(0)
    pkey, xkey = jax.random.split(key)

    B, T = 2, 16                      # small stand-in for feat_seq=1500
    params = init_params(pkey)
    feats = jax.random.normal(xkey, (B, T, D_FEAT), dtype=jnp.float32)

    out = jax.jit(forward)(feats, params)
    out = jax.block_until_ready(out)

    assert out.shape == (B, 1), out.shape
    assert bool(jnp.all(jnp.isfinite(out)))
    assert bool(jnp.all((out > 0.0) & (out < 1.0)))
    print("KERNEL_OK")
</pallas_src>

<mosaic_0001>
module attributes {stable_mosaic.version = 11 : i64} {
  func.func @kernel(%arg0: i32, %arg1: i32, %arg2: memref<1x128x768xf32, #tpu.memory_space<vmem>>, %arg3: memref<768x256xbf16, #tpu.memory_space<vmem>>, %arg4: memref<1x256xf32, #tpu.memory_space<vmem>>, %arg5: memref<128x256xf32, #tpu.memory_space<vmem>>, %arg6: memref<1x256x768xbf16, #tpu.memory_space<vmem>>, %arg7: memref<1x1x768xf32, #tpu.memory_space<vmem>>, %arg8: memref<1x256x256xbf16, #tpu.memory_space<vmem>>, %arg9: memref<1x1x256xf32, #tpu.memory_space<vmem>>, %arg10: memref<1x1x256xf32, #tpu.memory_space<vmem>>, %arg11: memref<1x1x256xf32, #tpu.memory_space<vmem>>, %arg12: memref<1x256x1024xbf16, #tpu.memory_space<vmem>>, %arg13: memref<1x1x1024xf32, #tpu.memory_space<vmem>>, %arg14: memref<1x1024x256xbf16, #tpu.memory_space<vmem>>, %arg15: memref<1x1x256xf32, #tpu.memory_space<vmem>>, %arg16: memref<1x1x256xf32, #tpu.memory_space<vmem>>, %arg17: memref<1x1x256xf32, #tpu.memory_space<vmem>>, %arg18: memref<1x128x256xbf16, #tpu.memory_space<vmem>>, %arg19: memref<128x256xf32, #tpu.memory_space<vmem>>, %arg20: memref<128x768xbf16, #tpu.memory_space<vmem>>, %arg21: memref<128x256xbf16, #tpu.memory_space<vmem>>) attributes {dimension_semantics = [#tpu.dimension_semantics<parallel>, #tpu.dimension_semantics<arbitrary>], iteration_bounds = array<i64: 2, 4>, scalar_prefetch = 0 : i64, scratch_operands = 3 : i64, tpu.core_type = #tpu.core_type<tc>, window_params = [{transform_indices = @transform_0, window_bounds = array<i64: 1, 128, 768>}, {pipeline_mode = #tpu.pipeline_mode<synchronous>, transform_indices = @transform_1, window_bounds = array<i64: 768, 256>}, {pipeline_mode = #tpu.pipeline_mode<synchronous>, transform_indices = @transform_2, window_bounds = array<i64: 1, 256>}, {pipeline_mode = #tpu.pipeline_mode<synchronous>, transform_indices = @transform_3, window_bounds = array<i64: 128, 256>}, {transform_indices = @transform_4, window_bounds = array<i64: 1, 256, 768>}, {transform_indices = @transform_5, window_bounds = array<i64: 1, 1, 768>}, {transform_indices = @transform_6, window_bounds = array<i64: 1, 256, 256>}, {transform_indices = @transform_7, window_bounds = array<i64: 1, 1, 256>}, {transform_indices = @transform_8, window_bounds = array<i64: 1, 1, 256>}, {transform_indices = @transform_9, window_bounds = array<i64: 1, 1, 256>}, {transform_indices = @transform_10, window_bounds = array<i64: 1, 256, 1024>}, {transform_indices = @transform_11, window_bounds = array<i64: 1, 1, 1024>}, {transform_indices = @transform_12, window_bounds = array<i64: 1, 1024, 256>}, {transform_indices = @transform_13, window_bounds = array<i64: 1, 1, 256>}, {transform_indices = @transform_14, window_bounds = array<i64: 1, 1, 256>}, {transform_indices = @transform_15, window_bounds = array<i64: 1, 1, 256>}, {transform_indices = @transform_16, window_bounds = array<i64: 1, 128, 256>}]} {
    %c0_i32 = arith.constant 0 : i32
    %0 = arith.cmpi eq, %arg1, %c0_i32 : i32
    %1 = arith.extui %0 : i1 to i32
    %c0_i32_0 = arith.constant 0 : i32
    %2 = arith.cmpi ne, %1, %c0_i32_0 : i32
    scf.if %2 {
      %c0_i32_106 = arith.constant 0 : i32
      %c128_i32_107 = arith.constant 128 : i32
      %260 = arith.muli %c0_i32_106, %c128_i32_107 : i32
      %261 = tpu.assume_multiple %260, 128 : i32
      %c0_108 = arith.constant 0 : index
      %262 = arith.index_cast %261 : i32 to index
      %c0_109 = arith.constant 0 : index
      %263 = vector.load %arg2[%c0_108, %262, %c0_109] : memref<1x128x768xf32, #tpu.memory_space<vmem>>, vector<1x128x768xf32>
      %264 = vector.shape_cast %263 : vector<1x128x768xf32> to vector<128x768xf32>
      %265 = arith.truncf %264 : vector<128x768xf32> to vector<128x768xbf16>
      %c0_110 = arith.constant 0 : index
      %c0_111 = arith.constant 0 : index
      %266 = vector.load %arg3[%c0_110, %c0_111] : memref<768x256xbf16, #tpu.memory_space<vmem>>, vector<768x256xbf16>
      %cst_112 = arith.constant dense<0.000000e+00> : vector<128x256xf32>
      %267 = tpu.matmul %265, %266, %cst_112 {dimension_numbers = #tpu.dot_dimension_numbers<[1], [0], [0], [1], [0, 0, 1, 1], [], []>} : vector<128x768xbf16>, vector<768x256xbf16>, vector<128x256xf32> -> vector<128x256xf32>
      %c0_113 = arith.constant 0 : index
      %c0_114 = arith.constant 0 : index
      %268 = vector.load %arg4[%c0_113, %c0_114] : memref<1x256xf32, #tpu.memory_space<vmem>>, vector<1x256xf32>
      %269 = vector.broadcast %268 : vector<1x256xf32> to vector<128x256xf32>
      %270 = arith.addf %267, %269 : vector<128x256xf32>
      %271 = arith.index_cast %261 : i32 to index
      %c0_115 = arith.constant 0 : index
      %272 = vector.load %arg5[%271, %c0_115] : memref<128x256xf32, #tpu.memory_space<vmem>>, vector<128x256xf32>
      %273 = arith.addf %270, %272 : vector<128x256xf32>
      %274 = arith.index_cast %261 : i32 to index
      %c0_116 = arith.constant 0 : index
      %275 = vector.load %arg19[%274, %c0_116] : memref<128x256xf32, #tpu.memory_space<vmem>>, vector<128x256xf32>
      tpu.vector_store %arg19[%274, %c0_116], %273 {strides = array<i32>} : memref<128x256xf32, #tpu.memory_space<vmem>>, vector<128x256xf32>,
      %c1_i32_117 = arith.constant 1 : i32
    } else {
    }
    %c0_i32_1 = arith.constant 0 : i32
    %c128_i32 = arith.constant 128 : i32
    %3 = arith.muli %c0_i32_1, %c128_i32 : i32
    %4 = tpu.assume_multiple %3, 128 : i32
    %5 = arith.index_cast %4 : i32 to index
    %c0 = arith.constant 0 : index
    %6 = vector.load %arg19[%5, %c0] : memref<128x256xf32, #tpu.memory_space<vmem>>, vector<128x256xf32>
    %7 = arith.truncf %6 : vector<128x256xf32> to vector<128x256xbf16>
    %c0_2 = arith.constant 0 : index
    %c0_3 = arith.constant 0 : index
    %c0_4 = arith.constant 0 : index
    %8 = vector.load %arg6[%c0_2, %c0_3, %c0_4] : memref<1x256x768xbf16, #tpu.memory_space<vmem>>, vector<1x256x768xbf16>
    %9 = vector.shape_cast %8 : vector<1x256x768xbf16> to vector<256x768xbf16>
    %cst = arith.constant dense<0.000000e+00> : vector<128x768xf32>
    %10 = tpu.matmul %7, %9, %cst {dimension_numbers = #tpu.dot_dimension_numbers<[1], [0], [0], [1], [0, 0, 1, 1], [], []>} : vector<128x256xbf16>, vector<256x768xbf16>, vector<128x768xf32> -> vector<128x768xf32>
    %c0_5 = arith.constant 0 : index
    %c0_6 = arith.constant 0 : index
    %c0_7 = arith.constant 0 : index
    %11 = vector.load %arg7[%c0_5, %c0_6, %c0_7] : memref<1x1x768xf32, #tpu.memory_space<vmem>>, vector<1x1x768xf32>
    %12 = vector.shape_cast %11 : vector<1x1x768xf32> to vector<1x768xf32>
    %13 = vector.broadcast %12 : vector<1x768xf32> to vector<128x768xf32>
    %14 = arith.addf %10, %13 : vector<128x768xf32>
    %15 = arith.truncf %14 : vector<128x768xf32> to vector<128x768xbf16>
    %16 = arith.index_cast %4 : i32 to index
    %c0_8 = arith.constant 0 : index
    %17 = vector.load %arg20[%16, %c0_8] : memref<128x768xbf16, #tpu.memory_space<vmem>>, vector<128x768xbf16>
    tpu.vector_store %arg20[%16, %c0_8], %15 {strides = array<i32>} : memref<128x768xbf16, #tpu.memory_space<vmem>>, vector<128x768xbf16>,
    %c1_i32 = arith.constant 1 : i32
    %c0_9 = arith.constant 0 : index
    %c0_10 = arith.constant 0 : index
    %18 = vector.load %arg20[%c0_9, %c0_10] : memref<128x768xbf16, #tpu.memory_space<vmem>>, vector<128x256xbf16>
    %cst_11 = arith.constant -1.000000e+30 : f32
    %19 = vector.broadcast %cst_11 : f32 to vector<128x1xf32>
    %cst_12 = arith.constant 0.000000e+00 : f32
    %20 = vector.broadcast %cst_12 : f32 to vector<128x1xf32>
    %cst_13 = arith.constant 0.000000e+00 : f32
    %21 = vector.broadcast %cst_13 : f32 to vector<128x64xf32>
    %cst_14 = arith.constant -1.000000e+30 : f32
    %22 = vector.broadcast %cst_14 : f32 to vector<128x1xf32>
    %cst_15 = arith.constant 0.000000e+00 : f32
    %23 = vector.broadcast %cst_15 : f32 to vector<128x1xf32>
    %cst_16 = arith.constant 0.000000e+00 : f32
    %24 = vector.broadcast %cst_16 : f32 to vector<128x64xf32>
    %cst_17 = arith.constant -1.000000e+30 : f32
    %25 = vector.broadcast %cst_17 : f32 to vector<128x1xf32>
    %cst_18 = arith.constant 0.000000e+00 : f32
    %26 = vector.broadcast %cst_18 : f32 to vector<128x1xf32>
    %cst_19 = arith.constant 0.000000e+00 : f32
    %27 = vector.broadcast %cst_19 : f32 to vector<128x64xf32>
    %cst_20 = arith.constant -1.000000e+30 : f32
    %28 = vector.broadcast %cst_20 : f32 to vector<128x1xf32>
    %cst_21 = arith.constant 0.000000e+00 : f32
    %29 = vector.broadcast %cst_21 : f32 to vector<128x1xf32>
    %cst_22 = arith.constant 0.000000e+00 : f32
    %30 = vector.broadcast %cst_22 : f32 to vector<128x64xf32>
    %c0_i32_23 = arith.constant 0 : i32
    %c128_i32_24 = arith.constant 128 : i32
    %31 = arith.muli %c0_i32_23, %c128_i32_24 : i32
    %32 = tpu.assume_multiple %31, 128 : i32
    %33 = arith.index_cast %32 : i32 to index
    %c256 = arith.constant 256 : index
    %34 = vector.load %arg20[%33, %c256] : memref<128x768xbf16, #tpu.memory_space<vmem>>, vector<128x256xbf16>
    %35 = arith.index_cast %32 : i32 to index
    %c512 = arith.constant 512 : index
    %36 = vector.load %arg20[%35, %c512] : memref<128x768xbf16, #tpu.memory_space<vmem>>, vector<128x256xbf16>
    %37 = tpu.iota {dimensions = array<i32: 1>} : vector<1x128xi32>
    %38 = vector.broadcast %32 : i32 to vector<1x128xi32>
    %39 = arith.addi %37, %38 : vector<1x128xi32>
    %c16_i32 = arith.constant 16 : i32
    %40 = vector.broadcast %c16_i32 : i32 to vector<1x128xi32>
    %41 = arith.cmpi slt, %39, %40 : vector<1x128xi32>
    %42 = vector.extract_strided_slice %18 {offsets = [0, 0], sizes = [128, 64], strides = [1, 1]} : vector<128x256xbf16> to vector<128x64xbf16>
    %43 = vector.extract_strided_slice %34 {offsets = [0, 0], sizes = [128, 64], strides = [1, 1]} : vector<128x256xbf16> to vector<128x64xbf16>
    %44 = vector.extract_strided_slice %36 {offsets = [0, 0], sizes = [128, 64], strides = [1, 1]} : vector<128x256xbf16> to vector<128x64xbf16>
    %cst_25 = arith.constant dense<0.000000e+00> : vector<128x128xf32>
    %45 = tpu.matmul %42, %43, %cst_25 {dimension_numbers = #tpu.dot_dimension_numbers<[1], [1], [0], [0], [0, 0, 1, 0], [], []>} : vector<128x64xbf16>, vector<128x64xbf16>, vector<128x128xf32> -> vector<128x128xf32>
    %cst_26 = arith.constant 1.250000e-01 : f32
    %46 = vector.broadcast %cst_26 : f32 to vector<128x128xf32>
    %47 = arith.mulf %45, %46 : vector<128x128xf32>
    %cst_27 = arith.constant -1.000000e+30 : f32
    %48 = vector.shape_cast %41 : vector<1x128xi1> to vector<1x128xi1>
    %49 = vector.broadcast %48 : vector<1x128xi1> to vector<128x128xi1>
    %50 = vector.broadcast %cst_27 : f32 to vector<128x128xf32>
    %51 = arith.select %49, %47, %50 : vector<128x128xi1>, vector<128x128xf32>
    %cst_28 = arith.constant dense<0xFF800000> : vector<128xf32>
    %52 = vector.multi_reduction <maximumf>, %51, %cst_28 [1] : vector<128x128xf32> to vector<128xf32>
    %53 = vector.shape_cast %52 : vector<128xf32> to vector<128x1xf32>
    %54 = arith.maximumf %19, %53 : vector<128x1xf32>
    %55 = arith.subf %19, %54 : vector<128x1xf32>
    %56 = math.exp %55 : vector<128x1xf32>
    %57 = vector.broadcast %54 : vector<128x1xf32> to vector<128x128xf32>
    %58 = arith.subf %51, %57 : vector<128x128xf32>
    %59 = math.exp %58 : vector<128x128xf32>
    %60 = arith.mulf %56, %20 : vector<128x1xf32>
    %cst_29 = arith.constant dense<0.000000e+00> : vector<128xf32>
    %61 = vector.multi_reduction <add>, %59, %cst_29 [1] : vector<128x128xf32> to vector<128xf32>
    %62 = vector.shape_cast %61 : vector<128xf32> to vector<128x1xf32>
    %63 = arith.addf %60, %62 : vector<128x1xf32>
    %64 = vector.broadcast %56 : vector<128x1xf32> to vector<128x64xf32>
    %65 = arith.mulf %64, %21 : vector<128x64xf32>
    %66 = arith.truncf %59 : vector<128x128xf32> to vector<128x128xbf16>
    %cst_30 = arith.constant dense<0.000000e+00> : vector<128x64xf32>
    %67 = tpu.matmul %66, %44, %cst_30 {dimension_numbers = #tpu.dot_dimension_numbers<[1], [0], [0], [1], [0, 0, 1, 1], [], []>} : vector<128x128xbf16>, vector<128x64xbf16>, vector<128x64xf32> -> vector<128x64xf32>
    %68 = arith.addf %65, %67 : vector<128x64xf32>
    %69 = vector.extract_strided_slice %18 {offsets = [0, 64], sizes = [128, 64], strides = [1, 1]} : vector<128x256xbf16> to vector<128x64xbf16>
    %70 = vector.extract_strided_slice %34 {offsets = [0, 64], sizes = [128, 64], strides = [1, 1]} : vector<128x256xbf16> to vector<128x64xbf16>
    %71 = vector.extract_strided_slice %36 {offsets = [0, 64], sizes = [128, 64], strides = [1, 1]} : vector<128x256xbf16> to vector<128x64xbf16>
    %cst_31 = arith.constant dense<0.000000e+00> : vector<128x128xf32>
    %72 = tpu.matmul %69, %70, %cst_31 {dimension_numbers = #tpu.dot_dimension_numbers<[1], [1], [0], [0], [0, 0, 1, 0], [], []>} : vector<128x64xbf16>, vector<128x64xbf16>, vector<128x128xf32> -> vector<128x128xf32>
    %cst_32 = arith.constant 1.250000e-01 : f32
    %73 = vector.broadcast %cst_32 : f32 to vector<128x128xf32>
    %74 = arith.mulf %72, %73 : vector<128x128xf32>
    %cst_33 = arith.constant -1.000000e+30 : f32
    %75 = vector.shape_cast %41 : vector<1x128xi1> to vector<1x128xi1>
    %76 = vector.broadcast %75 : vector<1x128xi1> to vector<128x128xi1>
    %77 = vector.broadcast %cst_33 : f32 to vector<128x128xf32>
    %78 = arith.select %76, %74, %77 : vector<128x128xi1>, vector<128x128xf32>
    %cst_34 = arith.constant dense<0xFF800000> : vector<128xf32>
    %79 = vector.multi_reduction <maximumf>, %78, %cst_34 [1] : vector<128x128xf32> to vector<128xf32>
    %80 = vector.shape_cast %79 : vector<128xf32> to vector<128x1xf32>
    %81 = arith.maximumf %22, %80 : vector<128x1xf32>
    %82 = arith.subf %22, %81 : vector<128x1xf32>
    %83 = math.exp %82 : vector<128x1xf32>
    %84 = vector.broadcast %81 : vector<128x1xf32> to vector<128x128xf32>
    %85 = arith.subf %78, %84 : vector<128x128xf32>
    %86 = math.exp %85 : vector<128x128xf32>
    %87 = arith.mulf %83, %23 : vector<128x1xf32>
    %cst_35 = arith.constant dense<0.000000e+00> : vector<128xf32>
    %88 = vector.multi_reduction <add>, %86, %cst_35 [1] : vector<128x128xf32> to vector<128xf32>
    %89 = vector.shape_cast %88 : vector<128xf32> to vector<128x1xf32>
    %90 = arith.addf %87, %89 : vector<128x1xf32>
    %91 = vector.broadcast %83 : vector<128x1xf32> to vector<128x64xf32>
    %92 = arith.mulf %91, %24 : vector<128x64xf32>
    %93 = arith.truncf %86 : vector<128x128xf32> to vector<128x128xbf16>
    %cst_36 = arith.constant dense<0.000000e+00> : vector<128x64xf32>
    %94 = tpu.matmul %93, %71, %cst_36 {dimension_numbers = #tpu.dot_dimension_numbers<[1], [0], [0], [1], [0, 0, 1, 1], [], []>} : vector<128x128xbf16>, vector<128x64xbf16>, vector<128x64xf32> -> vector<128x64xf32>
    %95 = arith.addf %92, %94 : vector<128x64xf32>
    %96 = vector.extract_strided_slice %18 {offsets = [0, 128], sizes = [128, 64], strides = [1, 1]} : vector<128x256xbf16> to vector<128x64xbf16>
    %97 = vector.extract_strided_slice %34 {offsets = [0, 128], sizes = [128, 64], strides = [1, 1]} : vector<128x256xbf16> to vector<128x64xbf16>
    %98 = vector.extract_strided_slice %36 {offsets = [0, 128], sizes = [128, 64], strides = [1, 1]} : vector<128x256xbf16> to vector<128x64xbf16>
    %cst_37 = arith.constant dense<0.000000e+00> : vector<128x128xf32>
    %99 = tpu.matmul %96, %97, %cst_37 {dimension_numbers = #tpu.dot_dimension_numbers<[1], [1], [0], [0], [0, 0, 1, 0], [], []>} : vector<128x64xbf16>, vector<128x64xbf16>, vector<128x128xf32> -> vector<128x128xf32>
    %cst_38 = arith.constant 1.250000e-01 : f32
    %100 = vector.broadcast %cst_38 : f32 to vector<128x128xf32>
    %101 = arith.mulf %99, %100 : vector<128x128xf32>
    %cst_39 = arith.constant -1.000000e+30 : f32
    %102 = vector.shape_cast %41 : vector<1x128xi1> to vector<1x128xi1>
    %103 = vector.broadcast %102 : vector<1x128xi1> to vector<128x128xi1>
    %104 = vector.broadcast %cst_39 : f32 to vector<128x128xf32>
    %105 = arith.select %103, %101, %104 : vector<128x128xi1>, vector<128x128xf32>
    %cst_40 = arith.constant dense<0xFF800000> : vector<128xf32>
    %106 = vector.multi_reduction <maximumf>, %105, %cst_40 [1] : vector<128x128xf32> to vector<128xf32>
    %107 = vector.shape_cast %106 : vector<128xf32> to vector<128x1xf32>
    %108 = arith.maximumf %25, %107 : vector<128x1xf32>
    %109 = arith.subf %25, %108 : vector<128x1xf32>
    %110 = math.exp %109 : vector<128x1xf32>
    %111 = vector.broadcast %108 : vector<128x1xf32> to vector<128x128xf32>
    %112 = arith.subf %105, %111 : vector<128x128xf32>
    %113 = math.exp %112 : vector<128x128xf32>
    %114 = arith.mulf %110, %26 : vector<128x1xf32>
    %cst_41 = arith.constant dense<0.000000e+00> : vector<128xf32>
    %115 = vector.multi_reduction <add>, %113, %cst_41 [1] : vector<128x128xf32> to vector<128xf32>
    %116 = vector.shape_cast %115 : vector<128xf32> to vector<128x1xf32>
    %117 = arith.addf %114, %116 : vector<128x1xf32>
    %118 = vector.broadcast %110 : vector<128x1xf32> to vector<128x64xf32>
    %119 = arith.mulf %118, %27 : vector<128x64xf32>
    %120 = arith.truncf %113 : vector<128x128xf32> to vector<128x128xbf16>
    %cst_42 = arith.constant dense<0.000000e+00> : vector<128x64xf32>
    %121 = tpu.matmul %120, %98, %cst_42 {dimension_numbers = #tpu.dot_dimension_numbers<[1], [0], [0], [1], [0, 0, 1, 1], [], []>} : vector<128x128xbf16>, vector<128x64xbf16>, vector<128x64xf32> -> vector<128x64xf32>
    %122 = arith.addf %119, %121 : vector<128x64xf32>
    %123 = vector.extract_strided_slice %18 {offsets = [0, 192], sizes = [128, 64], strides = [1, 1]} : vector<128x256xbf16> to vector<128x64xbf16>
    %124 = vector.extract_strided_slice %34 {offsets = [0, 192], sizes = [128, 64], strides = [1, 1]} : vector<128x256xbf16> to vector<128x64xbf16>
    %125 = vector.extract_strided_slice %36 {offsets = [0, 192], sizes = [128, 64], strides = [1, 1]} : vector<128x256xbf16> to vector<128x64xbf16>
    %cst_43 = arith.constant dense<0.000000e+00> : vector<128x128xf32>
    %126 = tpu.matmul %123, %124, %cst_43 {dimension_numbers = #tpu.dot_dimension_numbers<[1], [1], [0], [0], [0, 0, 1, 0], [], []>} : vector<128x64xbf16>, vector<128x64xbf16>, vector<128x128xf32> -> vector<128x128xf32>
    %cst_44 = arith.constant 1.250000e-01 : f32
    %127 = vector.broadcast %cst_44 : f32 to vector<128x128xf32>
    %128 = arith.mulf %126, %127 : vector<128x128xf32>
    %cst_45 = arith.constant -1.000000e+30 : f32
    %129 = vector.shape_cast %41 : vector<1x128xi1> to vector<1x128xi1>
    %130 = vector.broadcast %129 : vector<1x128xi1> to vector<128x128xi1>
    %131 = vector.broadcast %cst_45 : f32 to vector<128x128xf32>
    %132 = arith.select %130, %128, %131 : vector<128x128xi1>, vector<128x128xf32>
    %cst_46 = arith.constant dense<0xFF800000> : vector<128xf32>
    %133 = vector.multi_reduction <maximumf>, %132, %cst_46 [1] : vector<128x128xf32> to vector<128xf32>
    %134 = vector.shape_cast %133 : vector<128xf32> to vector<128x1xf32>
    %135 = arith.maximumf %28, %134 : vector<128x1xf32>
    %136 = arith.subf %28, %135 : vector<128x1xf32>
    %137 = math.exp %136 : vector<128x1xf32>
    %138 = vector.broadcast %135 : vector<128x1xf32> to vector<128x128xf32>
    %139 = arith.subf %132, %138 : vector<128x128xf32>
    %140 = math.exp %139 : vector<128x128xf32>
    %141 = arith.mulf %137, %29 : vector<128x1xf32>
    %cst_47 = arith.constant dense<0.000000e+00> : vector<128xf32>
    %142 = vector.multi_reduction <add>, %140, %cst_47 [1] : vector<128x128xf32> to vector<128xf32>
    %143 = vector.shape_cast %142 : vector<128xf32> to vector<128x1xf32>
    %144 = arith.addf %141, %143 : vector<128x1xf32>
    %145 = vector.broadcast %137 : vector<128x1xf32> to vector<128x64xf32>
    %146 = arith.mulf %145, %30 : vector<128x64xf32>
    %147 = arith.truncf %140 : vector<128x128xf32> to vector<128x128xbf16>
    %cst_48 = arith.constant dense<0.000000e+00> : vector<128x64xf32>
    %148 = tpu.matmul %147, %125, %cst_48 {dimension_numbers = #tpu.dot_dimension_numbers<[1], [0], [0], [1], [0, 0, 1, 1], [], []>} : vector<128x128xbf16>, vector<128x64xbf16>, vector<128x64xf32> -> vector<128x64xf32>
    %149 = arith.addf %146, %148 : vector<128x64xf32>
    %c1_i32_49 = arith.constant 1 : i32
    %150 = tpu.reciprocal %63 {approx = true} : vector<128x1xf32> -> vector<128x1xf32>
    %151 = vector.broadcast %150 : vector<128x1xf32> to vector<128x64xf32>
    %152 = arith.mulf %68, %151 : vector<128x64xf32>
    %153 = arith.truncf %152 : vector<128x64xf32> to vector<128x64xbf16>
    %c0_50 = arith.constant 0 : index
    %c0_51 = arith.constant 0 : index
    %154 = vector.load %arg21[%c0_50, %c0_51] : memref<128x256xbf16, #tpu.memory_space<vmem>>, vector<128x64xbf16>
    tpu.vector_store %arg21[%c0_50, %c0_51], %153 {strides = array<i32>} : memref<128x256xbf16, #tpu.memory_space<vmem>>, vector<128x64xbf16>,
    %155 = tpu.reciprocal %90 {approx = true} : vector<128x1xf32> -> vector<128x1xf32>
    %156 = vector.broadcast %155 : vector<128x1xf32> to vector<128x64xf32>
    %157 = arith.mulf %95, %156 : vector<128x64xf32>
    %158 = arith.truncf %157 : vector<128x64xf32> to vector<128x64xbf16>
    %c0_52 = arith.constant 0 : index
    %c64 = arith.constant 64 : index
    %159 = vector.load %arg21[%c0_52, %c64] : memref<128x256xbf16, #tpu.memory_space<vmem>>, vector<128x64xbf16>
    tpu.vector_store %arg21[%c0_52, %c64], %158 {strides = array<i32>} : memref<128x256xbf16, #tpu.memory_space<vmem>>, vector<128x64xbf16>,
    %160 = tpu.reciprocal %117 {approx = true} : vector<128x1xf32> -> vector<128x1xf32>
    %161 = vector.broadcast %160 : vector<128x1xf32> to vector<128x64xf32>
    %162 = arith.mulf %122, %161 : vector<128x64xf32>
    %163 = arith.truncf %162 : vector<128x64xf32> to vector<128x64xbf16>
    %c0_53 = arith.constant 0 : index
    %c128 = arith.constant 128 : index
    %164 = vector.load %arg21[%c0_53, %c128] : memref<128x256xbf16, #tpu.memory_space<vmem>>, vector<128x64xbf16>
    tpu.vector_store %arg21[%c0_53, %c128], %163 {strides = array<i32>} : memref<128x256xbf16, #tpu.memory_space<vmem>>, vector<128x64xbf16>,
    %165 = tpu.reciprocal %144 {approx = true} : vector<128x1xf32> -> vector<128x1xf32>
    %166 = vector.broadcast %165 : vector<128x1xf32> to vector<128x64xf32>
    %167 = arith.mulf %149, %166 : vector<128x64xf32>
    %168 = arith.truncf %167 : vector<128x64xf32> to vector<128x64xbf16>
    %c0_54 = arith.constant 0 : index
    %c192 = arith.constant 192 : index
    %169 = vector.load %arg21[%c0_54, %c192] : memref<128x256xbf16, #tpu.memory_space<vmem>>, vector<128x64xbf16>
    tpu.vector_store %arg21[%c0_54, %c192], %168 {strides = array<i32>} : memref<128x256xbf16, #tpu.memory_space<vmem>>, vector<128x64xbf16>,
    %c0_i32_55 = arith.constant 0 : i32
    %c128_i32_56 = arith.constant 128 : i32
    %170 = arith.muli %c0_i32_55, %c128_i32_56 : i32
    %171 = tpu.assume_multiple %170, 128 : i32
    %172 = arith.index_cast %171 : i32 to index
    %c0_57 = arith.constant 0 : index
    %173 = vector.load %arg19[%172, %c0_57] : memref<128x256xf32, #tpu.memory_space<vmem>>, vector<128x256xf32>
    %174 = arith.index_cast %171 : i32 to index
    %c0_58 = arith.constant 0 : index
    %175 = vector.load %arg21[%174, %c0_58] : memref<128x256xbf16, #tpu.memory_space<vmem>>, vector<128x256xbf16>
    %c0_59 = arith.constant 0 : index
    %c0_60 = arith.constant 0 : index
    %c0_61 = arith.constant 0 : index
    %176 = vector.load %arg8[%c0_59, %c0_60, %c0_61] : memref<1x256x256xbf16, #tpu.memory_space<vmem>>, vector<1x256x256xbf16>
    %177 = vector.shape_cast %176 : vector<1x256x256xbf16> to vector<256x256xbf16>
    %cst_62 = arith.constant dense<0.000000e+00> : vector<128x256xf32>
    %178 = tpu.matmul %175, %177, %cst_62 {dimension_numbers = #tpu.dot_dimension_numbers<[1], [0], [0], [1], [0, 0, 1, 1], [], []>} : vector<128x256xbf16>, vector<256x256xbf16>, vector<128x256xf32> -> vector<128x256xf32>
    %c0_63 = arith.constant 0 : index
    %c0_64 = arith.constant 0 : index
    %c0_65 = arith.constant 0 : index
    %179 = vector.load %arg9[%c0_63, %c0_64, %c0_65] : memref<1x1x256xf32, #tpu.memory_space<vmem>>, vector<1x1x256xf32>
    %180 = vector.shape_cast %179 : vector<1x1x256xf32> to vector<1x256xf32>
    %181 = vector.broadcast %180 : vector<1x256xf32> to vector<128x256xf32>
    %182 = arith.addf %178, %181 : vector<128x256xf32>
    %183 = arith.addf %173, %182 : vector<128x256xf32>
    %c0_66 = arith.constant 0 : index
    %c0_67 = arith.constant 0 : index
    %c0_68 = arith.constant 0 : index
    %184 = vector.load %arg10[%c0_66, %c0_67, %c0_68] : memref<1x1x256xf32, #tpu.memory_space<vmem>>, vector<1x1x256xf32>
    %185 = vector.shape_cast %184 : vector<1x1x256xf32> to vector<1x256xf32>
    %c0_69 = arith.constant 0 : index
    %c0_70 = arith.constant 0 : index
    %c0_71 = arith.constant 0 : index
    %186 = vector.load %arg11[%c0_69, %c0_70, %c0_71] : memref<1x1x256xf32, #tpu.memory_space<vmem>>, vector<1x1x256xf32>
    %187 = vector.shape_cast %186 : vector<1x1x256xf32> to vector<1x256xf32>
    %cst_72 = arith.constant dense<0.000000e+00> : vector<128xf32>
    %188 = vector.multi_reduction <add>, %183, %cst_72 [1] : vector<128x256xf32> to vector<128xf32>
    %189 = vector.shape_cast %188 : vector<128xf32> to vector<128x1xf32>
    %cst_73 = arith.constant 2.560000e+02 : f32
    %190 = vector.broadcast %cst_73 : f32 to vector<128x1xf32>
    %191 = arith.divf %189, %190 : vector<128x1xf32>
    %192 = vector.broadcast %191 : vector<128x1xf32> to vector<128x256xf32>
    %193 = arith.subf %183, %192 : vector<128x256xf32>
    %194 = arith.mulf %193, %193 : vector<128x256xf32>
    %cst_74 = arith.constant dense<0.000000e+00> : vector<128xf32>
    %195 = vector.multi_reduction <add>, %194, %cst_74 [1] : vector<128x256xf32> to vector<128xf32>
    %196 = vector.shape_cast %195 : vector<128xf32> to vector<128x1xf32>
    %cst_75 = arith.constant 2.560000e+02 : f32
    %197 = vector.broadcast %cst_75 : f32 to vector<128x1xf32>
    %198 = arith.divf %196, %197 : vector<128x1xf32>
    %199 = vector.broadcast %191 : vector<128x1xf32> to vector<128x256xf32>
    %200 = arith.subf %183, %199 : vector<128x256xf32>
    %cst_76 = arith.constant 9.99999974E-6 : f32
    %201 = vector.broadcast %cst_76 : f32 to vector<128x1xf32>
    %202 = arith.addf %198, %201 : vector<128x1xf32>
    %203 = math.rsqrt %202 : vector<128x1xf32>
    %204 = vector.broadcast %203 : vector<128x1xf32> to vector<128x256xf32>
    %205 = arith.mulf %200, %204 : vector<128x256xf32>
    %206 = vector.broadcast %185 : vector<1x256xf32> to vector<128x256xf32>
    %207 = arith.mulf %205, %206 : vector<128x256xf32>
    %208 = vector.broadcast %187 : vector<1x256xf32> to vector<128x256xf32>
    %209 = arith.addf %207, %208 : vector<128x256xf32>
    %210 = arith.truncf %209 : vector<128x256xf32> to vector<128x256xbf16>
    %c0_77 = arith.constant 0 : index
    %c0_78 = arith.constant 0 : index
    %c0_79 = arith.constant 0 : index
    %211 = vector.load %arg12[%c0_77, %c0_78, %c0_79] : memref<1x256x1024xbf16, #tpu.memory_space<vmem>>, vector<1x256x1024xbf16>
    %212 = vector.shape_cast %211 : vector<1x256x1024xbf16> to vector<256x1024xbf16>
    %cst_80 = arith.constant dense<0.000000e+00> : vector<128x1024xf32>
    %213 = tpu.matmul %210, %212, %cst_80 {dimension_numbers = #tpu.dot_dimension_numbers<[1], [0], [0], [1], [0, 0, 1, 1], [], []>} : vector<128x256xbf16>, vector<256x1024xbf16>, vector<128x1024xf32> -> vector<128x1024xf32>
    %c0_81 = arith.constant 0 : index
    %c0_82 = arith.constant 0 : index
    %c0_83 = arith.constant 0 : index
    %214 = vector.load %arg13[%c0_81, %c0_82, %c0_83] : memref<1x1x1024xf32, #tpu.memory_space<vmem>>, vector<1x1x1024xf32>
    %215 = vector.shape_cast %214 : vector<1x1x1024xf32> to vector<1x1024xf32>
    %216 = vector.broadcast %215 : vector<1x1024xf32> to vector<128x1024xf32>
    %217 = arith.addf %213, %216 : vector<128x1024xf32>
    %cst_84 = arith.constant 0.000000e+00 : f32
    %218 = vector.broadcast %cst_84 : f32 to vector<128x1024xf32>
    %219 = arith.maximumf %217, %218 : vector<128x1024xf32>
    %220 = arith.truncf %219 : vector<128x1024xf32> to vector<128x1024xbf16>
    %c0_85 = arith.constant 0 : index
    %c0_86 = arith.constant 0 : index
    %c0_87 = arith.constant 0 : index
    %221 = vector.load %arg14[%c0_85, %c0_86, %c0_87] : memref<1x1024x256xbf16, #tpu.memory_space<vmem>>, vector<1x1024x256xbf16>
    %222 = vector.shape_cast %221 : vector<1x1024x256xbf16> to vector<1024x256xbf16>
    %cst_88 = arith.constant dense<0.000000e+00> : vector<128x256xf32>
    %223 = tpu.matmul %220, %222, %cst_88 {dimension_numbers = #tpu.dot_dimension_numbers<[1], [0], [0], [1], [0, 0, 1, 1], [], []>} : vector<128x1024xbf16>, vector<1024x256xbf16>, vector<128x256xf32> -> vector<128x256xf32>
    %c0_89 = arith.constant 0 : index
    %c0_90 = arith.constant 0 : index
    %c0_91 = arith.constant 0 : index
    %224 = vector.load %arg15[%c0_89, %c0_90, %c0_91] : memref<1x1x256xf32, #tpu.memory_space<vmem>>, vector<1x1x256xf32>
    %225 = vector.shape_cast %224 : vector<1x1x256xf32> to vector<1x256xf32>
    %226 = vector.broadcast %225 : vector<1x256xf32> to vector<128x256xf32>
    %227 = arith.addf %223, %226 : vector<128x256xf32>
    %228 = arith.addf %209, %227 : vector<128x256xf32>
    %c0_92 = arith.constant 0 : index
    %c0_93 = arith.constant 0 : index
    %c0_94 = arith.constant 0 : index
    %229 = vector.load %arg16[%c0_92, %c0_93, %c0_94] : memref<1x1x256xf32, #tpu.memory_space<vmem>>, vector<1x1x256xf32>
    %230 = vector.shape_cast %229 : vector<1x1x256xf32> to vector<1x256xf32>
    %c0_95 = arith.constant 0 : index
    %c0_96 = arith.constant 0 : index
    %c0_97 = arith.constant 0 : index
    %231 = vector.load %arg17[%c0_95, %c0_96, %c0_97] : memref<1x1x256xf32, #tpu.memory_space<vmem>>, vector<1x1x256xf32>
    %232 = vector.shape_cast %231 : vector<1x1x256xf32> to vector<1x256xf32>
    %cst_98 = arith.constant dense<0.000000e+00> : vector<128xf32>
    %233 = vector.multi_reduction <add>, %228, %cst_98 [1] : vector<128x256xf32> to vector<128xf32>
    %234 = vector.shape_cast %233 : vector<128xf32> to vector<128x1xf32>
    %cst_99 = arith.constant 2.560000e+02 : f32
    %235 = vector.broadcast %cst_99 : f32 to vector<128x1xf32>
    %236 = arith.divf %234, %235 : vector<128x1xf32>
    %237 = vector.broadcast %236 : vector<128x1xf32> to vector<128x256xf32>
    %238 = arith.subf %228, %237 : vector<128x256xf32>
    %239 = arith.mulf %238, %238 : vector<128x256xf32>
    %cst_100 = arith.constant dense<0.000000e+00> : vector<128xf32>
    %240 = vector.multi_reduction <add>, %239, %cst_100 [1] : vector<128x256xf32> to vector<128xf32>
    %241 = vector.shape_cast %240 : vector<128xf32> to vector<128x1xf32>
    %cst_101 = arith.constant 2.560000e+02 : f32
    %242 = vector.broadcast %cst_101 : f32 to vector<128x1xf32>
    %243 = arith.divf %241, %242 : vector<128x1xf32>
    %244 = vector.broadcast %236 : vector<128x1xf32> to vector<128x256xf32>
    %245 = arith.subf %228, %244 : vector<128x256xf32>
    %cst_102 = arith.constant 9.99999974E-6 : f32
    %246 = vector.broadcast %cst_102 : f32 to vector<128x1xf32>
    %247 = arith.addf %243, %246 : vector<128x1xf32>
    %248 = math.rsqrt %247 : vector<128x1xf32>
    %249 = vector.broadcast %248 : vector<128x1xf32> to vector<128x256xf32>
    %250 = arith.mulf %245, %249 : vector<128x256xf32>
    %251 = vector.broadcast %230 : vector<1x256xf32> to vector<128x256xf32>
    %252 = arith.mulf %250, %251 : vector<128x256xf32>
    %253 = vector.broadcast %232 : vector<1x256xf32> to vector<128x256xf32>
    %254 = arith.addf %252, %253 : vector<128x256xf32>
    %255 = arith.index_cast %171 : i32 to index
    %c0_103 = arith.constant 0 : index
    %256 = vector.load %arg19[%255, %c0_103] : memref<128x256xf32, #tpu.memory_space<vmem>>, vector<128x256xf32>
    tpu.vector_store %arg19[%255, %c0_103], %254 {strides = array<i32>} : memref<128x256xf32, #tpu.memory_space<vmem>>, vector<128x256xf32>,
    %c1_i32_104 = arith.constant 1 : i32
    %c3_i32 = arith.constant 3 : i32
    %257 = arith.cmpi eq, %arg1, %c3_i32 : i32
    %258 = arith.extui %257 : i1 to i32
    %c0_i32_105 = arith.constant 0 : i32
    %259 = arith.cmpi ne, %258, %c0_i32_105 : i32
    scf.if %259 {
      %c0_106 = arith.constant 0 : index
      %c0_107 = arith.constant 0 : index
      %260 = vector.load %arg19[%c0_106, %c0_107] : memref<128x256xf32, #tpu.memory_space<vmem>>, vector<128x256xf32>
      %261 = vector.shape_cast %260 : vector<128x256xf32> to vector<1x128x256xf32>
      %262 = arith.truncf %261 : vector<1x128x256xf32> to vector<1x128x256xbf16>
      %c0_108 = arith.constant 0 : index
      %c0_109 = arith.constant 0 : index
      %c0_110 = arith.constant 0 : index
      %263 = vector.load %arg18[%c0_108, %c0_109, %c0_110] : memref<1x128x256xbf16, #tpu.memory_space<vmem>>, vector<1x128x256xbf16>
      tpu.vector_store %arg18[%c0_108, %c0_109, %c0_110], %262 {strides = array<i32>} : memref<1x128x256xbf16, #tpu.memory_space<vmem>>, vector<1x128x256xbf16>,
    } else {
    }
    return
  }
  func.func @transform_0(%arg0: i32, %arg1: i32) -> (i32, i32, i32) {
    %c0_i32 = arith.constant 0 : i32
    %c0_i32_0 = arith.constant 0 : i32
    %c0_i32_1 = arith.constant 0 : i32
    return %arg0, %c0_i32, %c0_i32_0 : i32, i32, i32
  }
  func.func @transform_1(%arg0: i32, %arg1: i32) -> (i32, i32) {
    %c0_i32 = arith.constant 0 : i32
    %c0_i32_0 = arith.constant 0 : i32
    %c0_i32_1 = arith.constant 0 : i32
    return %c0_i32, %c0_i32_0 : i32, i32
  }
  func.func @transform_2(%arg0: i32, %arg1: i32) -> (i32, i32) {
    %c0_i32 = arith.constant 0 : i32
    %c0_i32_0 = arith.constant 0 : i32
    %c0_i32_1 = arith.constant 0 : i32
    return %c0_i32, %c0_i32_0 : i32, i32
  }
  func.func @transform_3(%arg0: i32, %arg1: i32) -> (i32, i32) {
    %c0_i32 = arith.constant 0 : i32
    %c0_i32_0 = arith.constant 0 : i32
    %c0_i32_1 = arith.constant 0 : i32
    return %c0_i32, %c0_i32_0 : i32, i32
  }
  func.func @transform_4(%arg0: i32, %arg1: i32) -> (i32, i32, i32) {
    %c0_i32 = arith.constant 0 : i32
    %c0_i32_0 = arith.constant 0 : i32
    %c0_i32_1 = arith.constant 0 : i32
    return %arg1, %c0_i32, %c0_i32_0 : i32, i32, i32
  }
  func.func @transform_5(%arg0: i32, %arg1: i32) -> (i32, i32, i32) {
    %c0_i32 = arith.constant 0 : i32
    %c0_i32_0 = arith.constant 0 : i32
    %c0_i32_1 = arith.constant 0 : i32
    return %arg1, %c0_i32, %c0_i32_0 : i32, i32, i32
  }
  func.func @transform_6(%arg0: i32, %arg1: i32) -> (i32, i32, i32) {
    %c0_i32 = arith.constant 0 : i32
    %c0_i32_0 = arith.constant 0 : i32
    %c0_i32_1 = arith.constant 0 : i32
    return %arg1, %c0_i32, %c0_i32_0 : i32, i32, i32
  }
  func.func @transform_7(%arg0: i32, %arg1: i32) -> (i32, i32, i32) {
    %c0_i32 = arith.constant 0 : i32
    %c0_i32_0 = arith.constant 0 : i32
    %c0_i32_1 = arith.constant 0 : i32
    return %arg1, %c0_i32, %c0_i32_0 : i32, i32, i32
  }
  func.func @transform_8(%arg0: i32, %arg1: i32) -> (i32, i32, i32) {
    %c0_i32 = arith.constant 0 : i32
    %c0_i32_0 = arith.constant 0 : i32
    %c0_i32_1 = arith.constant 0 : i32
    return %arg1, %c0_i32, %c0_i32_0 : i32, i32, i32
  }
  func.func @transform_9(%arg0: i32, %arg1: i32) -> (i32, i32, i32) {
    %c0_i32 = arith.constant 0 : i32
    %c0_i32_0 = arith.constant 0 : i32
    %c0_i32_1 = arith.constant 0 : i32
    return %arg1, %c0_i32, %c0_i32_0 : i32, i32, i32
  }
  func.func @transform_10(%arg0: i32, %arg1: i32) -> (i32, i32, i32) {
    %c0_i32 = arith.constant 0 : i32
    %c0_i32_0 = arith.constant 0 : i32
    %c0_i32_1 = arith.constant 0 : i32
    return %arg1, %c0_i32, %c0_i32_0 : i32, i32, i32
  }
  func.func @transform_11(%arg0: i32, %arg1: i32) -> (i32, i32, i32) {
    %c0_i32 = arith.constant 0 : i32
    %c0_i32_0 = arith.constant 0 : i32
    %c0_i32_1 = arith.constant 0 : i32
    return %arg1, %c0_i32, %c0_i32_0 : i32, i32, i32
  }
  func.func @transform_12(%arg0: i32, %arg1: i32) -> (i32, i32, i32) {
    %c0_i32 = arith.constant 0 : i32
    %c0_i32_0 = arith.constant 0 : i32
    %c0_i32_1 = arith.constant 0 : i32
    return %arg1, %c0_i32, %c0_i32_0 : i32, i32, i32
  }
  func.func @transform_13(%arg0: i32, %arg1: i32) -> (i32, i32, i32) {
    %c0_i32 = arith.constant 0 : i32
    %c0_i32_0 = arith.constant 0 : i32
    %c0_i32_1 = arith.constant 0 : i32
    return %arg1, %c0_i32, %c0_i32_0 : i32, i32, i32
  }
  func.func @transform_14(%arg0: i32, %arg1: i32) -> (i32, i32, i32) {
    %c0_i32 = arith.constant 0 : i32
    %c0_i32_0 = arith.constant 0 : i32
    %c0_i32_1 = arith.constant 0 : i32
    return %arg1, %c0_i32, %c0_i32_0 : i32, i32, i32
  }
  func.func @transform_15(%arg0: i32, %arg1: i32) -> (i32, i32, i32) {
    %c0_i32 = arith.constant 0 : i32
    %c0_i32_0 = arith.constant 0 : i32
    %c0_i32_1 = arith.constant 0 : i32
    return %arg1, %c0_i32, %c0_i32_0 : i32, i32, i32
  }
  func.func @transform_16(%arg0: i32, %arg1: i32) -> (i32, i32, i32) {
    %c0_i32 = arith.constant 0 : i32
    %c0_i32_0 = arith.constant 0 : i32
    %c0_i32_1 = arith.constant 0 : i32
    return %arg0, %c0_i32, %c0_i32_0 : i32, i32, i32
  }
}

module attributes {stable_mosaic.version = 11 : i64} {
  func.func @kernel(%arg0: i32, %arg1: memref<1x128x256xbf16, #tpu.memory_space<vmem>>, %arg2: memref<256x512xbf16, #tpu.memory_space<vmem>>, %arg3: memref<1x512xf32, #tpu.memory_space<vmem>>, %arg4: memref<1x512xf32, #tpu.memory_space<vmem>>, %arg5: memref<1x1xf32, #tpu.memory_space<vmem>>, %arg6: memref<1x256xf32, #tpu.memory_space<vmem>>, %arg7: memref<1x1xf32, #tpu.memory_space<vmem>>, %arg8: memref<1x1x1xf32, #tpu.memory_space<vmem>>) attributes {dimension_semantics = [#tpu.dimension_semantics<parallel>], iteration_bounds = array<i64: 2>, scalar_prefetch = 0 : i64, scratch_operands = 0 : i64, tpu.core_type = #tpu.core_type<tc>, window_params = [{transform_indices = @transform_0, window_bounds = array<i64: 1, 128, 256>}, {pipeline_mode = #tpu.pipeline_mode<synchronous>, transform_indices = @transform_1, window_bounds = array<i64: 256, 512>}, {pipeline_mode = #tpu.pipeline_mode<synchronous>, transform_indices = @transform_2, window_bounds = array<i64: 1, 512>}, {pipeline_mode = #tpu.pipeline_mode<synchronous>, transform_indices = @transform_3, window_bounds = array<i64: 1, 512>}, {pipeline_mode = #tpu.pipeline_mode<synchronous>, transform_indices = @transform_4, window_bounds = array<i64: 1, 1>}, {pipeline_mode = #tpu.pipeline_mode<synchronous>, transform_indices = @transform_5, window_bounds = array<i64: 1, 256>}, {pipeline_mode = #tpu.pipeline_mode<synchronous>, transform_indices = @transform_6, window_bounds = array<i64: 1, 1>}, {transform_indices = @transform_7, window_bounds = array<i64: 1, 1, 1>}]} {
    %c0 = arith.constant 0 : index
    %c0_0 = arith.constant 0 : index
    %c0_1 = arith.constant 0 : index
    %0 = vector.load %arg1[%c0, %c0_0, %c0_1] : memref<1x128x256xbf16, #tpu.memory_space<vmem>>, vector<1x128x256xbf16>
    %1 = vector.shape_cast %0 : vector<1x128x256xbf16> to vector<128x256xbf16>
    %c0_2 = arith.constant 0 : index
    %c0_3 = arith.constant 0 : index
    %2 = vector.load %arg2[%c0_2, %c0_3] : memref<256x512xbf16, #tpu.memory_space<vmem>>, vector<256x512xbf16>
    %cst = arith.constant dense<0.000000e+00> : vector<128x512xf32>
    %3 = tpu.matmul %1, %2, %cst {dimension_numbers = #tpu.dot_dimension_numbers<[1], [0], [0], [1], [0, 0, 1, 1], [], []>} : vector<128x256xbf16>, vector<256x512xbf16>, vector<128x512xf32> -> vector<128x512xf32>
    %c0_4 = arith.constant 0 : index
    %c0_5 = arith.constant 0 : index
    %4 = vector.load %arg3[%c0_4, %c0_5] : memref<1x512xf32, #tpu.memory_space<vmem>>, vector<1x512xf32>
    %5 = vector.broadcast %4 : vector<1x512xf32> to vector<128x512xf32>
    %6 = arith.addf %3, %5 : vector<128x512xf32>
    %cst_6 = arith.constant 0.000000e+00 : f32
    %7 = vector.broadcast %cst_6 : f32 to vector<128x512xf32>
    %8 = arith.maximumf %6, %7 : vector<128x512xf32>
    %c0_7 = arith.constant 0 : index
    %c0_8 = arith.constant 0 : index
    %9 = vector.load %arg4[%c0_7, %c0_8] : memref<1x512xf32, #tpu.memory_space<vmem>>, vector<1x512xf32>
    %10 = vector.broadcast %9 : vector<1x512xf32> to vector<128x512xf32>
    %11 = arith.mulf %8, %10 : vector<128x512xf32>
    %cst_9 = arith.constant dense<0.000000e+00> : vector<128xf32>
    %12 = vector.multi_reduction <add>, %11, %cst_9 [1] : vector<128x512xf32> to vector<128xf32>
    %13 = vector.shape_cast %12 : vector<128xf32> to vector<128x1xf32>
    %c0_10 = arith.constant 0 : index
    %c0_11 = arith.constant 0 : index
    %14 = vector.load %arg5[%c0_10, %c0_11] : memref<1x1xf32, #tpu.memory_space<vmem>>, vector<1x1xf32>
    %15 = vector.broadcast %14 : vector<1x1xf32> to vector<128x1xf32>
    %16 = arith.addf %13, %15 : vector<128x1xf32>
    %17 = tpu.iota {dimensions = array<i32: 0>} : vector<128x1xi32>
    %c16_i32 = arith.constant 16 : i32
    %18 = vector.broadcast %c16_i32 : i32 to vector<128x1xi32>
    %19 = arith.cmpi slt, %17, %18 : vector<128x1xi32>
    %cst_12 = arith.constant -1.000000e+30 : f32
    %20 = vector.broadcast %cst_12 : f32 to vector<128x1xf32>
    %21 = arith.select %19, %16, %20 : vector<128x1xi1>, vector<128x1xf32>
    %cst_13 = arith.constant dense<0xFF800000> : vector<1xf32>
    %22 = vector.multi_reduction <maximumf>, %21, %cst_13 [0] : vector<128x1xf32> to vector<1xf32>
    %23 = vector.shape_cast %22 : vector<1xf32> to vector<1x1xf32>
    %24 = vector.broadcast %23 : vector<1x1xf32> to vector<128x1xf32>
    %25 = arith.subf %21, %24 : vector<128x1xf32>
    %26 = math.exp %25 : vector<128x1xf32>
    %cst_14 = arith.constant dense<0.000000e+00> : vector<1xf32>
    %27 = vector.multi_reduction <add>, %26, %cst_14 [0] : vector<128x1xf32> to vector<1xf32>
    %28 = vector.shape_cast %27 : vector<1xf32> to vector<1x1xf32>
    %29 = tpu.reciprocal %28 {approx = true} : vector<1x1xf32> -> vector<1x1xf32>
    %30 = vector.broadcast %29 : vector<1x1xf32> to vector<128x1xf32>
    %31 = arith.mulf %26, %30 : vector<128x1xf32>
    %32 = arith.extf %1 : vector<128x256xbf16> to vector<128x256xf32>
    %33 = vector.broadcast %31 : vector<128x1xf32> to vector<128x256xf32>
    %34 = arith.mulf %33, %32 : vector<128x256xf32>
    %cst_15 = arith.constant dense<0.000000e+00> : vector<256xf32>
    %35 = vector.multi_reduction <add>, %34, %cst_15 [0] : vector<128x256xf32> to vector<256xf32>
    %36 = vector.shape_cast %35 : vector<256xf32> to vector<1x256xf32>
    %c0_16 = arith.constant 0 : index
    %c0_17 = arith.constant 0 : index
    %37 = vector.load %arg6[%c0_16, %c0_17] : memref<1x256xf32, #tpu.memory_space<vmem>>, vector<1x256xf32>
    %38 = arith.mulf %36, %37 : vector<1x256xf32>
    %cst_18 = arith.constant dense<0.000000e+00> : vector<1xf32>
    %39 = vector.multi_reduction <add>, %38, %cst_18 [1] : vector<1x256xf32> to vector<1xf32>
    %40 = vector.shape_cast %39 : vector<1xf32> to vector<1x1xf32>
    %c0_19 = arith.constant 0 : index
    %c0_20 = arith.constant 0 : index
    %41 = vector.load %arg7[%c0_19, %c0_20] : memref<1x1xf32, #tpu.memory_space<vmem>>, vector<1x1xf32>
    %42 = arith.addf %40, %41 : vector<1x1xf32>
    %cst_21 = arith.constant 0.000000e+00 : f32
    %43 = vector.broadcast %cst_21 : f32 to vector<1x1xf32>
    %44 = arith.subf %43, %42 : vector<1x1xf32>
    %45 = math.exp %44 : vector<1x1xf32>
    %cst_22 = arith.constant 1.000000e+00 : f32
    %46 = vector.broadcast %cst_22 : f32 to vector<1x1xf32>
    %47 = arith.addf %46, %45 : vector<1x1xf32>
    %cst_23 = arith.constant 1.000000e+00 : f32
    %48 = vector.broadcast %cst_23 : f32 to vector<1x1xf32>
    %49 = arith.divf %48, %47 : vector<1x1xf32>
    %50 = vector.shape_cast %49 : vector<1x1xf32> to vector<1x1x1xf32>
    %c0_24 = arith.constant 0 : index
    %c0_25 = arith.constant 0 : index
    %c0_26 = arith.constant 0 : index
    %51 = vector.load %arg8[%c0_24, %c0_25, %c0_26] : memref<1x1x1xf32, #tpu.memory_space<vmem>>, vector<1x1x1xf32>
    tpu.vector_store %arg8[%c0_24, %c0_25, %c0_26], %50 {strides = array<i32>} : memref<1x1x1xf32, #tpu.memory_space<vmem>>, vector<1x1x1xf32>,
    return
  }
  func.func @transform_0(%arg0: i32) -> (i32, i32, i32) {
    %c0_i32 = arith.constant 0 : i32
    %c0_i32_0 = arith.constant 0 : i32
    %c0_i32_1 = arith.constant 0 : i32
    return %arg0, %c0_i32, %c0_i32_0 : i32, i32, i32
  }
  func.func @transform_1(%arg0: i32) -> (i32, i32) {
    %c0_i32 = arith.constant 0 : i32
    %c0_i32_0 = arith.constant 0 : i32
    %c0_i32_1 = arith.constant 0 : i32
    return %c0_i32, %c0_i32_0 : i32, i32
  }
  func.func @transform_2(%arg0: i32) -> (i32, i32) {
    %c0_i32 = arith.constant 0 : i32
    %c0_i32_0 = arith.constant 0 : i32
    %c0_i32_1 = arith.constant 0 : i32
    return %c0_i32, %c0_i32_0 : i32, i32
  }
  func.func @transform_3(%arg0: i32) -> (i32, i32) {
    %c0_i32 = arith.constant 0 : i32
    %c0_i32_0 = arith.constant 0 : i32
    %c0_i32_1 = arith.constant 0 : i32
    return %c0_i32, %c0_i32_0 : i32, i32
  }
  func.func @transform_4(%arg0: i32) -> (i32, i32) {
    %c0_i32 = arith.constant 0 : i32
    %c0_i32_0 = arith.constant 0 : i32
    %c0_i32_1 = arith.constant 0 : i32
    return %c0_i32, %c0_i32_0 : i32, i32
  }
  func.func @transform_5(%arg0: i32) -> (i32, i32) {
    %c0_i32 = arith.constant 0 : i32
    %c0_i32_0 = arith.constant 0 : i32
    %c0_i32_1 = arith.constant 0 : i32
    return %c0_i32, %c0_i32_0 : i32, i32
  }
  func.func @transform_6(%arg0: i32) -> (i32, i32) {
    %c0_i32 = arith.constant 0 : i32
    %c0_i32_0 = arith.constant 0 : i32
    %c0_i32_1 = arith.constant 0 : i32
    return %c0_i32, %c0_i32_0 : i32, i32
  }
  func.func @transform_7(%arg0: i32) -> (i32, i32, i32) {
    %c0_i32 = arith.constant 0 : i32
    %c0_i32_0 = arith.constant 0 : i32
    %c0_i32_1 = arith.constant 0 : i32
    return %arg0, %c0_i32, %c0_i32_0 : i32, i32, i32
  }
}

</mosaic_0001>

<llo_original>
// kernel: forward.3
$region0: #{forward.3}
  #allocation0 [shape = 'u32[]', space=smem, size = 0x4, offset = 0x4, fixed_abs, tag = 'smem constant byte address 0x4 - core index']
  #allocation1 [shape = 'u32[144,128]{1,0:T(1,128)}', space=vmem, size = 0x12000, scoped, tag = 'internal scratch']
  #allocation2 [shape = 'f32[1,1]{1,0:T(1,128)S(1)}', space=vmem, size = 0x200, scoped, tag = 'scoped memory for forward.3']
  #allocation3 [shape = 'f32[1,1]{1,0:T(1,128)S(1)}', space=vmem, size = 0x200, scoped, tag = 'scoped memory for forward.3']
  %s0 = inlined_call_operand.vmem [shape: bf16[2,128,256], index: 0, kind: input, shape index: {}]
  %s1 = inlined_call_operand.vmem [shape: bf16[256,512], index: 1, kind: input, shape index: {}]
  %s2 = inlined_call_operand.vmem [shape: f32[1,512], index: 2, kind: input, shape index: {}]
  %s3 = inlined_call_operand.vmem [shape: f32[1,512], index: 3, kind: input, shape index: {}]
  %s4 = inlined_call_operand.<no memory space> [shape: f32[1,1], index: 4, kind: input, shape index: {}]
  %s5 = inlined_call_operand.vmem [shape: f32[1,256], index: 5, kind: input, shape index: {}]
  %s6 = inlined_call_operand.<no memory space> [shape: f32[1,1], index: 6, kind: input, shape index: {}]
  %s7 = inlined_call_operand.vmem [shape: f32[2,1,1], index: 7, kind: output, shape index: {}]
  %s8 = sld [smem:[#allocation0]]
  $region61: #{forward.3} parent=0
    _
  %s10 = ssub.s32 1, %s8
  %s11 = scalar_select 0, %s10, %s8
  %v12 = vstv %s4
  %13 = vst [vmem:[#allocation2] sm:$0x1] %v12
  %v14 = vstv %s6
  %15 = vst [vmem:[#allocation3] sm:$0x1] %v14
  loop: start=0, step=1, limit=4
  $region2: #{forward.3} parent=0 // loop_pre_header
    _
  $region3: #{forward.3} parent=0 // loop_header
    %s17 = sphi 0, %s21
    %p18 = scmp.ge.s32.totalorder %s17, 4
    %s27 = sphi 0, %s29
    %s30 = sphi 0, %s27
    %s31 = sphi 0, %s30
    %s47 = sphi 0, %s31
    %s51 = sphi 0, %s51
    %s53 = sphi 0, %s51
    %s54 = sphi 0, %s53
    %s68 = sphi 0, %s54
    %s72 = sphi 0, %s72
    %s74 = sphi 0, %s72
    %s75 = sphi 0, %s74
    %s89 = sphi 0, %s75
    %s93 = sphi 0, %s93
    %s95 = sphi 0, %s93
    %s96 = sphi 0, %s95
    %s110 = sphi 0, %s96
    %s114 = sphi 0, %s114
    %s116 = sphi 0, %s114
    %s117 = sphi 0, %s116
    %s131 = sphi 0, %s117
    %s135 = sphi 0, %s135
    %s137 = sphi 0, %s135
    %s138 = sphi 0, %s137
    %s152 = sphi 0, %s138
    %s156 = sphi 0, %s156
    %s158 = sphi 0, %s156
    %s159 = sphi 0, %s158
    %s173 = sphi 0, %s159
    %s179 = sphi 0, %s181
    %s182 = sphi 0, %s179
    %s183 = sphi 0, %s182
    %s199 = sphi 0, %s183
  $region4: #{forward.3} parent=0 // loop_header_branch
    %20 = sbr.rel (%p18) target = $region8
  $region5: #{forward.3} parent=0 // loop_body
    %s22 = ssub.s32 %s17, 1
    %s23 = ssub.s32 %s17, 2
    %s24 = sadd.s32 %s17, 1
    %s25 = ssub.s32 %s17, %s24
    %p26 = scmp.eq.s32.totalorder %s25, 0
    %s28 = sadd.s32 %s27, 1
    %s29 = scalar_select %p26, %s27, %s28
    %p32 = pneg %p26
    %p33 = scmp.eq.s32.totalorder %s17, 1
    %p34 = por %p32, %p33
    %p35 = scmp.ne.s32.totalorder %s27, %s30
    %p36 = scmp.eq.s32.totalorder %s17, 0
    %p37 = por %p35, %p36
    %p38 = scmp.ne.s32.totalorder %s27, %s30
    %p39 = scmp.eq.s32.totalorder %s22, 1
    %p40 = por %p38, %p39
    %p41 = scmp.ne.s32.totalorder %s30, %s31
    %p42 = scmp.eq.s32.totalorder %s22, 0
    %p43 = por %p41, %p42
    %p44 = scmp.ne.s32.totalorder %s30, %s31
    %p45 = scmp.eq.s32.totalorder %s23, 1
    %p46 = por %p44, %p45
    %p48 = scmp.ne.s32.totalorder %s31, %s47
    %p49 = scmp.eq.s32.totalorder %s23, 0
    %p50 = por %p48, %p49
    %s52 = sadd.s32 %s51, 1
    %p55 = scmp.eq.s32.totalorder %s17, 1
    %p56 = scmp.ne.s32.totalorder %s51, %s53
    %p57 = scmp.eq.s32.totalorder %s17, 0
    %p58 = por %p56, %p57
    %p59 = scmp.ne.s32.totalorder %s51, %s53
    %p60 = scmp.eq.s32.totalorder %s22, 1
    %p61 = por %p59, %p60
    %p62 = scmp.ne.s32.totalorder %s53, %s54
    %p63 = scmp.eq.s32.totalorder %s22, 0
    %p64 = por %p62, %p63
    %p65 = scmp.ne.s32.totalorder %s53, %s54
    %p66 = scmp.eq.s32.totalorder %s23, 1
    %p67 = por %p65, %p66
    %p69 = scmp.ne.s32.totalorder %s54, %s68
    %p70 = scmp.eq.s32.totalorder %s23, 0
    %p71 = por %p69, %p70
    %s73 = sadd.s32 %s72, 1
    %p76 = scmp.eq.s32.totalorder %s17, 1
    %p77 = scmp.ne.s32.totalorder %s72, %s74
    %p78 = scmp.eq.s32.totalorder %s17, 0
    %p79 = por %p77, %p78
    %p80 = scmp.ne.s32.totalorder %s72, %s74
    %p81 = scmp.eq.s32.totalorder %s22, 1
    %p82 = por %p80, %p81
    %p83 = scmp.ne.s32.totalorder %s74, %s75
    %p84 = scmp.eq.s32.totalorder %s22, 0
    %p85 = por %p83, %p84
    %p86 = scmp.ne.s32.totalorder %s74, %s75
    %p87 = scmp.eq.s32.totalorder %s23, 1
    %p88 = por %p86, %p87
    %p90 = scmp.ne.s32.totalorder %s75, %s89
    %p91 = scmp.eq.s32.totalorder %s23, 0
    %p92 = por %p90, %p91
    %s94 = sadd.s32 %s93, 1
    %p97 = scmp.eq.s32.totalorder %s17, 1
    %p98 = scmp.ne.s32.totalorder %s93, %s95
    %p99 = scmp.eq.s32.totalorder %s17, 0
    %p100 = por %p98, %p99
    %p101 = scmp.ne.s32.totalorder %s93, %s95
    %p102 = scmp.eq.s32.totalorder %s22, 1
    %p103 = por %p101, %p102
    %p104 = scmp.ne.s32.totalorder %s95, %s96
    %p105 = scmp.eq.s32.totalorder %s22, 0
    %p106 = por %p104, %p105
    %p107 = scmp.ne.s32.totalorder %s95, %s96
    %p108 = scmp.eq.s32.totalorder %s23, 1
    %p109 = por %p107, %p108
    %p111 = scmp.ne.s32.totalorder %s96, %s110
    %p112 = scmp.eq.s32.totalorder %s23, 0
    %p113 = por %p111, %p112
    %s115 = sadd.s32 %s114, 1
    %p118 = scmp.eq.s32.totalorder %s17, 1
    %p119 = scmp.ne.s32.totalorder %s114, %s116
    %p120 = scmp.eq.s32.totalorder %s17, 0
    %p121 = por %p119, %p120
    %p122 = scmp.ne.s32.totalorder %s114, %s116
    %p123 = scmp.eq.s32.totalorder %s22, 1
    %p124 = por %p122, %p123
    %p125 = scmp.ne.s32.totalorder %s116, %s117
    %p126 = scmp.eq.s32.totalorder %s22, 0
    %p127 = por %p125, %p126
    %p128 = scmp.ne.s32.totalorder %s116, %s117
    %p129 = scmp.eq.s32.totalorder %s23, 1
    %p130 = por %p128, %p129
    %p132 = scmp.ne.s32.totalorder %s117, %s131
    %p133 = scmp.eq.s32.totalorder %s23, 0
    %p134 = por %p132, %p133
    %s136 = sadd.s32 %s135, 1
    %p139 = scmp.eq.s32.totalorder %s17, 1
    %p140 = scmp.ne.s32.totalorder %s135, %s137
    %p141 = scmp.eq.s32.totalorder %s17, 0
    %p142 = por %p140, %p141
    %p143 = scmp.ne.s32.totalorder %s135, %s137
    %p144 = scmp.eq.s32.totalorder %s22, 1
    %p145 = por %p143, %p144
    %p146 = scmp.ne.s32.totalorder %s137, %s138
    %p147 = scmp.eq.s32.totalorder %s22, 0
    %p148 = por %p146, %p147
    %p149 = scmp.ne.s32.totalorder %s137, %s138
    %p150 = scmp.eq.s32.totalorder %s23, 1
    %p151 = por %p149, %p150
    %p153 = scmp.ne.s32.totalorder %s138, %s152
    %p154 = scmp.eq.s32.totalorder %s23, 0
    %p155 = por %p153, %p154
    %s157 = sadd.s32 %s156, 1
    %p160 = scmp.eq.s32.totalorder %s17, 1
    %p161 = scmp.ne.s32.totalorder %s156, %s158
    %p162 = scmp.eq.s32.totalorder %s17, 0
    %p163 = por %p161, %p162
    %p164 = scmp.ne.s32.totalorder %s156, %s158
    %p165 = scmp.eq.s32.totalorder %s22, 1
    %p166 = por %p164, %p165
    %p167 = scmp.ne.s32.totalorder %s158, %s159
    %p168 = scmp.eq.s32.totalorder %s22, 0
    %p169 = por %p167, %p168
    %p170 = scmp.ne.s32.totalorder %s158, %s159
    %p171 = scmp.eq.s32.totalorder %s23, 1
    %p172 = por %p170, %p171
    %p174 = scmp.ne.s32.totalorder %s159, %s173
    %p175 = scmp.eq.s32.totalorder %s23, 0
    %p176 = por %p174, %p175
    %s177 = ssub.s32 %s17, %s24
    %p178 = scmp.eq.s32.totalorder %s177, 0
    %s180 = sadd.s32 %s179, 1
    %s181 = scalar_select %p178, %s179, %s180
    %p184 = pneg %p178
    %p185 = scmp.eq.s32.totalorder %s17, 1
    %p186 = por %p184, %p185
    %p187 = scmp.ne.s32.totalorder %s179, %s182
    %p188 = scmp.eq.s32.totalorder %s17, 0
    %p189 = por %p187, %p188
    %p190 = scmp.ne.s32.totalorder %s179, %s182
    %p191 = scmp.eq.s32.totalorder %s22, 1
    %p192 = por %p190, %p191
    %p193 = scmp.ne.s32.totalorder %s182, %s183
    %p194 = scmp.eq.s32.totalorder %s22, 0
    %p195 = por %p193, %p194
    %p196 = scmp.ne.s32.totalorder %s182, %s183
    %p197 = scmp.eq.s32.totalorder %s23, 1
    %p198 = por %p196, %p197
    %p200 = scmp.ne.s32.totalorder %s183, %s199
    %p201 = scmp.eq.s32.totalorder %s23, 0
    %p202 = por %p200, %p201
    %p203 = scmp.le.s32.totalorder 1, %s17
    %p204 = scmp.lt.s32.totalorder %s17, 3
    %p205 = pnand %p203, %p204
    %p206 = pneg %p205
    // Predicated region
    $region9: #{forward.3} parent=5 // pred_check
      _
    $region10: #{forward.3} parent=5 // pred_check_branch
      %208 = sbr.rel (%p205) target = $region12
    $region11: #{forward.3} parent=5 // pred_region
      %s209 = ssub.s32 %s17, 1
      // Predicated region
      $region13: #{forward.3} parent=11 // pred_check
        %p210 = pneg %p64
      $region14: #{forward.3} parent=11 // pred_check_branch
        %212 = sbr.rel (%p210) target = $region16
      $region15: #{forward.3} parent=11 // pred_region
        _
      $region16: #{forward.3} parent=11 // pred_fallthru
        _
      // Predicated region
      $region17: #{forward.3} parent=11 // pred_check
        %p213 = pneg %p85
      $region18: #{forward.3} parent=11 // pred_check_branch
        %215 = sbr.rel (%p213) target = $region20
      $region19: #{forward.3} parent=11 // pred_region
        _
      $region20: #{forward.3} parent=11 // pred_fallthru
        _
      // Predicated region
      $region21: #{forward.3} parent=11 // pred_check
        %p216 = pneg %p106
      $region22: #{forward.3} parent=11 // pred_check_branch
        %218 = sbr.rel (%p216) target = $region24
      $region23: #{forward.3} parent=11 // pred_region
        _
      $region24: #{forward.3} parent=11 // pred_fallthru
        _
      // Predicated region
      $region25: #{forward.3} parent=11 // pred_check
        %p219 = pneg %p127
      $region26: #{forward.3} parent=11 // pred_check_branch
        %221 = sbr.rel (%p219) target = $region28
      $region27: #{forward.3} parent=11 // pred_region
        _
      $region28: #{forward.3} parent=11 // pred_fallthru
        _
      // Predicated region
      $region29: #{forward.3} parent=11 // pred_check
        %p222 = pneg %p148
      $region30: #{forward.3} parent=11 // pred_check_branch
        %224 = sbr.rel (%p222) target = $region32
      $region31: #{forward.3} parent=11 // pred_region
        _
      $region32: #{forward.3} parent=11 // pred_fallthru
        _
      // Predicated region
      $region33: #{forward.3} parent=11 // pred_check
        %p225 = pneg %p169
      $region34: #{forward.3} parent=11 // pred_check_branch
        %227 = sbr.rel (%p225) target = $region36
      $region35: #{forward.3} parent=11 // pred_region
        _
      $region36: #{forward.3} parent=11 // pred_fallthru
        _
    $region12: #{forward.3} parent=5 // pred_fallthru
      _
    %p228 = scmp.lt.s32.totalorder %s17, 2
    // Predicated region
    $region37: #{forward.3} parent=5 // pred_check
      %p229 = pneg %p228
    $region38: #{forward.3} parent=5 // pred_check_branch
      %231 = sbr.rel (%p229) target = $region40
    $region39: #{forward.3} parent=5 // pred_region
      // Predicated region
      $region41: #{forward.3} parent=39 // pred_check
        %p232 = pneg %p37
      $region42: #{forward.3} parent=39 // pred_check_branch
        %234 = sbr.rel (%p232) target = $region44
      $region43: #{forward.3} parent=39 // pred_region
        %p235 = scmp.lt.s32.totalorder %s17, 1
        %s236 = scalar_select %p235, %s17, 1
        %s237 = smul.addr %s236, 32
        %s238 = smul.addr %s237, 4
        %s239 = scalar_lea.vmem %s0, %s238
      $region44: #{forward.3} parent=39 // pred_fallthru
        _
    $region40: #{forward.3} parent=5 // pred_fallthru
      _
    %p240 = scmp.le.s32.totalorder 1, %s17
    %p241 = scmp.lt.s32.totalorder %s17, 3
    %p242 = pnand %p240, %p241
    %p243 = pneg %p242
    // Predicated region
    $region45: #{forward.3} parent=5 // pred_check
      _
    $region46: #{forward.3} parent=5 // pred_check_branch
      %245 = sbr.rel (%p242) target = $region48
    $region47: #{forward.3} parent=5 // pred_region
      %s246 = ssub.s32 %s17, 1
      %p247 = scmp.lt.s32.totalorder %s22, 1
      %s248 = scalar_select %p247, %s22, 1
      %s249 = smul.addr %s248, 32
      %s250 = smul.addr %s249, 4
      %s251 = scalar_lea.vmem %s0, %s250
      %p252 = pneg %p43
      %p253 = pneg %p40
      %p254 = pneg %p64
      %p255 = pneg %p61
      %p256 = pneg %p85
      %p257 = pneg %p82
      %p258 = pneg %p106
      %p259 = pneg %p103
      %p260 = pneg %p127
      %p261 = pneg %p124
      %p262 = pneg %p148
      %p263 = pneg %p145
      %p264 = pneg %p169
      %p265 = pneg %p166
      %p266 = pneg %p195
      %p267 = pneg %p192
      %p268 = scmp.lt.s32.totalorder %s22, 1
      %s269 = scalar_select %p268, %s22, 1
      %s270 = scalar_lea.vmem %s7, %s269
      %p271 = scmp.lt.s32.totalorder %s22, 1
      %s272 = scalar_select %p271, %s22, 1
      %s273 = smul.addr %s272, 32
      %s274 = smul.addr %s273, 4
      %s275 = scalar_lea.vmem %s0, %s274
      %p276 = scmp.lt.s32.totalorder %s22, 1
      %s277 = scalar_select %p276, %s22, 1
      %s278 = scalar_lea.vmem %s7, %s277
      %v279 = vld [vmem:[%s275] sm:$0xff]
      %v280 = vld [vmem:[%s275 + $0x8] sm:$0xff]
      %v281 = vld [vmem:[%s275 + $0x10] sm:$0xff]
      %v282 = vld [vmem:[%s275 + $0x18] sm:$0xff]
      %v283 = vld [vmem:[%s275 + $0x20] sm:$0xff]
      %v284 = vld [vmem:[%s275 + $0x28] sm:$0xff]
      %v285 = vld [vmem:[%s275 + $0x30] sm:$0xff]
      %v286 = vld [vmem:[%s275 + $0x38] sm:$0xff]
      %v287 = vld [vmem:[%s275 + $0x40] sm:$0xff]
      %v288 = vld [vmem:[%s275 + $0x48] sm:$0xff]
      %v289 = vld [vmem:[%s275 + $0x50] sm:$0xff]
      %v290 = vld [vmem:[%s275 + $0x58] sm:$0xff]
      %v291 = vld [vmem:[%s275 + $0x60] sm:$0xff]
      %v292 = vld [vmem:[%s275 + $0x68] sm:$0xff]
      %v293 = vld [vmem:[%s275 + $0x70] sm:$0xff]
      %v294 = vld [vmem:[%s275 + $0x78] sm:$0xff]
      %v295 = vld [vmem:[%s1] sm:$0xff]
      %v296 = vld [vmem:[%s1 + $0x8] sm:$0xff]
      %v297 = vld [vmem:[%s1 + $0x10] sm:$0xff]
      %v298 = vld [vmem:[%s1 + $0x18] sm:$0xff]
      %v299 = vld [vmem:[%s1 + $0x20] sm:$0xff]
      %v300 = vld [vmem:[%s1 + $0x28] sm:$0xff]
      %v301 = vld [vmem:[%s1 + $0x30] sm:$0xff]
      %v302 = vld [vmem:[%s1 + $0x38] sm:$0xff]
      %v303 = vld [vmem:[%s1 + $0x40] sm:$0xff]
      %v304 = vld [vmem:[%s1 + $0x48] sm:$0xff]
      %v305 = vld [vmem:[%s1 + $0x50] sm:$0xff]
      %v306 = vld [vmem:[%s1 + $0x58] sm:$0xff]
      %v307 = vld [vmem:[%s1 + $0x60] sm:$0xff]
      %v308 = vld [vmem:[%s1 + $0x68] sm:$0xff]
      %v309 = vld [vmem:[%s1 + $0x70] sm:$0xff]
      %v310 = vld [vmem:[%s1 + $0x78] sm:$0xff]
      %v311 = vld [vmem:[%s1 + $0x80] sm:$0xff]
      %v312 = vld [vmem:[%s1 + $0x88] sm:$0xff]
      %v313 = vld [vmem:[%s1 + $0x90] sm:$0xff]
      %v314 = vld [vmem:[%s1 + $0x98] sm:$0xff]
      %v315 = vld [vmem:[%s1 + $0xa0] sm:$0xff]
      %v316 = vld [vmem:[%s1 + $0xa8] sm:$0xff]
      %v317 = vld [vmem:[%s1 + $0xb0] sm:$0xff]
      %v318 = vld [vmem:[%s1 + $0xb8] sm:$0xff]
      %v319 = vld [vmem:[%s1 + $0xc0] sm:$0xff]
      %v320 = vld [vmem:[%s1 + $0xc8] sm:$0xff]
      %v321 = vld [vmem:[%s1 + $0xd0] sm:$0xff]
      %v322 = vld [vmem:[%s1 + $0xd8] sm:$0xff]
      %v323 = vld [vmem:[%s1 + $0xe0] sm:$0xff]
      %v324 = vld [vmem:[%s1 + $0xe8] sm:$0xff]
      %v325 = vld [vmem:[%s1 + $0xf0] sm:$0xff]
      %v326 = vld [vmem:[%s1 + $0xf8] sm:$0xff]
      %v327 = vld [vmem:[%s1 + $0x100] sm:$0xff]
      %v328 = vld [vmem:[%s1 + $0x108] sm:$0xff]
      %v329 = vld [vmem:[%s1 + $0x110] sm:$0xff]
      %v330 = vld [vmem:[%s1 + $0x118] sm:$0xff]
      %v331 = vld [vmem:[%s1 + $0x120] sm:$0xff]
      %v332 = vld [vmem:[%s1 + $0x128] sm:$0xff]
      %v333 = vld [vmem:[%s1 + $0x130] sm:$0xff]
      %v334 = vld [vmem:[%s1 + $0x138] sm:$0xff]
      %v335 = vld [vmem:[%s1 + $0x140] sm:$0xff]
      %v336 = vld [vmem:[%s1 + $0x148] sm:$0xff]
      %v337 = vld [vmem:[%s1 + $0x150] sm:$0xff]
      %v338 = vld [vmem:[%s1 + $0x158] sm:$0xff]
      %v339 = vld [vmem:[%s1 + $0x160] sm:$0xff]
      %v340 = vld [vmem:[%s1 + $0x168] sm:$0xff]
      %v341 = vld [vmem:[%s1 + $0x170] sm:$0xff]
      %v342 = vld [vmem:[%s1 + $0x178] sm:$0xff]
      %v343 = vld [vmem:[%s1 + $0x180] sm:$0xff]
      %v344 = vld [vmem:[%s1 + $0x188] sm:$0xff]
      %v345 = vld [vmem:[%s1 + $0x190] sm:$0xff]
      %v346 = vld [vmem:[%s1 + $0x198] sm:$0xff]
      %v347 = vld [vmem:[%s1 + $0x1a0] sm:$0xff]
      %v348 = vld [vmem:[%s1 + $0x1a8] sm:$0xff]
      %v349 = vld [vmem:[%s1 + $0x1b0] sm:$0xff]
      %v350 = vld [vmem:[%s1 + $0x1b8] sm:$0xff]
      %v351 = vld [vmem:[%s1 + $0x1c0] sm:$0xff]
      %v352 = vld [vmem:[%s1 + $0x1c8] sm:$0xff]
      %v353 = vld [vmem:[%s1 + $0x1d0] sm:$0xff]
      %v354 = vld [vmem:[%s1 + $0x1d8] sm:$0xff]
      %v355 = vld [vmem:[%s1 + $0x1e0] sm:$0xff]
      %v356 = vld [vmem:[%s1 + $0x1e8] sm:$0xff]
      %v357 = vld [vmem:[%s1 + $0x1f0] sm:$0xff]
      %v358 = vld [vmem:[%s1 + $0x1f8] sm:$0xff]
      %v359 = vld [vmem:[%s2] sm:$0xf]
      %v361 = vlaneseq
      %v362 = vshrl.u32 %v361, 7
      %v363 = vsub.s32 0, %v362
      %v364 = vrot.slane %v359, %v363
      %v365 = vlaneseq
      %v366 = vshrl.u32 %v365, 7
      %v367 = vsub.s32 1, %v366
      %v368 = vrot.slane %v359, %v367
      %v369 = vlaneseq
      %v370 = vshrl.u32 %v369, 7
      %v371 = vsub.s32 2, %v370
      %v372 = vrot.slane %v359, %v371
      %v373 = vlaneseq
      %v374 = vshrl.u32 %v373, 7
      %v375 = vsub.s32 3, %v374
      %v376 = vrot.slane %v359, %v375
      %v397 = vunpack.c.l.b16 %v279
      %v398 = vunpack.c.h.b16 %v279
      %v399 = vunpack.c.l.b16 %v280
      %v400 = vunpack.c.h.b16 %v280
      %v401 = vunpack.c.l.b16 %v281
      %v402 = vunpack.c.h.b16 %v281
      %v403 = vunpack.c.l.b16 %v282
      %v404 = vunpack.c.h.b16 %v282
      %v405 = vunpack.c.l.b16 %v283
      %v406 = vunpack.c.h.b16 %v283
      %v407 = vunpack.c.l.b16 %v284
      %v408 = vunpack.c.h.b16 %v284
      %v409 = vunpack.c.l.b16 %v285
      %v410 = vunpack.c.h.b16 %v285
      %v411 = vunpack.c.l.b16 %v286
      %v412 = vunpack.c.h.b16 %v286
      %v413 = vunpack.c.l.b16 %v287
      %v414 = vunpack.c.h.b16 %v287
      %v415 = vunpack.c.l.b16 %v288
      %v416 = vunpack.c.h.b16 %v288
      %v417 = vunpack.c.l.b16 %v289
      %v418 = vunpack.c.h.b16 %v289
      %v419 = vunpack.c.l.b16 %v290
      %v420 = vunpack.c.h.b16 %v290
      %v421 = vunpack.c.l.b16 %v291
      %v422 = vunpack.c.h.b16 %v291
      %v423 = vunpack.c.l.b16 %v292
      %v424 = vunpack.c.h.b16 %v292
      %v425 = vunpack.c.l.b16 %v293
      %v426 = vunpack.c.h.b16 %v293
      %v427 = vunpack.c.l.b16 %v294
      %v428 = vunpack.c.h.b16 %v294
      %v429 = vpack.c.b16 %v399, %v397
      %v430 = vpack.c.b16 %v400, %v398
      %v431 = vpack.c.b16 %v403, %v401
      %v432 = vpack.c.b16 %v404, %v402
      %v433 = vpack.c.b16 %v407, %v405
      %v434 = vpack.c.b16 %v408, %v406
      %v435 = vpack.c.b16 %v411, %v409
      %v436 = vpack.c.b16 %v412, %v410
      %v437 = vpack.c.b16 %v415, %v413
      %v438 = vpack.c.b16 %v416, %v414
      %v439 = vpack.c.b16 %v419, %v417
      %v440 = vpack.c.b16 %v420, %v418
      %v441 = vpack.c.b16 %v423, %v421
      %v442 = vpack.c.b16 %v424, %v422
      %v443 = vpack.c.b16 %v427, %v425
      %v444 = vpack.c.b16 %v428, %v426
      %v525 = vunpack.c.l.b16 %v295
      %v526 = vunpack.c.h.b16 %v295
      %v527 = vunpack.c.l.b16 %v296
      %v528 = vunpack.c.h.b16 %v296
      %v529 = vunpack.c.l.b16 %v297
      %v530 = vunpack.c.h.b16 %v297
      %v531 = vunpack.c.l.b16 %v298
      %v532 = vunpack.c.h.b16 %v298
      %v533 = vunpack.c.l.b16 %v299
      %v534 = vunpack.c.h.b16 %v299
      %v535 = vunpack.c.l.b16 %v300
      %v536 = vunpack.c.h.b16 %v300
      %v537 = vunpack.c.l.b16 %v301
      %v538 = vunpack.c.h.b16 %v301
      %v539 = vunpack.c.l.b16 %v302
      %v540 = vunpack.c.h.b16 %v302
      %v541 = vunpack.c.l.b16 %v303
      %v542 = vunpack.c.h.b16 %v303
      %v543 = vunpack.c.l.b16 %v304
      %v544 = vunpack.c.h.b16 %v304
      %v545 = vunpack.c.l.b16 %v305
      %v546 = vunpack.c.h.b16 %v305
      %v547 = vunpack.c.l.b16 %v306
      %v548 = vunpack.c.h.b16 %v306
      %v549 = vunpack.c.l.b16 %v307
      %v550 = vunpack.c.h.b16 %v307
      %v551 = vunpack.c.l.b16 %v308
      %v552 = vunpack.c.h.b16 %v308
      %v553 = vunpack.c.l.b16 %v309
      %v554 = vunpack.c.h.b16 %v309
      %v555 = vunpack.c.l.b16 %v310
      %v556 = vunpack.c.h.b16 %v310
      %v557 = vunpack.c.l.b16 %v311
      %v558 = vunpack.c.h.b16 %v311
      %v559 = vunpack.c.l.b16 %v312
      %v560 = vunpack.c.h.b16 %v312
      %v561 = vunpack.c.l.b16 %v313
      %v562 = vunpack.c.h.b16 %v313
      %v563 = vunpack.c.l.b16 %v314
      %v564 = vunpack.c.h.b16 %v314
      %v565 = vunpack.c.l.b16 %v315
      %v566 = vunpack.c.h.b16 %v315
      %v567 = vunpack.c.l.b16 %v316
      %v568 = vunpack.c.h.b16 %v316
      %v569 = vunpack.c.l.b16 %v317
      %v570 = vunpack.c.h.b16 %v317
      %v571 = vunpack.c.l.b16 %v318
      %v572 = vunpack.c.h.b16 %v318
      %v573 = vunpack.c.l.b16 %v319
      %v574 = vunpack.c.h.b16 %v319
      %v575 = vunpack.c.l.b16 %v320
      %v576 = vunpack.c.h.b16 %v320
      %v577 = vunpack.c.l.b16 %v321
      %v578 = vunpack.c.h.b16 %v321
      %v579 = vunpack.c.l.b16 %v322
      %v580 = vunpack.c.h.b16 %v322
      %v581 = vunpack.c.l.b16 %v323
      %v582 = vunpack.c.h.b16 %v323
      %v583 = vunpack.c.l.b16 %v324
      %v584 = vunpack.c.h.b16 %v324
      %v585 = vunpack.c.l.b16 %v325
      %v586 = vunpack.c.h.b16 %v325
      %v587 = vunpack.c.l.b16 %v326
      %v588 = vunpack.c.h.b16 %v326
      %v589 = vunpack.c.l.b16 %v327
      %v590 = vunpack.c.h.b16 %v327
      %v591 = vunpack.c.l.b16 %v328
      %v592 = vunpack.c.h.b16 %v328
      %v593 = vunpack.c.l.b16 %v329
      %v594 = vunpack.c.h.b16 %v329
      %v595 = vunpack.c.l.b16 %v330
      %v596 = vunpack.c.h.b16 %v330
      %v597 = vunpack.c.l.b16 %v331
      %v598 = vunpack.c.h.b16 %v331
      %v599 = vunpack.c.l.b16 %v332
      %v600 = vunpack.c.h.b16 %v332
      %v601 = vunpack.c.l.b16 %v333
      %v602 = vunpack.c.h.b16 %v333
      %v603 = vunpack.c.l.b16 %v334
      %v604 = vunpack.c.h.b16 %v334
      %v605 = vunpack.c.l.b16 %v335
      %v606 = vunpack.c.h.b16 %v335
      %v607 = vunpack.c.l.b16 %v336
      %v608 = vunpack.c.h.b16 %v336
      %v609 = vunpack.c.l.b16 %v337
      %v610 = vunpack.c.h.b16 %v337
      %v611 = vunpack.c.l.b16 %v338
      %v612 = vunpack.c.h.b16 %v338
      %v613 = vunpack.c.l.b16 %v339
      %v614 = vunpack.c.h.b16 %v339
      %v615 = vunpack.c.l.b16 %v340
      %v616 = vunpack.c.h.b16 %v340
      %v617 = vunpack.c.l.b16 %v341
      %v618 = vunpack.c.h.b16 %v341
      %v619 = vunpack.c.l.b16 %v342
      %v620 = vunpack.c.h.b16 %v342
      %v621 = vunpack.c.l.b16 %v343
      %v622 = vunpack.c.h.b16 %v343
      %v623 = vunpack.c.l.b16 %v344
      %v624 = vunpack.c.h.b16 %v344
      %v625 = vunpack.c.l.b16 %v345
      %v626 = vunpack.c.h.b16 %v345
      %v627 = vunpack.c.l.b16 %v346
      %v628 = vunpack.c.h.b16 %v346
      %v629 = vunpack.c.l.b16 %v347
      %v630 = vunpack.c.h.b16 %v347
      %v631 = vunpack.c.l.b16 %v348
      %v632 = vunpack.c.h.b16 %v348
      %v633 = vunpack.c.l.b16 %v349
      %v634 = vunpack.c.h.b16 %v349
      %v635 = vunpack.c.l.b16 %v350
      %v636 = vunpack.c.h.b16 %v350
      %v637 = vunpack.c.l.b16 %v351
      %v638 = vunpack.c.h.b16 %v351
      %v639 = vunpack.c.l.b16 %v352
      %v640 = vunpack.c.h.b16 %v352
      %v641 = vunpack.c.l.b16 %v353
      %v642 = vunpack.c.h.b16 %v353
      %v643 = vunpack.c.l.b16 %v354
      %v644 = vunpack.c.h.b16 %v354
      %v645 = vunpack.c.l.b16 %v355
      %v646 = vunpack.c.h.b16 %v355
      %v647 = vunpack.c.l.b16 %v356
      %v648 = vunpack.c.h.b16 %v356
      %v649 = vunpack.c.l.b16 %v357
      %v650 = vunpack.c.h.b16 %v357
      %v651 = vunpack.c.l.b16 %v358
      %v652 = vunpack.c.h.b16 %v358
      %v653 = vpack.c.b16 %v529, %v525
      %v654 = vpack.c.b16 %v530, %v526
      %v655 = vpack.c.b16 %v531, %v527
      %v656 = vpack.c.b16 %v532, %v528
      %v657 = vpack.c.b16 %v537, %v533
      %v658 = vpack.c.b16 %v538, %v534
      %v659 = vpack.c.b16 %v539, %v535
      %v660 = vpack.c.b16 %v540, %v536
      %v661 = vpack.c.b16 %v545, %v541
      %v662 = vpack.c.b16 %v546, %v542
      %v663 = vpack.c.b16 %v547, %v543
      %v664 = vpack.c.b16 %v548, %v544
      %v665 = vpack.c.b16 %v553, %v549
      %v666 = vpack.c.b16 %v554, %v550
      %v667 = vpack.c.b16 %v555, %v551
      %v668 = vpack.c.b16 %v556, %v552
      %v669 = vpack.c.b16 %v561, %v557
      %v670 = vpack.c.b16 %v562, %v558
      %v671 = vpack.c.b16 %v563, %v559
      %v672 = vpack.c.b16 %v564, %v560
      %v673 = vpack.c.b16 %v569, %v565
      %v674 = vpack.c.b16 %v570, %v566
      %v675 = vpack.c.b16 %v571, %v567
      %v676 = vpack.c.b16 %v572, %v568
      %v677 = vpack.c.b16 %v577, %v573
      %v678 = vpack.c.b16 %v578, %v574
      %v679 = vpack.c.b16 %v579, %v575
      %v680 = vpack.c.b16 %v580, %v576
      %v681 = vpack.c.b16 %v585, %v581
      %v682 = vpack.c.b16 %v586, %v582
      %v683 = vpack.c.b16 %v587, %v583
      %v684 = vpack.c.b16 %v588, %v584
      %v685 = vpack.c.b16 %v593, %v589
      %v686 = vpack.c.b16 %v594, %v590
      %v687 = vpack.c.b16 %v595, %v591
      %v688 = vpack.c.b16 %v596, %v592
      %v689 = vpack.c.b16 %v601, %v597
      %v690 = vpack.c.b16 %v602, %v598
      %v691 = vpack.c.b16 %v603, %v599
      %v692 = vpack.c.b16 %v604, %v600
      %v693 = vpack.c.b16 %v609, %v605
      %v694 = vpack.c.b16 %v610, %v606
      %v695 = vpack.c.b16 %v611, %v607
      %v696 = vpack.c.b16 %v612, %v608
      %v697 = vpack.c.b16 %v617, %v613
      %v698 = vpack.c.b16 %v618, %v614
      %v699 = vpack.c.b16 %v619, %v615
      %v700 = vpack.c.b16 %v620, %v616
      %v701 = vpack.c.b16 %v625, %v621
      %v702 = vpack.c.b16 %v626, %v622
      %v703 = vpack.c.b16 %v627, %v623
      %v704 = vpack.c.b16 %v628, %v624
      %v705 = vpack.c.b16 %v633, %v629
      %v706 = vpack.c.b16 %v634, %v630
      %v707 = vpack.c.b16 %v635, %v631
      %v708 = vpack.c.b16 %v636, %v632
      %v709 = vpack.c.b16 %v641, %v637
      %v710 = vpack.c.b16 %v642, %v638
      %v711 = vpack.c.b16 %v643, %v639
      %v712 = vpack.c.b16 %v644, %v640
      %v713 = vpack.c.b16 %v649, %v645
      %v714 = vpack.c.b16 %v650, %v646
      %v715 = vpack.c.b16 %v651, %v647
      %v716 = vpack.c.b16 %v652, %v648
      %781 = vmatprep.subr.bf16.mxu0 %v654
      %782 = vmatpush1.bf16.msra.mxu0 %v653
      %783 = vmatprep.subr.bf16.mxu0 %v658
      %784 = vmatpush1.bf16.msra.mxu0 %v657
      %785 = vmatprep.subr.bf16.mxu0 %v662
      %786 = vmatpush1.bf16.msra.mxu0 %v661
      %787 = vmatprep.subr.bf16.mxu0 %v666
      %788 = vmatpush1.bf16.msra.mxu0 %v665
      %789 = vmatprep.subr.bf16.mxu0 %v670
      %790 = vmatpush1.bf16.msra.mxu0 %v669
      %791 = vmatprep.subr.bf16.mxu0 %v674
      %792 = vmatpush1.bf16.msra.mxu0 %v673
      %793 = vmatprep.subr.bf16.mxu0 %v678
      %794 = vmatpush1.bf16.msra.mxu0 %v677
      %795 = vmatprep.subr.bf16.mxu0 %v682
      %796 = vmatpush1.bf16.msra.mxu0 %v681
      %797 = vmatprep.subr.bf16.mxu0 %v686
      %798 = vmatpush1.bf16.msra.mxu0 %v685
      %799 = vmatprep.subr.bf16.mxu0 %v690
      %800 = vmatpush1.bf16.msra.mxu0 %v689
      %801 = vmatprep.subr.bf16.mxu0 %v694
      %802 = vmatpush1.bf16.msra.mxu0 %v693
      %803 = vmatprep.subr.bf16.mxu0 %v698
      %804 = vmatpush1.bf16.msra.mxu0 %v697
      %805 = vmatprep.subr.bf16.mxu0 %v702
      %806 = vmatpush1.bf16.msra.mxu0 %v701
      %807 = vmatprep.subr.bf16.mxu0 %v706
      %808 = vmatpush1.bf16.msra.mxu0 %v705
      %809 = vmatprep.subr.bf16.mxu0 %v710
      %810 = vmatpush1.bf16.msra.mxu0 %v709
      %811 = vmatprep.subr.bf16.mxu0 %v714
      %812 = vmatpush1.bf16.msra.mxu0 %v713
      %813 = vmatprep.mubr.bf16.mxu0 %v430
      %814 = vmatmul.mubr.bf16.gmra.mrb[0].mxu0 %v429
      %v815 = vpop.f32.mrb[0].mxu0
      %v816 = vadd.f32 %v364, %v815
      %v817 = vpop.f32.mrb[0].mxu0
      %v818 = vadd.f32 %v368, %v817
      %v819 = vpop.f32.mrb[0].mxu0
      %v820 = vadd.f32 %v364, %v819
      %v821 = vpop.f32.mrb[0].mxu0
      %v822 = vadd.f32 %v368, %v821
      %823 = vmatprep.mubr.bf16.mxu0 %v432
      %824 = vmatmul.mubr.bf16.gmra.mrb[0].mxu0 %v431
      %v825 = vpop.f32.mrb[0].mxu0
      %v826 = vadd.f32 %v364, %v825
      %v827 = vpop.f32.mrb[0].mxu0
      %v828 = vadd.f32 %v368, %v827
      %v829 = vpop.f32.mrb[0].mxu0
      %v830 = vadd.f32 %v364, %v829
      %v831 = vpop.f32.mrb[0].mxu0
      %v832 = vadd.f32 %v368, %v831
      %833 = vmatprep.mubr.bf16.mxu0 %v434
      %834 = vmatmul.mubr.bf16.gmra.mrb[0].mxu0 %v433
      %v835 = vpop.f32.mrb[0].mxu0
      %v836 = vadd.f32 %v364, %v835
      %v837 = vpop.f32.mrb[0].mxu0
      %v838 = vadd.f32 %v368, %v837
      %v839 = vpop.f32.mrb[0].mxu0
      %v840 = vadd.f32 %v364, %v839
      %v841 = vpop.f32.mrb[0].mxu0
      %v842 = vadd.f32 %v368, %v841
      %843 = vmatprep.mubr.bf16.mxu0 %v436
      %844 = vmatmul.mubr.bf16.gmra.mrb[0].mxu0 %v435
      %v845 = vpop.f32.mrb[0].mxu0
      %v846 = vadd.f32 %v364, %v845
      %v847 = vpop.f32.mrb[0].mxu0
      %v848 = vadd.f32 %v368, %v847
      %v849 = vpop.f32.mrb[0].mxu0
      %v850 = vadd.f32 %v364, %v849
      %v851 = vpop.f32.mrb[0].mxu0
      %v852 = vadd.f32 %v368, %v851
      %853 = vmatprep.mubr.bf16.mxu0 %v438
      %854 = vmatmul.mubr.bf16.gmra.mrb[0].mxu0 %v437
      %v855 = vpop.f32.mrb[0].mxu0
      %v856 = vadd.f32 %v364, %v855
      %v857 = vpop.f32.mrb[0].mxu0
      %v858 = vadd.f32 %v368, %v857
      %v859 = vpop.f32.mrb[0].mxu0
      %v860 = vadd.f32 %v364, %v859
      %v861 = vpop.f32.mrb[0].mxu0
      %v862 = vadd.f32 %v368, %v861
      %863 = vmatprep.mubr.bf16.mxu0 %v440
      %864 = vmatmul.mubr.bf16.gmra.mrb[0].mxu0 %v439
      %v865 = vpop.f32.mrb[0].mxu0
      %v866 = vadd.f32 %v364, %v865
      %v867 = vpop.f32.mrb[0].mxu0
      %v868 = vadd.f32 %v368, %v867
      %v869 = vpop.f32.mrb[0].mxu0
      %v870 = vadd.f32 %v364, %v869
      %v871 = vpop.f32.mrb[0].mxu0
      %v872 = vadd.f32 %v368, %v871
      %873 = vmatprep.mubr.bf16.mxu0 %v442
      %874 = vmatmul.mubr.bf16.gmra.mrb[0].mxu0 %v441
      %v875 = vpop.f32.mrb[0].mxu0
      %v876 = vadd.f32 %v364, %v875
      %v877 = vpop.f32.mrb[0].mxu0
      %v878 = vadd.f32 %v368, %v877
      %v879 = vpop.f32.mrb[0].mxu0
      %v880 = vadd.f32 %v364, %v879
      %v881 = vpop.f32.mrb[0].mxu0
      %v882 = vadd.f32 %v368, %v881
      %883 = vmatprep.mubr.bf16.mxu0 %v444
      %884 = vmatmul.mubr.bf16.gmra.mrb[0].mxu0 %v443
      %v885 = vpop.f32.mrb[0].mxu0
      %v886 = vadd.f32 %v364, %v885
      %v887 = vpop.f32.mrb[0].mxu0
      %v888 = vadd.f32 %v368, %v887
      %v889 = vpop.f32.mrb[0].mxu0
      %v890 = vadd.f32 %v364, %v889
      %v891 = vpop.f32.mrb[0].mxu0
      %v892 = vadd.f32 %v368, %v891
      %893 = vdwg.mxu0
      %894 = vmatprep.subr.bf16.mxu0 %v656
      %895 = vmatpush1.bf16.msra.mxu0 %v655
      %896 = vmatprep.subr.bf16.mxu0 %v660
      %897 = vmatpush1.bf16.msra.mxu0 %v659
      %898 = vmatprep.subr.bf16.mxu0 %v664
      %899 = vmatpush1.bf16.msra.mxu0 %v663
      %900 = vmatprep.subr.bf16.mxu0 %v668
      %901 = vmatpush1.bf16.msra.mxu0 %v667
      %902 = vmatprep.subr.bf16.mxu0 %v672
      %903 = vmatpush1.bf16.msra.mxu0 %v671
      %904 = vmatprep.subr.bf16.mxu0 %v676
      %905 = vmatpush1.bf16.msra.mxu0 %v675
      %906 = vmatprep.subr.bf16.mxu0 %v680
      %907 = vmatpush1.bf16.msra.mxu0 %v679
      %908 = vmatprep.subr.bf16.mxu0 %v684
      %909 = vmatpush1.bf16.msra.mxu0 %v683
      %910 = vmatprep.subr.bf16.mxu0 %v688
      %911 = vmatpush1.bf16.msra.mxu0 %v687
      %912 = vmatprep.subr.bf16.mxu0 %v692
      %913 = vmatpush1.bf16.msra.mxu0 %v691
      %914 = vmatprep.subr.bf16.mxu0 %v696
      %915 = vmatpush1.bf16.msra.mxu0 %v695
      %916 = vmatprep.subr.bf16.mxu0 %v700
      %917 = vmatpush1.bf16.msra.mxu0 %v699
      %918 = vmatprep.subr.bf16.mxu0 %v704
      %919 = vmatpush1.bf16.msra.mxu0 %v703
      %920 = vmatprep.subr.bf16.mxu0 %v708
      %921 = vmatpush1.bf16.msra.mxu0 %v707
      %922 = vmatprep.subr.bf16.mxu0 %v712
      %923 = vmatpush1.bf16.msra.mxu0 %v711
      %924 = vmatprep.subr.bf16.mxu0 %v716
      %925 = vmatpush1.bf16.msra.mxu0 %v715
      %926 = vmatprep.mubr.bf16.mxu0 %v430
      %927 = vmatmul.mubr.bf16.gmra.mrb[0].mxu0 %v429
      %v928 = vpop.f32.mrb[0].mxu0
      %v929 = vadd.f32 %v372, %v928
      %v930 = vpop.f32.mrb[0].mxu0
      %v931 = vadd.f32 %v376, %v930
      %v932 = vpop.f32.mrb[0].mxu0
      %v933 = vadd.f32 %v372, %v932
      %v934 = vpop.f32.mrb[0].mxu0
      %v935 = vadd.f32 %v376, %v934
      %936 = vmatprep.mubr.bf16.mxu0 %v432
      %937 = vmatmul.mubr.bf16.gmra.mrb[0].mxu0 %v431
      %v938 = vpop.f32.mrb[0].mxu0
      %v939 = vadd.f32 %v372, %v938
      %v940 = vpop.f32.mrb[0].mxu0
      %v941 = vadd.f32 %v376, %v940
      %v942 = vpop.f32.mrb[0].mxu0
      %v943 = vadd.f32 %v372, %v942
      %v944 = vpop.f32.mrb[0].mxu0
      %v945 = vadd.f32 %v376, %v944
      %946 = vmatprep.mubr.bf16.mxu0 %v434
      %947 = vmatmul.mubr.bf16.gmra.mrb[0].mxu0 %v433
      %v948 = vpop.f32.mrb[0].mxu0
      %v949 = vadd.f32 %v372, %v948
      %v950 = vpop.f32.mrb[0].mxu0
      %v951 = vadd.f32 %v376, %v950
      %v952 = vpop.f32.mrb[0].mxu0
      %v953 = vadd.f32 %v372, %v952
      %v954 = vpop.f32.mrb[0].mxu0
      %v955 = vadd.f32 %v376, %v954
      %956 = vmatprep.mubr.bf16.mxu0 %v436
      %957 = vmatmul.mubr.bf16.gmra.mrb[0].mxu0 %v435
      %v958 = vpop.f32.mrb[0].mxu0
      %v959 = vadd.f32 %v372, %v958
      %v960 = vpop.f32.mrb[0].mxu0
      %v961 = vadd.f32 %v376, %v960
      %v962 = vpop.f32.mrb[0].mxu0
      %v963 = vadd.f32 %v372, %v962
      %v964 = vpop.f32.mrb[0].mxu0
      %v965 = vadd.f32 %v376, %v964
      %966 = vmatprep.mubr.bf16.mxu0 %v438
      %967 = vmatmul.mubr.bf16.gmra.mrb[0].mxu0 %v437
      %v968 = vpop.f32.mrb[0].mxu0
      %v969 = vadd.f32 %v372, %v968
      %v970 = vpop.f32.mrb[0].mxu0
      %v971 = vadd.f32 %v376, %v970
      %v972 = vpop.f32.mrb[0].mxu0
      %v973 = vadd.f32 %v372, %v972
      %v974 = vpop.f32.mrb[0].mxu0
      %v975 = vadd.f32 %v376, %v974
      %976 = vmatprep.mubr.bf16.mxu0 %v440
      %977 = vmatmul.mubr.bf16.gmra.mrb[0].mxu0 %v439
      %v978 = vpop.f32.mrb[0].mxu0
      %v979 = vadd.f32 %v372, %v978
      %v980 = vpop.f32.mrb[0].mxu0
      %v981 = vadd.f32 %v376, %v980
      %v982 = vpop.f32.mrb[0].mxu0
      %v983 = vadd.f32 %v372, %v982
      %v984 = vpop.f32.mrb[0].mxu0
      %v985 = vadd.f32 %v376, %v984
      %986 = vmatprep.mubr.bf16.mxu0 %v442
      %987 = vmatmul.mubr.bf16.gmra.mrb[0].mxu0 %v441
      %v988 = vpop.f32.mrb[0].mxu0
      %v989 = vadd.f32 %v372, %v988
      %v990 = vpop.f32.mrb[0].mxu0
      %v991 = vadd.f32 %v376, %v990
      %v992 = vpop.f32.mrb[0].mxu0
      %v993 = vadd.f32 %v372, %v992
      %v994 = vpop.f32.mrb[0].mxu0
      %v995 = vadd.f32 %v376, %v994
      %996 = vmatprep.mubr.bf16.mxu0 %v444
      %997 = vmatmul.mubr.bf16.gmra.mrb[0].mxu0 %v443
      %v998 = vpop.f32.mrb[0].mxu0
      %v999 = vadd.f32 %v372, %v998
      %v1000 = vpop.f32.mrb[0].mxu0
      %v1001 = vadd.f32 %v376, %v1000
      %v1002 = vpop.f32.mrb[0].mxu0
      %v1003 = vadd.f32 %v372, %v1002
      %v1004 = vpop.f32.mrb[0].mxu0
      %v1005 = vadd.f32 %v376, %v1004
      %1006 = vdwg.mxu0
      %v1007 = vmax.f32 %v816, 0.0
      %v1008 = vmax.f32 %v818, 0.0
      %v1009 = vmax.f32 %v929, 0.0
      %v1010 = vmax.f32 %v931, 0.0
      %v1011 = vmax.f32 %v820, 0.0
      %v1012 = vmax.f32 %v822, 0.0
      %v1013 = vmax.f32 %v933, 0.0
      %v1014 = vmax.f32 %v935, 0.0
      %v1015 = vmax.f32 %v826, 0.0
      %v1016 = vmax.f32 %v828, 0.0
      %v1017 = vmax.f32 %v939, 0.0
      %v1018 = vmax.f32 %v941, 0.0
      %v1019 = vmax.f32 %v830, 0.0
      %v1020 = vmax.f32 %v832, 0.0
      %v1021 = vmax.f32 %v943, 0.0
      %v1022 = vmax.f32 %v945, 0.0
      %v1023 = vmax.f32 %v836, 0.0
      %v1024 = vmax.f32 %v838, 0.0
      %v1025 = vmax.f32 %v949, 0.0
      %v1026 = vmax.f32 %v951, 0.0
      %v1027 = vmax.f32 %v840, 0.0
      %v1028 = vmax.f32 %v842, 0.0
      %v1029 = vmax.f32 %v953, 0.0
      %v1030 = vmax.f32 %v955, 0.0
      %v1031 = vmax.f32 %v846, 0.0
      %v1032 = vmax.f32 %v848, 0.0
      %v1033 = vmax.f32 %v959, 0.0
      %v1034 = vmax.f32 %v961, 0.0
      %v1035 = vmax.f32 %v850, 0.0
      %v1036 = vmax.f32 %v852, 0.0
      %v1037 = vmax.f32 %v963, 0.0
      %v1038 = vmax.f32 %v965, 0.0
      %v1039 = vmax.f32 %v856, 0.0
      %v1040 = vmax.f32 %v858, 0.0
      %v1041 = vmax.f32 %v969, 0.0
      %v1042 = vmax.f32 %v971, 0.0
      %v1043 = vmax.f32 %v860, 0.0
      %v1044 = vmax.f32 %v862, 0.0
      %v1045 = vmax.f32 %v973, 0.0
      %v1046 = vmax.f32 %v975, 0.0
      %v1047 = vmax.f32 %v866, 0.0
      %v1048 = vmax.f32 %v868, 0.0
      %v1049 = vmax.f32 %v979, 0.0
      %v1050 = vmax.f32 %v981, 0.0
      %v1051 = vmax.f32 %v870, 0.0
      %v1052 = vmax.f32 %v872, 0.0
      %v1053 = vmax.f32 %v983, 0.0
      %v1054 = vmax.f32 %v985, 0.0
      %v1055 = vmax.f32 %v876, 0.0
      %v1056 = vmax.f32 %v878, 0.0
      %v1057 = vmax.f32 %v989, 0.0
      %v1058 = vmax.f32 %v991, 0.0
      %v1059 = vmax.f32 %v880, 0.0
      %v1060 = vmax.f32 %v882, 0.0
      %v1061 = vmax.f32 %v993, 0.0
      %v1062 = vmax.f32 %v995, 0.0
      %v1063 = vmax.f32 %v886, 0.0
      %v1064 = vmax.f32 %v888, 0.0
      %v1065 = vmax.f32 %v999, 0.0
      %v1066 = vmax.f32 %v1001, 0.0
      %v1067 = vmax.f32 %v890, 0.0
      %v1068 = vmax.f32 %v892, 0.0
      %v1069 = vmax.f32 %v1003, 0.0
      %v1070 = vmax.f32 %v1005, 0.0
      %v1071 = vld [vmem:[%s3] sm:$0xf]
      %v1073 = vlaneseq
      %v1074 = vshrl.u32 %v1073, 7
      %v1075 = vsub.s32 0, %v1074
      %v1076 = vrot.slane %v1071, %v1075
      %v1077 = vlaneseq
      %v1078 = vshrl.u32 %v1077, 7
      %v1079 = vsub.s32 1, %v1078
      %v1080 = vrot.slane %v1071, %v1079
      %v1081 = vlaneseq
      %v1082 = vshrl.u32 %v1081, 7
      %v1083 = vsub.s32 2, %v1082
      %v1084 = vrot.slane %v1071, %v1083
      %v1085 = vlaneseq
      %v1086 = vshrl.u32 %v1085, 7
      %v1087 = vsub.s32 3, %v1086
      %v1088 = vrot.slane %v1071, %v1087
      %v1093 = vmul.f32 %v1007, %v1076
      %v1094 = vmul.f32 %v1008, %v1080
      %v1095 = vmul.f32 %v1009, %v1084
      %v1096 = vmul.f32 %v1010, %v1088
      %v1097 = vmul.f32 %v1011, %v1076
      %v1098 = vmul.f32 %v1012, %v1080
      %v1099 = vmul.f32 %v1013, %v1084
      %v1100 = vmul.f32 %v1014, %v1088
      %v1101 = vmul.f32 %v1015, %v1076
      %v1102 = vmul.f32 %v1016, %v1080
      %v1103 = vmul.f32 %v1017, %v1084
      %v1104 = vmul.f32 %v1018, %v1088
      %v1105 = vmul.f32 %v1019, %v1076
      %v1106 = vmul.f32 %v1020, %v1080
      %v1107 = vmul.f32 %v1021, %v1084
      %v1108 = vmul.f32 %v1022, %v1088
      %v1109 = vmul.f32 %v1023, %v1076
      %v1110 = vmul.f32 %v1024, %v1080
      %v1111 = vmul.f32 %v1025, %v1084
      %v1112 = vmul.f32 %v1026, %v1088
      %v1113 = vmul.f32 %v1027, %v1076
      %v1114 = vmul.f32 %v1028, %v1080
      %v1115 = vmul.f32 %v1029, %v1084
      %v1116 = vmul.f32 %v1030, %v1088
      %v1117 = vmul.f32 %v1031, %v1076
      %v1118 = vmul.f32 %v1032, %v1080
      %v1119 = vmul.f32 %v1033, %v1084
      %v1120 = vmul.f32 %v1034, %v1088
      %v1121 = vmul.f32 %v1035, %v1076
      %v1122 = vmul.f32 %v1036, %v1080
      %v1123 = vmul.f32 %v1037, %v1084
      %v1124 = vmul.f32 %v1038, %v1088
      %v1125 = vmul.f32 %v1039, %v1076
      %v1126 = vmul.f32 %v1040, %v1080
      %v1127 = vmul.f32 %v1041, %v1084
      %v1128 = vmul.f32 %v1042, %v1088
      %v1129 = vmul.f32 %v1043, %v1076
      %v1130 = vmul.f32 %v1044, %v1080
      %v1131 = vmul.f32 %v1045, %v1084
      %v1132 = vmul.f32 %v1046, %v1088
      %v1133 = vmul.f32 %v1047, %v1076
      %v1134 = vmul.f32 %v1048, %v1080
      %v1135 = vmul.f32 %v1049, %v1084
      %v1136 = vmul.f32 %v1050, %v1088
      %v1137 = vmul.f32 %v1051, %v1076
      %v1138 = vmul.f32 %v1052, %v1080
      %v1139 = vmul.f32 %v1053, %v1084
      %v1140 = vmul.f32 %v1054, %v1088
      %v1141 = vmul.f32 %v1055, %v1076
      %v1142 = vmul.f32 %v1056, %v1080
      %v1143 = vmul.f32 %v1057, %v1084
      %v1144 = vmul.f32 %v1058, %v1088
      %v1145 = vmul.f32 %v1059, %v1076
      %v1146 = vmul.f32 %v1060, %v1080
      %v1147 = vmul.f32 %v1061, %v1084
      %v1148 = vmul.f32 %v1062, %v1088
      %v1149 = vmul.f32 %v1063, %v1076
      %v1150 = vmul.f32 %v1064, %v1080
      %v1151 = vmul.f32 %v1065, %v1084
      %v1152 = vmul.f32 %v1066, %v1088
      %v1153 = vmul.f32 %v1067, %v1076
      %v1154 = vmul.f32 %v1068, %v1080
      %v1155 = vmul.f32 %v1069, %v1084
      %v1156 = vmul.f32 %v1070, %v1088
      %v1157 = vadd.f32 %v1093, %v1094
      %v1158 = vadd.f32 %v1157, %v1095
      %v1159 = vadd.f32 %v1158, %v1096
      %1160 = vadd.xlane.f32.xlu0 %v1159
      %v1161 = vpop.xlane.xlu0 %1160
      %v1162 = vadd.f32 %v1097, %v1098
      %v1163 = vadd.f32 %v1162, %v1099
      %v1164 = vadd.f32 %v1163, %v1100
      %1165 = vadd.xlane.f32.xlu0 %v1164
      %v1166 = vpop.xlane.xlu0 %1165
      %v1167 = vadd.f32 %v1101, %v1102
      %v1168 = vadd.f32 %v1167, %v1103
      %v1169 = vadd.f32 %v1168, %v1104
      %1170 = vadd.xlane.f32.xlu0 %v1169
      %v1171 = vpop.xlane.xlu0 %1170
      %v1172 = vadd.f32 %v1105, %v1106
      %v1173 = vadd.f32 %v1172, %v1107
      %v1174 = vadd.f32 %v1173, %v1108
      %1175 = vadd.xlane.f32.xlu0 %v1174
      %v1176 = vpop.xlane.xlu0 %1175
      %v1177 = vadd.f32 %v1109, %v1110
      %v1178 = vadd.f32 %v1177, %v1111
      %v1179 = vadd.f32 %v1178, %v1112
      %1180 = vadd.xlane.f32.xlu0 %v1179
      %v1181 = vpop.xlane.xlu0 %1180
      %v1182 = vadd.f32 %v1113, %v1114
      %v1183 = vadd.f32 %v1182, %v1115
      %v1184 = vadd.f32 %v1183, %v1116
      %1185 = vadd.xlane.f32.xlu0 %v1184
      %v1186 = vpop.xlane.xlu0 %1185
      %v1187 = vadd.f32 %v1117, %v1118
      %v1188 = vadd.f32 %v1187, %v1119
      %v1189 = vadd.f32 %v1188, %v1120
      %1190 = vadd.xlane.f32.xlu0 %v1189
      %v1191 = vpop.xlane.xlu0 %1190
      %v1192 = vadd.f32 %v1121, %v1122
      %v1193 = vadd.f32 %v1192, %v1123
      %v1194 = vadd.f32 %v1193, %v1124
      %1195 = vadd.xlane.f32.xlu0 %v1194
      %v1196 = vpop.xlane.xlu0 %1195
      %v1197 = vadd.f32 %v1125, %v1126
      %v1198 = vadd.f32 %v1197, %v1127
      %v1199 = vadd.f32 %v1198, %v1128
      %1200 = vadd.xlane.f32.xlu0 %v1199
      %v1201 = vpop.xlane.xlu0 %1200
      %v1202 = vadd.f32 %v1129, %v1130
      %v1203 = vadd.f32 %v1202, %v1131
      %v1204 = vadd.f32 %v1203, %v1132
      %1205 = vadd.xlane.f32.xlu0 %v1204
      %v1206 = vpop.xlane.xlu0 %1205
      %v1207 = vadd.f32 %v1133, %v1134
      %v1208 = vadd.f32 %v1207, %v1135
      %v1209 = vadd.f32 %v1208, %v1136
      %1210 = vadd.xlane.f32.xlu0 %v1209
      %v1211 = vpop.xlane.xlu0 %1210
      %v1212 = vadd.f32 %v1137, %v1138
      %v1213 = vadd.f32 %v1212, %v1139
      %v1214 = vadd.f32 %v1213, %v1140
      %1215 = vadd.xlane.f32.xlu0 %v1214
      %v1216 = vpop.xlane.xlu0 %1215
      %v1217 = vadd.f32 %v1141, %v1142
      %v1218 = vadd.f32 %v1217, %v1143
      %v1219 = vadd.f32 %v1218, %v1144
      %1220 = vadd.xlane.f32.xlu0 %v1219
      %v1221 = vpop.xlane.xlu0 %1220
      %v1222 = vadd.f32 %v1145, %v1146
      %v1223 = vadd.f32 %v1222, %v1147
      %v1224 = vadd.f32 %v1223, %v1148
      %1225 = vadd.xlane.f32.xlu0 %v1224
      %v1226 = vpop.xlane.xlu0 %1225
      %v1227 = vadd.f32 %v1149, %v1150
      %v1228 = vadd.f32 %v1227, %v1151
      %v1229 = vadd.f32 %v1228, %v1152
      %1230 = vadd.xlane.f32.xlu0 %v1229
      %v1231 = vpop.xlane.xlu0 %1230
      %v1232 = vadd.f32 %v1153, %v1154
      %v1233 = vadd.f32 %v1232, %v1155
      %v1234 = vadd.f32 %v1233, %v1156
      %1235 = vadd.xlane.f32.xlu0 %v1234
      %v1236 = vpop.xlane.xlu0 %1235
      %v1237 = vld [vmem:[#allocation2] sm:$0x1]
      %v1239 = vlaneseq
      %v1240 = vshrl.u32 %v1239, 7
      %v1241 = vsub.s32 0, %v1240
      %v1242 = vrot.slane %v1237, %v1241
      %v1244 = vadd.f32 %v1161, %v1242
      %v1245 = vadd.f32 %v1166, %v1242
      %v1246 = vadd.f32 %v1171, %v1242
      %v1247 = vadd.f32 %v1176, %v1242
      %v1248 = vadd.f32 %v1181, %v1242
      %v1249 = vadd.f32 %v1186, %v1242
      %v1250 = vadd.f32 %v1191, %v1242
      %v1251 = vadd.f32 %v1196, %v1242
      %v1252 = vadd.f32 %v1201, %v1242
      %v1253 = vadd.f32 %v1206, %v1242
      %v1254 = vadd.f32 %v1211, %v1242
      %v1255 = vadd.f32 %v1216, %v1242
      %v1256 = vadd.f32 %v1221, %v1242
      %v1257 = vadd.f32 %v1226, %v1242
      %v1258 = vadd.f32 %v1231, %v1242
      %v1259 = vadd.f32 %v1236, %v1242
      %v1260 = vlaneseq
      %v1261 = vshrl.u32 %v1260, 7
      %v1262 = vadd.s32 %v1261, 8
      %v1263 = vadd.s32 %v1261, 16
      %v1264 = vadd.s32 %v1261, 24
      %v1265 = vadd.s32 %v1261, 32
      %v1266 = vadd.s32 %v1261, 40
      %v1267 = vadd.s32 %v1261, 48
      %v1268 = vadd.s32 %v1261, 56
      %v1269 = vadd.s32 %v1261, 64
      %v1270 = vadd.s32 %v1261, 72
      %v1271 = vadd.s32 %v1261, 80
      %v1272 = vadd.s32 %v1261, 88
      %v1273 = vadd.s32 %v1261, 96
      %v1274 = vadd.s32 %v1261, 104
      %v1275 = vadd.s32 %v1261, 112
      %v1276 = vadd.s32 %v1261, 120
      %vm1277 = vcmp.lt.s32.totalorder %v1261, 16
      %vm1278 = vcmp.lt.s32.totalorder %v1262, 16
      %vm1279 = vcmp.lt.s32.totalorder %v1263, 16
      %vm1280 = vcmp.lt.s32.totalorder %v1264, 16
      %vm1281 = vcmp.lt.s32.totalorder %v1265, 16
      %vm1282 = vcmp.lt.s32.totalorder %v1266, 16
      %vm1283 = vcmp.lt.s32.totalorder %v1267, 16
      %vm1284 = vcmp.lt.s32.totalorder %v1268, 16
      %vm1285 = vcmp.lt.s32.totalorder %v1269, 16
      %vm1286 = vcmp.lt.s32.totalorder %v1270, 16
      %vm1287 = vcmp.lt.s32.totalorder %v1271, 16
      %vm1288 = vcmp.lt.s32.totalorder %v1272, 16
      %vm1289 = vcmp.lt.s32.totalorder %v1273, 16
      %vm1290 = vcmp.lt.s32.totalorder %v1274, 16
      %vm1291 = vcmp.lt.s32.totalorder %v1275, 16
      %vm1292 = vcmp.lt.s32.totalorder %v1276, 16
      %v1293 = vsel %vm1277, %v1244, -1e+30
      %v1294 = vsel %vm1278, %v1245, -1e+30
      %v1295 = vsel %vm1279, %v1246, -1e+30
      %v1296 = vsel %vm1280, %v1247, -1e+30
      %v1297 = vsel %vm1281, %v1248, -1e+30
      %v1298 = vsel %vm1282, %v1249, -1e+30
      %v1299 = vsel %vm1283, %v1250, -1e+30
      %v1300 = vsel %vm1284, %v1251, -1e+30
      %v1301 = vsel %vm1285, %v1252, -1e+30
      %v1302 = vsel %vm1286, %v1253, -1e+30
      %v1303 = vsel %vm1287, %v1254, -1e+30
      %v1304 = vsel %vm1288, %v1255, -1e+30
      %v1305 = vsel %vm1289, %v1256, -1e+30
      %v1306 = vsel %vm1290, %v1257, -1e+30
      %v1307 = vsel %vm1291, %v1258, -1e+30
      %v1308 = vsel %vm1292, %v1259, -1e+30
      %vm1309 = vcmask 7168
      %v1310 = vsel %vm1309, %v1293, -inf
      %v1311 = vsel %vm1309, %v1294, -inf
      %v1312 = vsel %vm1309, %v1295, -inf
      %v1313 = vsel %vm1309, %v1296, -inf
      %v1314 = vsel %vm1309, %v1297, -inf
      %v1315 = vmax.f32 %v1310, %v1314
      %v1316 = vsel %vm1309, %v1298, -inf
      %v1317 = vmax.f32 %v1311, %v1316
      %v1318 = vsel %vm1309, %v1299, -inf
      %v1319 = vmax.f32 %v1312, %v1318
      %v1320 = vsel %vm1309, %v1300, -inf
      %v1321 = vmax.f32 %v1313, %v1320
      %v1322 = vsel %vm1309, %v1301, -inf
      %v1323 = vmax.f32 %v1315, %v1322
      %v1324 = vsel %vm1309, %v1302, -inf
      %v1325 = vmax.f32 %v1317, %v1324
      %v1326 = vsel %vm1309, %v1303, -inf
      %v1327 = vmax.f32 %v1319, %v1326
      %v1328 = vsel %vm1309, %v1304, -inf
      %v1329 = vmax.f32 %v1321, %v1328
      %v1330 = vsel %vm1309, %v1305, -inf
      %v1331 = vmax.f32 %v1323, %v1330
      %v1332 = vsel %vm1309, %v1306, -inf
      %v1333 = vmax.f32 %v1325, %v1332
      %v1334 = vsel %vm1309, %v1307, -inf
      %v1335 = vmax.f32 %v1327, %v1334
      %v1336 = vsel %vm1309, %v1308, -inf
      %v1337 = vmax.f32 %v1329, %v1336
      %v1338 = vmax.f32 %v1331, %v1333
      %v1339 = vmax.f32 %v1335, %v1337
      %v1340 = vmax.f32 %v1338, %v1339
      %v1341 = vrot.slane %v1340, 4
      %v1342 = vmax.f32 %v1340, %v1341
      %v1343 = vrot.slane %v1342, 2
      %v1344 = vmax.f32 %v1342, %v1343
      %v1345 = vrot.slane %v1344, 1
      %v1346 = vmax.f32 %v1344, %v1345
      %v1347 = vsub.f32 %v1293, %v1346
      %v1348 = vsub.f32 %v1294, %v1346
      %v1349 = vsub.f32 %v1295, %v1346
      %v1350 = vsub.f32 %v1296, %v1346
      %v1351 = vsub.f32 %v1297, %v1346
      %v1352 = vsub.f32 %v1298, %v1346
      %v1353 = vsub.f32 %v1299, %v1346
      %v1354 = vsub.f32 %v1300, %v1346
      %v1355 = vsub.f32 %v1301, %v1346
      %v1356 = vsub.f32 %v1302, %v1346
      %v1357 = vsub.f32 %v1303, %v1346
      %v1358 = vsub.f32 %v1304, %v1346
      %v1359 = vsub.f32 %v1305, %v1346
      %v1360 = vsub.f32 %v1306, %v1346
      %v1361 = vsub.f32 %v1307, %v1346
      %v1362 = vsub.f32 %v1308, %v1346
      %v1363 = vmul.f32 %v1347, 1.442695
      %v1364 = vpow.pop %v1363
      %v1365 = vmul.f32 %v1348, 1.442695
      %v1366 = vpow.pop %v1365
      %v1367 = vmul.f32 %v1349, 1.442695
      %v1368 = vpow.pop %v1367
      %v1369 = vmul.f32 %v1350, 1.442695
      %v1370 = vpow.pop %v1369
      %v1371 = vmul.f32 %v1351, 1.442695
      %v1372 = vpow.pop %v1371
      %v1373 = vmul.f32 %v1352, 1.442695
      %v1374 = vpow.pop %v1373
      %v1375 = vmul.f32 %v1353, 1.442695
      %v1376 = vpow.pop %v1375
      %v1377 = vmul.f32 %v1354, 1.442695
      %v1378 = vpow.pop %v1377
      %v1379 = vmul.f32 %v1355, 1.442695
      %v1380 = vpow.pop %v1379
      %v1381 = vmul.f32 %v1356, 1.442695
      %v1382 = vpow.pop %v1381
      %v1383 = vmul.f32 %v1357, 1.442695
      %v1384 = vpow.pop %v1383
      %v1385 = vmul.f32 %v1358, 1.442695
      %v1386 = vpow.pop %v1385
      %v1387 = vmul.f32 %v1359, 1.442695
      %v1388 = vpow.pop %v1387
      %v1389 = vmul.f32 %v1360, 1.442695
      %v1390 = vpow.pop %v1389
      %v1391 = vmul.f32 %v1361, 1.442695
      %v1392 = vpow.pop %v1391
      %v1393 = vmul.f32 %v1362, 1.442695
      %v1394 = vpow.pop %v1393
      %v1395 = vsel %vm1309, %v1364, 0.0
      %v1396 = vsel %vm1309, %v1366, 0.0
      %v1397 = vadd.f32 %v1395, %v1396
      %v1398 = vsel %vm1309, %v1368, 0.0
      %v1399 = vadd.f32 %v1397, %v1398
      %v1400 = vsel %vm1309, %v1370, 0.0
      %v1401 = vadd.f32 %v1399, %v1400
      %v1402 = vsel %vm1309, %v1372, 0.0
      %v1403 = vadd.f32 %v1401, %v1402
      %v1404 = vsel %vm1309, %v1374, 0.0
      %v1405 = vadd.f32 %v1403, %v1404
      %v1406 = vsel %vm1309, %v1376, 0.0
      %v1407 = vadd.f32 %v1405, %v1406
      %v1408 = vsel %vm1309, %v1378, 0.0
      %v1409 = vadd.f32 %v1407, %v1408
      %v1410 = vsel %vm1309, %v1380, 0.0
      %v1411 = vadd.f32 %v1409, %v1410
      %v1412 = vsel %vm1309, %v1382, 0.0
      %v1413 = vadd.f32 %v1411, %v1412
      %v1414 = vsel %vm1309, %v1384, 0.0
      %v1415 = vadd.f32 %v1413, %v1414
      %v1416 = vsel %vm1309, %v1386, 0.0
      %v1417 = vadd.f32 %v1415, %v1416
      %v1418 = vsel %vm1309, %v1388, 0.0
      %v1419 = vadd.f32 %v1417, %v1418
      %v1420 = vsel %vm1309, %v1390, 0.0
      %v1421 = vadd.f32 %v1419, %v1420
      %v1422 = vsel %vm1309, %v1392, 0.0
      %v1423 = vadd.f32 %v1421, %v1422
      %v1424 = vsel %vm1309, %v1394, 0.0
      %v1425 = vadd.f32 %v1423, %v1424
      %v1426 = vrot.slane %v1425, 4
      %v1427 = vadd.f32 %v1425, %v1426
      %v1428 = vrot.slane %v1427, 2
      %v1429 = vadd.f32 %v1427, %v1428
      %v1430 = vrot.slane %v1429, 1
      %v1431 = vadd.f32 %v1429, %v1430
      %v1432 = vrcp.pop %v1431
      %v1433 = vmul.f32 %v1364, %v1432
      %v1434 = vmul.f32 %v1366, %v1432
      %v1435 = vmul.f32 %v1368, %v1432
      %v1436 = vmul.f32 %v1370, %v1432
      %v1437 = vmul.f32 %v1372, %v1432
      %v1438 = vmul.f32 %v1374, %v1432
      %v1439 = vmul.f32 %v1376, %v1432
      %v1440 = vmul.f32 %v1378, %v1432
      %v1441 = vmul.f32 %v1380, %v1432
      %v1442 = vmul.f32 %v1382, %v1432
      %v1443 = vmul.f32 %v1384, %v1432
      %v1444 = vmul.f32 %v1386, %v1432
      %v1445 = vmul.f32 %v1388, %v1432
      %v1446 = vmul.f32 %v1390, %v1432
      %v1447 = vmul.f32 %v1392, %v1432
      %v1448 = vmul.f32 %v1394, %v1432
      %v1449 = vunpack.c.l.bf16 %v279
      %v1450 = vunpack.c.h.bf16 %v279
      %v1451 = vunpack.c.l.bf16 %v280
      %v1452 = vunpack.c.h.bf16 %v280
      %v1453 = vunpack.c.l.bf16 %v281
      %v1454 = vunpack.c.h.bf16 %v281
      %v1455 = vunpack.c.l.bf16 %v282
      %v1456 = vunpack.c.h.bf16 %v282
      %v1457 = vunpack.c.l.bf16 %v283
      %v1458 = vunpack.c.h.bf16 %v283
      %v1459 = vunpack.c.l.bf16 %v284
      %v1460 = vunpack.c.h.bf16 %v284
      %v1461 = vunpack.c.l.bf16 %v285
      %v1462 = vunpack.c.h.bf16 %v285
      %v1463 = vunpack.c.l.bf16 %v286
      %v1464 = vunpack.c.h.bf16 %v286
      %v1465 = vunpack.c.l.bf16 %v287
      %v1466 = vunpack.c.h.bf16 %v287
      %v1467 = vunpack.c.l.bf16 %v288
      %v1468 = vunpack.c.h.bf16 %v288
      %v1469 = vunpack.c.l.bf16 %v289
      %v1470 = vunpack.c.h.bf16 %v289
      %v1471 = vunpack.c.l.bf16 %v290
      %v1472 = vunpack.c.h.bf16 %v290
      %v1473 = vunpack.c.l.bf16 %v291
      %v1474 = vunpack.c.h.bf16 %v291
      %v1475 = vunpack.c.l.bf16 %v292
      %v1476 = vunpack.c.h.bf16 %v292
      %v1477 = vunpack.c.l.bf16 %v293
      %v1478 = vunpack.c.h.bf16 %v293
      %v1479 = vunpack.c.l.bf16 %v294
      %v1480 = vunpack.c.h.bf16 %v294
      %1482 = vset.pattern.permute.xlu0 0
      %1483 = vperm.xlu0 %1482, %v1433
      %v1484 = vpop.permute.xlu0 %1483
      %1487 = vset.pattern.permute.xlu0 0
      %1488 = vperm.xlu0 %1487, %v1434
      %v1489 = vpop.permute.xlu0 %1488
      %1492 = vset.pattern.permute.xlu0 0
      %1493 = vperm.xlu0 %1492, %v1435
      %v1494 = vpop.permute.xlu0 %1493
      %1497 = vset.pattern.permute.xlu0 0
      %1498 = vperm.xlu0 %1497, %v1436
      %v1499 = vpop.permute.xlu0 %1498
      %1502 = vset.pattern.permute.xlu0 0
      %1503 = vperm.xlu0 %1502, %v1437
      %v1504 = vpop.permute.xlu0 %1503
      %1507 = vset.pattern.permute.xlu0 0
      %1508 = vperm.xlu0 %1507, %v1438
      %v1509 = vpop.permute.xlu0 %1508
      %1512 = vset.pattern.permute.xlu0 0
      %1513 = vperm.xlu0 %1512, %v1439
      %v1514 = vpop.permute.xlu0 %1513
      %1517 = vset.pattern.permute.xlu0 0
      %1518 = vperm.xlu0 %1517, %v1440
      %v1519 = vpop.permute.xlu0 %1518
      %1522 = vset.pattern.permute.xlu0 0
      %1523 = vperm.xlu0 %1522, %v1441
      %v1524 = vpop.permute.xlu0 %1523
      %1527 = vset.pattern.permute.xlu0 0
      %1528 = vperm.xlu0 %1527, %v1442
      %v1529 = vpop.permute.xlu0 %1528
      %1532 = vset.pattern.permute.xlu0 0
      %1533 = vperm.xlu0 %1532, %v1443
      %v1534 = vpop.permute.xlu0 %1533
      %1537 = vset.pattern.permute.xlu0 0
      %1538 = vperm.xlu0 %1537, %v1444
      %v1539 = vpop.permute.xlu0 %1538
      %1542 = vset.pattern.permute.xlu0 0
      %1543 = vperm.xlu0 %1542, %v1445
      %v1544 = vpop.permute.xlu0 %1543
      %1547 = vset.pattern.permute.xlu0 0
      %1548 = vperm.xlu0 %1547, %v1446
      %v1549 = vpop.permute.xlu0 %1548
      %1552 = vset.pattern.permute.xlu0 0
      %1553 = vperm.xlu0 %1552, %v1447
      %v1554 = vpop.permute.xlu0 %1553
      %1557 = vset.pattern.permute.xlu0 0
      %1558 = vperm.xlu0 %1557, %v1448
      %v1559 = vpop.permute.xlu0 %1558
      %v1561 = vmul.f32 %v1484, %v1449
      %v1562 = vmul.f32 %v1484, %v1450
      %v1563 = vmul.f32 %v1489, %v1451
      %v1564 = vmul.f32 %v1489, %v1452
      %v1565 = vmul.f32 %v1494, %v1453
      %v1566 = vmul.f32 %v1494, %v1454
      %v1567 = vmul.f32 %v1499, %v1455
      %v1568 = vmul.f32 %v1499, %v1456
      %v1569 = vmul.f32 %v1504, %v1457
      %v1570 = vmul.f32 %v1504, %v1458
      %v1571 = vmul.f32 %v1509, %v1459
      %v1572 = vmul.f32 %v1509, %v1460
      %v1573 = vmul.f32 %v1514, %v1461
      %v1574 = vmul.f32 %v1514, %v1462
      %v1575 = vmul.f32 %v1519, %v1463
      %v1576 = vmul.f32 %v1519, %v1464
      %v1577 = vmul.f32 %v1524, %v1465
      %v1578 = vmul.f32 %v1524, %v1466
      %v1579 = vmul.f32 %v1529, %v1467
      %v1580 = vmul.f32 %v1529, %v1468
      %v1581 = vmul.f32 %v1534, %v1469
      %v1582 = vmul.f32 %v1534, %v1470
      %v1583 = vmul.f32 %v1539, %v1471
      %v1584 = vmul.f32 %v1539, %v1472
      %v1585 = vmul.f32 %v1544, %v1473
      %v1586 = vmul.f32 %v1544, %v1474
      %v1587 = vmul.f32 %v1549, %v1475
      %v1588 = vmul.f32 %v1549, %v1476
      %v1589 = vmul.f32 %v1554, %v1477
      %v1590 = vmul.f32 %v1554, %v1478
      %v1591 = vmul.f32 %v1559, %v1479
      %v1592 = vmul.f32 %v1559, %v1480
      %v1593 = vadd.f32 %v1561, %v1563
      %v1594 = vadd.f32 %v1593, %v1565
      %v1595 = vadd.f32 %v1594, %v1567
      %v1596 = vadd.f32 %v1595, %v1569
      %v1597 = vadd.f32 %v1596, %v1571
      %v1598 = vadd.f32 %v1597, %v1573
      %v1599 = vadd.f32 %v1598, %v1575
      %v1600 = vadd.f32 %v1599, %v1577
      %v1601 = vadd.f32 %v1600, %v1579
      %v1602 = vadd.f32 %v1601, %v1581
      %v1603 = vadd.f32 %v1602, %v1583
      %v1604 = vadd.f32 %v1603, %v1585
      %v1605 = vadd.f32 %v1604, %v1587
      %v1606 = vadd.f32 %v1605, %v1589
      %v1607 = vadd.f32 %v1606, %v1591
      %v1608 = vrot.slane %v1607, 4
      %v1609 = vadd.f32 %v1607, %v1608
      %v1610 = vrot.slane %v1609, 2
      %v1611 = vadd.f32 %v1609, %v1610
      %v1612 = vrot.slane %v1611, 1
      %v1613 = vadd.f32 %v1611, %v1612
      %v1614 = vadd.f32 %v1562, %v1564
      %v1615 = vadd.f32 %v1614, %v1566
      %v1616 = vadd.f32 %v1615, %v1568
      %v1617 = vadd.f32 %v1616, %v1570
      %v1618 = vadd.f32 %v1617, %v1572
      %v1619 = vadd.f32 %v1618, %v1574
      %v1620 = vadd.f32 %v1619, %v1576
      %v1621 = vadd.f32 %v1620, %v1578
      %v1622 = vadd.f32 %v1621, %v1580
      %v1623 = vadd.f32 %v1622, %v1582
      %v1624 = vadd.f32 %v1623, %v1584
      %v1625 = vadd.f32 %v1624, %v1586
      %v1626 = vadd.f32 %v1625, %v1588
      %v1627 = vadd.f32 %v1626, %v1590
      %v1628 = vadd.f32 %v1627, %v1592
      %v1629 = vrot.slane %v1628, 4
      %v1630 = vadd.f32 %v1628, %v1629
      %v1631 = vrot.slane %v1630, 2
      %v1632 = vadd.f32 %v1630, %v1631
      %v1633 = vrot.slane %v1632, 1
      %v1634 = vadd.f32 %v1632, %v1633
      %v1635 = vld [vmem:[%s5] sm:$0x3]
      %v1637 = vlaneseq
      %v1638 = vshrl.u32 %v1637, 7
      %v1639 = vsub.s32 0, %v1638
      %v1640 = vrot.slane %v1635, %v1639
      %v1641 = vlaneseq
      %v1642 = vshrl.u32 %v1641, 7
      %v1643 = vsub.s32 1, %v1642
      %v1644 = vrot.slane %v1635, %v1643
      %v1647 = vmul.f32 %v1613, %v1640
      %v1648 = vmul.f32 %v1634, %v1644
      %vm1649 = vcmask 1040384
      %v1650 = vsel %vm1649, %v1647, 0.0
      %v1651 = vsel %vm1649, %v1648, 0.0
      %v1652 = vadd.f32 %v1650, %v1651
      %1653 = vadd.xlane.f32.xlu0 %v1652
      %v1654 = vpop.xlane.xlu0 %1653
      %v1655 = vld [vmem:[#allocation3] sm:$0x1]
      %v1656 = vadd.f32 %v1654, %v1655
      %v1657 = vsub.f32 0.0, %v1656
      %v1658 = vmul.f32 %v1657, 1.442695
      %v1659 = vpow.pop %v1658
      %v1660 = vadd.f32 %v1659, 1.0
      %v1661 = vrcp.pop %v1660
      %v1662 = vmul.f32 1.0, %v1661
      %vm1663 = vcmask 0
      %1664 = vst.msk [vmem:[%s278] sm:$0x1] %vm1663, %v1662
      %p1665 = scmp.lt.s32.totalorder %s22, 1
      %s1666 = scalar_select %p1665, %s22, 1
      %s1667 = scalar_lea.vmem %s7, %s1666
      // Predicated region
      $region49: #{forward.3} parent=47 // pred_check
        %p1668 = pneg %p192
      $region50: #{forward.3} parent=47 // pred_check_branch
        %1670 = sbr.rel (%p1668) target = $region52
      $region51: #{forward.3} parent=47 // pred_region
        _
      $region52: #{forward.3} parent=47 // pred_fallthru
        _
    $region48: #{forward.3} parent=5 // pred_fallthru
      _
    %p1671 = scmp.le.s32.totalorder 2, %s17
    // Predicated region
    $region53: #{forward.3} parent=5 // pred_check
      %p1672 = pneg %p1671
    $region54: #{forward.3} parent=5 // pred_check_branch
      %1674 = sbr.rel (%p1672) target = $region56
    $region55: #{forward.3} parent=5 // pred_region
      %s1675 = ssub.s32 %s17, 2
      // Predicated region
      $region57: #{forward.3} parent=55 // pred_check
        %p1676 = pneg %p198
      $region58: #{forward.3} parent=55 // pred_check_branch
        %1678 = sbr.rel (%p1676) target = $region60
      $region59: #{forward.3} parent=55 // pred_region
        %p1679 = scmp.lt.s32.totalorder %s23, 1
        %s1680 = scalar_select %p1679, %s23, 1
        %s1681 = scalar_lea.vmem %s7, %s1680
      $region60: #{forward.3} parent=55 // pred_fallthru
        _
    $region56: #{forward.3} parent=5 // pred_fallthru
      _
  $region6: #{forward.3} parent=0 // loop_footer
    %s21 = sadd.s32 1, %s17
  $region7: #{forward.3} parent=0 // loop_footer_branch
    %16 = sbr.rel target = $region3
  $region8: #{forward.3} parent=0 // loop_exit
    _

// kernel: forward.2
$region0: #{forward.2}
  #allocation0 [shape = 'u32[]', space=smem, size = 0x4, offset = 0x4, fixed_abs, tag = 'smem constant byte address 0x4 - core index']
  #allocation1 [shape = 'u32[144,128]{1,0:T(1,128)}', space=vmem, size = 0x12000, scoped, tag = 'internal scratch']
  #allocation2 [shape = 'f32[128,256]{1,0:T(8,128)}', space=vmem, size = 0x20000, scoped, tag = 'scratch operand']
  #allocation3 [shape = 'bf16[128,768]{1,0:T(16,128)(2,1)}', space=vmem, size = 0x30000, scoped, tag = 'scratch operand']
  #allocation4 [shape = 'bf16[128,256]{1,0:T(16,128)(2,1)}', space=vmem, size = 0x10000, scoped, tag = 'scratch operand']
  %s0 = inlined_call_operand.vmem [shape: f32[2,128,768], index: 0, kind: input, shape index: {}]
  %s1 = inlined_call_operand.vmem [shape: bf16[768,256], index: 1, kind: input, shape index: {}]
  %s2 = inlined_call_operand.vmem [shape: f32[1,256], index: 2, kind: input, shape index: {}]
  %s3 = inlined_call_operand.vmem [shape: f32[128,256], index: 3, kind: input, shape index: {}]
  %s4 = inlined_call_operand.hbm [shape: bf16[4,256,768], index: 4, kind: input, shape index: {}]
  %s5 = inlined_call_operand.vmem [shape: f32[4,1,768], index: 5, kind: input, shape index: {}]
  %s6 = inlined_call_operand.vmem [shape: bf16[4,256,256], index: 6, kind: input, shape index: {}]
  %s7 = inlined_call_operand.vmem [shape: f32[4,1,256], index: 7, kind: input, shape index: {}]
  %s8 = inlined_call_operand.vmem [shape: f32[4,1,256], index: 8, kind: input, shape index: {}]
  %s9 = inlined_call_operand.vmem [shape: f32[4,1,256], index: 9, kind: input, shape index: {}]
  %s10 = inlined_call_operand.vmem [shape: bf16[4,256,1024], index: 10, kind: input, shape index: {}]
  %s11 = inlined_call_operand.vmem [shape: f32[4,1,1024], index: 11, kind: input, shape index: {}]
  %s12 = inlined_call_operand.hbm [shape: bf16[4,1024,256], index: 12, kind: input, shape index: {}]
  %s13 = inlined_call_operand.vmem [shape: f32[4,1,256], index: 13, kind: input, shape index: {}]
  %s14 = inlined_call_operand.vmem [shape: f32[4,1,256], index: 14, kind: input, shape index: {}]
  %s15 = inlined_call_operand.hbm [shape: f32[4,1,256], index: 15, kind: input, shape index: {}]
  %s16 = inlined_call_operand.vmem [shape: bf16[2,128,256], index: 16, kind: output, shape index: {}]
  %s17 = sld [smem:[#allocation0]]
  $region117: #{forward.2} parent=0
    _
  %s19 = ssub.s32 1, %s17
  %s20 = scalar_select 0, %s19, %s17
  $region1: #{forward.2} parent=0
    #allocation5 [shape = 'u8[786432]{0}', space=vmem, size = 0xc0000, scoped, tag = 'input window, operand 4']
    #allocation6 [shape = 's32[2]{0}', space=sflag, size = 0x8, scoped, tag = 'scoped memory for forward.2']
    #allocation7 [shape = 'u8[1048576]{0}', space=vmem, size = 0x100000, scoped, tag = 'input window, operand 12']
    #allocation8 [shape = 's32[2]{0}', space=sflag, size = 0x8, scoped, tag = 'scoped memory for forward.2']
    #allocation9 [shape = 'u8[2048]{0}', space=vmem, size = 0x800, scoped, tag = 'input window, operand 15']
    %21 = vsyncpa [#allocation6], 0
    %s22 = scalar_lea.sflag [#allocation6], 1
    %23 = vsyncpa %s22, 0
    %24 = vsyncpa [#allocation8], 0
    %s25 = scalar_lea.sflag [#allocation8], 1
    %26 = vsyncpa %s25, 0
    loop: start=0, step=1, limit=10
    $region2: #{forward.2} parent=1 // loop_pre_header
      _
    $region3: #{forward.2} parent=1 // loop_header
      %s28 = sphi 0, %s32
      %p29 = scmp.ge.s32.totalorder %s28, 10
      %s35 = sphi 0, %s47
      %s36 = sphi 0, %s43
      %s37 = sphi 0, %s35
      %s38 = sphi 0, %s36
      %s39 = sphi 0, %s37
      %s40 = sphi 0, %s38
      %s50 = sphi 0, %s52
      %s53 = sphi 0, %s50
      %s54 = sphi 0, %s53
      %s70 = sphi 0, %s54
      %s74 = sphi 0, %s74
      %s76 = sphi 0, %s74
      %s77 = sphi 0, %s76
      %s91 = sphi 0, %s77
      %s95 = sphi 0, %s95
      %s97 = sphi 0, %s95
      %s98 = sphi 0, %s97
      %s112 = sphi 0, %s98
      %s116 = sphi 0, %s116
      %s118 = sphi 0, %s116
      %s119 = sphi 0, %s118
      %s133 = sphi 0, %s119
      %s139 = sphi 0, %s141
      %s142 = sphi 0, %s139
      %s143 = sphi 0, %s142
      %s159 = sphi 0, %s143
      %s165 = sphi 0, %s167
      %s168 = sphi 0, %s165
      %s169 = sphi 0, %s168
      %s185 = sphi 0, %s169
      %s191 = sphi 0, %s193
      %s194 = sphi 0, %s191
      %s195 = sphi 0, %s194
      %s211 = sphi 0, %s195
      %s217 = sphi 0, %s219
      %s220 = sphi 0, %s217
      %s221 = sphi 0, %s220
      %s237 = sphi 0, %s221
      %s243 = sphi 0, %s245
      %s246 = sphi 0, %s243
      %s247 = sphi 0, %s246
      %s263 = sphi 0, %s247
      %s269 = sphi 0, %s271
      %s272 = sphi 0, %s269
      %s273 = sphi 0, %s272
      %s289 = sphi 0, %s273
      %s295 = sphi 0, %s297
      %s298 = sphi 0, %s295
      %s299 = sphi 0, %s298
      %s315 = sphi 0, %s299
      %s321 = sphi 0, %s323
      %s324 = sphi 0, %s321
      %s325 = sphi 0, %s324
      %s341 = sphi 0, %s325
      %s347 = sphi 0, %s349
      %s350 = sphi 0, %s347
      %s351 = sphi 0, %s350
      %s367 = sphi 0, %s351
      %s373 = sphi 0, %s375
      %s376 = sphi 0, %s373
      %s377 = sphi 0, %s376
      %s393 = sphi 0, %s377
      %s399 = sphi 0, %s401
      %s402 = sphi 0, %s399
      %s403 = sphi 0, %s402
      %s419 = sphi 0, %s403
      %s425 = sphi 0, %s427
      %s428 = sphi 0, %s425
      %s429 = sphi 0, %s428
      %s445 = sphi 0, %s429
      %s451 = sphi 0, %s453
      %s454 = sphi 0, %s451
      %s455 = sphi 0, %s454
      %s471 = sphi 0, %s455
    $region4: #{forward.2} parent=1 // loop_header_branch
      %31 = sbr.rel (%p29) target = $region8
    $region5: #{forward.2} parent=1 // loop_body
      %s33 = ssub.s32 %s28, 1
      %s34 = ssub.s32 %s28, 2
      %s41 = sadd.s32 1, %s36
      %p42 = scmp.ge.s32.totalorder %s41, 4
      %s43 = scalar_select %p42, 0, %s41
      %s44 = sadd.s32 1, %s35
      %s45 = scalar_select %p42, %s44, %s35
      %p46 = scmp.ge.s32.totalorder %s45, 2
      %s47 = scalar_select %p46, 0, %s45
      %s48 = ssub.s32 %s35, %s47
      %p49 = scmp.eq.s32.totalorder %s48, 0
      %s51 = sadd.s32 %s50, 1
      %s52 = scalar_select %p49, %s50, %s51
      %p55 = pneg %p49
      %p56 = scmp.eq.s32.totalorder %s28, 7
      %p57 = por %p55, %p56
      %p58 = scmp.ne.s32.totalorder %s50, %s53
      %p59 = scmp.eq.s32.totalorder %s28, 0
      %p60 = por %p58, %p59
      %p61 = scmp.ne.s32.totalorder %s50, %s53
      %p62 = scmp.eq.s32.totalorder %s33, 7
      %p63 = por %p61, %p62
      %p64 = scmp.ne.s32.totalorder %s53, %s54
      %p65 = scmp.eq.s32.totalorder %s33, 0
      %p66 = por %p64, %p65
      %p67 = scmp.ne.s32.totalorder %s53, %s54
      %p68 = scmp.eq.s32.totalorder %s34, 7
      %p69 = por %p67, %p68
      %p71 = scmp.ne.s32.totalorder %s54, %s70
      %p72 = scmp.eq.s32.totalorder %s34, 0
      %p73 = por %p71, %p72
      %s75 = sadd.s32 %s74, 1
      %p78 = scmp.eq.s32.totalorder %s28, 7
      %p79 = scmp.ne.s32.totalorder %s74, %s76
      %p80 = scmp.eq.s32.totalorder %s28, 0
      %p81 = por %p79, %p80
      %p82 = scmp.ne.s32.totalorder %s74, %s76
      %p83 = scmp.eq.s32.totalorder %s33, 7
      %p84 = por %p82, %p83
      %p85 = scmp.ne.s32.totalorder %s76, %s77
      %p86 = scmp.eq.s32.totalorder %s33, 0
      %p87 = por %p85, %p86
      %p88 = scmp.ne.s32.totalorder %s76, %s77
      %p89 = scmp.eq.s32.totalorder %s34, 7
      %p90 = por %p88, %p89
      %p92 = scmp.ne.s32.totalorder %s77, %s91
      %p93 = scmp.eq.s32.totalorder %s34, 0
      %p94 = por %p92, %p93
      %s96 = sadd.s32 %s95, 1
      %p99 = scmp.eq.s32.totalorder %s28, 7
      %p100 = scmp.ne.s32.totalorder %s95, %s97
      %p101 = scmp.eq.s32.totalorder %s28, 0
      %p102 = por %p100, %p101
      %p103 = scmp.ne.s32.totalorder %s95, %s97
      %p104 = scmp.eq.s32.totalorder %s33, 7
      %p105 = por %p103, %p104
      %p106 = scmp.ne.s32.totalorder %s97, %s98
      %p107 = scmp.eq.s32.totalorder %s33, 0
      %p108 = por %p106, %p107
      %p109 = scmp.ne.s32.totalorder %s97, %s98
      %p110 = scmp.eq.s32.totalorder %s34, 7
      %p111 = por %p109, %p110
      %p113 = scmp.ne.s32.totalorder %s98, %s112
      %p114 = scmp.eq.s32.totalorder %s34, 0
      %p115 = por %p113, %p114
      %s117 = sadd.s32 %s116, 1
      %p120 = scmp.eq.s32.totalorder %s28, 7
      %p121 = scmp.ne.s32.totalorder %s116, %s118
      %p122 = scmp.eq.s32.totalorder %s28, 0
      %p123 = por %p121, %p122
      %p124 = scmp.ne.s32.totalorder %s116, %s118
      %p125 = scmp.eq.s32.totalorder %s33, 7
      %p126 = por %p124, %p125
      %p127 = scmp.ne.s32.totalorder %s118, %s119
      %p128 = scmp.eq.s32.totalorder %s33, 0
      %p129 = por %p127, %p128
      %p130 = scmp.ne.s32.totalorder %s118, %s119
      %p131 = scmp.eq.s32.totalorder %s34, 7
      %p132 = por %p130, %p131
      %p134 = scmp.ne.s32.totalorder %s119, %s133
      %p135 = scmp.eq.s32.totalorder %s34, 0
      %p136 = por %p134, %p135
      %s137 = ssub.s32 %s36, %s43
      %p138 = scmp.eq.s32.totalorder %s137, 0
      %s140 = sadd.s32 %s139, 1
      %s141 = scalar_select %p138, %s139, %s140
      %p144 = pneg %p138
      %p145 = scmp.eq.s32.totalorder %s28, 7
      %p146 = por %p144, %p145
      %p147 = scmp.ne.s32.totalorder %s139, %s142
      %p148 = scmp.eq.s32.totalorder %s28, 0
      %p149 = por %p147, %p148
      %p150 = scmp.ne.s32.totalorder %s139, %s142
      %p151 = scmp.eq.s32.totalorder %s33, 7
      %p152 = por %p150, %p151
      %p153 = scmp.ne.s32.totalorder %s142, %s143
      %p154 = scmp.eq.s32.totalorder %s33, 0
      %p155 = por %p153, %p154
      %p156 = scmp.ne.s32.totalorder %s142, %s143
      %p157 = scmp.eq.s32.totalorder %s34, 7
      %p158 = por %p156, %p157
      %p160 = scmp.ne.s32.totalorder %s143, %s159
      %p161 = scmp.eq.s32.totalorder %s34, 0
      %p162 = por %p160, %p161
      %s163 = ssub.s32 %s36, %s43
      %p164 = scmp.eq.s32.totalorder %s163, 0
      %s166 = sadd.s32 %s165, 1
      %s167 = scalar_select %p164, %s165, %s166
      %p170 = pneg %p164
      %p171 = scmp.eq.s32.totalorder %s28, 7
      %p172 = por %p170, %p171
      %p173 = scmp.ne.s32.totalorder %s165, %s168
      %p174 = scmp.eq.s32.totalorder %s28, 0
      %p175 = por %p173, %p174
      %p176 = scmp.ne.s32.totalorder %s165, %s168
      %p177 = scmp.eq.s32.totalorder %s33, 7
      %p178 = por %p176, %p177
      %p179 = scmp.ne.s32.totalorder %s168, %s169
      %p180 = scmp.eq.s32.totalorder %s33, 0
      %p181 = por %p179, %p180
      %p182 = scmp.ne.s32.totalorder %s168, %s169
      %p183 = scmp.eq.s32.totalorder %s34, 7
      %p184 = por %p182, %p183
      %p186 = scmp.ne.s32.totalorder %s169, %s185
      %p187 = scmp.eq.s32.totalorder %s34, 0
      %p188 = por %p186, %p187
      %s189 = ssub.s32 %s36, %s43
      %p190 = scmp.eq.s32.totalorder %s189, 0
      %s192 = sadd.s32 %s191, 1
      %s193 = scalar_select %p190, %s191, %s192
      %p196 = pneg %p190
      %p197 = scmp.eq.s32.totalorder %s28, 7
      %p198 = por %p196, %p197
      %p199 = scmp.ne.s32.totalorder %s191, %s194
      %p200 = scmp.eq.s32.totalorder %s28, 0
      %p201 = por %p199, %p200
      %p202 = scmp.ne.s32.totalorder %s191, %s194
      %p203 = scmp.eq.s32.totalorder %s33, 7
      %p204 = por %p202, %p203
      %p205 = scmp.ne.s32.totalorder %s194, %s195
      %p206 = scmp.eq.s32.totalorder %s33, 0
      %p207 = por %p205, %p206
      %p208 = scmp.ne.s32.totalorder %s194, %s195
      %p209 = scmp.eq.s32.totalorder %s34, 7
      %p210 = por %p208, %p209
      %p212 = scmp.ne.s32.totalorder %s195, %s211
      %p213 = scmp.eq.s32.totalorder %s34, 0
      %p214 = por %p212, %p213
      %s215 = ssub.s32 %s36, %s43
      %p216 = scmp.eq.s32.totalorder %s215, 0
      %s218 = sadd.s32 %s217, 1
      %s219 = scalar_select %p216, %s217, %s218
      %p222 = pneg %p216
      %p223 = scmp.eq.s32.totalorder %s28, 7
      %p224 = por %p222, %p223
      %p225 = scmp.ne.s32.totalorder %s217, %s220
      %p226 = scmp.eq.s32.totalorder %s28, 0
      %p227 = por %p225, %p226
      %p228 = scmp.ne.s32.totalorder %s217, %s220
      %p229 = scmp.eq.s32.totalorder %s33, 7
      %p230 = por %p228, %p229
      %p231 = scmp.ne.s32.totalorder %s220, %s221
      %p232 = scmp.eq.s32.totalorder %s33, 0
      %p233 = por %p231, %p232
      %p234 = scmp.ne.s32.totalorder %s220, %s221
      %p235 = scmp.eq.s32.totalorder %s34, 7
      %p236 = por %p234, %p235
      %p238 = scmp.ne.s32.totalorder %s221, %s237
      %p239 = scmp.eq.s32.totalorder %s34, 0
      %p240 = por %p238, %p239
      %s241 = ssub.s32 %s36, %s43
      %p242 = scmp.eq.s32.totalorder %s241, 0
      %s244 = sadd.s32 %s243, 1
      %s245 = scalar_select %p242, %s243, %s244
      %p248 = pneg %p242
      %p249 = scmp.eq.s32.totalorder %s28, 7
      %p250 = por %p248, %p249
      %p251 = scmp.ne.s32.totalorder %s243, %s246
      %p252 = scmp.eq.s32.totalorder %s28, 0
      %p253 = por %p251, %p252
      %p254 = scmp.ne.s32.totalorder %s243, %s246
      %p255 = scmp.eq.s32.totalorder %s33, 7
      %p256 = por %p254, %p255
      %p257 = scmp.ne.s32.totalorder %s246, %s247
      %p258 = scmp.eq.s32.totalorder %s33, 0
      %p259 = por %p257, %p258
      %p260 = scmp.ne.s32.totalorder %s246, %s247
      %p261 = scmp.eq.s32.totalorder %s34, 7
      %p262 = por %p260, %p261
      %p264 = scmp.ne.s32.totalorder %s247, %s263
      %p265 = scmp.eq.s32.totalorder %s34, 0
      %p266 = por %p264, %p265
      %s267 = ssub.s32 %s36, %s43
      %p268 = scmp.eq.s32.totalorder %s267, 0
      %s270 = sadd.s32 %s269, 1
      %s271 = scalar_select %p268, %s269, %s270
      %p274 = pneg %p268
      %p275 = scmp.eq.s32.totalorder %s28, 7
      %p276 = por %p274, %p275
      %p277 = scmp.ne.s32.totalorder %s269, %s272
      %p278 = scmp.eq.s32.totalorder %s28, 0
      %p279 = por %p277, %p278
      %p280 = scmp.ne.s32.totalorder %s269, %s272
      %p281 = scmp.eq.s32.totalorder %s33, 7
      %p282 = por %p280, %p281
      %p283 = scmp.ne.s32.totalorder %s272, %s273
      %p284 = scmp.eq.s32.totalorder %s33, 0
      %p285 = por %p283, %p284
      %p286 = scmp.ne.s32.totalorder %s272, %s273
      %p287 = scmp.eq.s32.totalorder %s34, 7
      %p288 = por %p286, %p287
      %p290 = scmp.ne.s32.totalorder %s273, %s289
      %p291 = scmp.eq.s32.totalorder %s34, 0
      %p292 = por %p290, %p291
      %s293 = ssub.s32 %s36, %s43
      %p294 = scmp.eq.s32.totalorder %s293, 0
      %s296 = sadd.s32 %s295, 1
      %s297 = scalar_select %p294, %s295, %s296
      %p300 = pneg %p294
      %p301 = scmp.eq.s32.totalorder %s28, 7
      %p302 = por %p300, %p301
      %p303 = scmp.ne.s32.totalorder %s295, %s298
      %p304 = scmp.eq.s32.totalorder %s28, 0
      %p305 = por %p303, %p304
      %p306 = scmp.ne.s32.totalorder %s295, %s298
      %p307 = scmp.eq.s32.totalorder %s33, 7
      %p308 = por %p306, %p307
      %p309 = scmp.ne.s32.totalorder %s298, %s299
      %p310 = scmp.eq.s32.totalorder %s33, 0
      %p311 = por %p309, %p310
      %p312 = scmp.ne.s32.totalorder %s298, %s299
      %p313 = scmp.eq.s32.totalorder %s34, 7
      %p314 = por %p312, %p313
      %p316 = scmp.ne.s32.totalorder %s299, %s315
      %p317 = scmp.eq.s32.totalorder %s34, 0
      %p318 = por %p316, %p317
      %s319 = ssub.s32 %s36, %s43
      %p320 = scmp.eq.s32.totalorder %s319, 0
      %s322 = sadd.s32 %s321, 1
      %s323 = scalar_select %p320, %s321, %s322
      %p326 = pneg %p320
      %p327 = scmp.eq.s32.totalorder %s28, 7
      %p328 = por %p326, %p327
      %p329 = scmp.ne.s32.totalorder %s321, %s324
      %p330 = scmp.eq.s32.totalorder %s28, 0
      %p331 = por %p329, %p330
      %p332 = scmp.ne.s32.totalorder %s321, %s324
      %p333 = scmp.eq.s32.totalorder %s33, 7
      %p334 = por %p332, %p333
      %p335 = scmp.ne.s32.totalorder %s324, %s325
      %p336 = scmp.eq.s32.totalorder %s33, 0
      %p337 = por %p335, %p336
      %p338 = scmp.ne.s32.totalorder %s324, %s325
      %p339 = scmp.eq.s32.totalorder %s34, 7
      %p340 = por %p338, %p339
      %p342 = scmp.ne.s32.totalorder %s325, %s341
      %p343 = scmp.eq.s32.totalorder %s34, 0
      %p344 = por %p342, %p343
      %s345 = ssub.s32 %s36, %s43
      %p346 = scmp.eq.s32.totalorder %s345, 0
      %s348 = sadd.s32 %s347, 1
      %s349 = scalar_select %p346, %s347, %s348
      %p352 = pneg %p346
      %p353 = scmp.eq.s32.totalorder %s28, 7
      %p354 = por %p352, %p353
      %p355 = scmp.ne.s32.totalorder %s347, %s350
      %p356 = scmp.eq.s32.totalorder %s28, 0
      %p357 = por %p355, %p356
      %p358 = scmp.ne.s32.totalorder %s347, %s350
      %p359 = scmp.eq.s32.totalorder %s33, 7
      %p360 = por %p358, %p359
      %p361 = scmp.ne.s32.totalorder %s350, %s351
      %p362 = scmp.eq.s32.totalorder %s33, 0
      %p363 = por %p361, %p362
      %p364 = scmp.ne.s32.totalorder %s350, %s351
      %p365 = scmp.eq.s32.totalorder %s34, 7
      %p366 = por %p364, %p365
      %p368 = scmp.ne.s32.totalorder %s351, %s367
      %p369 = scmp.eq.s32.totalorder %s34, 0
      %p370 = por %p368, %p369
      %s371 = ssub.s32 %s36, %s43
      %p372 = scmp.eq.s32.totalorder %s371, 0
      %s374 = sadd.s32 %s373, 1
      %s375 = scalar_select %p372, %s373, %s374
      %p378 = pneg %p372
      %p379 = scmp.eq.s32.totalorder %s28, 7
      %p380 = por %p378, %p379
      %p381 = scmp.ne.s32.totalorder %s373, %s376
      %p382 = scmp.eq.s32.totalorder %s28, 0
      %p383 = por %p381, %p382
      %p384 = scmp.ne.s32.totalorder %s373, %s376
      %p385 = scmp.eq.s32.totalorder %s33, 7
      %p386 = por %p384, %p385
      %p387 = scmp.ne.s32.totalorder %s376, %s377
      %p388 = scmp.eq.s32.totalorder %s33, 0
      %p389 = por %p387, %p388
      %p390 = scmp.ne.s32.totalorder %s376, %s377
      %p391 = scmp.eq.s32.totalorder %s34, 7
      %p392 = por %p390, %p391
      %p394 = scmp.ne.s32.totalorder %s377, %s393
      %p395 = scmp.eq.s32.totalorder %s34, 0
      %p396 = por %p394, %p395
      %s397 = ssub.s32 %s36, %s43
      %p398 = scmp.eq.s32.totalorder %s397, 0
      %s400 = sadd.s32 %s399, 1
      %s401 = scalar_select %p398, %s399, %s400
      %p404 = pneg %p398
      %p405 = scmp.eq.s32.totalorder %s28, 7
      %p406 = por %p404, %p405
      %p407 = scmp.ne.s32.totalorder %s399, %s402
      %p408 = scmp.eq.s32.totalorder %s28, 0
      %p409 = por %p407, %p408
      %p410 = scmp.ne.s32.totalorder %s399, %s402
      %p411 = scmp.eq.s32.totalorder %s33, 7
      %p412 = por %p410, %p411
      %p413 = scmp.ne.s32.totalorder %s402, %s403
      %p414 = scmp.eq.s32.totalorder %s33, 0
      %p415 = por %p413, %p414
      %p416 = scmp.ne.s32.totalorder %s402, %s403
      %p417 = scmp.eq.s32.totalorder %s34, 7
      %p418 = por %p416, %p417
      %p420 = scmp.ne.s32.totalorder %s403, %s419
      %p421 = scmp.eq.s32.totalorder %s34, 0
      %p422 = por %p420, %p421
      %s423 = ssub.s32 %s36, %s43
      %p424 = scmp.eq.s32.totalorder %s423, 0
      %s426 = sadd.s32 %s425, 1
      %s427 = scalar_select %p424, %s425, %s426
      %p430 = pneg %p424
      %p431 = scmp.eq.s32.totalorder %s28, 7
      %p432 = por %p430, %p431
      %p433 = scmp.ne.s32.totalorder %s425, %s428
      %p434 = scmp.eq.s32.totalorder %s28, 0
      %p435 = por %p433, %p434
      %p436 = scmp.ne.s32.totalorder %s425, %s428
      %p437 = scmp.eq.s32.totalorder %s33, 7
      %p438 = por %p436, %p437
      %p439 = scmp.ne.s32.totalorder %s428, %s429
      %p440 = scmp.eq.s32.totalorder %s33, 0
      %p441 = por %p439, %p440
      %p442 = scmp.ne.s32.totalorder %s428, %s429
      %p443 = scmp.eq.s32.totalorder %s34, 7
      %p444 = por %p442, %p443
      %p446 = scmp.ne.s32.totalorder %s429, %s445
      %p447 = scmp.eq.s32.totalorder %s34, 0
      %p448 = por %p446, %p447
      %s449 = ssub.s32 %s35, %s47
      %p450 = scmp.eq.s32.totalorder %s449, 0
      %s452 = sadd.s32 %s451, 1
      %s453 = scalar_select %p450, %s451, %s452
      %p456 = pneg %p450
      %p457 = scmp.eq.s32.totalorder %s28, 7
      %p458 = por %p456, %p457
      %p459 = scmp.ne.s32.totalorder %s451, %s454
      %p460 = scmp.eq.s32.totalorder %s28, 0
      %p461 = por %p459, %p460
      %p462 = scmp.ne.s32.totalorder %s451, %s454
      %p463 = scmp.eq.s32.totalorder %s33, 7
      %p464 = por %p462, %p463
      %p465 = scmp.ne.s32.totalorder %s454, %s455
      %p466 = scmp.eq.s32.totalorder %s33, 0
      %p467 = por %p465, %p466
      %p468 = scmp.ne.s32.totalorder %s454, %s455
      %p469 = scmp.eq.s32.totalorder %s34, 7
      %p470 = por %p468, %p469
      %p472 = scmp.ne.s32.totalorder %s455, %s471
      %p473 = scmp.eq.s32.totalorder %s34, 0
      %p474 = por %p472, %p473
      %p475 = scmp.le.s32.totalorder 1, %s28
      %p476 = scmp.lt.s32.totalorder %s28, 9
      %p477 = pnand %p475, %p476
      %p478 = pneg %p477
      // Predicated region
      $region9: #{forward.2} parent=5 // pred_check
        _
      $region10: #{forward.2} parent=5 // pred_check_branch
        %480 = sbr.rel (%p477) target = $region12
      $region11: #{forward.2} parent=5 // pred_region
        %s481 = ssub.s32 %s28, 1
        // Predicated region
        $region13: #{forward.2} parent=11 // pred_check
          %p482 = pneg %p87
        $region14: #{forward.2} parent=11 // pred_check_branch
          %484 = sbr.rel (%p482) target = $region16
        $region15: #{forward.2} parent=11 // pred_region
          _
        $region16: #{forward.2} parent=11 // pred_fallthru
          _
        // Predicated region
        $region17: #{forward.2} parent=11 // pred_check
          %p485 = pneg %p108
        $region18: #{forward.2} parent=11 // pred_check_branch
          %487 = sbr.rel (%p485) target = $region20
        $region19: #{forward.2} parent=11 // pred_region
          _
        $region20: #{forward.2} parent=11 // pred_fallthru
          _
        // Predicated region
        $region21: #{forward.2} parent=11 // pred_check
          %p488 = pneg %p129
        $region22: #{forward.2} parent=11 // pred_check_branch
          %490 = sbr.rel (%p488) target = $region24
        $region23: #{forward.2} parent=11 // pred_region
          _
        $region24: #{forward.2} parent=11 // pred_fallthru
          _
      $region12: #{forward.2} parent=5 // pred_fallthru
        _
      %p491 = scmp.lt.s32.totalorder %s28, 8
      // Predicated region
      $region25: #{forward.2} parent=5 // pred_check
        %p492 = pneg %p491
      $region26: #{forward.2} parent=5 // pred_check_branch
        %494 = sbr.rel (%p492) target = $region28
      $region27: #{forward.2} parent=5 // pred_region
        // Predicated region
        $region29: #{forward.2} parent=27 // pred_check
          %p495 = pneg %p60
        $region30: #{forward.2} parent=27 // pred_check_branch
          %497 = sbr.rel (%p495) target = $region32
        $region31: #{forward.2} parent=27 // pred_region
          %p498 = scmp.lt.s32.totalorder %s35, 1
          %s499 = scalar_select %p498, %s35, 1
          %s500 = smul.addr %s499, 96
          %s501 = smul.addr %s500, 8
          %s502 = scalar_lea.vmem %s0, %s501
        $region32: #{forward.2} parent=27 // pred_fallthru
          _
        // Predicated region
        $region33: #{forward.2} parent=27 // pred_check
          %p503 = pneg %p149
        $region34: #{forward.2} parent=27 // pred_check_branch
          %505 = sbr.rel (%p503) target = $region36
        $region35: #{forward.2} parent=27 // pred_region
          %s506 = sand.u32 %s139, 1
          %s507 = scalar_lea.sflag [#allocation6], %s506
          %s508 = sand.u32 %s139, 1
          %s509 = smul.addr %s508, 768
          %s510 = scalar_lea.vmem [#allocation5], %s509
          %s512 = ssub.s32 12288, 12288
          %513 = vsyncadd %s507, %s512
          %s514 = smul.addr %s36, 192
          %s515 = smul.addr %s514, 64
          %s516 = scalar_lea.hbm %s4, %s515
          %s517 = sshll.u32 %s510, 4
          %s518 = int_to_ptr.vmem [resolvable:$true] %s517
          %523 = dma.hbm_to_vmem [thread:$0]  %s516, 12288, %s518, %s507, 384, 384, 24
        $region36: #{forward.2} parent=27 // pred_fallthru
          _
        // Predicated region
        $region37: #{forward.2} parent=27 // pred_check
          %p524 = pneg %p175
        $region38: #{forward.2} parent=27 // pred_check_branch
          %526 = sbr.rel (%p524) target = $region40
        $region39: #{forward.2} parent=27 // pred_region
          %p527 = scmp.lt.s32.totalorder %s36, 3
          %s528 = scalar_select %p527, %s36, 3
          %s529 = smul.addr %s528, 6
          %s530 = scalar_lea.vmem %s5, %s529
        $region40: #{forward.2} parent=27 // pred_fallthru
          _
        // Predicated region
        $region41: #{forward.2} parent=27 // pred_check
          %p531 = pneg %p201
        $region42: #{forward.2} parent=27 // pred_check_branch
          %533 = sbr.rel (%p531) target = $region44
        $region43: #{forward.2} parent=27 // pred_region
          %p534 = scmp.lt.s32.totalorder %s36, 3
          %s535 = scalar_select %p534, %s36, 3
          %s536 = smul.addr %s535, 64
          %s537 = smul.addr %s536, 4
          %s538 = scalar_lea.vmem %s6, %s537
        $region44: #{forward.2} parent=27 // pred_fallthru
          _
        // Predicated region
        $region45: #{forward.2} parent=27 // pred_check
          %p539 = pneg %p227
        $region46: #{forward.2} parent=27 // pred_check_branch
          %541 = sbr.rel (%p539) target = $region48
        $region47: #{forward.2} parent=27 // pred_region
          %p542 = scmp.lt.s32.totalorder %s36, 3
          %s543 = scalar_select %p542, %s36, 3
          %s544 = smul.addr %s543, 2
          %s545 = scalar_lea.vmem %s7, %s544
        $region48: #{forward.2} parent=27 // pred_fallthru
          _
        // Predicated region
        $region49: #{forward.2} parent=27 // pred_check
          %p546 = pneg %p253
        $region50: #{forward.2} parent=27 // pred_check_branch
          %548 = sbr.rel (%p546) target = $region52
        $region51: #{forward.2} parent=27 // pred_region
          %p549 = scmp.lt.s32.totalorder %s36, 3
          %s550 = scalar_select %p549, %s36, 3
          %s551 = smul.addr %s550, 2
          %s552 = scalar_lea.vmem %s8, %s551
        $region52: #{forward.2} parent=27 // pred_fallthru
          _
        // Predicated region
        $region53: #{forward.2} parent=27 // pred_check
          %p553 = pneg %p279
        $region54: #{forward.2} parent=27 // pred_check_branch
          %555 = sbr.rel (%p553) target = $region56
        $region55: #{forward.2} parent=27 // pred_region
          %p556 = scmp.lt.s32.totalorder %s36, 3
          %s557 = scalar_select %p556, %s36, 3
          %s558 = smul.addr %s557, 2
          %s559 = scalar_lea.vmem %s9, %s558
        $region56: #{forward.2} parent=27 // pred_fallthru
          _
        // Predicated region
        $region57: #{forward.2} parent=27 // pred_check
          %p560 = pneg %p305
        $region58: #{forward.2} parent=27 // pred_check_branch
          %562 = sbr.rel (%p560) target = $region60
        $region59: #{forward.2} parent=27 // pred_region
          %p563 = scmp.lt.s32.totalorder %s36, 3
          %s564 = scalar_select %p563, %s36, 3
          %s565 = smul.addr %s564, 256
          %s566 = smul.addr %s565, 4
          %s567 = scalar_lea.vmem %s10, %s566
        $region60: #{forward.2} parent=27 // pred_fallthru
          _
        // Predicated region
        $region61: #{forward.2} parent=27 // pred_check
          %p568 = pneg %p331
        $region62: #{forward.2} parent=27 // pred_check_branch
          %570 = sbr.rel (%p568) target = $region64
        $region63: #{forward.2} parent=27 // pred_region
          %p571 = scmp.lt.s32.totalorder %s36, 3
          %s572 = scalar_select %p571, %s36, 3
          %s573 = smul.addr %s572, 8
          %s574 = scalar_lea.vmem %s11, %s573
        $region64: #{forward.2} parent=27 // pred_fallthru
          _
        // Predicated region
        $region65: #{forward.2} parent=27 // pred_check
          %p575 = pneg %p357
        $region66: #{forward.2} parent=27 // pred_check_branch
          %577 = sbr.rel (%p575) target = $region68
        $region67: #{forward.2} parent=27 // pred_region
          %s578 = sand.u32 %s28, 1
          %s579 = scalar_lea.sflag [#allocation8], %s578
          %s580 = sand.u32 %s347, 1
          %s581 = smul.addr %s580, 1024
          %s582 = scalar_lea.vmem [#allocation7], %s581
          %s584 = ssub.s32 16384, 16384
          %585 = vsyncadd %s579, %s584
          %s586 = smul.addr %s36, 256
          %s587 = smul.addr %s586, 64
          %s588 = scalar_lea.hbm %s12, %s587
          %s589 = sshll.u32 %s582, 4
          %s590 = int_to_ptr.vmem [resolvable:$true] %s589
          %595 = dma.hbm_to_vmem [thread:$0]  %s588, 16384, %s590, %s579, 128, 128, 8
        $region68: #{forward.2} parent=27 // pred_fallthru
          _
        // Predicated region
        $region69: #{forward.2} parent=27 // pred_check
          %p596 = pneg %p383
        $region70: #{forward.2} parent=27 // pred_check_branch
          %598 = sbr.rel (%p596) target = $region72
        $region71: #{forward.2} parent=27 // pred_region
          %p599 = scmp.lt.s32.totalorder %s36, 3
          %s600 = scalar_select %p599, %s36, 3
          %s601 = smul.addr %s600, 2
          %s602 = scalar_lea.vmem %s13, %s601
        $region72: #{forward.2} parent=27 // pred_fallthru
          _
        // Predicated region
        $region73: #{forward.2} parent=27 // pred_check
          %p603 = pneg %p409
        $region74: #{forward.2} parent=27 // pred_check_branch
          %605 = sbr.rel (%p603) target = $region76
        $region75: #{forward.2} parent=27 // pred_region
          %p606 = scmp.lt.s32.totalorder %s36, 3
          %s607 = scalar_select %p606, %s36, 3
          %s608 = smul.addr %s607, 2
          %s609 = scalar_lea.vmem %s14, %s608
        $region76: #{forward.2} parent=27 // pred_fallthru
          _
        // Predicated region
        $region77: #{forward.2} parent=27 // pred_check
          %p610 = pneg %p435
        $region78: #{forward.2} parent=27 // pred_check_branch
          %612 = sbr.rel (%p610) target = $region80
        $region79: #{forward.2} parent=27 // pred_region
          %s613 = sand.u32 %s28, 1
          %s614 = scalar_lea.sflag [#allocation8], %s613
          %s615 = sand.u32 %s425, 1
          %s616 = smul.addr %s615, 2
          %s617 = scalar_lea.vmem [#allocation9], %s616
          %s619 = ssub.s32 32, 32
          %620 = vsyncadd %s614, %s619
          %s621 = smul.addr %s36, 2
          %s622 = smul.addr %s621, 16
          %s623 = scalar_lea.hbm %s15, %s622
          %s625 = sshll.u32 %s617, 4
          %s626 = int_to_ptr.vmem [resolvable:$true] %s625
          %628 = dma.hbm_to_vmem [thread:$0]  %s623, 32, %s626, %s614
        $region80: #{forward.2} parent=27 // pred_fallthru
          _
      $region28: #{forward.2} parent=5 // pred_fallthru
        _
      %p629 = scmp.le.s32.totalorder 1, %s28
      %p630 = scmp.lt.s32.totalorder %s28, 9
      %p631 = pnand %p629, %p630
      %p632 = pneg %p631
      // Predicated region
      $region81: #{forward.2} parent=5 // pred_check
        _
      $region82: #{forward.2} parent=5 // pred_check_branch
        %634 = sbr.rel (%p631) target = $region84
      $region83: #{forward.2} parent=5 // pred_region
        %s635 = ssub.s32 %s28, 1
        %s636 = sand.u32 %s142, 1
        %s637 = scalar_lea.sflag [#allocation6], %s636
        %s638 = sand.u32 %s142, 1
        %s639 = smul.addr %s638, 768
        %s640 = scalar_lea.vmem [#allocation5], %s639
        // Predicated region
        $region85: #{forward.2} parent=83 // pred_check
          %p641 = pneg %p155
        $region86: #{forward.2} parent=83 // pred_check_branch
          %643 = sbr.rel (%p641) target = $region88
        $region87: #{forward.2} parent=83 // pred_region
          %644 = dma.done %s637, 12288
        $region88: #{forward.2} parent=83 // pred_fallthru
          _
        %s645 = sand.u32 %s33, 1
        %s646 = scalar_lea.sflag [#allocation8], %s645
        %s647 = sand.u32 %s350, 1
        %s648 = smul.addr %s647, 1024
        %s649 = scalar_lea.vmem [#allocation7], %s648
        // Predicated region
        $region89: #{forward.2} parent=83 // pred_check
          %p650 = pneg %p363
        $region90: #{forward.2} parent=83 // pred_check_branch
          %652 = sbr.rel (%p650) target = $region92
        $region91: #{forward.2} parent=83 // pred_region
          %653 = dma.done %s646, 16384
        $region92: #{forward.2} parent=83 // pred_fallthru
          _
        %s654 = sand.u32 %s33, 1
        %s655 = scalar_lea.sflag [#allocation8], %s654
        %s656 = sand.u32 %s428, 1
        %s657 = smul.addr %s656, 2
        %s658 = scalar_lea.vmem [#allocation9], %s657
        // Predicated region
        $region93: #{forward.2} parent=83 // pred_check
          %p659 = pneg %p441
        $region94: #{forward.2} parent=83 // pred_check_branch
          %661 = sbr.rel (%p659) target = $region96
        $region95: #{forward.2} parent=83 // pred_region
          %662 = dma.done %s655, 32
        $region96: #{forward.2} parent=83 // pred_fallthru
          _
        %p663 = scmp.lt.s32.totalorder %s37, 1
        %s664 = scalar_select %p663, %s37, 1
        %s665 = smul.addr %s664, 96
        %s666 = smul.addr %s665, 8
        %s667 = scalar_lea.vmem %s0, %s666
        %p668 = pneg %p66
        %p669 = pneg %p63
        %p670 = pneg %p87
        %p671 = pneg %p84
        %p672 = pneg %p108
        %p673 = pneg %p105
        %p674 = pneg %p129
        %p675 = pneg %p126
        %s676 = sand.u32 %s142, 1
        %s677 = scalar_lea.sflag [#allocation6], %s676
        %s678 = sand.u32 %s142, 1
        %s679 = smul.addr %s678, 768
        %s680 = scalar_lea.vmem [#allocation5], %s679
        %p681 = pneg %p155
        %p682 = pneg %p152
        %p683 = scmp.lt.s32.totalorder %s38, 3
        %s684 = scalar_select %p683, %s38, 3
        %s685 = smul.addr %s684, 6
        %s686 = scalar_lea.vmem %s5, %s685
        %p687 = pneg %p181
        %p688 = pneg %p178
        %p689 = scmp.lt.s32.totalorder %s38, 3
        %s690 = scalar_select %p689, %s38, 3
        %s691 = smul.addr %s690, 64
        %s692 = smul.addr %s691, 4
        %s693 = scalar_lea.vmem %s6, %s692
        %p694 = pneg %p207
        %p695 = pneg %p204
        %p696 = scmp.lt.s32.totalorder %s38, 3
        %s697 = scalar_select %p696, %s38, 3
        %s698 = smul.addr %s697, 2
        %s699 = scalar_lea.vmem %s7, %s698
        %p700 = pneg %p233
        %p701 = pneg %p230
        %p702 = scmp.lt.s32.totalorder %s38, 3
        %s703 = scalar_select %p702, %s38, 3
        %s704 = smul.addr %s703, 2
        %s705 = scalar_lea.vmem %s8, %s704
        %p706 = pneg %p259
        %p707 = pneg %p256
        %p708 = scmp.lt.s32.totalorder %s38, 3
        %s709 = scalar_select %p708, %s38, 3
        %s710 = smul.addr %s709, 2
        %s711 = scalar_lea.vmem %s9, %s710
        %p712 = pneg %p285
        %p713 = pneg %p282
        %p714 = scmp.lt.s32.totalorder %s38, 3
        %s715 = scalar_select %p714, %s38, 3
        %s716 = smul.addr %s715, 256
        %s717 = smul.addr %s716, 4
        %s718 = scalar_lea.vmem %s10, %s717
        %p719 = pneg %p311
        %p720 = pneg %p308
        %p721 = scmp.lt.s32.totalorder %s38, 3
        %s722 = scalar_select %p721, %s38, 3
        %s723 = smul.addr %s722, 8
        %s724 = scalar_lea.vmem %s11, %s723
        %p725 = pneg %p337
        %p726 = pneg %p334
        %s727 = sand.u32 %s33, 1
        %s728 = scalar_lea.sflag [#allocation8], %s727
        %s729 = sand.u32 %s350, 1
        %s730 = smul.addr %s729, 1024
        %s731 = scalar_lea.vmem [#allocation7], %s730
        %p732 = pneg %p363
        %p733 = pneg %p360
        %p734 = scmp.lt.s32.totalorder %s38, 3
        %s735 = scalar_select %p734, %s38, 3
        %s736 = smul.addr %s735, 2
        %s737 = scalar_lea.vmem %s13, %s736
        %p738 = pneg %p389
        %p739 = pneg %p386
        %p740 = scmp.lt.s32.totalorder %s38, 3
        %s741 = scalar_select %p740, %s38, 3
        %s742 = smul.addr %s741, 2
        %s743 = scalar_lea.vmem %s14, %s742
        %p744 = pneg %p415
        %p745 = pneg %p412
        %s746 = sand.u32 %s33, 1
        %s747 = scalar_lea.sflag [#allocation8], %s746
        %s748 = sand.u32 %s428, 1
        %s749 = smul.addr %s748, 2
        %s750 = scalar_lea.vmem [#allocation9], %s749
        %p751 = pneg %p441
        %p752 = pneg %p438
        %p753 = pneg %p467
        %p754 = pneg %p464
        %p755 = scmp.lt.s32.totalorder %s37, 1
        %s756 = scalar_select %p755, %s37, 1
        %s757 = smul.addr %s756, 32
        %s758 = smul.addr %s757, 4
        %s759 = scalar_lea.vmem %s16, %s758
        %p760 = scmp.lt.s32.totalorder %s37, 1
        %s761 = scalar_select %p760, %s37, 1
        %s762 = smul.addr %s761, 96
        %s763 = smul.addr %s762, 8
        %s764 = scalar_lea.vmem %s0, %s763
        %p765 = scmp.lt.s32.totalorder %s38, 3
        %s766 = scalar_select %p765, %s38, 3
        %s767 = smul.addr %s766, 6
        %s768 = scalar_lea.vmem %s5, %s767
        %p769 = scmp.lt.s32.totalorder %s38, 3
        %s770 = scalar_select %p769, %s38, 3
        %s771 = smul.addr %s770, 64
        %s772 = smul.addr %s771, 4
        %s773 = scalar_lea.vmem %s6, %s772
        %p774 = scmp.lt.s32.totalorder %s38, 3
        %s775 = scalar_select %p774, %s38, 3
        %s776 = smul.addr %s775, 2
        %s777 = scalar_lea.vmem %s7, %s776
        %p778 = scmp.lt.s32.totalorder %s38, 3
        %s779 = scalar_select %p778, %s38, 3
        %s780 = smul.addr %s779, 2
        %s781 = scalar_lea.vmem %s8, %s780
        %p782 = scmp.lt.s32.totalorder %s38, 3
        %s783 = scalar_select %p782, %s38, 3
        %s784 = smul.addr %s783, 2
        %s785 = scalar_lea.vmem %s9, %s784
        %p786 = scmp.lt.s32.totalorder %s38, 3
        %s787 = scalar_select %p786, %s38, 3
        %s788 = smul.addr %s787, 256
        %s789 = smul.addr %s788, 4
        %s790 = scalar_lea.vmem %s10, %s789
        %p791 = scmp.lt.s32.totalorder %s38, 3
        %s792 = scalar_select %p791, %s38, 3
        %s793 = smul.addr %s792, 8
        %s794 = scalar_lea.vmem %s11, %s793
        %p795 = scmp.lt.s32.totalorder %s38, 3
        %s796 = scalar_select %p795, %s38, 3
        %s797 = smul.addr %s796, 2
        %s798 = scalar_lea.vmem %s13, %s797
        %p799 = scmp.lt.s32.totalorder %s38, 3
        %s800 = scalar_select %p799, %s38, 3
        %s801 = smul.addr %s800, 2
        %s802 = scalar_lea.vmem %s14, %s801
        %p803 = scmp.lt.s32.totalorder %s37, 1
        %s804 = scalar_select %p803, %s37, 1
        %s805 = smul.addr %s804, 32
        %s806 = smul.addr %s805, 4
        %s807 = scalar_lea.vmem %s16, %s806
        %p809 = scmp.eq.s32.totalorder %s38, 0
        // Predicated region
        $region97: #{forward.2} parent=83 // pred_check
          %p810 = pneg %p809
        $region98: #{forward.2} parent=83 // pred_check_branch
          %812 = sbr.rel (%p810) target = $region100
        $region99: #{forward.2} parent=83 // pred_region
          %s813 = smul.u32 0, 6
          %s814 = smul.addr %s813, 8
          %s815 = scalar_lea.vmem %s764, %s814
          %v816 = vld [vmem:[%s815] sm:$0xff]
          %v817 = vld [vmem:[%s815 + $0x8] sm:$0xff]
          %v818 = vld [vmem:[%s815 + $0x10] sm:$0xff]
          %v819 = vld [vmem:[%s815 + $0x18] sm:$0xff]
          %v820 = vld [vmem:[%s815 + $0x20] sm:$0xff]
          %v821 = vld [vmem:[%s815 + $0x28] sm:$0xff]
          %v822 = vld [vmem:[%s815 + $0x30] sm:$0xff]
          %v823 = vld [vmem:[%s815 + $0x38] sm:$0xff]
          %v824 = vld [vmem:[%s815 + $0x40] sm:$0xff]
          %v825 = vld [vmem:[%s815 + $0x48] sm:$0xff]
          %v826 = vld [vmem:[%s815 + $0x50] sm:$0xff]
          %v827 = vld [vmem:[%s815 + $0x58] sm:$0xff]
          %v828 = vld [vmem:[%s815 + $0x60] sm:$0xff]
          %v829 = vld [vmem:[%s815 + $0x68] sm:$0xff]
          %v830 = vld [vmem:[%s815 + $0x70] sm:$0xff]
          %v831 = vld [vmem:[%s815 + $0x78] sm:$0xff]
          %v832 = vld [vmem:[%s815 + $0x80] sm:$0xff]
          %v833 = vld [vmem:[%s815 + $0x88] sm:$0xff]
          %v834 = vld [vmem:[%s815 + $0x90] sm:$0xff]
          %v835 = vld [vmem:[%s815 + $0x98] sm:$0xff]
          %v836 = vld [vmem:[%s815 + $0xa0] sm:$0xff]
          %v837 = vld [vmem:[%s815 + $0xa8] sm:$0xff]
          %v838 = vld [vmem:[%s815 + $0xb0] sm:$0xff]
          %v839 = vld [vmem:[%s815 + $0xb8] sm:$0xff]
          %v840 = vld [vmem:[%s815 + $0xc0] sm:$0xff]
          %v841 = vld [vmem:[%s815 + $0xc8] sm:$0xff]
          %v842 = vld [vmem:[%s815 + $0xd0] sm:$0xff]
          %v843 = vld [vmem:[%s815 + $0xd8] sm:$0xff]
          %v844 = vld [vmem:[%s815 + $0xe0] sm:$0xff]
          %v845 = vld [vmem:[%s815 + $0xe8] sm:$0xff]
          %v846 = vld [vmem:[%s815 + $0xf0] sm:$0xff]
          %v847 = vld [vmem:[%s815 + $0xf8] sm:$0xff]
          %v848 = vld [vmem:[%s815 + $0x100] sm:$0xff]
          %v849 = vld [vmem:[%s815 + $0x108] sm:$0xff]
          %v850 = vld [vmem:[%s815 + $0x110] sm:$0xff]
          %v851 = vld [vmem:[%s815 + $0x118] sm:$0xff]
          %v852 = vld [vmem:[%s815 + $0x120] sm:$0xff]
          %v853 = vld [vmem:[%s815 + $0x128] sm:$0xff]
          %v854 = vld [vmem:[%s815 + $0x130] sm:$0xff]
          %v855 = vld [vmem:[%s815 + $0x138] sm:$0xff]
          %v856 = vld [vmem:[%s815 + $0x140] sm:$0xff]
          %v857 = vld [vmem:[%s815 + $0x148] sm:$0xff]
          %v858 = vld [vmem:[%s815 + $0x150] sm:$0xff]
          %v859 = vld [vmem:[%s815 + $0x158] sm:$0xff]
          %v860 = vld [vmem:[%s815 + $0x160] sm:$0xff]
          %v861 = vld [vmem:[%s815 + $0x168] sm:$0xff]
          %v862 = vld [vmem:[%s815 + $0x170] sm:$0xff]
          %v863 = vld [vmem:[%s815 + $0x178] sm:$0xff]
          %v864 = vld [vmem:[%s815 + $0x180] sm:$0xff]
          %v865 = vld [vmem:[%s815 + $0x188] sm:$0xff]
          %v866 = vld [vmem:[%s815 + $0x190] sm:$0xff]
          %v867 = vld [vmem:[%s815 + $0x198] sm:$0xff]
          %v868 = vld [vmem:[%s815 + $0x1a0] sm:$0xff]
          %v869 = vld [vmem:[%s815 + $0x1a8] sm:$0xff]
          %v870 = vld [vmem:[%s815 + $0x1b0] sm:$0xff]
          %v871 = vld [vmem:[%s815 + $0x1b8] sm:$0xff]
          %v872 = vld [vmem:[%s815 + $0x1c0] sm:$0xff]
          %v873 = vld [vmem:[%s815 + $0x1c8] sm:$0xff]
          %v874 = vld [vmem:[%s815 + $0x1d0] sm:$0xff]
          %v875 = vld [vmem:[%s815 + $0x1d8] sm:$0xff]
          %v876 = vld [vmem:[%s815 + $0x1e0] sm:$0xff]
          %v877 = vld [vmem:[%s815 + $0x1e8] sm:$0xff]
          %v878 = vld [vmem:[%s815 + $0x1f0] sm:$0xff]
          %v879 = vld [vmem:[%s815 + $0x1f8] sm:$0xff]
          %v880 = vld [vmem:[%s815 + $0x200] sm:$0xff]
          %v881 = vld [vmem:[%s815 + $0x208] sm:$0xff]
          %v882 = vld [vmem:[%s815 + $0x210] sm:$0xff]
          %v883 = vld [vmem:[%s815 + $0x218] sm:$0xff]
          %v884 = vld [vmem:[%s815 + $0x220] sm:$0xff]
          %v885 = vld [vmem:[%s815 + $0x228] sm:$0xff]
          %v886 = vld [vmem:[%s815 + $0x230] sm:$0xff]
          %v887 = vld [vmem:[%s815 + $0x238] sm:$0xff]
          %v888 = vld [vmem:[%s815 + $0x240] sm:$0xff]
          %v889 = vld [vmem:[%s815 + $0x248] sm:$0xff]
          %v890 = vld [vmem:[%s815 + $0x250] sm:$0xff]
          %v891 = vld [vmem:[%s815 + $0x258] sm:$0xff]
          %v892 = vld [vmem:[%s815 + $0x260] sm:$0xff]
          %v893 = vld [vmem:[%s815 + $0x268] sm:$0xff]
          %v894 = vld [vmem:[%s815 + $0x270] sm:$0xff]
          %v895 = vld [vmem:[%s815 + $0x278] sm:$0xff]
          %v896 = vld [vmem:[%s815 + $0x280] sm:$0xff]
          %v897 = vld [vmem:[%s815 + $0x288] sm:$0xff]
          %v898 = vld [vmem:[%s815 + $0x290] sm:$0xff]
          %v899 = vld [vmem:[%s815 + $0x298] sm:$0xff]
          %v900 = vld [vmem:[%s815 + $0x2a0] sm:$0xff]
          %v901 = vld [vmem:[%s815 + $0x2a8] sm:$0xff]
          %v902 = vld [vmem:[%s815 + $0x2b0] sm:$0xff]
          %v903 = vld [vmem:[%s815 + $0x2b8] sm:$0xff]
          %v904 = vld [vmem:[%s815 + $0x2c0] sm:$0xff]
          %v905 = vld [vmem:[%s815 + $0x2c8] sm:$0xff]
          %v906 = vld [vmem:[%s815 + $0x2d0] sm:$0xff]
          %v907 = vld [vmem:[%s815 + $0x2d8] sm:$0xff]
          %v908 = vld [vmem:[%s815 + $0x2e0] sm:$0xff]
          %v909 = vld [vmem:[%s815 + $0x2e8] sm:$0xff]
          %v910 = vld [vmem:[%s815 + $0x2f0] sm:$0xff]
          %v911 = vld [vmem:[%s815 + $0x2f8] sm:$0xff]
          %v912 = vpack.c.bf16 %v822, %v816
          %v913 = vpack.c.bf16 %v823, %v817
          %v914 = vpack.c.bf16 %v824, %v818
          %v915 = vpack.c.bf16 %v825, %v819
          %v916 = vpack.c.bf16 %v826, %v820
          %v917 = vpack.c.bf16 %v827, %v821
          %v918 = vpack.c.bf16 %v834, %v828
          %v919 = vpack.c.bf16 %v835, %v829
          %v920 = vpack.c.bf16 %v836, %v830
          %v921 = vpack.c.bf16 %v837, %v831
          %v922 = vpack.c.bf16 %v838, %v832
          %v923 = vpack.c.bf16 %v839, %v833
          %v924 = vpack.c.bf16 %v846, %v840
          %v925 = vpack.c.bf16 %v847, %v841
          %v926 = vpack.c.bf16 %v848, %v842
          %v927 = vpack.c.bf16 %v849, %v843
          %v928 = vpack.c.bf16 %v850, %v844
          %v929 = vpack.c.bf16 %v851, %v845
          %v930 = vpack.c.bf16 %v858, %v852
          %v931 = vpack.c.bf16 %v859, %v853
          %v932 = vpack.c.bf16 %v860, %v854
          %v933 = vpack.c.bf16 %v861, %v855
          %v934 = vpack.c.bf16 %v862, %v856
          %v935 = vpack.c.bf16 %v863, %v857
          %v936 = vpack.c.bf16 %v870, %v864
          %v937 = vpack.c.bf16 %v871, %v865
          %v938 = vpack.c.bf16 %v872, %v866
          %v939 = vpack.c.bf16 %v873, %v867
          %v940 = vpack.c.bf16 %v874, %v868
          %v941 = vpack.c.bf16 %v875, %v869
          %v942 = vpack.c.bf16 %v882, %v876
          %v943 = vpack.c.bf16 %v883, %v877
          %v944 = vpack.c.bf16 %v884, %v878
          %v945 = vpack.c.bf16 %v885, %v879
          %v946 = vpack.c.bf16 %v886, %v880
          %v947 = vpack.c.bf16 %v887, %v881
          %v948 = vpack.c.bf16 %v894, %v888
          %v949 = vpack.c.bf16 %v895, %v889
          %v950 = vpack.c.bf16 %v896, %v890
          %v951 = vpack.c.bf16 %v897, %v891
          %v952 = vpack.c.bf16 %v898, %v892
          %v953 = vpack.c.bf16 %v899, %v893
          %v954 = vpack.c.bf16 %v906, %v900
          %v955 = vpack.c.bf16 %v907, %v901
          %v956 = vpack.c.bf16 %v908, %v902
          %v957 = vpack.c.bf16 %v909, %v903
          %v958 = vpack.c.bf16 %v910, %v904
          %v959 = vpack.c.bf16 %v911, %v905
          %v960 = vld [vmem:[%s1] sm:$0xff]
          %v961 = vld [vmem:[%s1 + $0x8] sm:$0xff]
          %v962 = vld [vmem:[%s1 + $0x10] sm:$0xff]
          %v963 = vld [vmem:[%s1 + $0x18] sm:$0xff]
          %v964 = vld [vmem:[%s1 + $0x20] sm:$0xff]
          %v965 = vld [vmem:[%s1 + $0x28] sm:$0xff]
          %v966 = vld [vmem:[%s1 + $0x30] sm:$0xff]
          %v967 = vld [vmem:[%s1 + $0x38] sm:$0xff]
          %v968 = vld [vmem:[%s1 + $0x40] sm:$0xff]
          %v969 = vld [vmem:[%s1 + $0x48] sm:$0xff]
          %v970 = vld [vmem:[%s1 + $0x50] sm:$0xff]
          %v971 = vld [vmem:[%s1 + $0x58] sm:$0xff]
          %v972 = vld [vmem:[%s1 + $0x60] sm:$0xff]
          %v973 = vld [vmem:[%s1 + $0x68] sm:$0xff]
          %v974 = vld [vmem:[%s1 + $0x70] sm:$0xff]
          %v975 = vld [vmem:[%s1 + $0x78] sm:$0xff]
          %v976 = vld [vmem:[%s1 + $0x80] sm:$0xff]
          %v977 = vld [vmem:[%s1 + $0x88] sm:$0xff]
          %v978 = vld [vmem:[%s1 + $0x90] sm:$0xff]
          %v979 = vld [vmem:[%s1 + $0x98] sm:$0xff]
          %v980 = vld [vmem:[%s1 + $0xa0] sm:$0xff]
          %v981 = vld [vmem:[%s1 + $0xa8] sm:$0xff]
          %v982 = vld [vmem:[%s1 + $0xb0] sm:$0xff]
          %v983 = vld [vmem:[%s1 + $0xb8] sm:$0xff]
          %v984 = vld [vmem:[%s1 + $0xc0] sm:$0xff]
          %v985 = vld [vmem:[%s1 + $0xc8] sm:$0xff]
          %v986 = vld [vmem:[%s1 + $0xd0] sm:$0xff]
          %v987 = vld [vmem:[%s1 + $0xd8] sm:$0xff]
          %v988 = vld [vmem:[%s1 + $0xe0] sm:$0xff]
          %v989 = vld [vmem:[%s1 + $0xe8] sm:$0xff]
          %v990 = vld [vmem:[%s1 + $0xf0] sm:$0xff]
          %v991 = vld [vmem:[%s1 + $0xf8] sm:$0xff]
          %v992 = vld [vmem:[%s1 + $0x100] sm:$0xff]
          %v993 = vld [vmem:[%s1 + $0x108] sm:$0xff]
          %v994 = vld [vmem:[%s1 + $0x110] sm:$0xff]
          %v995 = vld [vmem:[%s1 + $0x118] sm:$0xff]
          %v996 = vld [vmem:[%s1 + $0x120] sm:$0xff]
          %v997 = vld [vmem:[%s1 + $0x128] sm:$0xff]
          %v998 = vld [vmem:[%s1 + $0x130] sm:$0xff]
          %v999 = vld [vmem:[%s1 + $0x138] sm:$0xff]
          %v1000 = vld [vmem:[%s1 + $0x140] sm:$0xff]
          %v1001 = vld [vmem:[%s1 + $0x148] sm:$0xff]
          %v1002 = vld [vmem:[%s1 + $0x150] sm:$0xff]
          %v1003 = vld [vmem:[%s1 + $0x158] sm:$0xff]
          %v1004 = vld [vmem:[%s1 + $0x160] sm:$0xff]
          %v1005 = vld [vmem:[%s1 + $0x168] sm:$0xff]
          %v1006 = vld [vmem:[%s1 + $0x170] sm:$0xff]
          %v1007 = vld [vmem:[%s1 + $0x178] sm:$0xff]
          %v1008 = vld [vmem:[%s1 + $0x180] sm:$0xff]
          %v1009 = vld [vmem:[%s1 + $0x188] sm:$0xff]
          %v1010 = vld [vmem:[%s1 + $0x190] sm:$0xff]
          %v1011 = vld [vmem:[%s1 + $0x198] sm:$0xff]
          %v1012 = vld [vmem:[%s1 + $0x1a0] sm:$0xff]
          %v1013 = vld [vmem:[%s1 + $0x1a8] sm:$0xff]
          %v1014 = vld [vmem:[%s1 + $0x1b0] sm:$0xff]
          %v1015 = vld [vmem:[%s1 + $0x1b8] sm:$0xff]
          %v1016 = vld [vmem:[%s1 + $0x1c0] sm:$0xff]
          %v1017 = vld [vmem:[%s1 + $0x1c8] sm:$0xff]
          %v1018 = vld [vmem:[%s1 + $0x1d0] sm:$0xff]
          %v1019 = vld [vmem:[%s1 + $0x1d8] sm:$0xff]
          %v1020 = vld [vmem:[%s1 + $0x1e0] sm:$0xff]
          %v1021 = vld [vmem:[%s1 + $0x1e8] sm:$0xff]
          %v1022 = vld [vmem:[%s1 + $0x1f0] sm:$0xff]
          %v1023 = vld [vmem:[%s1 + $0x1f8] sm:$0xff]
          %v1024 = vld [vmem:[%s1 + $0x200] sm:$0xff]
          %v1025 = vld [vmem:[%s1 + $0x208] sm:$0xff]
          %v1026 = vld [vmem:[%s1 + $0x210] sm:$0xff]
          %v1027 = vld [vmem:[%s1 + $0x218] sm:$0xff]
          %v1028 = vld [vmem:[%s1 + $0x220] sm:$0xff]
          %v1029 = vld [vmem:[%s1 + $0x228] sm:$0xff]
          %v1030 = vld [vmem:[%s1 + $0x230] sm:$0xff]
          %v1031 = vld [vmem:[%s1 + $0x238] sm:$0xff]
          %v1032 = vld [vmem:[%s1 + $0x240] sm:$0xff]
          %v1033 = vld [vmem:[%s1 + $0x248] sm:$0xff]
          %v1034 = vld [vmem:[%s1 + $0x250] sm:$0xff]
          %v1035 = vld [vmem:[%s1 + $0x258] sm:$0xff]
          %v1036 = vld [vmem:[%s1 + $0x260] sm:$0xff]
          %v1037 = vld [vmem:[%s1 + $0x268] sm:$0xff]
          %v1038 = vld [vmem:[%s1 + $0x270] sm:$0xff]
          %v1039 = vld [vmem:[%s1 + $0x278] sm:$0xff]
          %v1040 = vld [vmem:[%s1 + $0x280] sm:$0xff]
          %v1041 = vld [vmem:[%s1 + $0x288] sm:$0xff]
          %v1042 = vld [vmem:[%s1 + $0x290] sm:$0xff]
          %v1043 = vld [vmem:[%s1 + $0x298] sm:$0xff]
          %v1044 = vld [vmem:[%s1 + $0x2a0] sm:$0xff]
          %v1045 = vld [vmem:[%s1 + $0x2a8] sm:$0xff]
          %v1046 = vld [vmem:[%s1 + $0x2b0] sm:$0xff]
          %v1047 = vld [vmem:[%s1 + $0x2b8] sm:$0xff]
          %v1048 = vld [vmem:[%s1 + $0x2c0] sm:$0xff]
          %v1049 = vld [vmem:[%s1 + $0x2c8] sm:$0xff]
          %v1050 = vld [vmem:[%s1 + $0x2d0] sm:$0xff]
          %v1051 = vld [vmem:[%s1 + $0x2d8] sm:$0xff]
          %v1052 = vld [vmem:[%s1 + $0x2e0] sm:$0xff]
          %v1053 = vld [vmem:[%s1 + $0x2e8] sm:$0xff]
          %v1054 = vld [vmem:[%s1 + $0x2f0] sm:$0xff]
          %v1055 = vld [vmem:[%s1 + $0x2f8] sm:$0xff]
          %v1056 = vld [vmem:[%s2] sm:$0x3]
          %v1058 = vlaneseq
          %v1059 = vshrl.u32 %v1058, 7
          %v1060 = vsub.s32 0, %v1059
          %v1061 = vrot.slane %v1056, %v1060
          %v1062 = vlaneseq
          %v1063 = vshrl.u32 %v1062, 7
          %v1064 = vsub.s32 1, %v1063
          %v1065 = vrot.slane %v1056, %v1064
          %v1164 = vunpack.c.l.b16 %v960
          %v1165 = vunpack.c.h.b16 %v960
          %v1166 = vunpack.c.l.b16 %v961
          %v1167 = vunpack.c.h.b16 %v961
          %v1168 = vunpack.c.l.b16 %v962
          %v1169 = vunpack.c.h.b16 %v962
          %v1170 = vunpack.c.l.b16 %v963
          %v1171 = vunpack.c.h.b16 %v963
          %v1172 = vunpack.c.l.b16 %v964
          %v1173 = vunpack.c.h.b16 %v964
          %v1174 = vunpack.c.l.b16 %v965
          %v1175 = vunpack.c.h.b16 %v965
          %v1176 = vunpack.c.l.b16 %v966
          %v1177 = vunpack.c.h.b16 %v966
          %v1178 = vunpack.c.l.b16 %v967
          %v1179 = vunpack.c.h.b16 %v967
          %v1180 = vunpack.c.l.b16 %v968
          %v1181 = vunpack.c.h.b16 %v968
          %v1182 = vunpack.c.l.b16 %v969
          %v1183 = vunpack.c.h.b16 %v969
          %v1184 = vunpack.c.l.b16 %v970
          %v1185 = vunpack.c.h.b16 %v970
          %v1186 = vunpack.c.l.b16 %v971
          %v1187 = vunpack.c.h.b16 %v971
          %v1188 = vunpack.c.l.b16 %v972
          %v1189 = vunpack.c.h.b16 %v972
          %v1190 = vunpack.c.l.b16 %v973
          %v1191 = vunpack.c.h.b16 %v973
          %v1192 = vunpack.c.l.b16 %v974
          %v1193 = vunpack.c.h.b16 %v974
          %v1194 = vunpack.c.l.b16 %v975
          %v1195 = vunpack.c.h.b16 %v975
          %v1196 = vunpack.c.l.b16 %v976
          %v1197 = vunpack.c.h.b16 %v976
          %v1198 = vunpack.c.l.b16 %v977
          %v1199 = vunpack.c.h.b16 %v977
          %v1200 = vunpack.c.l.b16 %v978
          %v1201 = vunpack.c.h.b16 %v978
          %v1202 = vunpack.c.l.b16 %v979
          %v1203 = vunpack.c.h.b16 %v979
          %v1204 = vunpack.c.l.b16 %v980
          %v1205 = vunpack.c.h.b16 %v980
          %v1206 = vunpack.c.l.b16 %v981
          %v1207 = vunpack.c.h.b16 %v981
          %v1208 = vunpack.c.l.b16 %v982
          %v1209 = vunpack.c.h.b16 %v982
          %v1210 = vunpack.c.l.b16 %v983
          %v1211 = vunpack.c.h.b16 %v983
          %v1212 = vunpack.c.l.b16 %v984
          %v1213 = vunpack.c.h.b16 %v984
          %v1214 = vunpack.c.l.b16 %v985
          %v1215 = vunpack.c.h.b16 %v985
          %v1216 = vunpack.c.l.b16 %v986
          %v1217 = vunpack.c.h.b16 %v986
          %v1218 = vunpack.c.l.b16 %v987
          %v1219 = vunpack.c.h.b16 %v987
          %v1220 = vunpack.c.l.b16 %v988
          %v1221 = vunpack.c.h.b16 %v988
          %v1222 = vunpack.c.l.b16 %v989
          %v1223 = vunpack.c.h.b16 %v989
          %v1224 = vunpack.c.l.b16 %v990
          %v1225 = vunpack.c.h.b16 %v990
          %v1226 = vunpack.c.l.b16 %v991
          %v1227 = vunpack.c.h.b16 %v991
          %v1228 = vunpack.c.l.b16 %v992
          %v1229 = vunpack.c.h.b16 %v992
          %v1230 = vunpack.c.l.b16 %v993
          %v1231 = vunpack.c.h.b16 %v993
          %v1232 = vunpack.c.l.b16 %v994
          %v1233 = vunpack.c.h.b16 %v994
          %v1234 = vunpack.c.l.b16 %v995
          %v1235 = vunpack.c.h.b16 %v995
          %v1236 = vunpack.c.l.b16 %v996
          %v1237 = vunpack.c.h.b16 %v996
          %v1238 = vunpack.c.l.b16 %v997
          %v1239 = vunpack.c.h.b16 %v997
          %v1240 = vunpack.c.l.b16 %v998
          %v1241 = vunpack.c.h.b16 %v998
          %v1242 = vunpack.c.l.b16 %v999
          %v1243 = vunpack.c.h.b16 %v999
          %v1244 = vunpack.c.l.b16 %v1000
          %v1245 = vunpack.c.h.b16 %v1000
          %v1246 = vunpack.c.l.b16 %v1001
          %v1247 = vunpack.c.h.b16 %v1001
          %v1248 = vunpack.c.l.b16 %v1002
          %v1249 = vunpack.c.h.b16 %v1002
          %v1250 = vunpack.c.l.b16 %v1003
          %v1251 = vunpack.c.h.b16 %v1003
          %v1252 = vunpack.c.l.b16 %v1004
          %v1253 = vunpack.c.h.b16 %v1004
          %v1254 = vunpack.c.l.b16 %v1005
          %v1255 = vunpack.c.h.b16 %v1005
          %v1256 = vunpack.c.l.b16 %v1006
          %v1257 = vunpack.c.h.b16 %v1006
          %v1258 = vunpack.c.l.b16 %v1007
          %v1259 = vunpack.c.h.b16 %v1007
          %v1260 = vunpack.c.l.b16 %v1008
          %v1261 = vunpack.c.h.b16 %v1008
          %v1262 = vunpack.c.l.b16 %v1009
          %v1263 = vunpack.c.h.b16 %v1009
          %v1264 = vunpack.c.l.b16 %v1010
          %v1265 = vunpack.c.h.b16 %v1010
          %v1266 = vunpack.c.l.b16 %v1011
          %v1267 = vunpack.c.h.b16 %v1011
          %v1268 = vunpack.c.l.b16 %v1012
          %v1269 = vunpack.c.h.b16 %v1012
          %v1270 = vunpack.c.l.b16 %v1013
          %v1271 = vunpack.c.h.b16 %v1013
          %v1272 = vunpack.c.l.b16 %v1014
          %v1273 = vunpack.c.h.b16 %v1014
          %v1274 = vunpack.c.l.b16 %v1015
          %v1275 = vunpack.c.h.b16 %v1015
          %v1276 = vunpack.c.l.b16 %v1016
          %v1277 = vunpack.c.h.b16 %v1016
          %v1278 = vunpack.c.l.b16 %v1017
          %v1279 = vunpack.c.h.b16 %v1017
          %v1280 = vunpack.c.l.b16 %v1018
          %v1281 = vunpack.c.h.b16 %v1018
          %v1282 = vunpack.c.l.b16 %v1019
          %v1283 = vunpack.c.h.b16 %v1019
          %v1284 = vunpack.c.l.b16 %v1020
          %v1285 = vunpack.c.h.b16 %v1020
          %v1286 = vunpack.c.l.b16 %v1021
          %v1287 = vunpack.c.h.b16 %v1021
          %v1288 = vunpack.c.l.b16 %v1022
          %v1289 = vunpack.c.h.b16 %v1022
          %v1290 = vunpack.c.l.b16 %v1023
          %v1291 = vunpack.c.h.b16 %v1023
          %v1292 = vunpack.c.l.b16 %v1024
          %v1293 = vunpack.c.h.b16 %v1024
          %v1294 = vunpack.c.l.b16 %v1025
          %v1295 = vunpack.c.h.b16 %v1025
          %v1296 = vunpack.c.l.b16 %v1026
          %v1297 = vunpack.c.h.b16 %v1026
          %v1298 = vunpack.c.l.b16 %v1027
          %v1299 = vunpack.c.h.b16 %v1027
          %v1300 = vunpack.c.l.b16 %v1028
          %v1301 = vunpack.c.h.b16 %v1028
          %v1302 = vunpack.c.l.b16 %v1029
          %v1303 = vunpack.c.h.b16 %v1029
          %v1304 = vunpack.c.l.b16 %v1030
          %v1305 = vunpack.c.h.b16 %v1030
          %v1306 = vunpack.c.l.b16 %v1031
          %v1307 = vunpack.c.h.b16 %v1031
          %v1308 = vunpack.c.l.b16 %v1032
          %v1309 = vunpack.c.h.b16 %v1032
          %v1310 = vunpack.c.l.b16 %v1033
          %v1311 = vunpack.c.h.b16 %v1033
          %v1312 = vunpack.c.l.b16 %v1034
          %v1313 = vunpack.c.h.b16 %v1034
          %v1314 = vunpack.c.l.b16 %v1035
          %v1315 = vunpack.c.h.b16 %v1035
          %v1316 = vunpack.c.l.b16 %v1036
          %v1317 = vunpack.c.h.b16 %v1036
          %v1318 = vunpack.c.l.b16 %v1037
          %v1319 = vunpack.c.h.b16 %v1037
          %v1320 = vunpack.c.l.b16 %v1038
          %v1321 = vunpack.c.h.b16 %v1038
          %v1322 = vunpack.c.l.b16 %v1039
          %v1323 = vunpack.c.h.b16 %v1039
          %v1324 = vunpack.c.l.b16 %v1040
          %v1325 = vunpack.c.h.b16 %v1040
          %v1326 = vunpack.c.l.b16 %v1041
          %v1327 = vunpack.c.h.b16 %v1041
          %v1328 = vunpack.c.l.b16 %v1042
          %v1329 = vunpack.c.h.b16 %v1042
          %v1330 = vunpack.c.l.b16 %v1043
          %v1331 = vunpack.c.h.b16 %v1043
          %v1332 = vunpack.c.l.b16 %v1044
          %v1333 = vunpack.c.h.b16 %v1044
          %v1334 = vunpack.c.l.b16 %v1045
          %v1335 = vunpack.c.h.b16 %v1045
          %v1336 = vunpack.c.l.b16 %v1046
          %v1337 = vunpack.c.h.b16 %v1046
          %v1338 = vunpack.c.l.b16 %v1047
          %v1339 = vunpack.c.h.b16 %v1047
          %v1340 = vunpack.c.l.b16 %v1048
          %v1341 = vunpack.c.h.b16 %v1048
          %v1342 = vunpack.c.l.b16 %v1049
          %v1343 = vunpack.c.h.b16 %v1049
          %v1344 = vunpack.c.l.b16 %v1050
          %v1345 = vunpack.c.h.b16 %v1050
          %v1346 = vunpack.c.l.b16 %v1051
          %v1347 = vunpack.c.h.b16 %v1051
          %v1348 = vunpack.c.l.b16 %v1052
          %v1349 = vunpack.c.h.b16 %v1052
          %v1350 = vunpack.c.l.b16 %v1053
          %v1351 = vunpack.c.h.b16 %v1053
          %v1352 = vunpack.c.l.b16 %v1054
          %v1353 = vunpack.c.h.b16 %v1054
          %v1354 = vunpack.c.l.b16 %v1055
          %v1355 = vunpack.c.h.b16 %v1055
          %v1356 = vpack.c.b16 %v1166, %v1164
          %v1357 = vpack.c.b16 %v1167, %v1165
          %v1358 = vpack.c.b16 %v1170, %v1168
          %v1359 = vpack.c.b16 %v1171, %v1169
          %v1360 = vpack.c.b16 %v1174, %v1172
          %v1361 = vpack.c.b16 %v1175, %v1173
          %v1362 = vpack.c.b16 %v1178, %v1176
          %v1363 = vpack.c.b16 %v1179, %v1177
          %v1364 = vpack.c.b16 %v1182, %v1180
          %v1365 = vpack.c.b16 %v1183, %v1181
          %v1366 = vpack.c.b16 %v1186, %v1184
          %v1367 = vpack.c.b16 %v1187, %v1185
          %v1368 = vpack.c.b16 %v1190, %v1188
          %v1369 = vpack.c.b16 %v1191, %v1189
          %v1370 = vpack.c.b16 %v1194, %v1192
          %v1371 = vpack.c.b16 %v1195, %v1193
          %v1372 = vpack.c.b16 %v1198, %v1196
          %v1373 = vpack.c.b16 %v1199, %v1197
          %v1374 = vpack.c.b16 %v1202, %v1200
          %v1375 = vpack.c.b16 %v1203, %v1201
          %v1376 = vpack.c.b16 %v1206, %v1204
          %v1377 = vpack.c.b16 %v1207, %v1205
          %v1378 = vpack.c.b16 %v1210, %v1208
          %v1379 = vpack.c.b16 %v1211, %v1209
          %v1380 = vpack.c.b16 %v1214, %v1212
          %v1381 = vpack.c.b16 %v1215, %v1213
          %v1382 = vpack.c.b16 %v1218, %v1216
          %v1383 = vpack.c.b16 %v1219, %v1217
          %v1384 = vpack.c.b16 %v1222, %v1220
          %v1385 = vpack.c.b16 %v1223, %v1221
          %v1386 = vpack.c.b16 %v1226, %v1224
          %v1387 = vpack.c.b16 %v1227, %v1225
          %v1388 = vpack.c.b16 %v1230, %v1228
          %v1389 = vpack.c.b16 %v1231, %v1229
          %v1390 = vpack.c.b16 %v1234, %v1232
          %v1391 = vpack.c.b16 %v1235, %v1233
          %v1392 = vpack.c.b16 %v1238, %v1236
          %v1393 = vpack.c.b16 %v1239, %v1237
          %v1394 = vpack.c.b16 %v1242, %v1240
          %v1395 = vpack.c.b16 %v1243, %v1241
          %v1396 = vpack.c.b16 %v1246, %v1244
          %v1397 = vpack.c.b16 %v1247, %v1245
          %v1398 = vpack.c.b16 %v1250, %v1248
          %v1399 = vpack.c.b16 %v1251, %v1249
          %v1400 = vpack.c.b16 %v1254, %v1252
          %v1401 = vpack.c.b16 %v1255, %v1253
          %v1402 = vpack.c.b16 %v1258, %v1256
          %v1403 = vpack.c.b16 %v1259, %v1257
          %v1404 = vpack.c.b16 %v1262, %v1260
          %v1405 = vpack.c.b16 %v1263, %v1261
          %v1406 = vpack.c.b16 %v1266, %v1264
          %v1407 = vpack.c.b16 %v1267, %v1265
          %v1408 = vpack.c.b16 %v1270, %v1268
          %v1409 = vpack.c.b16 %v1271, %v1269
          %v1410 = vpack.c.b16 %v1274, %v1272
          %v1411 = vpack.c.b16 %v1275, %v1273
          %v1412 = vpack.c.b16 %v1278, %v1276
          %v1413 = vpack.c.b16 %v1279, %v1277
          %v1414 = vpack.c.b16 %v1282, %v1280
          %v1415 = vpack.c.b16 %v1283, %v1281
          %v1416 = vpack.c.b16 %v1286, %v1284
          %v1417 = vpack.c.b16 %v1287, %v1285
          %v1418 = vpack.c.b16 %v1290, %v1288
          %v1419 = vpack.c.b16 %v1291, %v1289
          %v1420 = vpack.c.b16 %v1294, %v1292
          %v1421 = vpack.c.b16 %v1295, %v1293
          %v1422 = vpack.c.b16 %v1298, %v1296
          %v1423 = vpack.c.b16 %v1299, %v1297
          %v1424 = vpack.c.b16 %v1302, %v1300
          %v1425 = vpack.c.b16 %v1303, %v1301
          %v1426 = vpack.c.b16 %v1306, %v1304
          %v1427 = vpack.c.b16 %v1307, %v1305
          %v1428 = vpack.c.b16 %v1310, %v1308
          %v1429 = vpack.c.b16 %v1311, %v1309
          %v1430 = vpack.c.b16 %v1314, %v1312
          %v1431 = vpack.c.b16 %v1315, %v1313
          %v1432 = vpack.c.b16 %v1318, %v1316
          %v1433 = vpack.c.b16 %v1319, %v1317
          %v1434 = vpack.c.b16 %v1322, %v1320
          %v1435 = vpack.c.b16 %v1323, %v1321
          %v1436 = vpack.c.b16 %v1326, %v1324
          %v1437 = vpack.c.b16 %v1327, %v1325
          %v1438 = vpack.c.b16 %v1330, %v1328
          %v1439 = vpack.c.b16 %v1331, %v1329
          %v1440 = vpack.c.b16 %v1334, %v1332
          %v1441 = vpack.c.b16 %v1335, %v1333
          %v1442 = vpack.c.b16 %v1338, %v1336
          %v1443 = vpack.c.b16 %v1339, %v1337
          %v1444 = vpack.c.b16 %v1342, %v1340
          %v1445 = vpack.c.b16 %v1343, %v1341
          %v1446 = vpack.c.b16 %v1346, %v1344
          %v1447 = vpack.c.b16 %v1347, %v1345
          %v1448 = vpack.c.b16 %v1350, %v1348
          %v1449 = vpack.c.b16 %v1351, %v1349
          %v1450 = vpack.c.b16 %v1354, %v1352
          %v1451 = vpack.c.b16 %v1355, %v1353
          %1548 = vmatprep.subr.bf16.mxu0 %v1357
          %1549 = vmatpush1.bf16.msra.mxu0 %v1356
          %1550 = vmatprep.subr.bf16.mxu0 %v1359
          %1551 = vmatpush1.bf16.msra.mxu0 %v1358
          %1552 = vmatprep.subr.bf16.mxu0 %v1361
          %1553 = vmatpush1.bf16.msra.mxu0 %v1360
          %1554 = vmatprep.subr.bf16.mxu0 %v1363
          %1555 = vmatpush1.bf16.msra.mxu0 %v1362
          %1556 = vmatprep.subr.bf16.mxu0 %v1365
          %1557 = vmatpush1.bf16.msra.mxu0 %v1364
          %1558 = vmatprep.subr.bf16.mxu0 %v1367
          %1559 = vmatpush1.bf16.msra.mxu0 %v1366
          %1560 = vmatprep.subr.bf16.mxu0 %v1369
          %1561 = vmatpush1.bf16.msra.mxu0 %v1368
          %1562 = vmatprep.subr.bf16.mxu0 %v1371
          %1563 = vmatpush1.bf16.msra.mxu0 %v1370
          %1564 = vmatprep.subr.bf16.mxu0 %v1373
          %1565 = vmatpush1.bf16.msra.mxu0 %v1372
          %1566 = vmatprep.subr.bf16.mxu0 %v1375
          %1567 = vmatpush1.bf16.msra.mxu0 %v1374
          %1568 = vmatprep.subr.bf16.mxu0 %v1377
          %1569 = vmatpush1.bf16.msra.mxu0 %v1376
          %1570 = vmatprep.subr.bf16.mxu0 %v1379
          %1571 = vmatpush1.bf16.msra.mxu0 %v1378
          %1572 = vmatprep.subr.bf16.mxu0 %v1381
          %1573 = vmatpush1.bf16.msra.mxu0 %v1380
          %1574 = vmatprep.subr.bf16.mxu0 %v1383
          %1575 = vmatpush1.bf16.msra.mxu0 %v1382
          %1576 = vmatprep.subr.bf16.mxu0 %v1385
          %1577 = vmatpush1.bf16.msra.mxu0 %v1384
          %1578 = vmatprep.subr.bf16.mxu0 %v1387
          %1579 = vmatpush1.bf16.msra.mxu0 %v1386
          %1580 = vmatprep.mubr.bf16.mxu0 %v913
          %1581 = vmatmul.mubr.bf16.gmra.mrb[0].mxu0 %v912
          %v1582 = vpop.f32.mrb[0].mxu0
          %v1583 = vadd.f32 %v1061, %v1582
          %v1584 = vpop.f32.mrb[0].mxu0
          %v1585 = vadd.f32 %v1065, %v1584
          %v1586 = vpop.f32.mrb[0].mxu0
          %v1587 = vadd.f32 %v1061, %v1586
          %v1588 = vpop.f32.mrb[0].mxu0
          %v1589 = vadd.f32 %v1065, %v1588
          %1590 = vmatprep.mubr.bf16.mxu0 %v919
          %1591 = vmatmul.mubr.bf16.gmra.mrb[0].mxu0 %v918
          %v1592 = vpop.f32.mrb[0].mxu0
          %v1593 = vadd.f32 %v1061, %v1592
          %v1594 = vpop.f32.mrb[0].mxu0
          %v1595 = vadd.f32 %v1065, %v1594
          %v1596 = vpop.f32.mrb[0].mxu0
          %v1597 = vadd.f32 %v1061, %v1596
          %v1598 = vpop.f32.mrb[0].mxu0
          %v1599 = vadd.f32 %v1065, %v1598
          %1600 = vmatprep.mubr.bf16.mxu0 %v925
          %1601 = vmatmul.mubr.bf16.gmra.mrb[0].mxu0 %v924
          %v1602 = vpop.f32.mrb[0].mxu0
          %v1603 = vadd.f32 %v1061, %v1602
          %v1604 = vpop.f32.mrb[0].mxu0
          %v1605 = vadd.f32 %v1065, %v1604
          %v1606 = vpop.f32.mrb[0].mxu0
          %v1607 = vadd.f32 %v1061, %v1606
          %v1608 = vpop.f32.mrb[0].mxu0
          %v1609 = vadd.f32 %v1065, %v1608
          %1610 = vmatprep.mubr.bf16.mxu0 %v931
          %1611 = vmatmul.mubr.bf16.gmra.mrb[0].mxu0 %v930
          %v1612 = vpop.f32.mrb[0].mxu0
          %v1613 = vadd.f32 %v1061, %v1612
          %v1614 = vpop.f32.mrb[0].mxu0
          %v1615 = vadd.f32 %v1065, %v1614
          %v1616 = vpop.f32.mrb[0].mxu0
          %v1617 = vadd.f32 %v1061, %v1616
          %v1618 = vpop.f32.mrb[0].mxu0
          %v1619 = vadd.f32 %v1065, %v1618
          %1620 = vmatprep.mubr.bf16.mxu0 %v937
          %1621 = vmatmul.mubr.bf16.gmra.mrb[0].mxu0 %v936
          %v1622 = vpop.f32.mrb[0].mxu0
          %v1623 = vadd.f32 %v1061, %v1622
          %v1624 = vpop.f32.mrb[0].mxu0
          %v1625 = vadd.f32 %v1065, %v1624
          %v1626 = vpop.f32.mrb[0].mxu0
          %v1627 = vadd.f32 %v1061, %v1626
          %v1628 = vpop.f32.mrb[0].mxu0
          %v1629 = vadd.f32 %v1065, %v1628
          %1630 = vmatprep.mubr.bf16.mxu0 %v943
          %1631 = vmatmul.mubr.bf16.gmra.mrb[0].mxu0 %v942
          %v1632 = vpop.f32.mrb[0].mxu0
          %v1633 = vadd.f32 %v1061, %v1632
          %v1634 = vpop.f32.mrb[0].mxu0
          %v1635 = vadd.f32 %v1065, %v1634
          %v1636 = vpop.f32.mrb[0].mxu0
          %v1637 = vadd.f32 %v1061, %v1636
          %v1638 = vpop.f32.mrb[0].mxu0
          %v1639 = vadd.f32 %v1065, %v1638
          %1640 = vmatprep.mubr.bf16.mxu0 %v949
          %1641 = vmatmul.mubr.bf16.gmra.mrb[0].mxu0 %v948
          %v1642 = vpop.f32.mrb[0].mxu0
          %v1643 = vadd.f32 %v1061, %v1642
          %v1644 = vpop.f32.mrb[0].mxu0
          %v1645 = vadd.f32 %v1065, %v1644
          %v1646 = vpop.f32.mrb[0].mxu0
          %v1647 = vadd.f32 %v1061, %v1646
          %v1648 = vpop.f32.mrb[0].mxu0
          %v1649 = vadd.f32 %v1065, %v1648
          %1650 = vmatprep.mubr.bf16.mxu0 %v955
          %1651 = vmatmul.mubr.bf16.gmra.mrb[0].mxu0 %v954
          %v1652 = vpop.f32.mrb[0].mxu0
          %v1653 = vadd.f32 %v1061, %v1652
          %v1654 = vpop.f32.mrb[0].mxu0
          %v1655 = vadd.f32 %v1065, %v1654
          %v1656 = vpop.f32.mrb[0].mxu0
          %v1657 = vadd.f32 %v1061, %v1656
          %v1658 = vpop.f32.mrb[0].mxu0
          %v1659 = vadd.f32 %v1065, %v1658
          %1660 = vdwg.mxu0
          %1661 = vmatprep.subr.bf16.mxu0 %v1389
          %1662 = vmatpush1.bf16.msra.mxu0 %v1388
          %1663 = vmatprep.subr.bf16.mxu0 %v1391
          %1664 = vmatpush1.bf16.msra.mxu0 %v1390
          %1665 = vmatprep.subr.bf16.mxu0 %v1393
          %1666 = vmatpush1.bf16.msra.mxu0 %v1392
          %1667 = vmatprep.subr.bf16.mxu0 %v1395
          %1668 = vmatpush1.bf16.msra.mxu0 %v1394
          %1669 = vmatprep.subr.bf16.mxu0 %v1397
          %1670 = vmatpush1.bf16.msra.mxu0 %v1396
          %1671 = vmatprep.subr.bf16.mxu0 %v1399
          %1672 = vmatpush1.bf16.msra.mxu0 %v1398
          %1673 = vmatprep.subr.bf16.mxu0 %v1401
          %1674 = vmatpush1.bf16.msra.mxu0 %v1400
          %1675 = vmatprep.subr.bf16.mxu0 %v1403
          %1676 = vmatpush1.bf16.msra.mxu0 %v1402
          %1677 = vmatprep.subr.bf16.mxu0 %v1405
          %1678 = vmatpush1.bf16.msra.mxu0 %v1404
          %1679 = vmatprep.subr.bf16.mxu0 %v1407
          %1680 = vmatpush1.bf16.msra.mxu0 %v1406
          %1681 = vmatprep.subr.bf16.mxu0 %v1409
          %1682 = vmatpush1.bf16.msra.mxu0 %v1408
          %1683 = vmatprep.subr.bf16.mxu0 %v1411
          %1684 = vmatpush1.bf16.msra.mxu0 %v1410
          %1685 = vmatprep.subr.bf16.mxu0 %v1413
          %1686 = vmatpush1.bf16.msra.mxu0 %v1412
          %1687 = vmatprep.subr.bf16.mxu0 %v1415
          %1688 = vmatpush1.bf16.msra.mxu0 %v1414
          %1689 = vmatprep.subr.bf16.mxu0 %v1417
          %1690 = vmatpush1.bf16.msra.mxu0 %v1416
          %1691 = vmatprep.subr.bf16.mxu0 %v1419
          %1692 = vmatpush1.bf16.msra.mxu0 %v1418
          %1693 = vmatprep.mubr.bf16.mxu0 %v915
          %1694 = vmatmul.mubr.bf16.gmra.mrb[0].mxu0 %v914
          %v1695 = vpop.f32.mrb[0].mxu0
          %v1696 = vadd.f32 %v1583, %v1695
          %v1697 = vpop.f32.mrb[0].mxu0
          %v1698 = vadd.f32 %v1585, %v1697
          %v1699 = vpop.f32.mrb[0].mxu0
          %v1700 = vadd.f32 %v1587, %v1699
          %v1701 = vpop.f32.mrb[0].mxu0
          %v1702 = vadd.f32 %v1589, %v1701
          %1703 = vmatprep.mubr.bf16.mxu0 %v921
          %1704 = vmatmul.mubr.bf16.gmra.mrb[0].mxu0 %v920
          %v1705 = vpop.f32.mrb[0].mxu0
          %v1706 = vadd.f32 %v1593, %v1705
          %v1707 = vpop.f32.mrb[0].mxu0
          %v1708 = vadd.f32 %v1595, %v1707
          %v1709 = vpop.f32.mrb[0].mxu0
          %v1710 = vadd.f32 %v1597, %v1709
          %v1711 = vpop.f32.mrb[0].mxu0
          %v1712 = vadd.f32 %v1599, %v1711
          %1713 = vmatprep.mubr.bf16.mxu0 %v927
          %1714 = vmatmul.mubr.bf16.gmra.mrb[0].mxu0 %v926
          %v1715 = vpop.f32.mrb[0].mxu0
          %v1716 = vadd.f32 %v1603, %v1715
          %v1717 = vpop.f32.mrb[0].mxu0
          %v1718 = vadd.f32 %v1605, %v1717
          %v1719 = vpop.f32.mrb[0].mxu0
          %v1720 = vadd.f32 %v1607, %v1719
          %v1721 = vpop.f32.mrb[0].mxu0
          %v1722 = vadd.f32 %v1609, %v1721
          %1723 = vmatprep.mubr.bf16.mxu0 %v933
          %1724 = vmatmul.mubr.bf16.gmra.mrb[0].mxu0 %v932
          %v1725 = vpop.f32.mrb[0].mxu0
          %v1726 = vadd.f32 %v1613, %v1725
          %v1727 = vpop.f32.mrb[0].mxu0
          %v1728 = vadd.f32 %v1615, %v1727
          %v1729 = vpop.f32.mrb[0].mxu0
          %v1730 = vadd.f32 %v1617, %v1729
          %v1731 = vpop.f32.mrb[0].mxu0
          %v1732 = vadd.f32 %v1619, %v1731
          %1733 = vmatprep.mubr.bf16.mxu0 %v939
          %1734 = vmatmul.mubr.bf16.gmra.mrb[0].mxu0 %v938
          %v1735 = vpop.f32.mrb[0].mxu0
          %v1736 = vadd.f32 %v1623, %v1735
          %v1737 = vpop.f32.mrb[0].mxu0
          %v1738 = vadd.f32 %v1625, %v1737
          %v1739 = vpop.f32.mrb[0].mxu0
          %v1740 = vadd.f32 %v1627, %v1739
          %v1741 = vpop.f32.mrb[0].mxu0
          %v1742 = vadd.f32 %v1629, %v1741
          %1743 = vmatprep.mubr.bf16.mxu0 %v945
          %1744 = vmatmul.mubr.bf16.gmra.mrb[0].mxu0 %v944
          %v1745 = vpop.f32.mrb[0].mxu0
          %v1746 = vadd.f32 %v1633, %v1745
          %v1747 = vpop.f32.mrb[0].mxu0
          %v1748 = vadd.f32 %v1635, %v1747
          %v1749 = vpop.f32.mrb[0].mxu0
          %v1750 = vadd.f32 %v1637, %v1749
          %v1751 = vpop.f32.mrb[0].mxu0
          %v1752 = vadd.f32 %v1639, %v1751
          %1753 = vmatprep.mubr.bf16.mxu0 %v951
          %1754 = vmatmul.mubr.bf16.gmra.mrb[0].mxu0 %v950
          %v1755 = vpop.f32.mrb[0].mxu0
          %v1756 = vadd.f32 %v1643, %v1755
          %v1757 = vpop.f32.mrb[0].mxu0
          %v1758 = vadd.f32 %v1645, %v1757
          %v1759 = vpop.f32.mrb[0].mxu0
          %v1760 = vadd.f32 %v1647, %v1759
          %v1761 = vpop.f32.mrb[0].mxu0
          %v1762 = vadd.f32 %v1649, %v1761
          %1763 = vmatprep.mubr.bf16.mxu0 %v957
          %1764 = vmatmul.mubr.bf16.gmra.mrb[0].mxu0 %v956
          %v1765 = vpop.f32.mrb[0].mxu0
          %v1766 = vadd.f32 %v1653, %v1765
          %v1767 = vpop.f32.mrb[0].mxu0
          %v1768 = vadd.f32 %v1655, %v1767
          %v1769 = vpop.f32.mrb[0].mxu0
          %v1770 = vadd.f32 %v1657, %v1769
          %v1771 = vpop.f32.mrb[0].mxu0
          %v1772 = vadd.f32 %v1659, %v1771
          %1773 = vdwg.mxu0
          %1774 = vmatprep.subr.bf16.mxu0 %v1421
          %1775 = vmatpush1.bf16.msra.mxu0 %v1420
          %1776 = vmatprep.subr.bf16.mxu0 %v1423
          %1777 = vmatpush1.bf16.msra.mxu0 %v1422
          %1778 = vmatprep.subr.bf16.mxu0 %v1425
          %1779 = vmatpush1.bf16.msra.mxu0 %v1424
          %1780 = vmatprep.subr.bf16.mxu0 %v1427
          %1781 = vmatpush1.bf16.msra.mxu0 %v1426
          %1782 = vmatprep.subr.bf16.mxu0 %v1429
          %1783 = vmatpush1.bf16.msra.mxu0 %v1428
          %1784 = vmatprep.subr.bf16.mxu0 %v1431
          %1785 = vmatpush1.bf16.msra.mxu0 %v1430
          %1786 = vmatprep.subr.bf16.mxu0 %v1433
          %1787 = vmatpush1.bf16.msra.mxu0 %v1432
          %1788 = vmatprep.subr.bf16.mxu0 %v1435
          %1789 = vmatpush1.bf16.msra.mxu0 %v1434
          %1790 = vmatprep.subr.bf16.mxu0 %v1437
          %1791 = vmatpush1.bf16.msra.mxu0 %v1436
          %1792 = vmatprep.subr.bf16.mxu0 %v1439
          %1793 = vmatpush1.bf16.msra.mxu0 %v1438
          %1794 = vmatprep.subr.bf16.mxu0 %v1441
          %1795 = vmatpush1.bf16.msra.mxu0 %v1440
          %1796 = vmatprep.subr.bf16.mxu0 %v1443
          %1797 = vmatpush1.bf16.msra.mxu0 %v1442
          %1798 = vmatprep.subr.bf16.mxu0 %v1445
          %1799 = vmatpush1.bf16.msra.mxu0 %v1444
          %1800 = vmatprep.subr.bf16.mxu0 %v1447
          %1801 = vmatpush1.bf16.msra.mxu0 %v1446
          %1802 = vmatprep.subr.bf16.mxu0 %v1449
          %1803 = vmatpush1.bf16.msra.mxu0 %v1448
          %1804 = vmatprep.subr.bf16.mxu0 %v1451
          %1805 = vmatpush1.bf16.msra.mxu0 %v1450
          %1806 = vmatprep.mubr.bf16.mxu0 %v917
          %1807 = vmatmul.mubr.bf16.gmra.mrb[0].mxu0 %v916
          %v1808 = vpop.f32.mrb[0].mxu0
          %v1809 = vadd.f32 %v1696, %v1808
          %v1810 = vpop.f32.mrb[0].mxu0
          %v1811 = vadd.f32 %v1698, %v1810
          %v1812 = vpop.f32.mrb[0].mxu0
          %v1813 = vadd.f32 %v1700, %v1812
          %v1814 = vpop.f32.mrb[0].mxu0
          %v1815 = vadd.f32 %v1702, %v1814
          %1816 = vmatprep.mubr.bf16.mxu0 %v923
          %1817 = vmatmul.mubr.bf16.gmra.mrb[0].mxu0 %v922
          %v1818 = vpop.f32.mrb[0].mxu0
          %v1819 = vadd.f32 %v1706, %v1818
          %v1820 = vpop.f32.mrb[0].mxu0
          %v1821 = vadd.f32 %v1708, %v1820
          %v1822 = vpop.f32.mrb[0].mxu0
          %v1823 = vadd.f32 %v1710, %v1822
          %v1824 = vpop.f32.mrb[0].mxu0
          %v1825 = vadd.f32 %v1712, %v1824
          %1826 = vmatprep.mubr.bf16.mxu0 %v929
          %1827 = vmatmul.mubr.bf16.gmra.mrb[0].mxu0 %v928
          %v1828 = vpop.f32.mrb[0].mxu0
          %v1829 = vadd.f32 %v1716, %v1828
          %v1830 = vpop.f32.mrb[0].mxu0
          %v1831 = vadd.f32 %v1718, %v1830
          %v1832 = vpop.f32.mrb[0].mxu0
          %v1833 = vadd.f32 %v1720, %v1832
          %v1834 = vpop.f32.mrb[0].mxu0
          %v1835 = vadd.f32 %v1722, %v1834
          %1836 = vmatprep.mubr.bf16.mxu0 %v935
          %1837 = vmatmul.mubr.bf16.gmra.mrb[0].mxu0 %v934
          %v1838 = vpop.f32.mrb[0].mxu0
          %v1839 = vadd.f32 %v1726, %v1838
          %v1840 = vpop.f32.mrb[0].mxu0
          %v1841 = vadd.f32 %v1728, %v1840
          %v1842 = vpop.f32.mrb[0].mxu0
          %v1843 = vadd.f32 %v1730, %v1842
          %v1844 = vpop.f32.mrb[0].mxu0
          %v1845 = vadd.f32 %v1732, %v1844
          %1846 = vmatprep.mubr.bf16.mxu0 %v941
          %1847 = vmatmul.mubr.bf16.gmra.mrb[0].mxu0 %v940
          %v1848 = vpop.f32.mrb[0].mxu0
          %v1849 = vadd.f32 %v1736, %v1848
          %v1850 = vpop.f32.mrb[0].mxu0
          %v1851 = vadd.f32 %v1738, %v1850
          %v1852 = vpop.f32.mrb[0].mxu0
          %v1853 = vadd.f32 %v1740, %v1852
          %v1854 = vpop.f32.mrb[0].mxu0
          %v1855 = vadd.f32 %v1742, %v1854
          %1856 = vmatprep.mubr.bf16.mxu0 %v947
          %1857 = vmatmul.mubr.bf16.gmra.mrb[0].mxu0 %v946
          %v1858 = vpop.f32.mrb[0].mxu0
          %v1859 = vadd.f32 %v1746, %v1858
          %v1860 = vpop.f32.mrb[0].mxu0
          %v1861 = vadd.f32 %v1748, %v1860
          %v1862 = vpop.f32.mrb[0].mxu0
          %v1863 = vadd.f32 %v1750, %v1862
          %v1864 = vpop.f32.mrb[0].mxu0
          %v1865 = vadd.f32 %v1752, %v1864
          %1866 = vmatprep.mubr.bf16.mxu0 %v953
          %1867 = vmatmul.mubr.bf16.gmra.mrb[0].mxu0 %v952
          %v1868 = vpop.f32.mrb[0].mxu0
          %v1869 = vadd.f32 %v1756, %v1868
          %v1870 = vpop.f32.mrb[0].mxu0
          %v1871 = vadd.f32 %v1758, %v1870
          %v1872 = vpop.f32.mrb[0].mxu0
          %v1873 = vadd.f32 %v1760, %v1872
          %v1874 = vpop.f32.mrb[0].mxu0
          %v1875 = vadd.f32 %v1762, %v1874
          %1876 = vmatprep.mubr.bf16.mxu0 %v959
          %1877 = vmatmul.mubr.bf16.gmra.mrb[0].mxu0 %v958
          %v1878 = vpop.f32.mrb[0].mxu0
          %v1879 = vadd.f32 %v1766, %v1878
          %v1880 = vpop.f32.mrb[0].mxu0
          %v1881 = vadd.f32 %v1768, %v1880
          %v1882 = vpop.f32.mrb[0].mxu0
          %v1883 = vadd.f32 %v1770, %v1882
          %v1884 = vpop.f32.mrb[0].mxu0
          %v1885 = vadd.f32 %v1772, %v1884
          %1886 = vdwg.mxu0
          %s1887 = smul.u32 0, 2
          %s1888 = smul.addr %s1887, 8
          %s1889 = scalar_lea.vmem %s3, %s1888
          %v1890 = vld [vmem:[%s1889] sm:$0xff]
          %v1891 = vld [vmem:[%s1889 + $0x8] sm:$0xff]
          %v1892 = vld [vmem:[%s1889 + $0x10] sm:$0xff]
          %v1893 = vld [vmem:[%s1889 + $0x18] sm:$0xff]
          %v1894 = vld [vmem:[%s1889 + $0x20] sm:$0xff]
          %v1895 = vld [vmem:[%s1889 + $0x28] sm:$0xff]
          %v1896 = vld [vmem:[%s1889 + $0x30] sm:$0xff]
          %v1897 = vld [vmem:[%s1889 + $0x38] sm:$0xff]
          %v1898 = vld [vmem:[%s1889 + $0x40] sm:$0xff]
          %v1899 = vld [vmem:[%s1889 + $0x48] sm:$0xff]
          %v1900 = vld [vmem:[%s1889 + $0x50] sm:$0xff]
          %v1901 = vld [vmem:[%s1889 + $0x58] sm:$0xff]
          %v1902 = vld [vmem:[%s1889 + $0x60] sm:$0xff]
          %v1903 = vld [vmem:[%s1889 + $0x68] sm:$0xff]
          %v1904 = vld [vmem:[%s1889 + $0x70] sm:$0xff]
          %v1905 = vld [vmem:[%s1889 + $0x78] sm:$0xff]
          %v1906 = vld [vmem:[%s1889 + $0x80] sm:$0xff]
          %v1907 = vld [vmem:[%s1889 + $0x88] sm:$0xff]
          %v1908 = vld [vmem:[%s1889 + $0x90] sm:$0xff]
          %v1909 = vld [vmem:[%s1889 + $0x98] sm:$0xff]
          %v1910 = vld [vmem:[%s1889 + $0xa0] sm:$0xff]
          %v1911 = vld [vmem:[%s1889 + $0xa8] sm:$0xff]
          %v1912 = vld [vmem:[%s1889 + $0xb0] sm:$0xff]
          %v1913 = vld [vmem:[%s1889 + $0xb8] sm:$0xff]
          %v1914 = vld [vmem:[%s1889 + $0xc0] sm:$0xff]
          %v1915 = vld [vmem:[%s1889 + $0xc8] sm:$0xff]
          %v1916 = vld [vmem:[%s1889 + $0xd0] sm:$0xff]
          %v1917 = vld [vmem:[%s1889 + $0xd8] sm:$0xff]
          %v1918 = vld [vmem:[%s1889 + $0xe0] sm:$0xff]
          %v1919 = vld [vmem:[%s1889 + $0xe8] sm:$0xff]
          %v1920 = vld [vmem:[%s1889 + $0xf0] sm:$0xff]
          %v1921 = vld [vmem:[%s1889 + $0xf8] sm:$0xff]
          %v1922 = vadd.f32 %v1809, %v1890
          %v1923 = vadd.f32 %v1811, %v1891
          %v1924 = vadd.f32 %v1813, %v1892
          %v1925 = vadd.f32 %v1815, %v1893
          %v1926 = vadd.f32 %v1819, %v1894
          %v1927 = vadd.f32 %v1821, %v1895
          %v1928 = vadd.f32 %v1823, %v1896
          %v1929 = vadd.f32 %v1825, %v1897
          %v1930 = vadd.f32 %v1829, %v1898
          %v1931 = vadd.f32 %v1831, %v1899
          %v1932 = vadd.f32 %v1833, %v1900
          %v1933 = vadd.f32 %v1835, %v1901
          %v1934 = vadd.f32 %v1839, %v1902
          %v1935 = vadd.f32 %v1841, %v1903
          %v1936 = vadd.f32 %v1843, %v1904
          %v1937 = vadd.f32 %v1845, %v1905
          %v1938 = vadd.f32 %v1849, %v1906
          %v1939 = vadd.f32 %v1851, %v1907
          %v1940 = vadd.f32 %v1853, %v1908
          %v1941 = vadd.f32 %v1855, %v1909
          %v1942 = vadd.f32 %v1859, %v1910
          %v1943 = vadd.f32 %v1861, %v1911
          %v1944 = vadd.f32 %v1863, %v1912
          %v1945 = vadd.f32 %v1865, %v1913
          %v1946 = vadd.f32 %v1869, %v1914
          %v1947 = vadd.f32 %v1871, %v1915
          %v1948 = vadd.f32 %v1873, %v1916
          %v1949 = vadd.f32 %v1875, %v1917
          %v1950 = vadd.f32 %v1879, %v1918
          %v1951 = vadd.f32 %v1881, %v1919
          %v1952 = vadd.f32 %v1883, %v1920
          %v1953 = vadd.f32 %v1885, %v1921
          %s1954 = smul.addr %s1887, 8
          %s1955 = scalar_lea.vmem [#allocation2], %s1954
          %1956 = vst [vmem:[%s1955] sm:$0xff] %v1922
          %1957 = vst [vmem:[%s1955 + $0x8] sm:$0xff] %v1923
          %1958 = vst [vmem:[%s1955 + $0x10] sm:$0xff] %v1924
          %1959 = vst [vmem:[%s1955 + $0x18] sm:$0xff] %v1925
          %1960 = vst [vmem:[%s1955 + $0x20] sm:$0xff] %v1926
          %1961 = vst [vmem:[%s1955 + $0x28] sm:$0xff] %v1927
          %1962 = vst [vmem:[%s1955 + $0x30] sm:$0xff] %v1928
          %1963 = vst [vmem:[%s1955 + $0x38] sm:$0xff] %v1929
          %1964 = vst [vmem:[%s1955 + $0x40] sm:$0xff] %v1930
          %1965 = vst [vmem:[%s1955 + $0x48] sm:$0xff] %v1931
          %1966 = vst [vmem:[%s1955 + $0x50] sm:$0xff] %v1932
          %1967 = vst [vmem:[%s1955 + $0x58] sm:$0xff] %v1933
          %1968 = vst [vmem:[%s1955 + $0x60] sm:$0xff] %v1934
          %1969 = vst [vmem:[%s1955 + $0x68] sm:$0xff] %v1935
          %1970 = vst [vmem:[%s1955 + $0x70] sm:$0xff] %v1936
          %1971 = vst [vmem:[%s1955 + $0x78] sm:$0xff] %v1937
          %1972 = vst [vmem:[%s1955 + $0x80] sm:$0xff] %v1938
          %1973 = vst [vmem:[%s1955 + $0x88] sm:$0xff] %v1939
          %1974 = vst [vmem:[%s1955 + $0x90] sm:$0xff] %v1940
          %1975 = vst [vmem:[%s1955 + $0x98] sm:$0xff] %v1941
          %1976 = vst [vmem:[%s1955 + $0xa0] sm:$0xff] %v1942
          %1977 = vst [vmem:[%s1955 + $0xa8] sm:$0xff] %v1943
          %1978 = vst [vmem:[%s1955 + $0xb0] sm:$0xff] %v1944
          %1979 = vst [vmem:[%s1955 + $0xb8] sm:$0xff] %v1945
          %1980 = vst [vmem:[%s1955 + $0xc0] sm:$0xff] %v1946
          %1981 = vst [vmem:[%s1955 + $0xc8] sm:$0xff] %v1947
          %1982 = vst [vmem:[%s1955 + $0xd0] sm:$0xff] %v1948
          %1983 = vst [vmem:[%s1955 + $0xd8] sm:$0xff] %v1949
          %1984 = vst [vmem:[%s1955 + $0xe0] sm:$0xff] %v1950
          %1985 = vst [vmem:[%s1955 + $0xe8] sm:$0xff] %v1951
          %1986 = vst [vmem:[%s1955 + $0xf0] sm:$0xff] %v1952
          %1987 = vst [vmem:[%s1955 + $0xf8] sm:$0xff] %v1953
        $region100: #{forward.2} parent=83 // pred_fallthru
          _
        %s1988 = smul.u32 0, 2
        %s1989 = smul.addr %s1988, 8
        %s1990 = scalar_lea.vmem [#allocation2], %s1989
        %v1991 = vld [vmem:[%s1990] sm:$0xff]
        %v1992 = vld [vmem:[%s1990 + $0x8] sm:$0xff]
        %v1993 = vld [vmem:[%s1990 + $0x10] sm:$0xff]
        %v1994 = vld [vmem:[%s1990 + $0x18] sm:$0xff]
        %v1995 = vld [vmem:[%s1990 + $0x20] sm:$0xff]
        %v1996 = vld [vmem:[%s1990 + $0x28] sm:$0xff]
        %v1997 = vld [vmem:[%s1990 + $0x30] sm:$0xff]
        %v1998 = vld [vmem:[%s1990 + $0x38] sm:$0xff]
        %v1999 = vld [vmem:[%s1990 + $0x40] sm:$0xff]
        %v2000 = vld [vmem:[%s1990 + $0x48] sm:$0xff]
        %v2001 = vld [vmem:[%s1990 + $0x50] sm:$0xff]
        %v2002 = vld [vmem:[%s1990 + $0x58] sm:$0xff]
        %v2003 = vld [vmem:[%s1990 + $0x60] sm:$0xff]
        %v2004 = vld [vmem:[%s1990 + $0x68] sm:$0xff]
        %v2005 = vld [vmem:[%s1990 + $0x70] sm:$0xff]
        %v2006 = vld [vmem:[%s1990 + $0x78] sm:$0xff]
        %v2007 = vld [vmem:[%s1990 + $0x80] sm:$0xff]
        %v2008 = vld [vmem:[%s1990 + $0x88] sm:$0xff]
        %v2009 = vld [vmem:[%s1990 + $0x90] sm:$0xff]
        %v2010 = vld [vmem:[%s1990 + $0x98] sm:$0xff]
        %v2011 = vld [vmem:[%s1990 + $0xa0] sm:$0xff]
        %v2012 = vld [vmem:[%s1990 + $0xa8] sm:$0xff]
        %v2013 = vld [vmem:[%s1990 + $0xb0] sm:$0xff]
        %v2014 = vld [vmem:[%s1990 + $0xb8] sm:$0xff]
        %v2015 = vld [vmem:[%s1990 + $0xc0] sm:$0xff]
        %v2016 = vld [vmem:[%s1990 + $0xc8] sm:$0xff]
        %v2017 = vld [vmem:[%s1990 + $0xd0] sm:$0xff]
        %v2018 = vld [vmem:[%s1990 + $0xd8] sm:$0xff]
        %v2019 = vld [vmem:[%s1990 + $0xe0] sm:$0xff]
        %v2020 = vld [vmem:[%s1990 + $0xe8] sm:$0xff]
        %v2021 = vld [vmem:[%s1990 + $0xf0] sm:$0xff]
        %v2022 = vld [vmem:[%s1990 + $0xf8] sm:$0xff]
        %v2023 = vpack.c.bf16 %v1993, %v1991
        %v2024 = vpack.c.bf16 %v1994, %v1992
        %v2025 = vpack.c.bf16 %v1997, %v1995
        %v2026 = vpack.c.bf16 %v1998, %v1996
        %v2027 = vpack.c.bf16 %v2001, %v1999
        %v2028 = vpack.c.bf16 %v2002, %v2000
        %v2029 = vpack.c.bf16 %v2005, %v2003
        %v2030 = vpack.c.bf16 %v2006, %v2004
        %v2031 = vpack.c.bf16 %v2009, %v2007
        %v2032 = vpack.c.bf16 %v2010, %v2008
        %v2033 = vpack.c.bf16 %v2013, %v2011
        %v2034 = vpack.c.bf16 %v2014, %v2012
        %v2035 = vpack.c.bf16 %v2017, %v2015
        %v2036 = vpack.c.bf16 %v2018, %v2016
        %v2037 = vpack.c.bf16 %v2021, %v2019
        %v2038 = vpack.c.bf16 %v2022, %v2020
        %v2039 = vld [vmem:[%s640] sm:$0xff]
        %v2040 = vld [vmem:[%s640 + $0x8] sm:$0xff]
        %v2041 = vld [vmem:[%s640 + $0x10] sm:$0xff]
        %v2042 = vld [vmem:[%s640 + $0x18] sm:$0xff]
        %v2043 = vld [vmem:[%s640 + $0x20] sm:$0xff]
        %v2044 = vld [vmem:[%s640 + $0x28] sm:$0xff]
        %v2045 = vld [vmem:[%s640 + $0x30] sm:$0xff]
        %v2046 = vld [vmem:[%s640 + $0x38] sm:$0xff]
        %v2047 = vld [vmem:[%s640 + $0x40] sm:$0xff]
        %v2048 = vld [vmem:[%s640 + $0x48] sm:$0xff]
        %v2049 = vld [vmem:[%s640 + $0x50] sm:$0xff]
        %v2050 = vld [vmem:[%s640 + $0x58] sm:$0xff]
        %v2051 = vld [vmem:[%s640 + $0x60] sm:$0xff]
        %v2052 = vld [vmem:[%s640 + $0x68] sm:$0xff]
        %v2053 = vld [vmem:[%s640 + $0x70] sm:$0xff]
        %v2054 = vld [vmem:[%s640 + $0x78] sm:$0xff]
        %v2055 = vld [vmem:[%s640 + $0x80] sm:$0xff]
        %v2056 = vld [vmem:[%s640 + $0x88] sm:$0xff]
        %v2057 = vld [vmem:[%s640 + $0x90] sm:$0xff]
        %v2058 = vld [vmem:[%s640 + $0x98] sm:$0xff]
        %v2059 = vld [vmem:[%s640 + $0xa0] sm:$0xff]
        %v2060 = vld [vmem:[%s640 + $0xa8] sm:$0xff]
        %v2061 = vld [vmem:[%s640 + $0xb0] sm:$0xff]
        %v2062 = vld [vmem:[%s640 + $0xb8] sm:$0xff]
        %v2063 = vld [vmem:[%s640 + $0xc0] sm:$0xff]
        %v2064 = vld [vmem:[%s640 + $0xc8] sm:$0xff]
        %v2065 = vld [vmem:[%s640 + $0xd0] sm:$0xff]
        %v2066 = vld [vmem:[%s640 + $0xd8] sm:$0xff]
        %v2067 = vld [vmem:[%s640 + $0xe0] sm:$0xff]
        %v2068 = vld [vmem:[%s640 + $0xe8] sm:$0xff]
        %v2069 = vld [vmem:[%s640 + $0xf0] sm:$0xff]
        %v2070 = vld [vmem:[%s640 + $0xf8] sm:$0xff]
        %v2071 = vld [vmem:[%s640 + $0x100] sm:$0xff]
        %v2072 = vld [vmem:[%s640 + $0x108] sm:$0xff]
        %v2073 = vld [vmem:[%s640 + $0x110] sm:$0xff]
        %v2074 = vld [vmem:[%s640 + $0x118] sm:$0xff]
        %v2075 = vld [vmem:[%s640 + $0x120] sm:$0xff]
        %v2076 = vld [vmem:[%s640 + $0x128] sm:$0xff]
        %v2077 = vld [vmem:[%s640 + $0x130] sm:$0xff]
        %v2078 = vld [vmem:[%s640 + $0x138] sm:$0xff]
        %v2079 = vld [vmem:[%s640 + $0x140] sm:$0xff]
        %v2080 = vld [vmem:[%s640 + $0x148] sm:$0xff]
        %v2081 = vld [vmem:[%s640 + $0x150] sm:$0xff]
        %v2082 = vld [vmem:[%s640 + $0x158] sm:$0xff]
        %v2083 = vld [vmem:[%s640 + $0x160] sm:$0xff]
        %v2084 = vld [vmem:[%s640 + $0x168] sm:$0xff]
        %v2085 = vld [vmem:[%s640 + $0x170] sm:$0xff]
        %v2086 = vld [vmem:[%s640 + $0x178] sm:$0xff]
        %v2087 = vld [vmem:[%s640 + $0x180] sm:$0xff]
        %v2088 = vld [vmem:[%s640 + $0x188] sm:$0xff]
        %v2089 = vld [vmem:[%s640 + $0x190] sm:$0xff]
        %v2090 = vld [vmem:[%s640 + $0x198] sm:$0xff]
        %v2091 = vld [vmem:[%s640 + $0x1a0] sm:$0xff]
        %v2092 = vld [vmem:[%s640 + $0x1a8] sm:$0xff]
        %v2093 = vld [vmem:[%s640 + $0x1b0] sm:$0xff]
        %v2094 = vld [vmem:[%s640 + $0x1b8] sm:$0xff]
        %v2095 = vld [vmem:[%s640 + $0x1c0] sm:$0xff]
        %v2096 = vld [vmem:[%s640 + $0x1c8] sm:$0xff]
        %v2097 = vld [vmem:[%s640 + $0x1d0] sm:$0xff]
        %v2098 = vld [vmem:[%s640 + $0x1d8] sm:$0xff]
        %v2099 = vld [vmem:[%s640 + $0x1e0] sm:$0xff]
        %v2100 = vld [vmem:[%s640 + $0x1e8] sm:$0xff]
        %v2101 = vld [vmem:[%s640 + $0x1f0] sm:$0xff]
        %v2102 = vld [vmem:[%s640 + $0x1f8] sm:$0xff]
        %v2103 = vld [vmem:[%s640 + $0x200] sm:$0xff]
        %v2104 = vld [vmem:[%s640 + $0x208] sm:$0xff]
        %v2105 = vld [vmem:[%s640 + $0x210] sm:$0xff]
        %v2106 = vld [vmem:[%s640 + $0x218] sm:$0xff]
        %v2107 = vld [vmem:[%s640 + $0x220] sm:$0xff]
        %v2108 = vld [vmem:[%s640 + $0x228] sm:$0xff]
        %v2109 = vld [vmem:[%s640 + $0x230] sm:$0xff]
        %v2110 = vld [vmem:[%s640 + $0x238] sm:$0xff]
        %v2111 = vld [vmem:[%s640 + $0x240] sm:$0xff]
        %v2112 = vld [vmem:[%s640 + $0x248] sm:$0xff]
        %v2113 = vld [vmem:[%s640 + $0x250] sm:$0xff]
        %v2114 = vld [vmem:[%s640 + $0x258] sm:$0xff]
        %v2115 = vld [vmem:[%s640 + $0x260] sm:$0xff]
        %v2116 = vld [vmem:[%s640 + $0x268] sm:$0xff]
        %v2117 = vld [vmem:[%s640 + $0x270] sm:$0xff]
        %v2118 = vld [vmem:[%s640 + $0x278] sm:$0xff]
        %v2119 = vld [vmem:[%s640 + $0x280] sm:$0xff]
        %v2120 = vld [vmem:[%s640 + $0x288] sm:$0xff]
        %v2121 = vld [vmem:[%s640 + $0x290] sm:$0xff]
        %v2122 = vld [vmem:[%s640 + $0x298] sm:$0xff]
        %v2123 = vld [vmem:[%s640 + $0x2a0] sm:$0xff]
        %v2124 = vld [vmem:[%s640 + $0x2a8] sm:$0xff]
        %v2125 = vld [vmem:[%s640 + $0x2b0] sm:$0xff]
        %v2126 = vld [vmem:[%s640 + $0x2b8] sm:$0xff]
        %v2127 = vld [vmem:[%s640 + $0x2c0] sm:$0xff]
        %v2128 = vld [vmem:[%s640 + $0x2c8] sm:$0xff]
        %v2129 = vld [vmem:[%s640 + $0x2d0] sm:$0xff]
        %v2130 = vld [vmem:[%s640 + $0x2d8] sm:$0xff]
        %v2131 = vld [vmem:[%s640 + $0x2e0] sm:$0xff]
        %v2132 = vld [vmem:[%s640 + $0x2e8] sm:$0xff]
        %v2133 = vld [vmem:[%s640 + $0x2f0] sm:$0xff]
        %v2134 = vld [vmem:[%s640 + $0x2f8] sm:$0xff]
        %v2135 = vld [vmem:[%s768] sm:$0x3f]
        %v2137 = vlaneseq
        %v2138 = vshrl.u32 %v2137, 7
        %v2139 = vsub.s32 0, %v2138
        %v2140 = vrot.slane %v2135, %v2139
        %v2141 = vlaneseq
        %v2142 = vshrl.u32 %v2141, 7
        %v2143 = vsub.s32 1, %v2142
        %v2144 = vrot.slane %v2135, %v2143
        %v2145 = vlaneseq
        %v2146 = vshrl.u32 %v2145, 7
        %v2147 = vsub.s32 2, %v2146
        %v2148 = vrot.slane %v2135, %v2147
        %v2149 = vlaneseq
        %v2150 = vshrl.u32 %v2149, 7
        %v2151 = vsub.s32 3, %v2150
        %v2152 = vrot.slane %v2135, %v2151
        %v2153 = vlaneseq
        %v2154 = vshrl.u32 %v2153, 7
        %v2155 = vsub.s32 4, %v2154
        %v2156 = vrot.slane %v2135, %v2155
        %v2157 = vlaneseq
        %v2158 = vshrl.u32 %v2157, 7
        %v2159 = vsub.s32 5, %v2158
        %v2160 = vrot.slane %v2135, %v2159
        %v2263 = vunpack.c.l.b16 %v2039
        %v2264 = vunpack.c.h.b16 %v2039
        %v2265 = vunpack.c.l.b16 %v2040
        %v2266 = vunpack.c.h.b16 %v2040
        %v2267 = vunpack.c.l.b16 %v2041
        %v2268 = vunpack.c.h.b16 %v2041
        %v2269 = vunpack.c.l.b16 %v2042
        %v2270 = vunpack.c.h.b16 %v2042
        %v2271 = vunpack.c.l.b16 %v2043
        %v2272 = vunpack.c.h.b16 %v2043
        %v2273 = vunpack.c.l.b16 %v2044
        %v2274 = vunpack.c.h.b16 %v2044
        %v2275 = vunpack.c.l.b16 %v2045
        %v2276 = vunpack.c.h.b16 %v2045
        %v2277 = vunpack.c.l.b16 %v2046
        %v2278 = vunpack.c.h.b16 %v2046
        %v2279 = vunpack.c.l.b16 %v2047
        %v2280 = vunpack.c.h.b16 %v2047
        %v2281 = vunpack.c.l.b16 %v2048
        %v2282 = vunpack.c.h.b16 %v2048
        %v2283 = vunpack.c.l.b16 %v2049
        %v2284 = vunpack.c.h.b16 %v2049
        %v2285 = vunpack.c.l.b16 %v2050
        %v2286 = vunpack.c.h.b16 %v2050
        %v2287 = vunpack.c.l.b16 %v2051
        %v2288 = vunpack.c.h.b16 %v2051
        %v2289 = vunpack.c.l.b16 %v2052
        %v2290 = vunpack.c.h.b16 %v2052
        %v2291 = vunpack.c.l.b16 %v2053
        %v2292 = vunpack.c.h.b16 %v2053
        %v2293 = vunpack.c.l.b16 %v2054
        %v2294 = vunpack.c.h.b16 %v2054
        %v2295 = vunpack.c.l.b16 %v2055
        %v2296 = vunpack.c.h.b16 %v2055
        %v2297 = vunpack.c.l.b16 %v2056
        %v2298 = vunpack.c.h.b16 %v2056
        %v2299 = vunpack.c.l.b16 %v2057
        %v2300 = vunpack.c.h.b16 %v2057
        %v2301 = vunpack.c.l.b16 %v2058
        %v2302 = vunpack.c.h.b16 %v2058
        %v2303 = vunpack.c.l.b16 %v2059
        %v2304 = vunpack.c.h.b16 %v2059
        %v2305 = vunpack.c.l.b16 %v2060
        %v2306 = vunpack.c.h.b16 %v2060
        %v2307 = vunpack.c.l.b16 %v2061
        %v2308 = vunpack.c.h.b16 %v2061
        %v2309 = vunpack.c.l.b16 %v2062
        %v2310 = vunpack.c.h.b16 %v2062
        %v2311 = vunpack.c.l.b16 %v2063
        %v2312 = vunpack.c.h.b16 %v2063
        %v2313 = vunpack.c.l.b16 %v2064
        %v2314 = vunpack.c.h.b16 %v2064
        %v2315 = vunpack.c.l.b16 %v2065
        %v2316 = vunpack.c.h.b16 %v2065
        %v2317 = vunpack.c.l.b16 %v2066
        %v2318 = vunpack.c.h.b16 %v2066
        %v2319 = vunpack.c.l.b16 %v2067
        %v2320 = vunpack.c.h.b16 %v2067
        %v2321 = vunpack.c.l.b16 %v2068
        %v2322 = vunpack.c.h.b16 %v2068
        %v2323 = vunpack.c.l.b16 %v2069
        %v2324 = vunpack.c.h.b16 %v2069
        %v2325 = vunpack.c.l.b16 %v2070
        %v2326 = vunpack.c.h.b16 %v2070
        %v2327 = vunpack.c.l.b16 %v2071
        %v2328 = vunpack.c.h.b16 %v2071
        %v2329 = vunpack.c.l.b16 %v2072
        %v2330 = vunpack.c.h.b16 %v2072
        %v2331 = vunpack.c.l.b16 %v2073
        %v2332 = vunpack.c.h.b16 %v2073
        %v2333 = vunpack.c.l.b16 %v2074
        %v2334 = vunpack.c.h.b16 %v2074
        %v2335 = vunpack.c.l.b16 %v2075
        %v2336 = vunpack.c.h.b16 %v2075
        %v2337 = vunpack.c.l.b16 %v2076
        %v2338 = vunpack.c.h.b16 %v2076
        %v2339 = vunpack.c.l.b16 %v2077
        %v2340 = vunpack.c.h.b16 %v2077
        %v2341 = vunpack.c.l.b16 %v2078
        %v2342 = vunpack.c.h.b16 %v2078
        %v2343 = vunpack.c.l.b16 %v2079
        %v2344 = vunpack.c.h.b16 %v2079
        %v2345 = vunpack.c.l.b16 %v2080
        %v2346 = vunpack.c.h.b16 %v2080
        %v2347 = vunpack.c.l.b16 %v2081
        %v2348 = vunpack.c.h.b16 %v2081
        %v2349 = vunpack.c.l.b16 %v2082
        %v2350 = vunpack.c.h.b16 %v2082
        %v2351 = vunpack.c.l.b16 %v2083
        %v2352 = vunpack.c.h.b16 %v2083
        %v2353 = vunpack.c.l.b16 %v2084
        %v2354 = vunpack.c.h.b16 %v2084
        %v2355 = vunpack.c.l.b16 %v2085
        %v2356 = vunpack.c.h.b16 %v2085
        %v2357 = vunpack.c.l.b16 %v2086
        %v2358 = vunpack.c.h.b16 %v2086
        %v2359 = vunpack.c.l.b16 %v2087
        %v2360 = vunpack.c.h.b16 %v2087
        %v2361 = vunpack.c.l.b16 %v2088
        %v2362 = vunpack.c.h.b16 %v2088
        %v2363 = vunpack.c.l.b16 %v2089
        %v2364 = vunpack.c.h.b16 %v2089
        %v2365 = vunpack.c.l.b16 %v2090
        %v2366 = vunpack.c.h.b16 %v2090
        %v2367 = vunpack.c.l.b16 %v2091
        %v2368 = vunpack.c.h.b16 %v2091
        %v2369 = vunpack.c.l.b16 %v2092
        %v2370 = vunpack.c.h.b16 %v2092
        %v2371 = vunpack.c.l.b16 %v2093
        %v2372 = vunpack.c.h.b16 %v2093
        %v2373 = vunpack.c.l.b16 %v2094
        %v2374 = vunpack.c.h.b16 %v2094
        %v2375 = vunpack.c.l.b16 %v2095
        %v2376 = vunpack.c.h.b16 %v2095
        %v2377 = vunpack.c.l.b16 %v2096
        %v2378 = vunpack.c.h.b16 %v2096
        %v2379 = vunpack.c.l.b16 %v2097
        %v2380 = vunpack.c.h.b16 %v2097
        %v2381 = vunpack.c.l.b16 %v2098
        %v2382 = vunpack.c.h.b16 %v2098
        %v2383 = vunpack.c.l.b16 %v2099
        %v2384 = vunpack.c.h.b16 %v2099
        %v2385 = vunpack.c.l.b16 %v2100
        %v2386 = vunpack.c.h.b16 %v2100
        %v2387 = vunpack.c.l.b16 %v2101
        %v2388 = vunpack.c.h.b16 %v2101
        %v2389 = vunpack.c.l.b16 %v2102
        %v2390 = vunpack.c.h.b16 %v2102
        %v2391 = vunpack.c.l.b16 %v2103
        %v2392 = vunpack.c.h.b16 %v2103
        %v2393 = vunpack.c.l.b16 %v2104
        %v2394 = vunpack.c.h.b16 %v2104
        %v2395 = vunpack.c.l.b16 %v2105
        %v2396 = vunpack.c.h.b16 %v2105
        %v2397 = vunpack.c.l.b16 %v2106
        %v2398 = vunpack.c.h.b16 %v2106
        %v2399 = vunpack.c.l.b16 %v2107
        %v2400 = vunpack.c.h.b16 %v2107
        %v2401 = vunpack.c.l.b16 %v2108
        %v2402 = vunpack.c.h.b16 %v2108
        %v2403 = vunpack.c.l.b16 %v2109
        %v2404 = vunpack.c.h.b16 %v2109
        %v2405 = vunpack.c.l.b16 %v2110
        %v2406 = vunpack.c.h.b16 %v2110
        %v2407 = vunpack.c.l.b16 %v2111
        %v2408 = vunpack.c.h.b16 %v2111
        %v2409 = vunpack.c.l.b16 %v2112
        %v2410 = vunpack.c.h.b16 %v2112
        %v2411 = vunpack.c.l.b16 %v2113
        %v2412 = vunpack.c.h.b16 %v2113
        %v2413 = vunpack.c.l.b16 %v2114
        %v2414 = vunpack.c.h.b16 %v2114
        %v2415 = vunpack.c.l.b16 %v2115
        %v2416 = vunpack.c.h.b16 %v2115
        %v2417 = vunpack.c.l.b16 %v2116
        %v2418 = vunpack.c.h.b16 %v2116
        %v2419 = vunpack.c.l.b16 %v2117
        %v2420 = vunpack.c.h.b16 %v2117
        %v2421 = vunpack.c.l.b16 %v2118
        %v2422 = vunpack.c.h.b16 %v2118
        %v2423 = vunpack.c.l.b16 %v2119
        %v2424 = vunpack.c.h.b16 %v2119
        %v2425 = vunpack.c.l.b16 %v2120
        %v2426 = vunpack.c.h.b16 %v2120
        %v2427 = vunpack.c.l.b16 %v2121
        %v2428 = vunpack.c.h.b16 %v2121
        %v2429 = vunpack.c.l.b16 %v2122
        %v2430 = vunpack.c.h.b16 %v2122
        %v2431 = vunpack.c.l.b16 %v2123
        %v2432 = vunpack.c.h.b16 %v2123
        %v2433 = vunpack.c.l.b16 %v2124
        %v2434 = vunpack.c.h.b16 %v2124
        %v2435 = vunpack.c.l.b16 %v2125
        %v2436 = vunpack.c.h.b16 %v2125
        %v2437 = vunpack.c.l.b16 %v2126
        %v2438 = vunpack.c.h.b16 %v2126
        %v2439 = vunpack.c.l.b16 %v2127
        %v2440 = vunpack.c.h.b16 %v2127
        %v2441 = vunpack.c.l.b16 %v2128
        %v2442 = vunpack.c.h.b16 %v2128
        %v2443 = vunpack.c.l.b16 %v2129
        %v2444 = vunpack.c.h.b16 %v2129
        %v2445 = vunpack.c.l.b16 %v2130
        %v2446 = vunpack.c.h.b16 %v2130
        %v2447 = vunpack.c.l.b16 %v2131
        %v2448 = vunpack.c.h.b16 %v2131
        %v2449 = vunpack.c.l.b16 %v2132
        %v2450 = vunpack.c.h.b16 %v2132
        %v2451 = vunpack.c.l.b16 %v2133
        %v2452 = vunpack.c.h.b16 %v2133
        %v2453 = vunpack.c.l.b16 %v2134
        %v2454 = vunpack.c.h.b16 %v2134
        %v2455 = vpack.c.b16 %v2269, %v2263
        %v2456 = vpack.c.b16 %v2270, %v2264
        %v2457 = vpack.c.b16 %v2271, %v2265
        %v2458 = vpack.c.b16 %v2272, %v2266
        %v2459 = vpack.c.b16 %v2273, %v2267
        %v2460 = vpack.c.b16 %v2274, %v2268
        %v2461 = vpack.c.b16 %v2281, %v2275
        %v2462 = vpack.c.b16 %v2282, %v2276
        %v2463 = vpack.c.b16 %v2283, %v2277
        %v2464 = vpack.c.b16 %v2284, %v2278
        %v2465 = vpack.c.b16 %v2285, %v2279
        %v2466 = vpack.c.b16 %v2286, %v2280
        %v2467 = vpack.c.b16 %v2293, %v2287
        %v2468 = vpack.c.b16 %v2294, %v2288
        %v2469 = vpack.c.b16 %v2295, %v2289
        %v2470 = vpack.c.b16 %v2296, %v2290
        %v2471 = vpack.c.b16 %v2297, %v2291
        %v2472 = vpack.c.b16 %v2298, %v2292
        %v2473 = vpack.c.b16 %v2305, %v2299
        %v2474 = vpack.c.b16 %v2306, %v2300
        %v2475 = vpack.c.b16 %v2307, %v2301
        %v2476 = vpack.c.b16 %v2308, %v2302
        %v2477 = vpack.c.b16 %v2309, %v2303
        %v2478 = vpack.c.b16 %v2310, %v2304
        %v2479 = vpack.c.b16 %v2317, %v2311
        %v2480 = vpack.c.b16 %v2318, %v2312
        %v2481 = vpack.c.b16 %v2319, %v2313
        %v2482 = vpack.c.b16 %v2320, %v2314
        %v2483 = vpack.c.b16 %v2321, %v2315
        %v2484 = vpack.c.b16 %v2322, %v2316
        %v2485 = vpack.c.b16 %v2329, %v2323
        %v2486 = vpack.c.b16 %v2330, %v2324
        %v2487 = vpack.c.b16 %v2331, %v2325
        %v2488 = vpack.c.b16 %v2332, %v2326
        %v2489 = vpack.c.b16 %v2333, %v2327
        %v2490 = vpack.c.b16 %v2334, %v2328
        %v2491 = vpack.c.b16 %v2341, %v2335
        %v2492 = vpack.c.b16 %v2342, %v2336
        %v2493 = vpack.c.b16 %v2343, %v2337
        %v2494 = vpack.c.b16 %v2344, %v2338
        %v2495 = vpack.c.b16 %v2345, %v2339
        %v2496 = vpack.c.b16 %v2346, %v2340
        %v2497 = vpack.c.b16 %v2353, %v2347
        %v2498 = vpack.c.b16 %v2354, %v2348
        %v2499 = vpack.c.b16 %v2355, %v2349
        %v2500 = vpack.c.b16 %v2356, %v2350
        %v2501 = vpack.c.b16 %v2357, %v2351
        %v2502 = vpack.c.b16 %v2358, %v2352
        %v2503 = vpack.c.b16 %v2365, %v2359
        %v2504 = vpack.c.b16 %v2366, %v2360
        %v2505 = vpack.c.b16 %v2367, %v2361
        %v2506 = vpack.c.b16 %v2368, %v2362
        %v2507 = vpack.c.b16 %v2369, %v2363
        %v2508 = vpack.c.b16 %v2370, %v2364
        %v2509 = vpack.c.b16 %v2377, %v2371
        %v2510 = vpack.c.b16 %v2378, %v2372
        %v2511 = vpack.c.b16 %v2379, %v2373
        %v2512 = vpack.c.b16 %v2380, %v2374
        %v2513 = vpack.c.b16 %v2381, %v2375
        %v2514 = vpack.c.b16 %v2382, %v2376
        %v2515 = vpack.c.b16 %v2389, %v2383
        %v2516 = vpack.c.b16 %v2390, %v2384
        %v2517 = vpack.c.b16 %v2391, %v2385
        %v2518 = vpack.c.b16 %v2392, %v2386
        %v2519 = vpack.c.b16 %v2393, %v2387
        %v2520 = vpack.c.b16 %v2394, %v2388
        %v2521 = vpack.c.b16 %v2401, %v2395
        %v2522 = vpack.c.b16 %v2402, %v2396
        %v2523 = vpack.c.b16 %v2403, %v2397
        %v2524 = vpack.c.b16 %v2404, %v2398
        %v2525 = vpack.c.b16 %v2405, %v2399
        %v2526 = vpack.c.b16 %v2406, %v2400
        %v2527 = vpack.c.b16 %v2413, %v2407
        %v2528 = vpack.c.b16 %v2414, %v2408
        %v2529 = vpack.c.b16 %v2415, %v2409
        %v2530 = vpack.c.b16 %v2416, %v2410
        %v2531 = vpack.c.b16 %v2417, %v2411
        %v2532 = vpack.c.b16 %v2418, %v2412
        %v2533 = vpack.c.b16 %v2425, %v2419
        %v2534 = vpack.c.b16 %v2426, %v2420
        %v2535 = vpack.c.b16 %v2427, %v2421
        %v2536 = vpack.c.b16 %v2428, %v2422
        %v2537 = vpack.c.b16 %v2429, %v2423
        %v2538 = vpack.c.b16 %v2430, %v2424
        %v2539 = vpack.c.b16 %v2437, %v2431
        %v2540 = vpack.c.b16 %v2438, %v2432
        %v2541 = vpack.c.b16 %v2439, %v2433
        %v2542 = vpack.c.b16 %v2440, %v2434
        %v2543 = vpack.c.b16 %v2441, %v2435
        %v2544 = vpack.c.b16 %v2442, %v2436
        %v2545 = vpack.c.b16 %v2449, %v2443
        %v2546 = vpack.c.b16 %v2450, %v2444
        %v2547 = vpack.c.b16 %v2451, %v2445
        %v2548 = vpack.c.b16 %v2452, %v2446
        %v2549 = vpack.c.b16 %v2453, %v2447
        %v2550 = vpack.c.b16 %v2454, %v2448
        %2647 = vmatprep.subr.bf16.mxu0 %v2456
        %2648 = vmatpush1.bf16.msra.mxu0 %v2455
        %2649 = vmatprep.subr.bf16.mxu0 %v2462
        %2650 = vmatpush1.bf16.msra.mxu0 %v2461
        %2651 = vmatprep.subr.bf16.mxu0 %v2468
        %2652 = vmatpush1.bf16.msra.mxu0 %v2467
        %2653 = vmatprep.subr.bf16.mxu0 %v2474
        %2654 = vmatpush1.bf16.msra.mxu0 %v2473
        %2655 = vmatprep.subr.bf16.mxu0 %v2480
        %2656 = vmatpush1.bf16.msra.mxu0 %v2479
        %2657 = vmatprep.subr.bf16.mxu0 %v2486
        %2658 = vmatpush1.bf16.msra.mxu0 %v2485
        %2659 = vmatprep.subr.bf16.mxu0 %v2492
        %2660 = vmatpush1.bf16.msra.mxu0 %v2491
        %2661 = vmatprep.subr.bf16.mxu0 %v2498
        %2662 = vmatpush1.bf16.msra.mxu0 %v2497
        %2663 = vmatprep.subr.bf16.mxu0 %v2504
        %2664 = vmatpush1.bf16.msra.mxu0 %v2503
        %2665 = vmatprep.subr.bf16.mxu0 %v2510
        %2666 = vmatpush1.bf16.msra.mxu0 %v2509
        %2667 = vmatprep.subr.bf16.mxu0 %v2516
        %2668 = vmatpush1.bf16.msra.mxu0 %v2515
        %2669 = vmatprep.subr.bf16.mxu0 %v2522
        %2670 = vmatpush1.bf16.msra.mxu0 %v2521
        %2671 = vmatprep.subr.bf16.mxu0 %v2528
        %2672 = vmatpush1.bf16.msra.mxu0 %v2527
        %2673 = vmatprep.subr.bf16.mxu0 %v2534
        %2674 = vmatpush1.bf16.msra.mxu0 %v2533
        %2675 = vmatprep.subr.bf16.mxu0 %v2540
        %2676 = vmatpush1.bf16.msra.mxu0 %v2539
        %2677 = vmatprep.subr.bf16.mxu0 %v2546
        %2678 = vmatpush1.bf16.msra.mxu0 %v2545
        %2679 = vmatprep.mubr.bf16.mxu0 %v2024
        %2680 = vmatmul.mubr.bf16.gmra.mrb[0].mxu0 %v2023
        %v2681 = vpop.f32.mrb[0].mxu0
        %v2682 = vadd.f32 %v2140, %v2681
        %v2683 = vpop.f32.mrb[0].mxu0
        %v2684 = vadd.f32 %v2144, %v2683
        %v2685 = vpop.f32.mrb[0].mxu0
        %v2686 = vadd.f32 %v2140, %v2685
        %v2687 = vpop.f32.mrb[0].mxu0
        %v2688 = vadd.f32 %v2144, %v2687
        %2689 = vmatprep.mubr.bf16.mxu0 %v2026
        %2690 = vmatmul.mubr.bf16.gmra.mrb[0].mxu0 %v2025
        %v2691 = vpop.f32.mrb[0].mxu0
        %v2692 = vadd.f32 %v2140, %v2691
        %v2693 = vpop.f32.mrb[0].mxu0
        %v2694 = vadd.f32 %v2144, %v2693
        %v2695 = vpop.f32.mrb[0].mxu0
        %v2696 = vadd.f32 %v2140, %v2695
        %v2697 = vpop.f32.mrb[0].mxu0
        %v2698 = vadd.f32 %v2144, %v2697
        %2699 = vmatprep.mubr.bf16.mxu0 %v2028
        %2700 = vmatmul.mubr.bf16.gmra.mrb[0].mxu0 %v2027
        %v2701 = vpop.f32.mrb[0].mxu0
        %v2702 = vadd.f32 %v2140, %v2701
        %v2703 = vpop.f32.mrb[0].mxu0
        %v2704 = vadd.f32 %v2144, %v2703
        %v2705 = vpop.f32.mrb[0].mxu0
        %v2706 = vadd.f32 %v2140, %v2705
        %v2707 = vpop.f32.mrb[0].mxu0
        %v2708 = vadd.f32 %v2144, %v2707
        %2709 = vmatprep.mubr.bf16.mxu0 %v2030
        %2710 = vmatmul.mubr.bf16.gmra.mrb[0].mxu0 %v2029
        %v2711 = vpop.f32.mrb[0].mxu0
        %v2712 = vadd.f32 %v2140, %v2711
        %v2713 = vpop.f32.mrb[0].mxu0
        %v2714 = vadd.f32 %v2144, %v2713
        %v2715 = vpop.f32.mrb[0].mxu0
        %v2716 = vadd.f32 %v2140, %v2715
        %v2717 = vpop.f32.mrb[0].mxu0
        %v2718 = vadd.f32 %v2144, %v2717
        %2719 = vmatprep.mubr.bf16.mxu0 %v2032
        %2720 = vmatmul.mubr.bf16.gmra.mrb[0].mxu0 %v2031
        %v2721 = vpop.f32.mrb[0].mxu0
        %v2722 = vadd.f32 %v2140, %v2721
        %v2723 = vpop.f32.mrb[0].mxu0
        %v2724 = vadd.f32 %v2144, %v2723
        %v2725 = vpop.f32.mrb[0].mxu0
        %v2726 = vadd.f32 %v2140, %v2725
        %v2727 = vpop.f32.mrb[0].mxu0
        %v2728 = vadd.f32 %v2144, %v2727
        %2729 = vmatprep.mubr.bf16.mxu0 %v2034
        %2730 = vmatmul.mubr.bf16.gmra.mrb[0].mxu0 %v2033
        %v2731 = vpop.f32.mrb[0].mxu0
        %v2732 = vadd.f32 %v2140, %v2731
        %v2733 = vpop.f32.mrb[0].mxu0
        %v2734 = vadd.f32 %v2144, %v2733
        %v2735 = vpop.f32.mrb[0].mxu0
        %v2736 = vadd.f32 %v2140, %v2735
        %v2737 = vpop.f32.mrb[0].mxu0
        %v2738 = vadd.f32 %v2144, %v2737
        %2739 = vmatprep.mubr.bf16.mxu0 %v2036
        %2740 = vmatmul.mubr.bf16.gmra.mrb[0].mxu0 %v2035
        %v2741 = vpop.f32.mrb[0].mxu0
        %v2742 = vadd.f32 %v2140, %v2741
        %v2743 = vpop.f32.mrb[0].mxu0
        %v2744 = vadd.f32 %v2144, %v2743
        %v2745 = vpop.f32.mrb[0].mxu0
        %v2746 = vadd.f32 %v2140, %v2745
        %v2747 = vpop.f32.mrb[0].mxu0
        %v2748 = vadd.f32 %v2144, %v2747
        %2749 = vmatprep.mubr.bf16.mxu0 %v2038
        %2750 = vmatmul.mubr.bf16.gmra.mrb[0].mxu0 %v2037
        %v2751 = vpop.f32.mrb[0].mxu0
        %v2752 = vadd.f32 %v2140, %v2751
        %v2753 = vpop.f32.mrb[0].mxu0
        %v2754 = vadd.f32 %v2144, %v2753
        %v2755 = vpop.f32.mrb[0].mxu0
        %v2756 = vadd.f32 %v2140, %v2755
        %v2757 = vpop.f32.mrb[0].mxu0
        %v2758 = vadd.f32 %v2144, %v2757
        %2759 = vdwg.mxu0
        %2760 = vmatprep.subr.bf16.mxu0 %v2458
        %2761 = vmatpush1.bf16.msra.mxu0 %v2457
        %2762 = vmatprep.subr.bf16.mxu0 %v2464
        %2763 = vmatpush1.bf16.msra.mxu0 %v2463
        %2764 = vmatprep.subr.bf16.mxu0 %v2470
        %2765 = vmatpush1.bf16.msra.mxu0 %v2469
        %2766 = vmatprep.subr.bf16.mxu0 %v2476
        %2767 = vmatpush1.bf16.msra.mxu0 %v2475
        %2768 = vmatprep.subr.bf16.mxu0 %v2482
        %2769 = vmatpush1.bf16.msra.mxu0 %v2481
        %2770 = vmatprep.subr.bf16.mxu0 %v2488
        %2771 = vmatpush1.bf16.msra.mxu0 %v2487
        %2772 = vmatprep.subr.bf16.mxu0 %v2494
        %2773 = vmatpush1.bf16.msra.mxu0 %v2493
        %2774 = vmatprep.subr.bf16.mxu0 %v2500
        %2775 = vmatpush1.bf16.msra.mxu0 %v2499
        %2776 = vmatprep.subr.bf16.mxu0 %v2506
        %2777 = vmatpush1.bf16.msra.mxu0 %v2505
        %2778 = vmatprep.subr.bf16.mxu0 %v2512
        %2779 = vmatpush1.bf16.msra.mxu0 %v2511
        %2780 = vmatprep.subr.bf16.mxu0 %v2518
        %2781 = vmatpush1.bf16.msra.mxu0 %v2517
        %2782 = vmatprep.subr.bf16.mxu0 %v2524
        %2783 = vmatpush1.bf16.msra.mxu0 %v2523
        %2784 = vmatprep.subr.bf16.mxu0 %v2530
        %2785 = vmatpush1.bf16.msra.mxu0 %v2529
        %2786 = vmatprep.subr.bf16.mxu0 %v2536
        %2787 = vmatpush1.bf16.msra.mxu0 %v2535
        %2788 = vmatprep.subr.bf16.mxu0 %v2542
        %2789 = vmatpush1.bf16.msra.mxu0 %v2541
        %2790 = vmatprep.subr.bf16.mxu0 %v2548
        %2791 = vmatpush1.bf16.msra.mxu0 %v2547
        %2792 = vmatprep.mubr.bf16.mxu0 %v2024
        %2793 = vmatmul.mubr.bf16.gmra.mrb[0].mxu0 %v2023
        %v2794 = vpop.f32.mrb[0].mxu0
        %v2795 = vadd.f32 %v2148, %v2794
        %v2796 = vpop.f32.mrb[0].mxu0
        %v2797 = vadd.f32 %v2152, %v2796
        %v2798 = vpop.f32.mrb[0].mxu0
        %v2799 = vadd.f32 %v2148, %v2798
        %v2800 = vpop.f32.mrb[0].mxu0
        %v2801 = vadd.f32 %v2152, %v2800
        %2802 = vmatprep.mubr.bf16.mxu0 %v2026
        %2803 = vmatmul.mubr.bf16.gmra.mrb[0].mxu0 %v2025
        %v2804 = vpop.f32.mrb[0].mxu0
        %v2805 = vadd.f32 %v2148, %v2804
        %v2806 = vpop.f32.mrb[0].mxu0
        %v2807 = vadd.f32 %v2152, %v2806
        %v2808 = vpop.f32.mrb[0].mxu0
        %v2809 = vadd.f32 %v2148, %v2808
        %v2810 = vpop.f32.mrb[0].mxu0
        %v2811 = vadd.f32 %v2152, %v2810
        %2812 = vmatprep.mubr.bf16.mxu0 %v2028
        %2813 = vmatmul.mubr.bf16.gmra.mrb[0].mxu0 %v2027
        %v2814 = vpop.f32.mrb[0].mxu0
        %v2815 = vadd.f32 %v2148, %v2814
        %v2816 = vpop.f32.mrb[0].mxu0
        %v2817 = vadd.f32 %v2152, %v2816
        %v2818 = vpop.f32.mrb[0].mxu0
        %v2819 = vadd.f32 %v2148, %v2818
        %v2820 = vpop.f32.mrb[0].mxu0
        %v2821 = vadd.f32 %v2152, %v2820
        %2822 = vmatprep.mubr.bf16.mxu0 %v2030
        %2823 = vmatmul.mubr.bf16.gmra.mrb[0].mxu0 %v2029
        %v2824 = vpop.f32.mrb[0].mxu0
        %v2825 = vadd.f32 %v2148, %v2824
        %v2826 = vpop.f32.mrb[0].mxu0
        %v2827 = vadd.f32 %v2152, %v2826
        %v2828 = vpop.f32.mrb[0].mxu0
        %v2829 = vadd.f32 %v2148, %v2828
        %v2830 = vpop.f32.mrb[0].mxu0
        %v2831 = vadd.f32 %v2152, %v2830
        %2832 = vmatprep.mubr.bf16.mxu0 %v2032
        %2833 = vmatmul.mubr.bf16.gmra.mrb[0].mxu0 %v2031
        %v2834 = vpop.f32.mrb[0].mxu0
        %v2835 = vadd.f32 %v2148, %v2834
        %v2836 = vpop.f32.mrb[0].mxu0
        %v2837 = vadd.f32 %v2152, %v2836
        %v2838 = vpop.f32.mrb[0].mxu0
        %v2839 = vadd.f32 %v2148, %v2838
        %v2840 = vpop.f32.mrb[0].mxu0
        %v2841 = vadd.f32 %v2152, %v2840
        %2842 = vmatprep.mubr.bf16.mxu0 %v2034
        %2843 = vmatmul.mubr.bf16.gmra.mrb[0].mxu0 %v2033
        %v2844 = vpop.f32.mrb[0].mxu0
        %v2845 = vadd.f32 %v2148, %v2844
        %v2846 = vpop.f32.mrb[0].mxu0
        %v2847 = vadd.f32 %v2152, %v2846
        %v2848 = vpop.f32.mrb[0].mxu0
        %v2849 = vadd.f32 %v2148, %v2848
        %v2850 = vpop.f32.mrb[0].mxu0
        %v2851 = vadd.f32 %v2152, %v2850
        %2852 = vmatprep.mubr.bf16.mxu0 %v2036
        %2853 = vmatmul.mubr.bf16.gmra.mrb[0].mxu0 %v2035
        %v2854 = vpop.f32.mrb[0].mxu0
        %v2855 = vadd.f32 %v2148, %v2854
        %v2856 = vpop.f32.mrb[0].mxu0
        %v2857 = vadd.f32 %v2152, %v2856
        %v2858 = vpop.f32.mrb[0].mxu0
        %v2859 = vadd.f32 %v2148, %v2858
        %v2860 = vpop.f32.mrb[0].mxu0
        %v2861 = vadd.f32 %v2152, %v2860
        %2862 = vmatprep.mubr.bf16.mxu0 %v2038
        %2863 = vmatmul.mubr.bf16.gmra.mrb[0].mxu0 %v2037
        %v2864 = vpop.f32.mrb[0].mxu0
        %v2865 = vadd.f32 %v2148, %v2864
        %v2866 = vpop.f32.mrb[0].mxu0
        %v2867 = vadd.f32 %v2152, %v2866
        %v2868 = vpop.f32.mrb[0].mxu0
        %v2869 = vadd.f32 %v2148, %v2868
        %v2870 = vpop.f32.mrb[0].mxu0
        %v2871 = vadd.f32 %v2152, %v2870
        %2872 = vdwg.mxu0
        %2873 = vmatprep.subr.bf16.mxu0 %v2460
        %2874 = vmatpush1.bf16.msra.mxu0 %v2459
        %2875 = vmatprep.subr.bf16.mxu0 %v2466
        %2876 = vmatpush1.bf16.msra.mxu0 %v2465
        %2877 = vmatprep.subr.bf16.mxu0 %v2472
        %2878 = vmatpush1.bf16.msra.mxu0 %v2471
        %2879 = vmatprep.subr.bf16.mxu0 %v2478
        %2880 = vmatpush1.bf16.msra.mxu0 %v2477
        %2881 = vmatprep.subr.bf16.mxu0 %v2484
        %2882 = vmatpush1.bf16.msra.mxu0 %v2483
        %2883 = vmatprep.subr.bf16.mxu0 %v2490
        %2884 = vmatpush1.bf16.msra.mxu0 %v2489
        %2885 = vmatprep.subr.bf16.mxu0 %v2496
        %2886 = vmatpush1.bf16.msra.mxu0 %v2495
        %2887 = vmatprep.subr.bf16.mxu0 %v2502
        %2888 = vmatpush1.bf16.msra.mxu0 %v2501
        %2889 = vmatprep.subr.bf16.mxu0 %v2508
        %2890 = vmatpush1.bf16.msra.mxu0 %v2507
        %2891 = vmatprep.subr.bf16.mxu0 %v2514
        %2892 = vmatpush1.bf16.msra.mxu0 %v2513
        %2893 = vmatprep.subr.bf16.mxu0 %v2520
        %2894 = vmatpush1.bf16.msra.mxu0 %v2519
        %2895 = vmatprep.subr.bf16.mxu0 %v2526
        %2896 = vmatpush1.bf16.msra.mxu0 %v2525
        %2897 = vmatprep.subr.bf16.mxu0 %v2532
        %2898 = vmatpush1.bf16.msra.mxu0 %v2531
        %2899 = vmatprep.subr.bf16.mxu0 %v2538
        %2900 = vmatpush1.bf16.msra.mxu0 %v2537
        %2901 = vmatprep.subr.bf16.mxu0 %v2544
        %2902 = vmatpush1.bf16.msra.mxu0 %v2543
        %2903 = vmatprep.subr.bf16.mxu0 %v2550
        %2904 = vmatpush1.bf16.msra.mxu0 %v2549
        %2905 = vmatprep.mubr.bf16.mxu0 %v2024
        %2906 = vmatmul.mubr.bf16.gmra.mrb[0].mxu0 %v2023
        %v2907 = vpop.f32.mrb[0].mxu0
        %v2908 = vadd.f32 %v2156, %v2907
        %v2909 = vpop.f32.mrb[0].mxu0
        %v2910 = vadd.f32 %v2160, %v2909
        %v2911 = vpop.f32.mrb[0].mxu0
        %v2912 = vadd.f32 %v2156, %v2911
        %v2913 = vpop.f32.mrb[0].mxu0
        %v2914 = vadd.f32 %v2160, %v2913
        %2915 = vmatprep.mubr.bf16.mxu0 %v2026
        %2916 = vmatmul.mubr.bf16.gmra.mrb[0].mxu0 %v2025
        %v2917 = vpop.f32.mrb[0].mxu0
        %v2918 = vadd.f32 %v2156, %v2917
        %v2919 = vpop.f32.mrb[0].mxu0
        %v2920 = vadd.f32 %v2160, %v2919
        %v2921 = vpop.f32.mrb[0].mxu0
        %v2922 = vadd.f32 %v2156, %v2921
        %v2923 = vpop.f32.mrb[0].mxu0
        %v2924 = vadd.f32 %v2160, %v2923
        %2925 = vmatprep.mubr.bf16.mxu0 %v2028
        %2926 = vmatmul.mubr.bf16.gmra.mrb[0].mxu0 %v2027
        %v2927 = vpop.f32.mrb[0].mxu0
        %v2928 = vadd.f32 %v2156, %v2927
        %v2929 = vpop.f32.mrb[0].mxu0
        %v2930 = vadd.f32 %v2160, %v2929
        %v2931 = vpop.f32.mrb[0].mxu0
        %v2932 = vadd.f32 %v2156, %v2931
        %v2933 = vpop.f32.mrb[0].mxu0
        %v2934 = vadd.f32 %v2160, %v2933
        %2935 = vmatprep.mubr.bf16.mxu0 %v2030
        %2936 = vmatmul.mubr.bf16.gmra.mrb[0].mxu0 %v2029
        %v2937 = vpop.f32.mrb[0].mxu0
        %v2938 = vadd.f32 %v2156, %v2937
        %v2939 = vpop.f32.mrb[0].mxu0
        %v2940 = vadd.f32 %v2160, %v2939
        %v2941 = vpop.f32.mrb[0].mxu0
        %v2942 = vadd.f32 %v2156, %v2941
        %v2943 = vpop.f32.mrb[0].mxu0
        %v2944 = vadd.f32 %v2160, %v2943
        %2945 = vmatprep.mubr.bf16.mxu0 %v2032
        %2946 = vmatmul.mubr.bf16.gmra.mrb[0].mxu0 %v2031
        %v2947 = vpop.f32.mrb[0].mxu0
        %v2948 = vadd.f32 %v2156, %v2947
        %v2949 = vpop.f32.mrb[0].mxu0
        %v2950 = vadd.f32 %v2160, %v2949
        %v2951 = vpop.f32.mrb[0].mxu0
        %v2952 = vadd.f32 %v2156, %v2951
        %v2953 = vpop.f32.mrb[0].mxu0
        %v2954 = vadd.f32 %v2160, %v2953
        %2955 = vmatprep.mubr.bf16.mxu0 %v2034
        %2956 = vmatmul.mubr.bf16.gmra.mrb[0].mxu0 %v2033
        %v2957 = vpop.f32.mrb[0].mxu0
        %v2958 = vadd.f32 %v2156, %v2957
        %v2959 = vpop.f32.mrb[0].mxu0
        %v2960 = vadd.f32 %v2160, %v2959
        %v2961 = vpop.f32.mrb[0].mxu0
        %v2962 = vadd.f32 %v2156, %v2961
        %v2963 = vpop.f32.mrb[0].mxu0
        %v2964 = vadd.f32 %v2160, %v2963
        %2965 = vmatprep.mubr.bf16.mxu0 %v2036
        %2966 = vmatmul.mubr.bf16.gmra.mrb[0].mxu0 %v2035
        %v2967 = vpop.f32.mrb[0].mxu0
        %v2968 = vadd.f32 %v2156, %v2967
        %v2969 = vpop.f32.mrb[0].mxu0
        %v2970 = vadd.f32 %v2160, %v2969
        %v2971 = vpop.f32.mrb[0].mxu0
        %v2972 = vadd.f32 %v2156, %v2971
        %v2973 = vpop.f32.mrb[0].mxu0
        %v2974 = vadd.f32 %v2160, %v2973
        %2975 = vmatprep.mubr.bf16.mxu0 %v2038
        %2976 = vmatmul.mubr.bf16.gmra.mrb[0].mxu0 %v2037
        %v2977 = vpop.f32.mrb[0].mxu0
        %v2978 = vadd.f32 %v2156, %v2977
        %v2979 = vpop.f32.mrb[0].mxu0
        %v2980 = vadd.f32 %v2160, %v2979
        %v2981 = vpop.f32.mrb[0].mxu0
        %v2982 = vadd.f32 %v2156, %v2981
        %v2983 = vpop.f32.mrb[0].mxu0
        %v2984 = vadd.f32 %v2160, %v2983
        %2985 = vdwg.mxu0
        %v2986 = vpack.c.bf16 %v2686, %v2682
        %v2987 = vpack.c.bf16 %v2688, %v2684
        %v2988 = vpack.c.bf16 %v2799, %v2795
        %v2989 = vpack.c.bf16 %v2801, %v2797
        %v2990 = vpack.c.bf16 %v2912, %v2908
        %v2991 = vpack.c.bf16 %v2914, %v2910
        %v2992 = vpack.c.bf16 %v2696, %v2692
        %v2993 = vpack.c.bf16 %v2698, %v2694
        %v2994 = vpack.c.bf16 %v2809, %v2805
        %v2995 = vpack.c.bf16 %v2811, %v2807
        %v2996 = vpack.c.bf16 %v2922, %v2918
        %v2997 = vpack.c.bf16 %v2924, %v2920
        %v2998 = vpack.c.bf16 %v2706, %v2702
        %v2999 = vpack.c.bf16 %v2708, %v2704
        %v3000 = vpack.c.bf16 %v2819, %v2815
        %v3001 = vpack.c.bf16 %v2821, %v2817
        %v3002 = vpack.c.bf16 %v2932, %v2928
        %v3003 = vpack.c.bf16 %v2934, %v2930
        %v3004 = vpack.c.bf16 %v2716, %v2712
        %v3005 = vpack.c.bf16 %v2718, %v2714
        %v3006 = vpack.c.bf16 %v2829, %v2825
        %v3007 = vpack.c.bf16 %v2831, %v2827
        %v3008 = vpack.c.bf16 %v2942, %v2938
        %v3009 = vpack.c.bf16 %v2944, %v2940
        %v3010 = vpack.c.bf16 %v2726, %v2722
        %v3011 = vpack.c.bf16 %v2728, %v2724
        %v3012 = vpack.c.bf16 %v2839, %v2835
        %v3013 = vpack.c.bf16 %v2841, %v2837
        %v3014 = vpack.c.bf16 %v2952, %v2948
        %v3015 = vpack.c.bf16 %v2954, %v2950
        %v3016 = vpack.c.bf16 %v2736, %v2732
        %v3017 = vpack.c.bf16 %v2738, %v2734
        %v3018 = vpack.c.bf16 %v2849, %v2845
        %v3019 = vpack.c.bf16 %v2851, %v2847
        %v3020 = vpack.c.bf16 %v2962, %v2958
        %v3021 = vpack.c.bf16 %v2964, %v2960
        %v3022 = vpack.c.bf16 %v2746, %v2742
        %v3023 = vpack.c.bf16 %v2748, %v2744
        %v3024 = vpack.c.bf16 %v2859, %v2855
        %v3025 = vpack.c.bf16 %v2861, %v2857
        %v3026 = vpack.c.bf16 %v2972, %v2968
        %v3027 = vpack.c.bf16 %v2974, %v2970
        %v3028 = vpack.c.bf16 %v2756, %v2752
        %v3029 = vpack.c.bf16 %v2758, %v2754
        %v3030 = vpack.c.bf16 %v2869, %v2865
        %v3031 = vpack.c.bf16 %v2871, %v2867
        %v3032 = vpack.c.bf16 %v2982, %v2978
        %v3033 = vpack.c.bf16 %v2984, %v2980
        %s3034 = smul.u32 0, 6
        %s3035 = smul.addr %s3034, 8
        %s3036 = scalar_lea.vmem [#allocation3], %s3035
        %3037 = vst [vmem:[%s3036] sm:$0xff] %v2986
        %3038 = vst [vmem:[%s3036 + $0x8] sm:$0xff] %v2987
        %3039 = vst [vmem:[%s3036 + $0x10] sm:$0xff] %v2988
        %3040 = vst [vmem:[%s3036 + $0x18] sm:$0xff] %v2989
        %3041 = vst [vmem:[%s3036 + $0x20] sm:$0xff] %v2990
        %3042 = vst [vmem:[%s3036 + $0x28] sm:$0xff] %v2991
        %3043 = vst [vmem:[%s3036 + $0x30] sm:$0xff] %v2992
        %3044 = vst [vmem:[%s3036 + $0x38] sm:$0xff] %v2993
        %3045 = vst [vmem:[%s3036 + $0x40] sm:$0xff] %v2994
        %3046 = vst [vmem:[%s3036 + $0x48] sm:$0xff] %v2995
        %3047 = vst [vmem:[%s3036 + $0x50] sm:$0xff] %v2996
        %3048 = vst [vmem:[%s3036 + $0x58] sm:$0xff] %v2997
        %3049 = vst [vmem:[%s3036 + $0x60] sm:$0xff] %v2998
        %3050 = vst [vmem:[%s3036 + $0x68] sm:$0xff] %v2999
        %3051 = vst [vmem:[%s3036 + $0x70] sm:$0xff] %v3000
        %3052 = vst [vmem:[%s3036 + $0x78] sm:$0xff] %v3001
        %3053 = vst [vmem:[%s3036 + $0x80] sm:$0xff] %v3002
        %3054 = vst [vmem:[%s3036 + $0x88] sm:$0xff] %v3003
        %3055 = vst [vmem:[%s3036 + $0x90] sm:$0xff] %v3004
        %3056 = vst [vmem:[%s3036 + $0x98] sm:$0xff] %v3005
        %3057 = vst [vmem:[%s3036 + $0xa0] sm:$0xff] %v3006
        %3058 = vst [vmem:[%s3036 + $0xa8] sm:$0xff] %v3007
        %3059 = vst [vmem:[%s3036 + $0xb0] sm:$0xff] %v3008
        %3060 = vst [vmem:[%s3036 + $0xb8] sm:$0xff] %v3009
        %3061 = vst [vmem:[%s3036 + $0xc0] sm:$0xff] %v3010
        %3062 = vst [vmem:[%s3036 + $0xc8] sm:$0xff] %v3011
        %3063 = vst [vmem:[%s3036 + $0xd0] sm:$0xff] %v3012
        %3064 = vst [vmem:[%s3036 + $0xd8] sm:$0xff] %v3013
        %3065 = vst [vmem:[%s3036 + $0xe0] sm:$0xff] %v3014
        %3066 = vst [vmem:[%s3036 + $0xe8] sm:$0xff] %v3015
        %3067 = vst [vmem:[%s3036 + $0xf0] sm:$0xff] %v3016
        %3068 = vst [vmem:[%s3036 + $0xf8] sm:$0xff] %v3017
        %3069 = vst [vmem:[%s3036 + $0x100] sm:$0xff] %v3018
        %3070 = vst [vmem:[%s3036 + $0x108] sm:$0xff] %v3019
        %3071 = vst [vmem:[%s3036 + $0x110] sm:$0xff] %v3020
        %3072 = vst [vmem:[%s3036 + $0x118] sm:$0xff] %v3021
        %3073 = vst [vmem:[%s3036 + $0x120] sm:$0xff] %v3022
        %3074 = vst [vmem:[%s3036 + $0x128] sm:$0xff] %v3023
        %3075 = vst [vmem:[%s3036 + $0x130] sm:$0xff] %v3024
        %3076 = vst [vmem:[%s3036 + $0x138] sm:$0xff] %v3025
        %3077 = vst [vmem:[%s3036 + $0x140] sm:$0xff] %v3026
        %3078 = vst [vmem:[%s3036 + $0x148] sm:$0xff] %v3027
        %3079 = vst [vmem:[%s3036 + $0x150] sm:$0xff] %v3028
        %3080 = vst [vmem:[%s3036 + $0x158] sm:$0xff] %v3029
        %3081 = vst [vmem:[%s3036 + $0x160] sm:$0xff] %v3030
        %3082 = vst [vmem:[%s3036 + $0x168] sm:$0xff] %v3031
        %3083 = vst [vmem:[%s3036 + $0x170] sm:$0xff] %v3032
        %3084 = vst [vmem:[%s3036 + $0x178] sm:$0xff] %v3033
        %v3085 = vld [vmem:[#allocation3] sm:$0xff]
        %v3086 = vld [vmem:[#allocation3 + $0x8] sm:$0xff]
        %v3087 = vld [vmem:[#allocation3 + $0x30] sm:$0xff]
        %v3088 = vld [vmem:[#allocation3 + $0x38] sm:$0xff]
        %v3089 = vld [vmem:[#allocation3 + $0x60] sm:$0xff]
        %v3090 = vld [vmem:[#allocation3 + $0x68] sm:$0xff]
        %v3091 = vld [vmem:[#allocation3 + $0x90] sm:$0xff]
        %v3092 = vld [vmem:[#allocation3 + $0x98] sm:$0xff]
        %v3093 = vld [vmem:[#allocation3 + $0xc0] sm:$0xff]
        %v3094 = vld [vmem:[#allocation3 + $0xc8] sm:$0xff]
        %v3095 = vld [vmem:[#allocation3 + $0xf0] sm:$0xff]
        %v3096 = vld [vmem:[#allocation3 + $0xf8] sm:$0xff]
        %v3097 = vld [vmem:[#allocation3 + $0x120] sm:$0xff]
        %v3098 = vld [vmem:[#allocation3 + $0x128] sm:$0xff]
        %v3099 = vld [vmem:[#allocation3 + $0x150] sm:$0xff]
        %v3100 = vld [vmem:[#allocation3 + $0x158] sm:$0xff]
        %v3101 = vld [vmem:[%s3036 + $0x10] sm:$0xff]
        %v3102 = vld [vmem:[%s3036 + $0x18] sm:$0xff]
        %v3103 = vld [vmem:[%s3036 + $0x40] sm:$0xff]
        %v3104 = vld [vmem:[%s3036 + $0x48] sm:$0xff]
        %v3105 = vld [vmem:[%s3036 + $0x70] sm:$0xff]
        %v3106 = vld [vmem:[%s3036 + $0x78] sm:$0xff]
        %v3107 = vld [vmem:[%s3036 + $0xa0] sm:$0xff]
        %v3108 = vld [vmem:[%s3036 + $0xa8] sm:$0xff]
        %v3109 = vld [vmem:[%s3036 + $0xd0] sm:$0xff]
        %v3110 = vld [vmem:[%s3036 + $0xd8] sm:$0xff]
        %v3111 = vld [vmem:[%s3036 + $0x100] sm:$0xff]
        %v3112 = vld [vmem:[%s3036 + $0x108] sm:$0xff]
        %v3113 = vld [vmem:[%s3036 + $0x130] sm:$0xff]
        %v3114 = vld [vmem:[%s3036 + $0x138] sm:$0xff]
        %v3115 = vld [vmem:[%s3036 + $0x160] sm:$0xff]
        %v3116 = vld [vmem:[%s3036 + $0x168] sm:$0xff]
        %v3117 = vld [vmem:[%s3036 + $0x20] sm:$0xff]
        %v3118 = vld [vmem:[%s3036 + $0x28] sm:$0xff]
        %v3119 = vld [vmem:[%s3036 + $0x50] sm:$0xff]
        %v3120 = vld [vmem:[%s3036 + $0x58] sm:$0xff]
        %v3121 = vld [vmem:[%s3036 + $0x80] sm:$0xff]
        %v3122 = vld [vmem:[%s3036 + $0x88] sm:$0xff]
        %v3123 = vld [vmem:[%s3036 + $0xb0] sm:$0xff]
        %v3124 = vld [vmem:[%s3036 + $0xb8] sm:$0xff]
        %v3125 = vld [vmem:[%s3036 + $0xe0] sm:$0xff]
        %v3126 = vld [vmem:[%s3036 + $0xe8] sm:$0xff]
        %v3127 = vld [vmem:[%s3036 + $0x110] sm:$0xff]
        %v3128 = vld [vmem:[%s3036 + $0x118] sm:$0xff]
        %v3129 = vld [vmem:[%s3036 + $0x140] sm:$0xff]
        %v3130 = vld [vmem:[%s3036 + $0x148] sm:$0xff]
        %v3131 = vld [vmem:[%s3036 + $0x170] sm:$0xff]
        %v3132 = vld [vmem:[%s3036 + $0x178] sm:$0xff]
        %v3133 = vlaneseq
        %v3134 = vand.u32 %v3133, 127
        %v3135 = vstv 0
        %v3136 = vadd.s32 %v3134, %v3135
        %vm3137 = vcmp.lt.s32.totalorder %v3136, 16
        %vm3138 = vcmask 523264
        %v3140 = vsel %vm3138, %v3085, 0
        %v3143 = vsel %vm3138, %v3087, 0
        %v3146 = vsel %vm3138, %v3089, 0
        %v3149 = vsel %vm3138, %v3091, 0
        %v3152 = vsel %vm3138, %v3093, 0
        %v3155 = vsel %vm3138, %v3095, 0
        %v3158 = vsel %vm3138, %v3097, 0
        %v3161 = vsel %vm3138, %v3099, 0
        %v3164 = vsel %vm3138, %v3101, 0
        %v3167 = vsel %vm3138, %v3103, 0
        %v3170 = vsel %vm3138, %v3105, 0
        %v3173 = vsel %vm3138, %v3107, 0
        %v3176 = vsel %vm3138, %v3109, 0
        %v3179 = vsel %vm3138, %v3111, 0
        %v3182 = vsel %vm3138, %v3113, 0
        %v3185 = vsel %vm3138, %v3115, 0
        %3187 = vmatprep.subr.bf16.mxu0 0
        %3188 = vmatpush1.bf16.xpose.msra.mxu0 %v3164
        %3189 = vmatprep.subr.bf16.mxu0 0
        %3190 = vmatpush1.bf16.xpose.msra.mxu0 %v3167
        %3191 = vmatprep.subr.bf16.mxu0 0
        %3192 = vmatpush1.bf16.xpose.msra.mxu0 %v3170
        %3193 = vmatprep.subr.bf16.mxu0 0
        %3194 = vmatpush1.bf16.xpose.msra.mxu0 %v3173
        %3195 = vmatprep.subr.bf16.mxu0 0
        %3196 = vmatpush1.bf16.xpose.msra.mxu0 %v3176
        %3197 = vmatprep.subr.bf16.mxu0 0
        %3198 = vmatpush1.bf16.xpose.msra.mxu0 %v3179
        %3199 = vmatprep.subr.bf16.mxu0 0
        %3200 = vmatpush1.bf16.xpose.msra.mxu0 %v3182
        %3201 = vmatprep.subr.bf16.mxu0 0
        %3202 = vmatpush1.bf16.xpose.msra.mxu0 %v3185
        %3203 = vmatprep.subr.bf16.mxu0 0
        %3204 = vmatpush1.bf16.xpose.msra.mxu0 0
        %3205 = vmatprep.subr.bf16.mxu0 0
        %3206 = vmatpush1.bf16.xpose.msra.mxu0 0
        %3207 = vmatprep.subr.bf16.mxu0 0
        %3208 = vmatpush1.bf16.xpose.msra.mxu0 0
        %3209 = vmatprep.subr.bf16.mxu0 0
        %3210 = vmatpush1.bf16.xpose.msra.mxu0 0
        %3211 = vmatprep.subr.bf16.mxu0 0
        %3212 = vmatpush1.bf16.xpose.msra.mxu0 0
        %3213 = vmatprep.subr.bf16.mxu0 0
        %3214 = vmatpush1.bf16.xpose.msra.mxu0 0
        %3215 = vmatprep.subr.bf16.mxu0 0
        %3216 = vmatpush1.bf16.xpose.msra.mxu0 0
        %3217 = vmatprep.subr.bf16.mxu0 0
        %3218 = vmatpush1.bf16.xpose.msra.mxu0 0
        %3219 = vmatprep.mubr.bf16.mxu0 0
        %3220 = vmatmul.mubr.bf16.gmra.mrb[0].mxu0 %v3140
        %v3221 = vpop.f32.mrb[0].mxu0
        %v3222 = vadd.f32 0.0, %v3221
        %v3223 = vpop.f32.mrb[0].mxu0
        %v3224 = vpop.f32.mrb[0].mxu0
        %v3225 = vadd.f32 0.0, %v3224
        %v3226 = vpop.f32.mrb[0].mxu0
        %3227 = vmatprep.mubr.bf16.mxu0 0
        %3228 = vmatmul.mubr.bf16.gmra.mrb[0].mxu0 %v3143
        %v3229 = vpop.f32.mrb[0].mxu0
        %v3230 = vadd.f32 0.0, %v3229
        %v3231 = vpop.f32.mrb[0].mxu0
        %v3232 = vpop.f32.mrb[0].mxu0
        %v3233 = vadd.f32 0.0, %v3232
        %v3234 = vpop.f32.mrb[0].mxu0
        %3235 = vmatprep.mubr.bf16.mxu0 0
        %3236 = vmatmul.mubr.bf16.gmra.mrb[0].mxu0 %v3146
        %v3237 = vpop.f32.mrb[0].mxu0
        %v3238 = vadd.f32 0.0, %v3237
        %v3239 = vpop.f32.mrb[0].mxu0
        %v3240 = vpop.f32.mrb[0].mxu0
        %v3241 = vadd.f32 0.0, %v3240
        %v3242 = vpop.f32.mrb[0].mxu0
        %3243 = vmatprep.mubr.bf16.mxu0 0
        %3244 = vmatmul.mubr.bf16.gmra.mrb[0].mxu0 %v3149
        %v3245 = vpop.f32.mrb[0].mxu0
        %v3246 = vadd.f32 0.0, %v3245
        %v3247 = vpop.f32.mrb[0].mxu0
        %v3248 = vpop.f32.mrb[0].mxu0
        %v3249 = vadd.f32 0.0, %v3248
        %v3250 = vpop.f32.mrb[0].mxu0
        %3251 = vmatprep.mubr.bf16.mxu0 0
        %3252 = vmatmul.mubr.bf16.gmra.mrb[0].mxu0 %v3152
        %v3253 = vpop.f32.mrb[0].mxu0
        %v3254 = vadd.f32 0.0, %v3253
        %v3255 = vpop.f32.mrb[0].mxu0
        %v3256 = vpop.f32.mrb[0].mxu0
        %v3257 = vadd.f32 0.0, %v3256
        %v3258 = vpop.f32.mrb[0].mxu0
        %3259 = vmatprep.mubr.bf16.mxu0 0
        %3260 = vmatmul.mubr.bf16.gmra.mrb[0].mxu0 %v3155
        %v3261 = vpop.f32.mrb[0].mxu0
        %v3262 = vadd.f32 0.0, %v3261
        %v3263 = vpop.f32.mrb[0].mxu0
        %v3264 = vpop.f32.mrb[0].mxu0
        %v3265 = vadd.f32 0.0, %v3264
        %v3266 = vpop.f32.mrb[0].mxu0
        %3267 = vmatprep.mubr.bf16.mxu0 0
        %3268 = vmatmul.mubr.bf16.gmra.mrb[0].mxu0 %v3158
        %v3269 = vpop.f32.mrb[0].mxu0
        %v3270 = vadd.f32 0.0, %v3269
        %v3271 = vpop.f32.mrb[0].mxu0
        %v3272 = vpop.f32.mrb[0].mxu0
        %v3273 = vadd.f32 0.0, %v3272
        %v3274 = vpop.f32.mrb[0].mxu0
        %3275 = vmatprep.mubr.bf16.mxu0 0
        %3276 = vmatmul.mubr.bf16.gmra.mrb[0].mxu0 %v3161
        %v3277 = vpop.f32.mrb[0].mxu0
        %v3278 = vadd.f32 0.0, %v3277
        %v3279 = vpop.f32.mrb[0].mxu0
        %v3280 = vpop.f32.mrb[0].mxu0
        %v3281 = vadd.f32 0.0, %v3280
        %v3282 = vpop.f32.mrb[0].mxu0
        %3283 = vdwg.mxu0
        %v3284 = vmul.f32 %v3222, 0.125
        %v3285 = vmul.f32 %v3225, 0.125
        %v3286 = vmul.f32 %v3230, 0.125
        %v3287 = vmul.f32 %v3233, 0.125
        %v3288 = vmul.f32 %v3238, 0.125
        %v3289 = vmul.f32 %v3241, 0.125
        %v3290 = vmul.f32 %v3246, 0.125
        %v3291 = vmul.f32 %v3249, 0.125
        %v3292 = vmul.f32 %v3254, 0.125
        %v3293 = vmul.f32 %v3257, 0.125
        %v3294 = vmul.f32 %v3262, 0.125
        %v3295 = vmul.f32 %v3265, 0.125
        %v3296 = vmul.f32 %v3270, 0.125
        %v3297 = vmul.f32 %v3273, 0.125
        %v3298 = vmul.f32 %v3278, 0.125
        %v3299 = vmul.f32 %v3281, 0.125
        %v3300 = vsel %vm3137, 1, 0
        %vm3301 = vcmp.eq.s32.totalorder %v3300, 1
        %v3302 = vsel %vm3301, %v3284, -1e+30
        %v3303 = vsel %vm3301, %v3285, -1e+30
        %v3304 = vsel %vm3301, %v3286, -1e+30
        %v3305 = vsel %vm3301, %v3287, -1e+30
        %v3306 = vsel %vm3301, %v3288, -1e+30
        %v3307 = vsel %vm3301, %v3289, -1e+30
        %v3308 = vsel %vm3301, %v3290, -1e+30
        %v3309 = vsel %vm3301, %v3291, -1e+30
        %v3310 = vsel %vm3301, %v3292, -1e+30
        %v3311 = vsel %vm3301, %v3293, -1e+30
        %v3312 = vsel %vm3301, %v3294, -1e+30
        %v3313 = vsel %vm3301, %v3295, -1e+30
        %v3314 = vsel %vm3301, %v3296, -1e+30
        %v3315 = vsel %vm3301, %v3297, -1e+30
        %v3316 = vsel %vm3301, %v3298, -1e+30
        %v3317 = vsel %vm3301, %v3299, -1e+30
        %3318 = vmax.xlane.f32.xlu0 %v3302
        %v3319 = vpop.xlane.xlu0 %3318
        %3320 = vmax.xlane.f32.xlu0 %v3303
        %v3321 = vpop.xlane.xlu0 %3320
        %3322 = vmax.xlane.f32.xlu0 %v3304
        %v3323 = vpop.xlane.xlu0 %3322
        %3324 = vmax.xlane.f32.xlu0 %v3305
        %v3325 = vpop.xlane.xlu0 %3324
        %3326 = vmax.xlane.f32.xlu0 %v3306
        %v3327 = vpop.xlane.xlu0 %3326
        %3328 = vmax.xlane.f32.xlu0 %v3307
        %v3329 = vpop.xlane.xlu0 %3328
        %3330 = vmax.xlane.f32.xlu0 %v3308
        %v3331 = vpop.xlane.xlu0 %3330
        %3332 = vmax.xlane.f32.xlu0 %v3309
        %v3333 = vpop.xlane.xlu0 %3332
        %3334 = vmax.xlane.f32.xlu0 %v3310
        %v3335 = vpop.xlane.xlu0 %3334
        %3336 = vmax.xlane.f32.xlu0 %v3311
        %v3337 = vpop.xlane.xlu0 %3336
        %3338 = vmax.xlane.f32.xlu0 %v3312
        %v3339 = vpop.xlane.xlu0 %3338
        %3340 = vmax.xlane.f32.xlu0 %v3313
        %v3341 = vpop.xlane.xlu0 %3340
        %3342 = vmax.xlane.f32.xlu0 %v3314
        %v3343 = vpop.xlane.xlu0 %3342
        %3344 = vmax.xlane.f32.xlu0 %v3315
        %v3345 = vpop.xlane.xlu0 %3344
        %3346 = vmax.xlane.f32.xlu0 %v3316
        %v3347 = vpop.xlane.xlu0 %3346
        %3348 = vmax.xlane.f32.xlu0 %v3317
        %v3349 = vpop.xlane.xlu0 %3348
        %v3350 = vmax.f32 %v3319, -1e+30
        %v3351 = vmax.f32 %v3321, -1e+30
        %v3352 = vmax.f32 %v3323, -1e+30
        %v3353 = vmax.f32 %v3325, -1e+30
        %v3354 = vmax.f32 %v3327, -1e+30
        %v3355 = vmax.f32 %v3329, -1e+30
        %v3356 = vmax.f32 %v3331, -1e+30
        %v3357 = vmax.f32 %v3333, -1e+30
        %v3358 = vmax.f32 %v3335, -1e+30
        %v3359 = vmax.f32 %v3337, -1e+30
        %v3360 = vmax.f32 %v3339, -1e+30
        %v3361 = vmax.f32 %v3341, -1e+30
        %v3362 = vmax.f32 %v3343, -1e+30
        %v3363 = vmax.f32 %v3345, -1e+30
        %v3364 = vmax.f32 %v3347, -1e+30
        %v3365 = vmax.f32 %v3349, -1e+30
        %v3366 = vsub.f32 -1e+30, %v3350
        %v3367 = vsub.f32 -1e+30, %v3351
        %v3368 = vsub.f32 -1e+30, %v3352
        %v3369 = vsub.f32 -1e+30, %v3353
        %v3370 = vsub.f32 -1e+30, %v3354
        %v3371 = vsub.f32 -1e+30, %v3355
        %v3372 = vsub.f32 -1e+30, %v3356
        %v3373 = vsub.f32 -1e+30, %v3357
        %v3374 = vsub.f32 -1e+30, %v3358
        %v3375 = vsub.f32 -1e+30, %v3359
        %v3376 = vsub.f32 -1e+30, %v3360
        %v3377 = vsub.f32 -1e+30, %v3361
        %v3378 = vsub.f32 -1e+30, %v3362
        %v3379 = vsub.f32 -1e+30, %v3363
        %v3380 = vsub.f32 -1e+30, %v3364
        %v3381 = vsub.f32 -1e+30, %v3365
        %v3382 = vmul.f32 %v3366, 1.442695
        %v3383 = vpow.pop %v3382
        %v3384 = vmul.f32 %v3367, 1.442695
        %v3385 = vpow.pop %v3384
        %v3386 = vmul.f32 %v3368, 1.442695
        %v3387 = vpow.pop %v3386
        %v3388 = vmul.f32 %v3369, 1.442695
        %v3389 = vpow.pop %v3388
        %v3390 = vmul.f32 %v3370, 1.442695
        %v3391 = vpow.pop %v3390
        %v3392 = vmul.f32 %v3371, 1.442695
        %v3393 = vpow.pop %v3392
        %v3394 = vmul.f32 %v3372, 1.442695
        %v3395 = vpow.pop %v3394
        %v3396 = vmul.f32 %v3373, 1.442695
        %v3397 = vpow.pop %v3396
        %v3398 = vmul.f32 %v3374, 1.442695
        %v3399 = vpow.pop %v3398
        %v3400 = vmul.f32 %v3375, 1.442695
        %v3401 = vpow.pop %v3400
        %v3402 = vmul.f32 %v3376, 1.442695
        %v3403 = vpow.pop %v3402
        %v3404 = vmul.f32 %v3377, 1.442695
        %v3405 = vpow.pop %v3404
        %v3406 = vmul.f32 %v3378, 1.442695
        %v3407 = vpow.pop %v3406
        %v3408 = vmul.f32 %v3379, 1.442695
        %v3409 = vpow.pop %v3408
        %v3410 = vmul.f32 %v3380, 1.442695
        %v3411 = vpow.pop %v3410
        %v3412 = vmul.f32 %v3381, 1.442695
        %v3413 = vpow.pop %v3412
        %v3414 = vsub.f32 %v3302, %v3350
        %v3415 = vsub.f32 %v3303, %v3351
        %v3416 = vsub.f32 %v3304, %v3352
        %v3417 = vsub.f32 %v3305, %v3353
        %v3418 = vsub.f32 %v3306, %v3354
        %v3419 = vsub.f32 %v3307, %v3355
        %v3420 = vsub.f32 %v3308, %v3356
        %v3421 = vsub.f32 %v3309, %v3357
        %v3422 = vsub.f32 %v3310, %v3358
        %v3423 = vsub.f32 %v3311, %v3359
        %v3424 = vsub.f32 %v3312, %v3360
        %v3425 = vsub.f32 %v3313, %v3361
        %v3426 = vsub.f32 %v3314, %v3362
        %v3427 = vsub.f32 %v3315, %v3363
        %v3428 = vsub.f32 %v3316, %v3364
        %v3429 = vsub.f32 %v3317, %v3365
        %v3430 = vmul.f32 %v3414, 1.442695
        %v3431 = vpow.pop %v3430
        %v3432 = vmul.f32 %v3415, 1.442695
        %v3433 = vpow.pop %v3432
        %v3434 = vmul.f32 %v3416, 1.442695
        %v3435 = vpow.pop %v3434
        %v3436 = vmul.f32 %v3417, 1.442695
        %v3437 = vpow.pop %v3436
        %v3438 = vmul.f32 %v3418, 1.442695
        %v3439 = vpow.pop %v3438
        %v3440 = vmul.f32 %v3419, 1.442695
        %v3441 = vpow.pop %v3440
        %v3442 = vmul.f32 %v3420, 1.442695
        %v3443 = vpow.pop %v3442
        %v3444 = vmul.f32 %v3421, 1.442695
        %v3445 = vpow.pop %v3444
        %v3446 = vmul.f32 %v3422, 1.442695
        %v3447 = vpow.pop %v3446
        %v3448 = vmul.f32 %v3423, 1.442695
        %v3449 = vpow.pop %v3448
        %v3450 = vmul.f32 %v3424, 1.442695
        %v3451 = vpow.pop %v3450
        %v3452 = vmul.f32 %v3425, 1.442695
        %v3453 = vpow.pop %v3452
        %v3454 = vmul.f32 %v3426, 1.442695
        %v3455 = vpow.pop %v3454
        %v3456 = vmul.f32 %v3427, 1.442695
        %v3457 = vpow.pop %v3456
        %v3458 = vmul.f32 %v3428, 1.442695
        %v3459 = vpow.pop %v3458
        %v3460 = vmul.f32 %v3429, 1.442695
        %v3461 = vpow.pop %v3460
        %v3462 = vmul.f32 %v3383, 0.0
        %v3463 = vmul.f32 %v3385, 0.0
        %v3464 = vmul.f32 %v3387, 0.0
        %v3465 = vmul.f32 %v3389, 0.0
        %v3466 = vmul.f32 %v3391, 0.0
        %v3467 = vmul.f32 %v3393, 0.0
        %v3468 = vmul.f32 %v3395, 0.0
        %v3469 = vmul.f32 %v3397, 0.0
        %v3470 = vmul.f32 %v3399, 0.0
        %v3471 = vmul.f32 %v3401, 0.0
        %v3472 = vmul.f32 %v3403, 0.0
        %v3473 = vmul.f32 %v3405, 0.0
        %v3474 = vmul.f32 %v3407, 0.0
        %v3475 = vmul.f32 %v3409, 0.0
        %v3476 = vmul.f32 %v3411, 0.0
        %v3477 = vmul.f32 %v3413, 0.0
        %3478 = vadd.xlane.f32.xlu0 %v3431
        %v3479 = vpop.xlane.xlu0 %3478
        %3480 = vadd.xlane.f32.xlu0 %v3433
        %v3481 = vpop.xlane.xlu0 %3480
        %3482 = vadd.xlane.f32.xlu0 %v3435
        %v3483 = vpop.xlane.xlu0 %3482
        %3484 = vadd.xlane.f32.xlu0 %v3437
        %v3485 = vpop.xlane.xlu0 %3484
        %3486 = vadd.xlane.f32.xlu0 %v3439
        %v3487 = vpop.xlane.xlu0 %3486
        %3488 = vadd.xlane.f32.xlu0 %v3441
        %v3489 = vpop.xlane.xlu0 %3488
        %3490 = vadd.xlane.f32.xlu0 %v3443
        %v3491 = vpop.xlane.xlu0 %3490
        %3492 = vadd.xlane.f32.xlu0 %v3445
        %v3493 = vpop.xlane.xlu0 %3492
        %3494 = vadd.xlane.f32.xlu0 %v3447
        %v3495 = vpop.xlane.xlu0 %3494
        %3496 = vadd.xlane.f32.xlu0 %v3449
        %v3497 = vpop.xlane.xlu0 %3496
        %3498 = vadd.xlane.f32.xlu0 %v3451
        %v3499 = vpop.xlane.xlu0 %3498
        %3500 = vadd.xlane.f32.xlu0 %v3453
        %v3501 = vpop.xlane.xlu0 %3500
        %3502 = vadd.xlane.f32.xlu0 %v3455
        %v3503 = vpop.xlane.xlu0 %3502
        %3504 = vadd.xlane.f32.xlu0 %v3457
        %v3505 = vpop.xlane.xlu0 %3504
        %3506 = vadd.xlane.f32.xlu0 %v3459
        %v3507 = vpop.xlane.xlu0 %3506
        %3508 = vadd.xlane.f32.xlu0 %v3461
        %v3509 = vpop.xlane.xlu0 %3508
        %v3510 = vadd.f32 %v3462, %v3479
        %v3511 = vadd.f32 %v3463, %v3481
        %v3512 = vadd.f32 %v3464, %v3483
        %v3513 = vadd.f32 %v3465, %v3485
        %v3514 = vadd.f32 %v3466, %v3487
        %v3515 = vadd.f32 %v3467, %v3489
        %v3516 = vadd.f32 %v3468, %v3491
        %v3517 = vadd.f32 %v3469, %v3493
        %v3518 = vadd.f32 %v3470, %v3495
        %v3519 = vadd.f32 %v3471, %v3497
        %v3520 = vadd.f32 %v3472, %v3499
        %v3521 = vadd.f32 %v3473, %v3501
        %v3522 = vadd.f32 %v3474, %v3503
        %v3523 = vadd.f32 %v3475, %v3505
        %v3524 = vadd.f32 %v3476, %v3507
        %v3525 = vadd.f32 %v3477, %v3509
        %v3526 = vpack.c.bf16 %v3433, %v3431
        %v3527 = vpack.c.bf16 %v3437, %v3435
        %v3528 = vpack.c.bf16 %v3441, %v3439
        %v3529 = vpack.c.bf16 %v3445, %v3443
        %v3530 = vpack.c.bf16 %v3449, %v3447
        %v3531 = vpack.c.bf16 %v3453, %v3451
        %v3532 = vpack.c.bf16 %v3457, %v3455
        %v3533 = vpack.c.bf16 %v3461, %v3459
        %3534 = vmatprep.subr.bf16.mxu0 0
        %3535 = vmatpush1.bf16.msra.mxu0 %v3117
        %3536 = vmatprep.subr.bf16.mxu0 0
        %3537 = vmatpush1.bf16.msra.mxu0 %v3119
        %3538 = vmatprep.subr.bf16.mxu0 0
        %3539 = vmatpush1.bf16.msra.mxu0 %v3121
        %3540 = vmatprep.subr.bf16.mxu0 0
        %3541 = vmatpush1.bf16.msra.mxu0 %v3123
        %3542 = vmatprep.subr.bf16.mxu0 0
        %3543 = vmatpush1.bf16.msra.mxu0 %v3125
        %3544 = vmatprep.subr.bf16.mxu0 0
        %3545 = vmatpush1.bf16.msra.mxu0 %v3127
        %3546 = vmatprep.subr.bf16.mxu0 0
        %3547 = vmatpush1.bf16.msra.mxu0 %v3129
        %3548 = vmatprep.subr.bf16.mxu0 0
        %3549 = vmatpush1.bf16.msra.mxu0 %v3131
        %3550 = vmatprep.subr.bf16.mxu0 0
        %3551 = vmatpush1.bf16.msra.mxu0 0
        %3552 = vmatprep.subr.bf16.mxu0 0
        %3553 = vmatpush1.bf16.msra.mxu0 0
        %3554 = vmatprep.subr.bf16.mxu0 0
        %3555 = vmatpush1.bf16.msra.mxu0 0
        %3556 = vmatprep.subr.bf16.mxu0 0
        %3557 = vmatpush1.bf16.msra.mxu0 0
        %3558 = vmatprep.subr.bf16.mxu0 0
        %3559 = vmatpush1.bf16.msra.mxu0 0
        %3560 = vmatprep.subr.bf16.mxu0 0
        %3561 = vmatpush1.bf16.msra.mxu0 0
        %3562 = vmatprep.subr.bf16.mxu0 0
        %3563 = vmatpush1.bf16.msra.mxu0 0
        %3564 = vmatprep.subr.bf16.mxu0 0
        %3565 = vmatpush1.bf16.msra.mxu0 0
        %3566 = vmatprep.mubr.bf16.mxu0 0
        %3567 = vmatmul.mubr.bf16.gmra.mrb[0].mxu0 %v3526
        %v3568 = vpop.f32.mrb[0].mxu0
        %v3569 = vadd.f32 0.0, %v3568
        %v3570 = vpop.f32.mrb[0].mxu0
        %v3571 = vpop.f32.mrb[0].mxu0
        %v3572 = vadd.f32 0.0, %v3571
        %v3573 = vpop.f32.mrb[0].mxu0
        %3574 = vmatprep.mubr.bf16.mxu0 0
        %3575 = vmatmul.mubr.bf16.gmra.mrb[0].mxu0 %v3527
        %v3576 = vpop.f32.mrb[0].mxu0
        %v3577 = vadd.f32 0.0, %v3576
        %v3578 = vpop.f32.mrb[0].mxu0
        %v3579 = vpop.f32.mrb[0].mxu0
        %v3580 = vadd.f32 0.0, %v3579
        %v3581 = vpop.f32.mrb[0].mxu0
        %3582 = vmatprep.mubr.bf16.mxu0 0
        %3583 = vmatmul.mubr.bf16.gmra.mrb[0].mxu0 %v3528
        %v3584 = vpop.f32.mrb[0].mxu0
        %v3585 = vadd.f32 0.0, %v3584
        %v3586 = vpop.f32.mrb[0].mxu0
        %v3587 = vpop.f32.mrb[0].mxu0
        %v3588 = vadd.f32 0.0, %v3587
        %v3589 = vpop.f32.mrb[0].mxu0
        %3590 = vmatprep.mubr.bf16.mxu0 0
        %3591 = vmatmul.mubr.bf16.gmra.mrb[0].mxu0 %v3529
        %v3592 = vpop.f32.mrb[0].mxu0
        %v3593 = vadd.f32 0.0, %v3592
        %v3594 = vpop.f32.mrb[0].mxu0
        %v3595 = vpop.f32.mrb[0].mxu0
        %v3596 = vadd.f32 0.0, %v3595
        %v3597 = vpop.f32.mrb[0].mxu0
        %3598 = vmatprep.mubr.bf16.mxu0 0
        %3599 = vmatmul.mubr.bf16.gmra.mrb[0].mxu0 %v3530
        %v3600 = vpop.f32.mrb[0].mxu0
        %v3601 = vadd.f32 0.0, %v3600
        %v3602 = vpop.f32.mrb[0].mxu0
        %v3603 = vpop.f32.mrb[0].mxu0
        %v3604 = vadd.f32 0.0, %v3603
        %v3605 = vpop.f32.mrb[0].mxu0
        %3606 = vmatprep.mubr.bf16.mxu0 0
        %3607 = vmatmul.mubr.bf16.gmra.mrb[0].mxu0 %v3531
        %v3608 = vpop.f32.mrb[0].mxu0
        %v3609 = vadd.f32 0.0, %v3608
        %v3610 = vpop.f32.mrb[0].mxu0
        %v3611 = vpop.f32.mrb[0].mxu0
        %v3612 = vadd.f32 0.0, %v3611
        %v3613 = vpop.f32.mrb[0].mxu0
        %3614 = vmatprep.mubr.bf16.mxu0 0
        %3615 = vmatmul.mubr.bf16.gmra.mrb[0].mxu0 %v3532
        %v3616 = vpop.f32.mrb[0].mxu0
        %v3617 = vadd.f32 0.0, %v3616
        %v3618 = vpop.f32.mrb[0].mxu0
        %v3619 = vpop.f32.mrb[0].mxu0
        %v3620 = vadd.f32 0.0, %v3619
        %v3621 = vpop.f32.mrb[0].mxu0
        %3622 = vmatprep.mubr.bf16.mxu0 0
        %3623 = vmatmul.mubr.bf16.gmra.mrb[0].mxu0 %v3533
        %v3624 = vpop.f32.mrb[0].mxu0
        %v3625 = vadd.f32 0.0, %v3624
        %v3626 = vpop.f32.mrb[0].mxu0
        %v3627 = vpop.f32.mrb[0].mxu0
        %v3628 = vadd.f32 0.0, %v3627
        %v3629 = vpop.f32.mrb[0].mxu0
        %3630 = vdwg.mxu0
        %v3631 = vadd.f32 %v3462, %v3569
        %v3632 = vadd.f32 %v3463, %v3572
        %v3633 = vadd.f32 %v3464, %v3577
        %v3634 = vadd.f32 %v3465, %v3580
        %v3635 = vadd.f32 %v3466, %v3585
        %v3636 = vadd.f32 %v3467, %v3588
        %v3637 = vadd.f32 %v3468, %v3593
        %v3638 = vadd.f32 %v3469, %v3596
        %v3639 = vadd.f32 %v3470, %v3601
        %v3640 = vadd.f32 %v3471, %v3604
        %v3641 = vadd.f32 %v3472, %v3609
        %v3642 = vadd.f32 %v3473, %v3612
        %v3643 = vadd.f32 %v3474, %v3617
        %v3644 = vadd.f32 %v3475, %v3620
        %v3645 = vadd.f32 %v3476, %v3625
        %v3646 = vadd.f32 %v3477, %v3628
        %3655 = vrot.lane.b32.xlu0 %v3085, 64
        %v3656 = vpop.permute.xlu0 %3655
        %3657 = vrot.lane.b32.xlu0 %v3087, 64
        %v3658 = vpop.permute.xlu0 %3657
        %3659 = vrot.lane.b32.xlu0 %v3089, 64
        %v3660 = vpop.permute.xlu0 %3659
        %3661 = vrot.lane.b32.xlu0 %v3091, 64
        %v3662 = vpop.permute.xlu0 %3661
        %3663 = vrot.lane.b32.xlu0 %v3093, 64
        %v3664 = vpop.permute.xlu0 %3663
        %3665 = vrot.lane.b32.xlu0 %v3095, 64
        %v3666 = vpop.permute.xlu0 %3665
        %3667 = vrot.lane.b32.xlu0 %v3097, 64
        %v3668 = vpop.permute.xlu0 %3667
        %3669 = vrot.lane.b32.xlu0 %v3099, 64
        %v3670 = vpop.permute.xlu0 %3669
        %3679 = vrot.lane.b32.xlu0 %v3101, 64
        %v3680 = vpop.permute.xlu0 %3679
        %3681 = vrot.lane.b32.xlu0 %v3103, 64
        %v3682 = vpop.permute.xlu0 %3681
        %3683 = vrot.lane.b32.xlu0 %v3105, 64
        %v3684 = vpop.permute.xlu0 %3683
        %3685 = vrot.lane.b32.xlu0 %v3107, 64
        %v3686 = vpop.permute.xlu0 %3685
        %3687 = vrot.lane.b32.xlu0 %v3109, 64
        %v3688 = vpop.permute.xlu0 %3687
        %3689 = vrot.lane.b32.xlu0 %v3111, 64
        %v3690 = vpop.permute.xlu0 %3689
        %3691 = vrot.lane.b32.xlu0 %v3113, 64
        %v3692 = vpop.permute.xlu0 %3691
        %3693 = vrot.lane.b32.xlu0 %v3115, 64
        %v3694 = vpop.permute.xlu0 %3693
        %v3696 = vsel %vm3138, %v3656, 0
        %v3699 = vsel %vm3138, %v3658, 0
        %v3702 = vsel %vm3138, %v3660, 0
        %v3705 = vsel %vm3138, %v3662, 0
        %v3708 = vsel %vm3138, %v3664, 0
        %v3711 = vsel %vm3138, %v3666, 0
        %v3714 = vsel %vm3138, %v3668, 0
        %v3717 = vsel %vm3138, %v3670, 0
        %v3720 = vsel %vm3138, %v3680, 0
        %v3723 = vsel %vm3138, %v3682, 0
        %v3726 = vsel %vm3138, %v3684, 0
        %v3729 = vsel %vm3138, %v3686, 0
        %v3732 = vsel %vm3138, %v3688, 0
        %v3735 = vsel %vm3138, %v3690, 0
        %v3738 = vsel %vm3138, %v3692, 0
        %v3741 = vsel %vm3138, %v3694, 0
        %3743 = vmatprep.subr.bf16.mxu0 0
        %3744 = vmatpush1.bf16.xpose.msra.mxu0 %v3720
        %3745 = vmatprep.subr.bf16.mxu0 0
        %3746 = vmatpush1.bf16.xpose.msra.mxu0 %v3723
        %3747 = vmatprep.subr.bf16.mxu0 0
        %3748 = vmatpush1.bf16.xpose.msra.mxu0 %v3726
        %3749 = vmatprep.subr.bf16.mxu0 0
        %3750 = vmatpush1.bf16.xpose.msra.mxu0 %v3729
        %3751 = vmatprep.subr.bf16.mxu0 0
        %3752 = vmatpush1.bf16.xpose.msra.mxu0 %v3732
        %3753 = vmatprep.subr.bf16.mxu0 0
        %3754 = vmatpush1.bf16.xpose.msra.mxu0 %v3735
        %3755 = vmatprep.subr.bf16.mxu0 0
        %3756 = vmatpush1.bf16.xpose.msra.mxu0 %v3738
        %3757 = vmatprep.subr.bf16.mxu0 0
        %3758 = vmatpush1.bf16.xpose.msra.mxu0 %v3741
        %3759 = vmatprep.subr.bf16.mxu0 0
        %3760 = vmatpush1.bf16.xpose.msra.mxu0 0
        %3761 = vmatprep.subr.bf16.mxu0 0
        %3762 = vmatpush1.bf16.xpose.msra.mxu0 0
        %3763 = vmatprep.subr.bf16.mxu0 0
        %3764 = vmatpush1.bf16.xpose.msra.mxu0 0
        %3765 = vmatprep.subr.bf16.mxu0 0
        %3766 = vmatpush1.bf16.xpose.msra.mxu0 0
        %3767 = vmatprep.subr.bf16.mxu0 0
        %3768 = vmatpush1.bf16.xpose.msra.mxu0 0
        %3769 = vmatprep.subr.bf16.mxu0 0
        %3770 = vmatpush1.bf16.xpose.msra.mxu0 0
        %3771 = vmatprep.subr.bf16.mxu0 0
        %3772 = vmatpush1.bf16.xpose.msra.mxu0 0
        %3773 = vmatprep.subr.bf16.mxu0 0
        %3774 = vmatpush1.bf16.xpose.msra.mxu0 0
        %3775 = vmatprep.mubr.bf16.mxu0 0
        %3776 = vmatmul.mubr.bf16.gmra.mrb[0].mxu0 %v3696
        %v3777 = vpop.f32.mrb[0].mxu0
        %v3778 = vadd.f32 0.0, %v3777
        %v3779 = vpop.f32.mrb[0].mxu0
        %v3780 = vpop.f32.mrb[0].mxu0
        %v3781 = vadd.f32 0.0, %v3780
        %v3782 = vpop.f32.mrb[0].mxu0
        %3783 = vmatprep.mubr.bf16.mxu0 0
        %3784 = vmatmul.mubr.bf16.gmra.mrb[0].mxu0 %v3699
        %v3785 = vpop.f32.mrb[0].mxu0
        %v3786 = vadd.f32 0.0, %v3785
        %v3787 = vpop.f32.mrb[0].mxu0
        %v3788 = vpop.f32.mrb[0].mxu0
        %v3789 = vadd.f32 0.0, %v3788
        %v3790 = vpop.f32.mrb[0].mxu0
        %3791 = vmatprep.mubr.bf16.mxu0 0
        %3792 = vmatmul.mubr.bf16.gmra.mrb[0].mxu0 %v3702
        %v3793 = vpop.f32.mrb[0].mxu0
        %v3794 = vadd.f32 0.0, %v3793
        %v3795 = vpop.f32.mrb[0].mxu0
        %v3796 = vpop.f32.mrb[0].mxu0
        %v3797 = vadd.f32 0.0, %v3796
        %v3798 = vpop.f32.mrb[0].mxu0
        %3799 = vmatprep.mubr.bf16.mxu0 0
        %3800 = vmatmul.mubr.bf16.gmra.mrb[0].mxu0 %v3705
        %v3801 = vpop.f32.mrb[0].mxu0
        %v3802 = vadd.f32 0.0, %v3801
        %v3803 = vpop.f32.mrb[0].mxu0
        %v3804 = vpop.f32.mrb[0].mxu0
        %v3805 = vadd.f32 0.0, %v3804
        %v3806 = vpop.f32.mrb[0].mxu0
        %3807 = vmatprep.mubr.bf16.mxu0 0
        %3808 = vmatmul.mubr.bf16.gmra.mrb[0].mxu0 %v3708
        %v3809 = vpop.f32.mrb[0].mxu0
        %v3810 = vadd.f32 0.0, %v3809
        %v3811 = vpop.f32.mrb[0].mxu0
        %v3812 = vpop.f32.mrb[0].mxu0
        %v3813 = vadd.f32 0.0, %v3812
        %v3814 = vpop.f32.mrb[0].mxu0
        %3815 = vmatprep.mubr.bf16.mxu0 0
        %3816 = vmatmul.mubr.bf16.gmra.mrb[0].mxu0 %v3711
        %v3817 = vpop.f32.mrb[0].mxu0
        %v3818 = vadd.f32 0.0, %v3817
        %v3819 = vpop.f32.mrb[0].mxu0
        %v3820 = vpop.f32.mrb[0].mxu0
        %v3821 = vadd.f32 0.0, %v3820
        %v3822 = vpop.f32.mrb[0].mxu0
        %3823 = vmatprep.mubr.bf16.mxu0 0
        %3824 = vmatmul.mubr.bf16.gmra.mrb[0].mxu0 %v3714
        %v3825 = vpop.f32.mrb[0].mxu0
        %v3826 = vadd.f32 0.0, %v3825
        %v3827 = vpop.f32.mrb[0].mxu0
        %v3828 = vpop.f32.mrb[0].mxu0
        %v3829 = vadd.f32 0.0, %v3828
        %v3830 = vpop.f32.mrb[0].mxu0
        %3831 = vmatprep.mubr.bf16.mxu0 0
        %3832 = vmatmul.mubr.bf16.gmra.mrb[0].mxu0 %v3717
        %v3833 = vpop.f32.mrb[0].mxu0
        %v3834 = vadd.f32 0.0, %v3833
        %v3835 = vpop.f32.mrb[0].mxu0
        %v3836 = vpop.f32.mrb[0].mxu0
        %v3837 = vadd.f32 0.0, %v3836
        %v3838 = vpop.f32.mrb[0].mxu0
        %3839 = vdwg.mxu0
        %v3840 = vmul.f32 %v3778, 0.125
        %v3841 = vmul.f32 %v3781, 0.125
        %v3842 = vmul.f32 %v3786, 0.125
        %v3843 = vmul.f32 %v3789, 0.125
        %v3844 = vmul.f32 %v3794, 0.125
        %v3845 = vmul.f32 %v3797, 0.125
        %v3846 = vmul.f32 %v3802, 0.125
        %v3847 = vmul.f32 %v3805, 0.125
        %v3848 = vmul.f32 %v3810, 0.125
        %v3849 = vmul.f32 %v3813, 0.125
        %v3850 = vmul.f32 %v3818, 0.125
        %v3851 = vmul.f32 %v3821, 0.125
        %v3852 = vmul.f32 %v3826, 0.125
        %v3853 = vmul.f32 %v3829, 0.125
        %v3854 = vmul.f32 %v3834, 0.125
        %v3855 = vmul.f32 %v3837, 0.125
        %v3856 = vsel %vm3301, %v3840, -1e+30
        %v3857 = vsel %vm3301, %v3841, -1e+30
        %v3858 = vsel %vm3301, %v3842, -1e+30
        %v3859 = vsel %vm3301, %v3843, -1e+30
        %v3860 = vsel %vm3301, %v3844, -1e+30
        %v3861 = vsel %vm3301, %v3845, -1e+30
        %v3862 = vsel %vm3301, %v3846, -1e+30
        %v3863 = vsel %vm3301, %v3847, -1e+30
        %v3864 = vsel %vm3301, %v3848, -1e+30
        %v3865 = vsel %vm3301, %v3849, -1e+30
        %v3866 = vsel %vm3301, %v3850, -1e+30
        %v3867 = vsel %vm3301, %v3851, -1e+30
        %v3868 = vsel %vm3301, %v3852, -1e+30
        %v3869 = vsel %vm3301, %v3853, -1e+30
        %v3870 = vsel %vm3301, %v3854, -1e+30
        %v3871 = vsel %vm3301, %v3855, -1e+30
        %3872 = vmax.xlane.f32.xlu0 %v3856
        %v3873 = vpop.xlane.xlu0 %3872
        %3874 = vmax.xlane.f32.xlu0 %v3857
        %v3875 = vpop.xlane.xlu0 %3874
        %3876 = vmax.xlane.f32.xlu0 %v3858
        %v3877 = vpop.xlane.xlu0 %3876
        %3878 = vmax.xlane.f32.xlu0 %v3859
        %v3879 = vpop.xlane.xlu0 %3878
        %3880 = vmax.xlane.f32.xlu0 %v3860
        %v3881 = vpop.xlane.xlu0 %3880
        %3882 = vmax.xlane.f32.xlu0 %v3861
        %v3883 = vpop.xlane.xlu0 %3882
        %3884 = vmax.xlane.f32.xlu0 %v3862
        %v3885 = vpop.xlane.xlu0 %3884
        %3886 = vmax.xlane.f32.xlu0 %v3863
        %v3887 = vpop.xlane.xlu0 %3886
        %3888 = vmax.xlane.f32.xlu0 %v3864
        %v3889 = vpop.xlane.xlu0 %3888
        %3890 = vmax.xlane.f32.xlu0 %v3865
        %v3891 = vpop.xlane.xlu0 %3890
        %3892 = vmax.xlane.f32.xlu0 %v3866
        %v3893 = vpop.xlane.xlu0 %3892
        %3894 = vmax.xlane.f32.xlu0 %v3867
        %v3895 = vpop.xlane.xlu0 %3894
        %3896 = vmax.xlane.f32.xlu0 %v3868
        %v3897 = vpop.xlane.xlu0 %3896
        %3898 = vmax.xlane.f32.xlu0 %v3869
        %v3899 = vpop.xlane.xlu0 %3898
        %3900 = vmax.xlane.f32.xlu0 %v3870
        %v3901 = vpop.xlane.xlu0 %3900
        %3902 = vmax.xlane.f32.xlu0 %v3871
        %v3903 = vpop.xlane.xlu0 %3902
        %v3904 = vmax.f32 %v3873, -1e+30
        %v3905 = vmax.f32 %v3875, -1e+30
        %v3906 = vmax.f32 %v3877, -1e+30
        %v3907 = vmax.f32 %v3879, -1e+30
        %v3908 = vmax.f32 %v3881, -1e+30
        %v3909 = vmax.f32 %v3883, -1e+30
        %v3910 = vmax.f32 %v3885, -1e+30
        %v3911 = vmax.f32 %v3887, -1e+30
        %v3912 = vmax.f32 %v3889, -1e+30
        %v3913 = vmax.f32 %v3891, -1e+30
        %v3914 = vmax.f32 %v3893, -1e+30
        %v3915 = vmax.f32 %v3895, -1e+30
        %v3916 = vmax.f32 %v3897, -1e+30
        %v3917 = vmax.f32 %v3899, -1e+30
        %v3918 = vmax.f32 %v3901, -1e+30
        %v3919 = vmax.f32 %v3903, -1e+30
        %v3920 = vsub.f32 -1e+30, %v3904
        %v3921 = vsub.f32 -1e+30, %v3905
        %v3922 = vsub.f32 -1e+30, %v3906
        %v3923 = vsub.f32 -1e+30, %v3907
        %v3924 = vsub.f32 -1e+30, %v3908
        %v3925 = vsub.f32 -1e+30, %v3909
        %v3926 = vsub.f32 -1e+30, %v3910
        %v3927 = vsub.f32 -1e+30, %v3911
        %v3928 = vsub.f32 -1e+30, %v3912
        %v3929 = vsub.f32 -1e+30, %v3913
        %v3930 = vsub.f32 -1e+30, %v3914
        %v3931 = vsub.f32 -1e+30, %v3915
        %v3932 = vsub.f32 -1e+30, %v3916
        %v3933 = vsub.f32 -1e+30, %v3917
        %v3934 = vsub.f32 -1e+30, %v3918
        %v3935 = vsub.f32 -1e+30, %v3919
        %v3936 = vmul.f32 %v3920, 1.442695
        %v3937 = vpow.pop %v3936
        %v3938 = vmul.f32 %v3921, 1.442695
        %v3939 = vpow.pop %v3938
        %v3940 = vmul.f32 %v3922, 1.442695
        %v3941 = vpow.pop %v3940
        %v3942 = vmul.f32 %v3923, 1.442695
        %v3943 = vpow.pop %v3942
        %v3944 = vmul.f32 %v3924, 1.442695
        %v3945 = vpow.pop %v3944
        %v3946 = vmul.f32 %v3925, 1.442695
        %v3947 = vpow.pop %v3946
        %v3948 = vmul.f32 %v3926, 1.442695
        %v3949 = vpow.pop %v3948
        %v3950 = vmul.f32 %v3927, 1.442695
        %v3951 = vpow.pop %v3950
        %v3952 = vmul.f32 %v3928, 1.442695
        %v3953 = vpow.pop %v3952
        %v3954 = vmul.f32 %v3929, 1.442695
        %v3955 = vpow.pop %v3954
        %v3956 = vmul.f32 %v3930, 1.442695
        %v3957 = vpow.pop %v3956
        %v3958 = vmul.f32 %v3931, 1.442695
        %v3959 = vpow.pop %v3958
        %v3960 = vmul.f32 %v3932, 1.442695
        %v3961 = vpow.pop %v3960
        %v3962 = vmul.f32 %v3933, 1.442695
        %v3963 = vpow.pop %v3962
        %v3964 = vmul.f32 %v3934, 1.442695
        %v3965 = vpow.pop %v3964
        %v3966 = vmul.f32 %v3935, 1.442695
        %v3967 = vpow.pop %v3966
        %v3968 = vsub.f32 %v3856, %v3904
        %v3969 = vsub.f32 %v3857, %v3905
        %v3970 = vsub.f32 %v3858, %v3906
        %v3971 = vsub.f32 %v3859, %v3907
        %v3972 = vsub.f32 %v3860, %v3908
        %v3973 = vsub.f32 %v3861, %v3909
        %v3974 = vsub.f32 %v3862, %v3910
        %v3975 = vsub.f32 %v3863, %v3911
        %v3976 = vsub.f32 %v3864, %v3912
        %v3977 = vsub.f32 %v3865, %v3913
        %v3978 = vsub.f32 %v3866, %v3914
        %v3979 = vsub.f32 %v3867, %v3915
        %v3980 = vsub.f32 %v3868, %v3916
        %v3981 = vsub.f32 %v3869, %v3917
        %v3982 = vsub.f32 %v3870, %v3918
        %v3983 = vsub.f32 %v3871, %v3919
        %v3984 = vmul.f32 %v3968, 1.442695
        %v3985 = vpow.pop %v3984
        %v3986 = vmul.f32 %v3969, 1.442695
        %v3987 = vpow.pop %v3986
        %v3988 = vmul.f32 %v3970, 1.442695
        %v3989 = vpow.pop %v3988
        %v3990 = vmul.f32 %v3971, 1.442695
        %v3991 = vpow.pop %v3990
        %v3992 = vmul.f32 %v3972, 1.442695
        %v3993 = vpow.pop %v3992
        %v3994 = vmul.f32 %v3973, 1.442695
        %v3995 = vpow.pop %v3994
        %v3996 = vmul.f32 %v3974, 1.442695
        %v3997 = vpow.pop %v3996
        %v3998 = vmul.f32 %v3975, 1.442695
        %v3999 = vpow.pop %v3998
        %v4000 = vmul.f32 %v3976, 1.442695
        %v4001 = vpow.pop %v4000
        %v4002 = vmul.f32 %v3977, 1.442695
        %v4003 = vpow.pop %v4002
        %v4004 = vmul.f32 %v3978, 1.442695
        %v4005 = vpow.pop %v4004
        %v4006 = vmul.f32 %v3979, 1.442695
        %v4007 = vpow.pop %v4006
        %v4008 = vmul.f32 %v3980, 1.442695
        %v4009 = vpow.pop %v4008
        %v4010 = vmul.f32 %v3981, 1.442695
        %v4011 = vpow.pop %v4010
        %v4012 = vmul.f32 %v3982, 1.442695
        %v4013 = vpow.pop %v4012
        %v4014 = vmul.f32 %v3983, 1.442695
        %v4015 = vpow.pop %v4014
        %v4016 = vmul.f32 %v3937, 0.0
        %v4017 = vmul.f32 %v3939, 0.0
        %v4018 = vmul.f32 %v3941, 0.0
        %v4019 = vmul.f32 %v3943, 0.0
        %v4020 = vmul.f32 %v3945, 0.0
        %v4021 = vmul.f32 %v3947, 0.0
        %v4022 = vmul.f32 %v3949, 0.0
        %v4023 = vmul.f32 %v3951, 0.0
        %v4024 = vmul.f32 %v3953, 0.0
        %v4025 = vmul.f32 %v3955, 0.0
        %v4026 = vmul.f32 %v3957, 0.0
        %v4027 = vmul.f32 %v3959, 0.0
        %v4028 = vmul.f32 %v3961, 0.0
        %v4029 = vmul.f32 %v3963, 0.0
        %v4030 = vmul.f32 %v3965, 0.0
        %v4031 = vmul.f32 %v3967, 0.0
        %4032 = vadd.xlane.f32.xlu0 %v3985
        %v4033 = vpop.xlane.xlu0 %4032
        %4034 = vadd.xlane.f32.xlu0 %v3987
        %v4035 = vpop.xlane.xlu0 %4034
        %4036 = vadd.xlane.f32.xlu0 %v3989
        %v4037 = vpop.xlane.xlu0 %4036
        %4038 = vadd.xlane.f32.xlu0 %v3991
        %v4039 = vpop.xlane.xlu0 %4038
        %4040 = vadd.xlane.f32.xlu0 %v3993
        %v4041 = vpop.xlane.xlu0 %4040
        %4042 = vadd.xlane.f32.xlu0 %v3995
        %v4043 = vpop.xlane.xlu0 %4042
        %4044 = vadd.xlane.f32.xlu0 %v3997
        %v4045 = vpop.xlane.xlu0 %4044
        %4046 = vadd.xlane.f32.xlu0 %v3999
        %v4047 = vpop.xlane.xlu0 %4046
        %4048 = vadd.xlane.f32.xlu0 %v4001
        %v4049 = vpop.xlane.xlu0 %4048
        %4050 = vadd.xlane.f32.xlu0 %v4003
        %v4051 = vpop.xlane.xlu0 %4050
        %4052 = vadd.xlane.f32.xlu0 %v4005
        %v4053 = vpop.xlane.xlu0 %4052
        %4054 = vadd.xlane.f32.xlu0 %v4007
        %v4055 = vpop.xlane.xlu0 %4054
        %4056 = vadd.xlane.f32.xlu0 %v4009
        %v4057 = vpop.xlane.xlu0 %4056
        %4058 = vadd.xlane.f32.xlu0 %v4011
        %v4059 = vpop.xlane.xlu0 %4058
        %4060 = vadd.xlane.f32.xlu0 %v4013
        %v4061 = vpop.xlane.xlu0 %4060
        %4062 = vadd.xlane.f32.xlu0 %v4015
        %v4063 = vpop.xlane.xlu0 %4062
        %v4064 = vadd.f32 %v4016, %v4033
        %v4065 = vadd.f32 %v4017, %v4035
        %v4066 = vadd.f32 %v4018, %v4037
        %v4067 = vadd.f32 %v4019, %v4039
        %v4068 = vadd.f32 %v4020, %v4041
        %v4069 = vadd.f32 %v4021, %v4043
        %v4070 = vadd.f32 %v4022, %v4045
        %v4071 = vadd.f32 %v4023, %v4047
        %v4072 = vadd.f32 %v4024, %v4049
        %v4073 = vadd.f32 %v4025, %v4051
        %v4074 = vadd.f32 %v4026, %v4053
        %v4075 = vadd.f32 %v4027, %v4055
        %v4076 = vadd.f32 %v4028, %v4057
        %v4077 = vadd.f32 %v4029, %v4059
        %v4078 = vadd.f32 %v4030, %v4061
        %v4079 = vadd.f32 %v4031, %v4063
        %v4080 = vpack.c.bf16 %v3987, %v3985
        %v4081 = vpack.c.bf16 %v3991, %v3989
        %v4082 = vpack.c.bf16 %v3995, %v3993
        %v4083 = vpack.c.bf16 %v3999, %v3997
        %v4084 = vpack.c.bf16 %v4003, %v4001
        %v4085 = vpack.c.bf16 %v4007, %v4005
        %v4086 = vpack.c.bf16 %v4011, %v4009
        %v4087 = vpack.c.bf16 %v4015, %v4013
        %4096 = vrot.lane.b32.xlu0 %v3117, 64
        %v4097 = vpop.permute.xlu0 %4096
        %4098 = vrot.lane.b32.xlu0 %v3119, 64
        %v4099 = vpop.permute.xlu0 %4098
        %4100 = vrot.lane.b32.xlu0 %v3121, 64
        %v4101 = vpop.permute.xlu0 %4100
        %4102 = vrot.lane.b32.xlu0 %v3123, 64
        %v4103 = vpop.permute.xlu0 %4102
        %4104 = vrot.lane.b32.xlu0 %v3125, 64
        %v4105 = vpop.permute.xlu0 %4104
        %4106 = vrot.lane.b32.xlu0 %v3127, 64
        %v4107 = vpop.permute.xlu0 %4106
        %4108 = vrot.lane.b32.xlu0 %v3129, 64
        %v4109 = vpop.permute.xlu0 %4108
        %4110 = vrot.lane.b32.xlu0 %v3131, 64
        %v4111 = vpop.permute.xlu0 %4110
        %4120 = vmatprep.subr.bf16.mxu0 0
        %4121 = vmatpush1.bf16.msra.mxu0 %v4097
        %4122 = vmatprep.subr.bf16.mxu0 0
        %4123 = vmatpush1.bf16.msra.mxu0 %v4099
        %4124 = vmatprep.subr.bf16.mxu0 0
        %4125 = vmatpush1.bf16.msra.mxu0 %v4101
        %4126 = vmatprep.subr.bf16.mxu0 0
        %4127 = vmatpush1.bf16.msra.mxu0 %v4103
        %4128 = vmatprep.subr.bf16.mxu0 0
        %4129 = vmatpush1.bf16.msra.mxu0 %v4105
        %4130 = vmatprep.subr.bf16.mxu0 0
        %4131 = vmatpush1.bf16.msra.mxu0 %v4107
        %4132 = vmatprep.subr.bf16.mxu0 0
        %4133 = vmatpush1.bf16.msra.mxu0 %v4109
        %4134 = vmatprep.subr.bf16.mxu0 0
        %4135 = vmatpush1.bf16.msra.mxu0 %v4111
        %4136 = vmatprep.subr.bf16.mxu0 0
        %4137 = vmatpush1.bf16.msra.mxu0 0
        %4138 = vmatprep.subr.bf16.mxu0 0
        %4139 = vmatpush1.bf16.msra.mxu0 0
        %4140 = vmatprep.subr.bf16.mxu0 0
        %4141 = vmatpush1.bf16.msra.mxu0 0
        %4142 = vmatprep.subr.bf16.mxu0 0
        %4143 = vmatpush1.bf16.msra.mxu0 0
        %4144 = vmatprep.subr.bf16.mxu0 0
        %4145 = vmatpush1.bf16.msra.mxu0 0
        %4146 = vmatprep.subr.bf16.mxu0 0
        %4147 = vmatpush1.bf16.msra.mxu0 0
        %4148 = vmatprep.subr.bf16.mxu0 0
        %4149 = vmatpush1.bf16.msra.mxu0 0
        %4150 = vmatprep.subr.bf16.mxu0 0
        %4151 = vmatpush1.bf16.msra.mxu0 0
        %4152 = vmatprep.mubr.bf16.mxu0 0
        %4153 = vmatmul.mubr.bf16.gmra.mrb[0].mxu0 %v4080
        %v4154 = vpop.f32.mrb[0].mxu0
        %v4155 = vadd.f32 0.0, %v4154
        %v4156 = vpop.f32.mrb[0].mxu0
        %v4157 = vpop.f32.mrb[0].mxu0
        %v4158 = vadd.f32 0.0, %v4157
        %v4159 = vpop.f32.mrb[0].mxu0
        %4160 = vmatprep.mubr.bf16.mxu0 0
        %4161 = vmatmul.mubr.bf16.gmra.mrb[0].mxu0 %v4081
        %v4162 = vpop.f32.mrb[0].mxu0
        %v4163 = vadd.f32 0.0, %v4162
        %v4164 = vpop.f32.mrb[0].mxu0
        %v4165 = vpop.f32.mrb[0].mxu0
        %v4166 = vadd.f32 0.0, %v4165
        %v4167 = vpop.f32.mrb[0].mxu0
        %4168 = vmatprep.mubr.bf16.mxu0 0
        %4169 = vmatmul.mubr.bf16.gmra.mrb[0].mxu0 %v4082
        %v4170 = vpop.f32.mrb[0].mxu0
        %v4171 = vadd.f32 0.0, %v4170
        %v4172 = vpop.f32.mrb[0].mxu0
        %v4173 = vpop.f32.mrb[0].mxu0
        %v4174 = vadd.f32 0.0, %v4173
        %v4175 = vpop.f32.mrb[0].mxu0
        %4176 = vmatprep.mubr.bf16.mxu0 0
        %4177 = vmatmul.mubr.bf16.gmra.mrb[0].mxu0 %v4083
        %v4178 = vpop.f32.mrb[0].mxu0
        %v4179 = vadd.f32 0.0, %v4178
        %v4180 = vpop.f32.mrb[0].mxu0
        %v4181 = vpop.f32.mrb[0].mxu0
        %v4182 = vadd.f32 0.0, %v4181
        %v4183 = vpop.f32.mrb[0].mxu0
        %4184 = vmatprep.mubr.bf16.mxu0 0
        %4185 = vmatmul.mubr.bf16.gmra.mrb[0].mxu0 %v4084
        %v4186 = vpop.f32.mrb[0].mxu0
        %v4187 = vadd.f32 0.0, %v4186
        %v4188 = vpop.f32.mrb[0].mxu0
        %v4189 = vpop.f32.mrb[0].mxu0
        %v4190 = vadd.f32 0.0, %v4189
        %v4191 = vpop.f32.mrb[0].mxu0
        %4192 = vmatprep.mubr.bf16.mxu0 0
        %4193 = vmatmul.mubr.bf16.gmra.mrb[0].mxu0 %v4085
        %v4194 = vpop.f32.mrb[0].mxu0
        %v4195 = vadd.f32 0.0, %v4194
        %v4196 = vpop.f32.mrb[0].mxu0
        %v4197 = vpop.f32.mrb[0].mxu0
        %v4198 = vadd.f32 0.0, %v4197
        %v4199 = vpop.f32.mrb[0].mxu0
        %4200 = vmatprep.mubr.bf16.mxu0 0
        %4201 = vmatmul.mubr.bf16.gmra.mrb[0].mxu0 %v4086
        %v4202 = vpop.f32.mrb[0].mxu0
        %v4203 = vadd.f32 0.0, %v4202
        %v4204 = vpop.f32.mrb[0].mxu0
        %v4205 = vpop.f32.mrb[0].mxu0
        %v4206 = vadd.f32 0.0, %v4205
        %v4207 = vpop.f32.mrb[0].mxu0
        %4208 = vmatprep.mubr.bf16.mxu0 0
        %4209 = vmatmul.mubr.bf16.gmra.mrb[0].mxu0 %v4087
        %v4210 = vpop.f32.mrb[0].mxu0
        %v4211 = vadd.f32 0.0, %v4210
        %v4212 = vpop.f32.mrb[0].mxu0
        %v4213 = vpop.f32.mrb[0].mxu0
        %v4214 = vadd.f32 0.0, %v4213
        %v4215 = vpop.f32.mrb[0].mxu0
        %4216 = vdwg.mxu0
        %v4217 = vadd.f32 %v4016, %v4155
        %v4218 = vadd.f32 %v4017, %v4158
        %v4219 = vadd.f32 %v4018, %v4163
        %v4220 = vadd.f32 %v4019, %v4166
        %v4221 = vadd.f32 %v4020, %v4171
        %v4222 = vadd.f32 %v4021, %v4174
        %v4223 = vadd.f32 %v4022, %v4179
        %v4224 = vadd.f32 %v4023, %v4182
        %v4225 = vadd.f32 %v4024, %v4187
        %v4226 = vadd.f32 %v4025, %v4190
        %v4227 = vadd.f32 %v4026, %v4195
        %v4228 = vadd.f32 %v4027, %v4198
        %v4229 = vadd.f32 %v4028, %v4203
        %v4230 = vadd.f32 %v4029, %v4206
        %v4231 = vadd.f32 %v4030, %v4211
        %v4232 = vadd.f32 %v4031, %v4214
        %v4234 = vsel %vm3138, %v3086, 0
        %v4237 = vsel %vm3138, %v3088, 0
        %v4240 = vsel %vm3138, %v3090, 0
        %v4243 = vsel %vm3138, %v3092, 0
        %v4246 = vsel %vm3138, %v3094, 0
        %v4249 = vsel %vm3138, %v3096, 0
        %v4252 = vsel %vm3138, %v3098, 0
        %v4255 = vsel %vm3138, %v3100, 0
        %v4258 = vsel %vm3138, %v3102, 0
        %v4261 = vsel %vm3138, %v3104, 0
        %v4264 = vsel %vm3138, %v3106, 0
        %v4267 = vsel %vm3138, %v3108, 0
        %v4270 = vsel %vm3138, %v3110, 0
        %v4273 = vsel %vm3138, %v3112, 0
        %v4276 = vsel %vm3138, %v3114, 0
        %v4279 = vsel %vm3138, %v3116, 0
        %4281 = vmatprep.subr.bf16.mxu0 0
        %4282 = vmatpush1.bf16.xpose.msra.mxu0 %v4258
        %4283 = vmatprep.subr.bf16.mxu0 0
        %4284 = vmatpush1.bf16.xpose.msra.mxu0 %v4261
        %4285 = vmatprep.subr.bf16.mxu0 0
        %4286 = vmatpush1.bf16.xpose.msra.mxu0 %v4264
        %4287 = vmatprep.subr.bf16.mxu0 0
        %4288 = vmatpush1.bf16.xpose.msra.mxu0 %v4267
        %4289 = vmatprep.subr.bf16.mxu0 0
        %4290 = vmatpush1.bf16.xpose.msra.mxu0 %v4270
        %4291 = vmatprep.subr.bf16.mxu0 0
        %4292 = vmatpush1.bf16.xpose.msra.mxu0 %v4273
        %4293 = vmatprep.subr.bf16.mxu0 0
        %4294 = vmatpush1.bf16.xpose.msra.mxu0 %v4276
        %4295 = vmatprep.subr.bf16.mxu0 0
        %4296 = vmatpush1.bf16.xpose.msra.mxu0 %v4279
        %4297 = vmatprep.subr.bf16.mxu0 0
        %4298 = vmatpush1.bf16.xpose.msra.mxu0 0
        %4299 = vmatprep.subr.bf16.mxu0 0
        %4300 = vmatpush1.bf16.xpose.msra.mxu0 0
        %4301 = vmatprep.subr.bf16.mxu0 0
        %4302 = vmatpush1.bf16.xpose.msra.mxu0 0
        %4303 = vmatprep.subr.bf16.mxu0 0
        %4304 = vmatpush1.bf16.xpose.msra.mxu0 0
        %4305 = vmatprep.subr.bf16.mxu0 0
        %4306 = vmatpush1.bf16.xpose.msra.mxu0 0
        %4307 = vmatprep.subr.bf16.mxu0 0
        %4308 = vmatpush1.bf16.xpose.msra.mxu0 0
        %4309 = vmatprep.subr.bf16.mxu0 0
        %4310 = vmatpush1.bf16.xpose.msra.mxu0 0
        %4311 = vmatprep.subr.bf16.mxu0 0
        %4312 = vmatpush1.bf16.xpose.msra.mxu0 0
        %4313 = vmatprep.mubr.bf16.mxu0 0
        %4314 = vmatmul.mubr.bf16.gmra.mrb[0].mxu0 %v4234
        %v4315 = vpop.f32.mrb[0].mxu0
        %v4316 = vadd.f32 0.0, %v4315
        %v4317 = vpop.f32.mrb[0].mxu0
        %v4318 = vpop.f32.mrb[0].mxu0
        %v4319 = vadd.f32 0.0, %v4318
        %v4320 = vpop.f32.mrb[0].mxu0
        %4321 = vmatprep.mubr.bf16.mxu0 0
        %4322 = vmatmul.mubr.bf16.gmra.mrb[0].mxu0 %v4237
        %v4323 = vpop.f32.mrb[0].mxu0
        %v4324 = vadd.f32 0.0, %v4323
        %v4325 = vpop.f32.mrb[0].mxu0
        %v4326 = vpop.f32.mrb[0].mxu0
        %v4327 = vadd.f32 0.0, %v4326
        %v4328 = vpop.f32.mrb[0].mxu0
        %4329 = vmatprep.mubr.bf16.mxu0 0
        %4330 = vmatmul.mubr.bf16.gmra.mrb[0].mxu0 %v4240
        %v4331 = vpop.f32.mrb[0].mxu0
        %v4332 = vadd.f32 0.0, %v4331
        %v4333 = vpop.f32.mrb[0].mxu0
        %v4334 = vpop.f32.mrb[0].mxu0
        %v4335 = vadd.f32 0.0, %v4334
        %v4336 = vpop.f32.mrb[0].mxu0
        %4337 = vmatprep.mubr.bf16.mxu0 0
        %4338 = vmatmul.mubr.bf16.gmra.mrb[0].mxu0 %v4243
        %v4339 = vpop.f32.mrb[0].mxu0
        %v4340 = vadd.f32 0.0, %v4339
        %v4341 = vpop.f32.mrb[0].mxu0
        %v4342 = vpop.f32.mrb[0].mxu0
        %v4343 = vadd.f32 0.0, %v4342
        %v4344 = vpop.f32.mrb[0].mxu0
        %4345 = vmatprep.mubr.bf16.mxu0 0
        %4346 = vmatmul.mubr.bf16.gmra.mrb[0].mxu0 %v4246
        %v4347 = vpop.f32.mrb[0].mxu0
        %v4348 = vadd.f32 0.0, %v4347
        %v4349 = vpop.f32.mrb[0].mxu0
        %v4350 = vpop.f32.mrb[0].mxu0
        %v4351 = vadd.f32 0.0, %v4350
        %v4352 = vpop.f32.mrb[0].mxu0
        %4353 = vmatprep.mubr.bf16.mxu0 0
        %4354 = vmatmul.mubr.bf16.gmra.mrb[0].mxu0 %v4249
        %v4355 = vpop.f32.mrb[0].mxu0
        %v4356 = vadd.f32 0.0, %v4355
        %v4357 = vpop.f32.mrb[0].mxu0
        %v4358 = vpop.f32.mrb[0].mxu0
        %v4359 = vadd.f32 0.0, %v4358
        %v4360 = vpop.f32.mrb[0].mxu0
        %4361 = vmatprep.mubr.bf16.mxu0 0
        %4362 = vmatmul.mubr.bf16.gmra.mrb[0].mxu0 %v4252
        %v4363 = vpop.f32.mrb[0].mxu0
        %v4364 = vadd.f32 0.0, %v4363
        %v4365 = vpop.f32.mrb[0].mxu0
        %v4366 = vpop.f32.mrb[0].mxu0
        %v4367 = vadd.f32 0.0, %v4366
        %v4368 = vpop.f32.mrb[0].mxu0
        %4369 = vmatprep.mubr.bf16.mxu0 0
        %4370 = vmatmul.mubr.bf16.gmra.mrb[0].mxu0 %v4255
        %v4371 = vpop.f32.mrb[0].mxu0
        %v4372 = vadd.f32 0.0, %v4371
        %v4373 = vpop.f32.mrb[0].mxu0
        %v4374 = vpop.f32.mrb[0].mxu0
        %v4375 = vadd.f32 0.0, %v4374
        %v4376 = vpop.f32.mrb[0].mxu0
        %4377 = vdwg.mxu0
        %v4378 = vmul.f32 %v4316, 0.125
        %v4379 = vmul.f32 %v4319, 0.125
        %v4380 = vmul.f32 %v4324, 0.125
        %v4381 = vmul.f32 %v4327, 0.125
        %v4382 = vmul.f32 %v4332, 0.125
        %v4383 = vmul.f32 %v4335, 0.125
        %v4384 = vmul.f32 %v4340, 0.125
        %v4385 = vmul.f32 %v4343, 0.125
        %v4386 = vmul.f32 %v4348, 0.125
        %v4387 = vmul.f32 %v4351, 0.125
        %v4388 = vmul.f32 %v4356, 0.125
        %v4389 = vmul.f32 %v4359, 0.125
        %v4390 = vmul.f32 %v4364, 0.125
        %v4391 = vmul.f32 %v4367, 0.125
        %v4392 = vmul.f32 %v4372, 0.125
        %v4393 = vmul.f32 %v4375, 0.125
        %v4394 = vsel %vm3301, %v4378, -1e+30
        %v4395 = vsel %vm3301, %v4379, -1e+30
        %v4396 = vsel %vm3301, %v4380, -1e+30
        %v4397 = vsel %vm3301, %v4381, -1e+30
        %v4398 = vsel %vm3301, %v4382, -1e+30
        %v4399 = vsel %vm3301, %v4383, -1e+30
        %v4400 = vsel %vm3301, %v4384, -1e+30
        %v4401 = vsel %vm3301, %v4385, -1e+30
        %v4402 = vsel %vm3301, %v4386, -1e+30
        %v4403 = vsel %vm3301, %v4387, -1e+30
        %v4404 = vsel %vm3301, %v4388, -1e+30
        %v4405 = vsel %vm3301, %v4389, -1e+30
        %v4406 = vsel %vm3301, %v4390, -1e+30
        %v4407 = vsel %vm3301, %v4391, -1e+30
        %v4408 = vsel %vm3301, %v4392, -1e+30
        %v4409 = vsel %vm3301, %v4393, -1e+30
        %4410 = vmax.xlane.f32.xlu0 %v4394
        %v4411 = vpop.xlane.xlu0 %4410
        %4412 = vmax.xlane.f32.xlu0 %v4395
        %v4413 = vpop.xlane.xlu0 %4412
        %4414 = vmax.xlane.f32.xlu0 %v4396
        %v4415 = vpop.xlane.xlu0 %4414
        %4416 = vmax.xlane.f32.xlu0 %v4397
        %v4417 = vpop.xlane.xlu0 %4416
        %4418 = vmax.xlane.f32.xlu0 %v4398
        %v4419 = vpop.xlane.xlu0 %4418
        %4420 = vmax.xlane.f32.xlu0 %v4399
        %v4421 = vpop.xlane.xlu0 %4420
        %4422 = vmax.xlane.f32.xlu0 %v4400
        %v4423 = vpop.xlane.xlu0 %4422
        %4424 = vmax.xlane.f32.xlu0 %v4401
        %v4425 = vpop.xlane.xlu0 %4424
        %4426 = vmax.xlane.f32.xlu0 %v4402
        %v4427 = vpop.xlane.xlu0 %4426
        %4428 = vmax.xlane.f32.xlu0 %v4403
        %v4429 = vpop.xlane.xlu0 %4428
        %4430 = vmax.xlane.f32.xlu0 %v4404
        %v4431 = vpop.xlane.xlu0 %4430
        %4432 = vmax.xlane.f32.xlu0 %v4405
        %v4433 = vpop.xlane.xlu0 %4432
        %4434 = vmax.xlane.f32.xlu0 %v4406
        %v4435 = vpop.xlane.xlu0 %4434
        %4436 = vmax.xlane.f32.xlu0 %v4407
        %v4437 = vpop.xlane.xlu0 %4436
        %4438 = vmax.xlane.f32.xlu0 %v4408
        %v4439 = vpop.xlane.xlu0 %4438
        %4440 = vmax.xlane.f32.xlu0 %v4409
        %v4441 = vpop.xlane.xlu0 %4440
        %v4442 = vmax.f32 %v4411, -1e+30
        %v4443 = vmax.f32 %v4413, -1e+30
        %v4444 = vmax.f32 %v4415, -1e+30
        %v4445 = vmax.f32 %v4417, -1e+30
        %v4446 = vmax.f32 %v4419, -1e+30
        %v4447 = vmax.f32 %v4421, -1e+30
        %v4448 = vmax.f32 %v4423, -1e+30
        %v4449 = vmax.f32 %v4425, -1e+30
        %v4450 = vmax.f32 %v4427, -1e+30
        %v4451 = vmax.f32 %v4429, -1e+30
        %v4452 = vmax.f32 %v4431, -1e+30
        %v4453 = vmax.f32 %v4433, -1e+30
        %v4454 = vmax.f32 %v4435, -1e+30
        %v4455 = vmax.f32 %v4437, -1e+30
        %v4456 = vmax.f32 %v4439, -1e+30
        %v4457 = vmax.f32 %v4441, -1e+30
        %v4458 = vsub.f32 -1e+30, %v4442
        %v4459 = vsub.f32 -1e+30, %v4443
        %v4460 = vsub.f32 -1e+30, %v4444
        %v4461 = vsub.f32 -1e+30, %v4445
        %v4462 = vsub.f32 -1e+30, %v4446
        %v4463 = vsub.f32 -1e+30, %v4447
        %v4464 = vsub.f32 -1e+30, %v4448
        %v4465 = vsub.f32 -1e+30, %v4449
        %v4466 = vsub.f32 -1e+30, %v4450
        %v4467 = vsub.f32 -1e+30, %v4451
        %v4468 = vsub.f32 -1e+30, %v4452
        %v4469 = vsub.f32 -1e+30, %v4453
        %v4470 = vsub.f32 -1e+30, %v4454
        %v4471 = vsub.f32 -1e+30, %v4455
        %v4472 = vsub.f32 -1e+30, %v4456
        %v4473 = vsub.f32 -1e+30, %v4457
        %v4474 = vmul.f32 %v4458, 1.442695
        %v4475 = vpow.pop %v4474
        %v4476 = vmul.f32 %v4459, 1.442695
        %v4477 = vpow.pop %v4476
        %v4478 = vmul.f32 %v4460, 1.442695
        %v4479 = vpow.pop %v4478
        %v4480 = vmul.f32 %v4461, 1.442695
        %v4481 = vpow.pop %v4480
        %v4482 = vmul.f32 %v4462, 1.442695
        %v4483 = vpow.pop %v4482
        %v4484 = vmul.f32 %v4463, 1.442695
        %v4485 = vpow.pop %v4484
        %v4486 = vmul.f32 %v4464, 1.442695
        %v4487 = vpow.pop %v4486
        %v4488 = vmul.f32 %v4465, 1.442695
        %v4489 = vpow.pop %v4488
        %v4490 = vmul.f32 %v4466, 1.442695
        %v4491 = vpow.pop %v4490
        %v4492 = vmul.f32 %v4467, 1.442695
        %v4493 = vpow.pop %v4492
        %v4494 = vmul.f32 %v4468, 1.442695
        %v4495 = vpow.pop %v4494
        %v4496 = vmul.f32 %v4469, 1.442695
        %v4497 = vpow.pop %v4496
        %v4498 = vmul.f32 %v4470, 1.442695
        %v4499 = vpow.pop %v4498
        %v4500 = vmul.f32 %v4471, 1.442695
        %v4501 = vpow.pop %v4500
        %v4502 = vmul.f32 %v4472, 1.442695
        %v4503 = vpow.pop %v4502
        %v4504 = vmul.f32 %v4473, 1.442695
        %v4505 = vpow.pop %v4504
        %v4506 = vsub.f32 %v4394, %v4442
        %v4507 = vsub.f32 %v4395, %v4443
        %v4508 = vsub.f32 %v4396, %v4444
        %v4509 = vsub.f32 %v4397, %v4445
        %v4510 = vsub.f32 %v4398, %v4446
        %v4511 = vsub.f32 %v4399, %v4447
        %v4512 = vsub.f32 %v4400, %v4448
        %v4513 = vsub.f32 %v4401, %v4449
        %v4514 = vsub.f32 %v4402, %v4450
        %v4515 = vsub.f32 %v4403, %v4451
        %v4516 = vsub.f32 %v4404, %v4452
        %v4517 = vsub.f32 %v4405, %v4453
        %v4518 = vsub.f32 %v4406, %v4454
        %v4519 = vsub.f32 %v4407, %v4455
        %v4520 = vsub.f32 %v4408, %v4456
        %v4521 = vsub.f32 %v4409, %v4457
        %v4522 = vmul.f32 %v4506, 1.442695
        %v4523 = vpow.pop %v4522
        %v4524 = vmul.f32 %v4507, 1.442695
        %v4525 = vpow.pop %v4524
        %v4526 = vmul.f32 %v4508, 1.442695
        %v4527 = vpow.pop %v4526
        %v4528 = vmul.f32 %v4509, 1.442695
        %v4529 = vpow.pop %v4528
        %v4530 = vmul.f32 %v4510, 1.442695
        %v4531 = vpow.pop %v4530
        %v4532 = vmul.f32 %v4511, 1.442695
        %v4533 = vpow.pop %v4532
        %v4534 = vmul.f32 %v4512, 1.442695
        %v4535 = vpow.pop %v4534
        %v4536 = vmul.f32 %v4513, 1.442695
        %v4537 = vpow.pop %v4536
        %v4538 = vmul.f32 %v4514, 1.442695
        %v4539 = vpow.pop %v4538
        %v4540 = vmul.f32 %v4515, 1.442695
        %v4541 = vpow.pop %v4540
        %v4542 = vmul.f32 %v4516, 1.442695
        %v4543 = vpow.pop %v4542
        %v4544 = vmul.f32 %v4517, 1.442695
        %v4545 = vpow.pop %v4544
        %v4546 = vmul.f32 %v4518, 1.442695
        %v4547 = vpow.pop %v4546
        %v4548 = vmul.f32 %v4519, 1.442695
        %v4549 = vpow.pop %v4548
        %v4550 = vmul.f32 %v4520, 1.442695
        %v4551 = vpow.pop %v4550
        %v4552 = vmul.f32 %v4521, 1.442695
        %v4553 = vpow.pop %v4552
        %v4554 = vmul.f32 %v4475, 0.0
        %v4555 = vmul.f32 %v4477, 0.0
        %v4556 = vmul.f32 %v4479, 0.0
        %v4557 = vmul.f32 %v4481, 0.0
        %v4558 = vmul.f32 %v4483, 0.0
        %v4559 = vmul.f32 %v4485, 0.0
        %v4560 = vmul.f32 %v4487, 0.0
        %v4561 = vmul.f32 %v4489, 0.0
        %v4562 = vmul.f32 %v4491, 0.0
        %v4563 = vmul.f32 %v4493, 0.0
        %v4564 = vmul.f32 %v4495, 0.0
        %v4565 = vmul.f32 %v4497, 0.0
        %v4566 = vmul.f32 %v4499, 0.0
        %v4567 = vmul.f32 %v4501, 0.0
        %v4568 = vmul.f32 %v4503, 0.0
        %v4569 = vmul.f32 %v4505, 0.0
        %4570 = vadd.xlane.f32.xlu0 %v4523
        %v4571 = vpop.xlane.xlu0 %4570
        %4572 = vadd.xlane.f32.xlu0 %v4525
        %v4573 = vpop.xlane.xlu0 %4572
        %4574 = vadd.xlane.f32.xlu0 %v4527
        %v4575 = vpop.xlane.xlu0 %4574
        %4576 = vadd.xlane.f32.xlu0 %v4529
        %v4577 = vpop.xlane.xlu0 %4576
        %4578 = vadd.xlane.f32.xlu0 %v4531
        %v4579 = vpop.xlane.xlu0 %4578
        %4580 = vadd.xlane.f32.xlu0 %v4533
        %v4581 = vpop.xlane.xlu0 %4580
        %4582 = vadd.xlane.f32.xlu0 %v4535
        %v4583 = vpop.xlane.xlu0 %4582
        %4584 = vadd.xlane.f32.xlu0 %v4537
        %v4585 = vpop.xlane.xlu0 %4584
        %4586 = vadd.xlane.f32.xlu0 %v4539
        %v4587 = vpop.xlane.xlu0 %4586
        %4588 = vadd.xlane.f32.xlu0 %v4541
        %v4589 = vpop.xlane.xlu0 %4588
        %4590 = vadd.xlane.f32.xlu0 %v4543
        %v4591 = vpop.xlane.xlu0 %4590
        %4592 = vadd.xlane.f32.xlu0 %v4545
        %v4593 = vpop.xlane.xlu0 %4592
        %4594 = vadd.xlane.f32.xlu0 %v4547
        %v4595 = vpop.xlane.xlu0 %4594
        %4596 = vadd.xlane.f32.xlu0 %v4549
        %v4597 = vpop.xlane.xlu0 %4596
        %4598 = vadd.xlane.f32.xlu0 %v4551
        %v4599 = vpop.xlane.xlu0 %4598
        %4600 = vadd.xlane.f32.xlu0 %v4553
        %v4601 = vpop.xlane.xlu0 %4600
        %v4602 = vadd.f32 %v4554, %v4571
        %v4603 = vadd.f32 %v4555, %v4573
        %v4604 = vadd.f32 %v4556, %v4575
        %v4605 = vadd.f32 %v4557, %v4577
        %v4606 = vadd.f32 %v4558, %v4579
        %v4607 = vadd.f32 %v4559, %v4581
        %v4608 = vadd.f32 %v4560, %v4583
        %v4609 = vadd.f32 %v4561, %v4585
        %v4610 = vadd.f32 %v4562, %v4587
        %v4611 = vadd.f32 %v4563, %v4589
        %v4612 = vadd.f32 %v4564, %v4591
        %v4613 = vadd.f32 %v4565, %v4593
        %v4614 = vadd.f32 %v4566, %v4595
        %v4615 = vadd.f32 %v4567, %v4597
        %v4616 = vadd.f32 %v4568, %v4599
        %v4617 = vadd.f32 %v4569, %v4601
        %v4618 = vpack.c.bf16 %v4525, %v4523
        %v4619 = vpack.c.bf16 %v4529, %v4527
        %v4620 = vpack.c.bf16 %v4533, %v4531
        %v4621 = vpack.c.bf16 %v4537, %v4535
        %v4622 = vpack.c.bf16 %v4541, %v4539
        %v4623 = vpack.c.bf16 %v4545, %v4543
        %v4624 = vpack.c.bf16 %v4549, %v4547
        %v4625 = vpack.c.bf16 %v4553, %v4551
        %4626 = vmatprep.subr.bf16.mxu0 0
        %4627 = vmatpush1.bf16.msra.mxu0 %v3118
        %4628 = vmatprep.subr.bf16.mxu0 0
        %4629 = vmatpush1.bf16.msra.mxu0 %v3120
        %4630 = vmatprep.subr.bf16.mxu0 0
        %4631 = vmatpush1.bf16.msra.mxu0 %v3122
        %4632 = vmatprep.subr.bf16.mxu0 0
        %4633 = vmatpush1.bf16.msra.mxu0 %v3124
        %4634 = vmatprep.subr.bf16.mxu0 0
        %4635 = vmatpush1.bf16.msra.mxu0 %v3126
        %4636 = vmatprep.subr.bf16.mxu0 0
        %4637 = vmatpush1.bf16.msra.mxu0 %v3128
        %4638 = vmatprep.subr.bf16.mxu0 0
        %4639 = vmatpush1.bf16.msra.mxu0 %v3130
        %4640 = vmatprep.subr.bf16.mxu0 0
        %4641 = vmatpush1.bf16.msra.mxu0 %v3132
        %4642 = vmatprep.subr.bf16.mxu0 0
        %4643 = vmatpush1.bf16.msra.mxu0 0
        %4644 = vmatprep.subr.bf16.mxu0 0
        %4645 = vmatpush1.bf16.msra.mxu0 0
        %4646 = vmatprep.subr.bf16.mxu0 0
        %4647 = vmatpush1.bf16.msra.mxu0 0
        %4648 = vmatprep.subr.bf16.mxu0 0
        %4649 = vmatpush1.bf16.msra.mxu0 0
        %4650 = vmatprep.subr.bf16.mxu0 0
        %4651 = vmatpush1.bf16.msra.mxu0 0
        %4652 = vmatprep.subr.bf16.mxu0 0
        %4653 = vmatpush1.bf16.msra.mxu0 0
        %4654 = vmatprep.subr.bf16.mxu0 0
        %4655 = vmatpush1.bf16.msra.mxu0 0
        %4656 = vmatprep.subr.bf16.mxu0 0
        %4657 = vmatpush1.bf16.msra.mxu0 0
        %4658 = vmatprep.mubr.bf16.mxu0 0
        %4659 = vmatmul.mubr.bf16.gmra.mrb[0].mxu0 %v4618
        %v4660 = vpop.f32.mrb[0].mxu0
        %v4661 = vadd.f32 0.0, %v4660
        %v4662 = vpop.f32.mrb[0].mxu0
        %v4663 = vpop.f32.mrb[0].mxu0
        %v4664 = vadd.f32 0.0, %v4663
        %v4665 = vpop.f32.mrb[0].mxu0
        %4666 = vmatprep.mubr.bf16.mxu0 0
        %4667 = vmatmul.mubr.bf16.gmra.mrb[0].mxu0 %v4619
        %v4668 = vpop.f32.mrb[0].mxu0
        %v4669 = vadd.f32 0.0, %v4668
        %v4670 = vpop.f32.mrb[0].mxu0
        %v4671 = vpop.f32.mrb[0].mxu0
        %v4672 = vadd.f32 0.0, %v4671
        %v4673 = vpop.f32.mrb[0].mxu0
        %4674 = vmatprep.mubr.bf16.mxu0 0
        %4675 = vmatmul.mubr.bf16.gmra.mrb[0].mxu0 %v4620
        %v4676 = vpop.f32.mrb[0].mxu0
        %v4677 = vadd.f32 0.0, %v4676
        %v4678 = vpop.f32.mrb[0].mxu0
        %v4679 = vpop.f32.mrb[0].mxu0
        %v4680 = vadd.f32 0.0, %v4679
        %v4681 = vpop.f32.mrb[0].mxu0
        %4682 = vmatprep.mubr.bf16.mxu0 0
        %4683 = vmatmul.mubr.bf16.gmra.mrb[0].mxu0 %v4621
        %v4684 = vpop.f32.mrb[0].mxu0
        %v4685 = vadd.f32 0.0, %v4684
        %v4686 = vpop.f32.mrb[0].mxu0
        %v4687 = vpop.f32.mrb[0].mxu0
        %v4688 = vadd.f32 0.0, %v4687
        %v4689 = vpop.f32.mrb[0].mxu0
        %4690 = vmatprep.mubr.bf16.mxu0 0
        %4691 = vmatmul.mubr.bf16.gmra.mrb[0].mxu0 %v4622
        %v4692 = vpop.f32.mrb[0].mxu0
        %v4693 = vadd.f32 0.0, %v4692
        %v4694 = vpop.f32.mrb[0].mxu0
        %v4695 = vpop.f32.mrb[0].mxu0
        %v4696 = vadd.f32 0.0, %v4695
        %v4697 = vpop.f32.mrb[0].mxu0
        %4698 = vmatprep.mubr.bf16.mxu0 0
        %4699 = vmatmul.mubr.bf16.gmra.mrb[0].mxu0 %v4623
        %v4700 = vpop.f32.mrb[0].mxu0
        %v4701 = vadd.f32 0.0, %v4700
        %v4702 = vpop.f32.mrb[0].mxu0
        %v4703 = vpop.f32.mrb[0].mxu0
        %v4704 = vadd.f32 0.0, %v4703
        %v4705 = vpop.f32.mrb[0].mxu0
        %4706 = vmatprep.mubr.bf16.mxu0 0
        %4707 = vmatmul.mubr.bf16.gmra.mrb[0].mxu0 %v4624
        %v4708 = vpop.f32.mrb[0].mxu0
        %v4709 = vadd.f32 0.0, %v4708
        %v4710 = vpop.f32.mrb[0].mxu0
        %v4711 = vpop.f32.mrb[0].mxu0
        %v4712 = vadd.f32 0.0, %v4711
        %v4713 = vpop.f32.mrb[0].mxu0
        %4714 = vmatprep.mubr.bf16.mxu0 0
        %4715 = vmatmul.mubr.bf16.gmra.mrb[0].mxu0 %v4625
        %v4716 = vpop.f32.mrb[0].mxu0
        %v4717 = vadd.f32 0.0, %v4716
        %v4718 = vpop.f32.mrb[0].mxu0
        %v4719 = vpop.f32.mrb[0].mxu0
        %v4720 = vadd.f32 0.0, %v4719
        %v4721 = vpop.f32.mrb[0].mxu0
        %4722 = vdwg.mxu0
        %v4723 = vadd.f32 %v4554, %v4661
        %v4724 = vadd.f32 %v4555, %v4664
        %v4725 = vadd.f32 %v4556, %v4669
        %v4726 = vadd.f32 %v4557, %v4672
        %v4727 = vadd.f32 %v4558, %v4677
        %v4728 = vadd.f32 %v4559, %v4680
        %v4729 = vadd.f32 %v4560, %v4685
        %v4730 = vadd.f32 %v4561, %v4688
        %v4731 = vadd.f32 %v4562, %v4693
        %v4732 = vadd.f32 %v4563, %v4696
        %v4733 = vadd.f32 %v4564, %v4701
        %v4734 = vadd.f32 %v4565, %v4704
        %v4735 = vadd.f32 %v4566, %v4709
        %v4736 = vadd.f32 %v4567, %v4712
        %v4737 = vadd.f32 %v4568, %v4717
        %v4738 = vadd.f32 %v4569, %v4720
        %4747 = vrot.lane.b32.xlu0 %v3086, 64
        %v4748 = vpop.permute.xlu0 %4747
        %4749 = vrot.lane.b32.xlu0 %v3088, 64
        %v4750 = vpop.permute.xlu0 %4749
        %4751 = vrot.lane.b32.xlu0 %v3090, 64
        %v4752 = vpop.permute.xlu0 %4751
        %4753 = vrot.lane.b32.xlu0 %v3092, 64
        %v4754 = vpop.permute.xlu0 %4753
        %4755 = vrot.lane.b32.xlu0 %v3094, 64
        %v4756 = vpop.permute.xlu0 %4755
        %4757 = vrot.lane.b32.xlu0 %v3096, 64
        %v4758 = vpop.permute.xlu0 %4757
        %4759 = vrot.lane.b32.xlu0 %v3098, 64
        %v4760 = vpop.permute.xlu0 %4759
        %4761 = vrot.lane.b32.xlu0 %v3100, 64
        %v4762 = vpop.permute.xlu0 %4761
        %4771 = vrot.lane.b32.xlu0 %v3102, 64
        %v4772 = vpop.permute.xlu0 %4771
        %4773 = vrot.lane.b32.xlu0 %v3104, 64
        %v4774 = vpop.permute.xlu0 %4773
        %4775 = vrot.lane.b32.xlu0 %v3106, 64
        %v4776 = vpop.permute.xlu0 %4775
        %4777 = vrot.lane.b32.xlu0 %v3108, 64
        %v4778 = vpop.permute.xlu0 %4777
        %4779 = vrot.lane.b32.xlu0 %v3110, 64
        %v4780 = vpop.permute.xlu0 %4779
        %4781 = vrot.lane.b32.xlu0 %v3112, 64
        %v4782 = vpop.permute.xlu0 %4781
        %4783 = vrot.lane.b32.xlu0 %v3114, 64
        %v4784 = vpop.permute.xlu0 %4783
        %4785 = vrot.lane.b32.xlu0 %v3116, 64
        %v4786 = vpop.permute.xlu0 %4785
        %v4788 = vsel %vm3138, %v4748, 0
        %v4791 = vsel %vm3138, %v4750, 0
        %v4794 = vsel %vm3138, %v4752, 0
        %v4797 = vsel %vm3138, %v4754, 0
        %v4800 = vsel %vm3138, %v4756, 0
        %v4803 = vsel %vm3138, %v4758, 0
        %v4806 = vsel %vm3138, %v4760, 0
        %v4809 = vsel %vm3138, %v4762, 0
        %v4812 = vsel %vm3138, %v4772, 0
        %v4815 = vsel %vm3138, %v4774, 0
        %v4818 = vsel %vm3138, %v4776, 0
        %v4821 = vsel %vm3138, %v4778, 0
        %v4824 = vsel %vm3138, %v4780, 0
        %v4827 = vsel %vm3138, %v4782, 0
        %v4830 = vsel %vm3138, %v4784, 0
        %v4833 = vsel %vm3138, %v4786, 0
        %4835 = vmatprep.subr.bf16.mxu0 0
        %4836 = vmatpush1.bf16.xpose.msra.mxu0 %v4812
        %4837 = vmatprep.subr.bf16.mxu0 0
        %4838 = vmatpush1.bf16.xpose.msra.mxu0 %v4815
        %4839 = vmatprep.subr.bf16.mxu0 0
        %4840 = vmatpush1.bf16.xpose.msra.mxu0 %v4818
        %4841 = vmatprep.subr.bf16.mxu0 0
        %4842 = vmatpush1.bf16.xpose.msra.mxu0 %v4821
        %4843 = vmatprep.subr.bf16.mxu0 0
        %4844 = vmatpush1.bf16.xpose.msra.mxu0 %v4824
        %4845 = vmatprep.subr.bf16.mxu0 0
        %4846 = vmatpush1.bf16.xpose.msra.mxu0 %v4827
        %4847 = vmatprep.subr.bf16.mxu0 0
        %4848 = vmatpush1.bf16.xpose.msra.mxu0 %v4830
        %4849 = vmatprep.subr.bf16.mxu0 0
        %4850 = vmatpush1.bf16.xpose.msra.mxu0 %v4833
        %4851 = vmatprep.subr.bf16.mxu0 0
        %4852 = vmatpush1.bf16.xpose.msra.mxu0 0
        %4853 = vmatprep.subr.bf16.mxu0 0
        %4854 = vmatpush1.bf16.xpose.msra.mxu0 0
        %4855 = vmatprep.subr.bf16.mxu0 0
        %4856 = vmatpush1.bf16.xpose.msra.mxu0 0
        %4857 = vmatprep.subr.bf16.mxu0 0
        %4858 = vmatpush1.bf16.xpose.msra.mxu0 0
        %4859 = vmatprep.subr.bf16.mxu0 0
        %4860 = vmatpush1.bf16.xpose.msra.mxu0 0
        %4861 = vmatprep.subr.bf16.mxu0 0
        %4862 = vmatpush1.bf16.xpose.msra.mxu0 0
        %4863 = vmatprep.subr.bf16.mxu0 0
        %4864 = vmatpush1.bf16.xpose.msra.mxu0 0
        %4865 = vmatprep.subr.bf16.mxu0 0
        %4866 = vmatpush1.bf16.xpose.msra.mxu0 0
        %4867 = vmatprep.mubr.bf16.mxu0 0
        %4868 = vmatmul.mubr.bf16.gmra.mrb[0].mxu0 %v4788
        %v4869 = vpop.f32.mrb[0].mxu0
        %v4870 = vadd.f32 0.0, %v4869
        %v4871 = vpop.f32.mrb[0].mxu0
        %v4872 = vpop.f32.mrb[0].mxu0
        %v4873 = vadd.f32 0.0, %v4872
        %v4874 = vpop.f32.mrb[0].mxu0
        %4875 = vmatprep.mubr.bf16.mxu0 0
        %4876 = vmatmul.mubr.bf16.gmra.mrb[0].mxu0 %v4791
        %v4877 = vpop.f32.mrb[0].mxu0
        %v4878 = vadd.f32 0.0, %v4877
        %v4879 = vpop.f32.mrb[0].mxu0
        %v4880 = vpop.f32.mrb[0].mxu0
        %v4881 = vadd.f32 0.0, %v4880
        %v4882 = vpop.f32.mrb[0].mxu0
        %4883 = vmatprep.mubr.bf16.mxu0 0
        %4884 = vmatmul.mubr.bf16.gmra.mrb[0].mxu0 %v4794
        %v4885 = vpop.f32.mrb[0].mxu0
        %v4886 = vadd.f32 0.0, %v4885
        %v4887 = vpop.f32.mrb[0].mxu0
        %v4888 = vpop.f32.mrb[0].mxu0
        %v4889 = vadd.f32 0.0, %v4888
        %v4890 = vpop.f32.mrb[0].mxu0
        %4891 = vmatprep.mubr.bf16.mxu0 0
        %4892 = vmatmul.mubr.bf16.gmra.mrb[0].mxu0 %v4797
        %v4893 = vpop.f32.mrb[0].mxu0
        %v4894 = vadd.f32 0.0, %v4893
        %v4895 = vpop.f32.mrb[0].mxu0
        %v4896 = vpop.f32.mrb[0].mxu0
        %v4897 = vadd.f32 0.0, %v4896
        %v4898 = vpop.f32.mrb[0].mxu0
        %4899 = vmatprep.mubr.bf16.mxu0 0
        %4900 = vmatmul.mubr.bf16.gmra.mrb[0].mxu0 %v4800
        %v4901 = vpop.f32.mrb[0].mxu0
        %v4902 = vadd.f32 0.0, %v4901
        %v4903 = vpop.f32.mrb[0].mxu0
        %v4904 = vpop.f32.mrb[0].mxu0
        %v4905 = vadd.f32 0.0, %v4904
        %v4906 = vpop.f32.mrb[0].mxu0
        %4907 = vmatprep.mubr.bf16.mxu0 0
        %4908 = vmatmul.mubr.bf16.gmra.mrb[0].mxu0 %v4803
        %v4909 = vpop.f32.mrb[0].mxu0
        %v4910 = vadd.f32 0.0, %v4909
        %v4911 = vpop.f32.mrb[0].mxu0
        %v4912 = vpop.f32.mrb[0].mxu0
        %v4913 = vadd.f32 0.0, %v4912
        %v4914 = vpop.f32.mrb[0].mxu0
        %4915 = vmatprep.mubr.bf16.mxu0 0
        %4916 = vmatmul.mubr.bf16.gmra.mrb[0].mxu0 %v4806
        %v4917 = vpop.f32.mrb[0].mxu0
        %v4918 = vadd.f32 0.0, %v4917
        %v4919 = vpop.f32.mrb[0].mxu0
        %v4920 = vpop.f32.mrb[0].mxu0
        %v4921 = vadd.f32 0.0, %v4920
        %v4922 = vpop.f32.mrb[0].mxu0
        %4923 = vmatprep.mubr.bf16.mxu0 0
        %4924 = vmatmul.mubr.bf16.gmra.mrb[0].mxu0 %v4809
        %v4925 = vpop.f32.mrb[0].mxu0
        %v4926 = vadd.f32 0.0, %v4925
        %v4927 = vpop.f32.mrb[0].mxu0
        %v4928 = vpop.f32.mrb[0].mxu0
        %v4929 = vadd.f32 0.0, %v4928
        %v4930 = vpop.f32.mrb[0].mxu0
        %4931 = vdwg.mxu0
        %v4932 = vmul.f32 %v4870, 0.125
        %v4933 = vmul.f32 %v4873, 0.125
        %v4934 = vmul.f32 %v4878, 0.125
        %v4935 = vmul.f32 %v4881, 0.125
        %v4936 = vmul.f32 %v4886, 0.125
        %v4937 = vmul.f32 %v4889, 0.125
        %v4938 = vmul.f32 %v4894, 0.125
        %v4939 = vmul.f32 %v4897, 0.125
        %v4940 = vmul.f32 %v4902, 0.125
        %v4941 = vmul.f32 %v4905, 0.125
        %v4942 = vmul.f32 %v4910, 0.125
        %v4943 = vmul.f32 %v4913, 0.125
        %v4944 = vmul.f32 %v4918, 0.125
        %v4945 = vmul.f32 %v4921, 0.125
        %v4946 = vmul.f32 %v4926, 0.125
        %v4947 = vmul.f32 %v4929, 0.125
        %v4948 = vsel %vm3301, %v4932, -1e+30
        %v4949 = vsel %vm3301, %v4933, -1e+30
        %v4950 = vsel %vm3301, %v4934, -1e+30
        %v4951 = vsel %vm3301, %v4935, -1e+30
        %v4952 = vsel %vm3301, %v4936, -1e+30
        %v4953 = vsel %vm3301, %v4937, -1e+30
        %v4954 = vsel %vm3301, %v4938, -1e+30
        %v4955 = vsel %vm3301, %v4939, -1e+30
        %v4956 = vsel %vm3301, %v4940, -1e+30
        %v4957 = vsel %vm3301, %v4941, -1e+30
        %v4958 = vsel %vm3301, %v4942, -1e+30
        %v4959 = vsel %vm3301, %v4943, -1e+30
        %v4960 = vsel %vm3301, %v4944, -1e+30
        %v4961 = vsel %vm3301, %v4945, -1e+30
        %v4962 = vsel %vm3301, %v4946, -1e+30
        %v4963 = vsel %vm3301, %v4947, -1e+30
        %4964 = vmax.xlane.f32.xlu0 %v4948
        %v4965 = vpop.xlane.xlu0 %4964
        %4966 = vmax.xlane.f32.xlu0 %v4949
        %v4967 = vpop.xlane.xlu0 %4966
        %4968 = vmax.xlane.f32.xlu0 %v4950
        %v4969 = vpop.xlane.xlu0 %4968
        %4970 = vmax.xlane.f32.xlu0 %v4951
        %v4971 = vpop.xlane.xlu0 %4970
        %4972 = vmax.xlane.f32.xlu0 %v4952
        %v4973 = vpop.xlane.xlu0 %4972
        %4974 = vmax.xlane.f32.xlu0 %v4953
        %v4975 = vpop.xlane.xlu0 %4974
        %4976 = vmax.xlane.f32.xlu0 %v4954
        %v4977 = vpop.xlane.xlu0 %4976
        %4978 = vmax.xlane.f32.xlu0 %v4955
        %v4979 = vpop.xlane.xlu0 %4978
        %4980 = vmax.xlane.f32.xlu0 %v4956
        %v4981 = vpop.xlane.xlu0 %4980
        %4982 = vmax.xlane.f32.xlu0 %v4957
        %v4983 = vpop.xlane.xlu0 %4982
        %4984 = vmax.xlane.f32.xlu0 %v4958
        %v4985 = vpop.xlane.xlu0 %4984
        %4986 = vmax.xlane.f32.xlu0 %v4959
        %v4987 = vpop.xlane.xlu0 %4986
        %4988 = vmax.xlane.f32.xlu0 %v4960
        %v4989 = vpop.xlane.xlu0 %4988
        %4990 = vmax.xlane.f32.xlu0 %v4961
        %v4991 = vpop.xlane.xlu0 %4990
        %4992 = vmax.xlane.f32.xlu0 %v4962
        %v4993 = vpop.xlane.xlu0 %4992
        %4994 = vmax.xlane.f32.xlu0 %v4963
        %v4995 = vpop.xlane.xlu0 %4994
        %v4996 = vmax.f32 %v4965, -1e+30
        %v4997 = vmax.f32 %v4967, -1e+30
        %v4998 = vmax.f32 %v4969, -1e+30
        %v4999 = vmax.f32 %v4971, -1e+30
        %v5000 = vmax.f32 %v4973, -1e+30
        %v5001 = vmax.f32 %v4975, -1e+30
        %v5002 = vmax.f32 %v4977, -1e+30
        %v5003 = vmax.f32 %v4979, -1e+30
        %v5004 = vmax.f32 %v4981, -1e+30
        %v5005 = vmax.f32 %v4983, -1e+30
        %v5006 = vmax.f32 %v4985, -1e+30
        %v5007 = vmax.f32 %v4987, -1e+30
        %v5008 = vmax.f32 %v4989, -1e+30
        %v5009 = vmax.f32 %v4991, -1e+30
        %v5010 = vmax.f32 %v4993, -1e+30
        %v5011 = vmax.f32 %v4995, -1e+30
        %v5012 = vsub.f32 -1e+30, %v4996
        %v5013 = vsub.f32 -1e+30, %v4997
        %v5014 = vsub.f32 -1e+30, %v4998
        %v5015 = vsub.f32 -1e+30, %v4999
        %v5016 = vsub.f32 -1e+30, %v5000
        %v5017 = vsub.f32 -1e+30, %v5001
        %v5018 = vsub.f32 -1e+30, %v5002
        %v5019 = vsub.f32 -1e+30, %v5003
        %v5020 = vsub.f32 -1e+30, %v5004
        %v5021 = vsub.f32 -1e+30, %v5005
        %v5022 = vsub.f32 -1e+30, %v5006
        %v5023 = vsub.f32 -1e+30, %v5007
        %v5024 = vsub.f32 -1e+30, %v5008
        %v5025 = vsub.f32 -1e+30, %v5009
        %v5026 = vsub.f32 -1e+30, %v5010
        %v5027 = vsub.f32 -1e+30, %v5011
        %v5028 = vmul.f32 %v5012, 1.442695
        %v5029 = vpow.pop %v5028
        %v5030 = vmul.f32 %v5013, 1.442695
        %v5031 = vpow.pop %v5030
        %v5032 = vmul.f32 %v5014, 1.442695
        %v5033 = vpow.pop %v5032
        %v5034 = vmul.f32 %v5015, 1.442695
        %v5035 = vpow.pop %v5034
        %v5036 = vmul.f32 %v5016, 1.442695
        %v5037 = vpow.pop %v5036
        %v5038 = vmul.f32 %v5017, 1.442695
        %v5039 = vpow.pop %v5038
        %v5040 = vmul.f32 %v5018, 1.442695
        %v5041 = vpow.pop %v5040
        %v5042 = vmul.f32 %v5019, 1.442695
        %v5043 = vpow.pop %v5042
        %v5044 = vmul.f32 %v5020, 1.442695
        %v5045 = vpow.pop %v5044
        %v5046 = vmul.f32 %v5021, 1.442695
        %v5047 = vpow.pop %v5046
        %v5048 = vmul.f32 %v5022, 1.442695
        %v5049 = vpow.pop %v5048
        %v5050 = vmul.f32 %v5023, 1.442695
        %v5051 = vpow.pop %v5050
        %v5052 = vmul.f32 %v5024, 1.442695
        %v5053 = vpow.pop %v5052
        %v5054 = vmul.f32 %v5025, 1.442695
        %v5055 = vpow.pop %v5054
        %v5056 = vmul.f32 %v5026, 1.442695
        %v5057 = vpow.pop %v5056
        %v5058 = vmul.f32 %v5027, 1.442695
        %v5059 = vpow.pop %v5058
        %v5060 = vsub.f32 %v4948, %v4996
        %v5061 = vsub.f32 %v4949, %v4997
        %v5062 = vsub.f32 %v4950, %v4998
        %v5063 = vsub.f32 %v4951, %v4999
        %v5064 = vsub.f32 %v4952, %v5000
        %v5065 = vsub.f32 %v4953, %v5001
        %v5066 = vsub.f32 %v4954, %v5002
        %v5067 = vsub.f32 %v4955, %v5003
        %v5068 = vsub.f32 %v4956, %v5004
        %v5069 = vsub.f32 %v4957, %v5005
        %v5070 = vsub.f32 %v4958, %v5006
        %v5071 = vsub.f32 %v4959, %v5007
        %v5072 = vsub.f32 %v4960, %v5008
        %v5073 = vsub.f32 %v4961, %v5009
        %v5074 = vsub.f32 %v4962, %v5010
        %v5075 = vsub.f32 %v4963, %v5011
        %v5076 = vmul.f32 %v5060, 1.442695
        %v5077 = vpow.pop %v5076
        %v5078 = vmul.f32 %v5061, 1.442695
        %v5079 = vpow.pop %v5078
        %v5080 = vmul.f32 %v5062, 1.442695
        %v5081 = vpow.pop %v5080
        %v5082 = vmul.f32 %v5063, 1.442695
        %v5083 = vpow.pop %v5082
        %v5084 = vmul.f32 %v5064, 1.442695
        %v5085 = vpow.pop %v5084
        %v5086 = vmul.f32 %v5065, 1.442695
        %v5087 = vpow.pop %v5086
        %v5088 = vmul.f32 %v5066, 1.442695
        %v5089 = vpow.pop %v5088
        %v5090 = vmul.f32 %v5067, 1.442695
        %v5091 = vpow.pop %v5090
        %v5092 = vmul.f32 %v5068, 1.442695
        %v5093 = vpow.pop %v5092
        %v5094 = vmul.f32 %v5069, 1.442695
        %v5095 = vpow.pop %v5094
        %v5096 = vmul.f32 %v5070, 1.442695
        %v5097 = vpow.pop %v5096
        %v5098 = vmul.f32 %v5071, 1.442695
        %v5099 = vpow.pop %v5098
        %v5100 = vmul.f32 %v5072, 1.442695
        %v5101 = vpow.pop %v5100
        %v5102 = vmul.f32 %v5073, 1.442695
        %v5103 = vpow.pop %v5102
        %v5104 = vmul.f32 %v5074, 1.442695
        %v5105 = vpow.pop %v5104
        %v5106 = vmul.f32 %v5075, 1.442695
        %v5107 = vpow.pop %v5106
        %v5108 = vmul.f32 %v5029, 0.0
        %v5109 = vmul.f32 %v5031, 0.0
        %v5110 = vmul.f32 %v5033, 0.0
        %v5111 = vmul.f32 %v5035, 0.0
        %v5112 = vmul.f32 %v5037, 0.0
        %v5113 = vmul.f32 %v5039, 0.0
        %v5114 = vmul.f32 %v5041, 0.0
        %v5115 = vmul.f32 %v5043, 0.0
        %v5116 = vmul.f32 %v5045, 0.0
        %v5117 = vmul.f32 %v5047, 0.0
        %v5118 = vmul.f32 %v5049, 0.0
        %v5119 = vmul.f32 %v5051, 0.0
        %v5120 = vmul.f32 %v5053, 0.0
        %v5121 = vmul.f32 %v5055, 0.0
        %v5122 = vmul.f32 %v5057, 0.0
        %v5123 = vmul.f32 %v5059, 0.0
        %5124 = vadd.xlane.f32.xlu0 %v5077
        %v5125 = vpop.xlane.xlu0 %5124
        %5126 = vadd.xlane.f32.xlu0 %v5079
        %v5127 = vpop.xlane.xlu0 %5126
        %5128 = vadd.xlane.f32.xlu0 %v5081
        %v5129 = vpop.xlane.xlu0 %5128
        %5130 = vadd.xlane.f32.xlu0 %v5083
        %v5131 = vpop.xlane.xlu0 %5130
        %5132 = vadd.xlane.f32.xlu0 %v5085
        %v5133 = vpop.xlane.xlu0 %5132
        %5134 = vadd.xlane.f32.xlu0 %v5087
        %v5135 = vpop.xlane.xlu0 %5134
        %5136 = vadd.xlane.f32.xlu0 %v5089
        %v5137 = vpop.xlane.xlu0 %5136
        %5138 = vadd.xlane.f32.xlu0 %v5091
        %v5139 = vpop.xlane.xlu0 %5138
        %5140 = vadd.xlane.f32.xlu0 %v5093
        %v5141 = vpop.xlane.xlu0 %5140
        %5142 = vadd.xlane.f32.xlu0 %v5095
        %v5143 = vpop.xlane.xlu0 %5142
        %5144 = vadd.xlane.f32.xlu0 %v5097
        %v5145 = vpop.xlane.xlu0 %5144
        %5146 = vadd.xlane.f32.xlu0 %v5099
        %v5147 = vpop.xlane.xlu0 %5146
        %5148 = vadd.xlane.f32.xlu0 %v5101
        %v5149 = vpop.xlane.xlu0 %5148
        %5150 = vadd.xlane.f32.xlu0 %v5103
        %v5151 = vpop.xlane.xlu0 %5150
        %5152 = vadd.xlane.f32.xlu0 %v5105
        %v5153 = vpop.xlane.xlu0 %5152
        %5154 = vadd.xlane.f32.xlu0 %v5107
        %v5155 = vpop.xlane.xlu0 %5154
        %v5156 = vadd.f32 %v5108, %v5125
        %v5157 = vadd.f32 %v5109, %v5127
        %v5158 = vadd.f32 %v5110, %v5129
        %v5159 = vadd.f32 %v5111, %v5131
        %v5160 = vadd.f32 %v5112, %v5133
        %v5161 = vadd.f32 %v5113, %v5135
        %v5162 = vadd.f32 %v5114, %v5137
        %v5163 = vadd.f32 %v5115, %v5139
        %v5164 = vadd.f32 %v5116, %v5141
        %v5165 = vadd.f32 %v5117, %v5143
        %v5166 = vadd.f32 %v5118, %v5145
        %v5167 = vadd.f32 %v5119, %v5147
        %v5168 = vadd.f32 %v5120, %v5149
        %v5169 = vadd.f32 %v5121, %v5151
        %v5170 = vadd.f32 %v5122, %v5153
        %v5171 = vadd.f32 %v5123, %v5155
        %v5172 = vpack.c.bf16 %v5079, %v5077
        %v5173 = vpack.c.bf16 %v5083, %v5081
        %v5174 = vpack.c.bf16 %v5087, %v5085
        %v5175 = vpack.c.bf16 %v5091, %v5089
        %v5176 = vpack.c.bf16 %v5095, %v5093
        %v5177 = vpack.c.bf16 %v5099, %v5097
        %v5178 = vpack.c.bf16 %v5103, %v5101
        %v5179 = vpack.c.bf16 %v5107, %v5105
        %5188 = vrot.lane.b32.xlu0 %v3118, 64
        %v5189 = vpop.permute.xlu0 %5188
        %5190 = vrot.lane.b32.xlu0 %v3120, 64
        %v5191 = vpop.permute.xlu0 %5190
        %5192 = vrot.lane.b32.xlu0 %v3122, 64
        %v5193 = vpop.permute.xlu0 %5192
        %5194 = vrot.lane.b32.xlu0 %v3124, 64
        %v5195 = vpop.permute.xlu0 %5194
        %5196 = vrot.lane.b32.xlu0 %v3126, 64
        %v5197 = vpop.permute.xlu0 %5196
        %5198 = vrot.lane.b32.xlu0 %v3128, 64
        %v5199 = vpop.permute.xlu0 %5198
        %5200 = vrot.lane.b32.xlu0 %v3130, 64
        %v5201 = vpop.permute.xlu0 %5200
        %5202 = vrot.lane.b32.xlu0 %v3132, 64
        %v5203 = vpop.permute.xlu0 %5202
        %5212 = vmatprep.subr.bf16.mxu0 0
        %5213 = vmatpush1.bf16.msra.mxu0 %v5189
        %5214 = vmatprep.subr.bf16.mxu0 0
        %5215 = vmatpush1.bf16.msra.mxu0 %v5191
        %5216 = vmatprep.subr.bf16.mxu0 0
        %5217 = vmatpush1.bf16.msra.mxu0 %v5193
        %5218 = vmatprep.subr.bf16.mxu0 0
        %5219 = vmatpush1.bf16.msra.mxu0 %v5195
        %5220 = vmatprep.subr.bf16.mxu0 0
        %5221 = vmatpush1.bf16.msra.mxu0 %v5197
        %5222 = vmatprep.subr.bf16.mxu0 0
        %5223 = vmatpush1.bf16.msra.mxu0 %v5199
        %5224 = vmatprep.subr.bf16.mxu0 0
        %5225 = vmatpush1.bf16.msra.mxu0 %v5201
        %5226 = vmatprep.subr.bf16.mxu0 0
        %5227 = vmatpush1.bf16.msra.mxu0 %v5203
        %5228 = vmatprep.subr.bf16.mxu0 0
        %5229 = vmatpush1.bf16.msra.mxu0 0
        %5230 = vmatprep.subr.bf16.mxu0 0
        %5231 = vmatpush1.bf16.msra.mxu0 0
        %5232 = vmatprep.subr.bf16.mxu0 0
        %5233 = vmatpush1.bf16.msra.mxu0 0
        %5234 = vmatprep.subr.bf16.mxu0 0
        %5235 = vmatpush1.bf16.msra.mxu0 0
        %5236 = vmatprep.subr.bf16.mxu0 0
        %5237 = vmatpush1.bf16.msra.mxu0 0
        %5238 = vmatprep.subr.bf16.mxu0 0
        %5239 = vmatpush1.bf16.msra.mxu0 0
        %5240 = vmatprep.subr.bf16.mxu0 0
        %5241 = vmatpush1.bf16.msra.mxu0 0
        %5242 = vmatprep.subr.bf16.mxu0 0
        %5243 = vmatpush1.bf16.msra.mxu0 0
        %5244 = vmatprep.mubr.bf16.mxu0 0
        %5245 = vmatmul.mubr.bf16.gmra.mrb[0].mxu0 %v5172
        %v5246 = vpop.f32.mrb[0].mxu0
        %v5247 = vadd.f32 0.0, %v5246
        %v5248 = vpop.f32.mrb[0].mxu0
        %v5249 = vpop.f32.mrb[0].mxu0
        %v5250 = vadd.f32 0.0, %v5249
        %v5251 = vpop.f32.mrb[0].mxu0
        %5252 = vmatprep.mubr.bf16.mxu0 0
        %5253 = vmatmul.mubr.bf16.gmra.mrb[0].mxu0 %v5173
        %v5254 = vpop.f32.mrb[0].mxu0
        %v5255 = vadd.f32 0.0, %v5254
        %v5256 = vpop.f32.mrb[0].mxu0
        %v5257 = vpop.f32.mrb[0].mxu0
        %v5258 = vadd.f32 0.0, %v5257
        %v5259 = vpop.f32.mrb[0].mxu0
        %5260 = vmatprep.mubr.bf16.mxu0 0
        %5261 = vmatmul.mubr.bf16.gmra.mrb[0].mxu0 %v5174
        %v5262 = vpop.f32.mrb[0].mxu0
        %v5263 = vadd.f32 0.0, %v5262
        %v5264 = vpop.f32.mrb[0].mxu0
        %v5265 = vpop.f32.mrb[0].mxu0
        %v5266 = vadd.f32 0.0, %v5265
        %v5267 = vpop.f32.mrb[0].mxu0
        %5268 = vmatprep.mubr.bf16.mxu0 0
        %5269 = vmatmul.mubr.bf16.gmra.mrb[0].mxu0 %v5175
        %v5270 = vpop.f32.mrb[0].mxu0
        %v5271 = vadd.f32 0.0, %v5270
        %v5272 = vpop.f32.mrb[0].mxu0
        %v5273 = vpop.f32.mrb[0].mxu0
        %v5274 = vadd.f32 0.0, %v5273
        %v5275 = vpop.f32.mrb[0].mxu0
        %5276 = vmatprep.mubr.bf16.mxu0 0
        %5277 = vmatmul.mubr.bf16.gmra.mrb[0].mxu0 %v5176
        %v5278 = vpop.f32.mrb[0].mxu0
        %v5279 = vadd.f32 0.0, %v5278
        %v5280 = vpop.f32.mrb[0].mxu0
        %v5281 = vpop.f32.mrb[0].mxu0
        %v5282 = vadd.f32 0.0, %v5281
        %v5283 = vpop.f32.mrb[0].mxu0
        %5284 = vmatprep.mubr.bf16.mxu0 0
        %5285 = vmatmul.mubr.bf16.gmra.mrb[0].mxu0 %v5177
        %v5286 = vpop.f32.mrb[0].mxu0
        %v5287 = vadd.f32 0.0, %v5286
        %v5288 = vpop.f32.mrb[0].mxu0
        %v5289 = vpop.f32.mrb[0].mxu0
        %v5290 = vadd.f32 0.0, %v5289
        %v5291 = vpop.f32.mrb[0].mxu0
        %5292 = vmatprep.mubr.bf16.mxu0 0
        %5293 = vmatmul.mubr.bf16.gmra.mrb[0].mxu0 %v5178
        %v5294 = vpop.f32.mrb[0].mxu0
        %v5295 = vadd.f32 0.0, %v5294
        %v5296 = vpop.f32.mrb[0].mxu0
        %v5297 = vpop.f32.mrb[0].mxu0
        %v5298 = vadd.f32 0.0, %v5297
        %v5299 = vpop.f32.mrb[0].mxu0
        %5300 = vmatprep.mubr.bf16.mxu0 0
        %5301 = vmatmul.mubr.bf16.gmra.mrb[0].mxu0 %v5179
        %v5302 = vpop.f32.mrb[0].mxu0
        %v5303 = vadd.f32 0.0, %v5302
        %v5304 = vpop.f32.mrb[0].mxu0
        %v5305 = vpop.f32.mrb[0].mxu0
        %v5306 = vadd.f32 0.0, %v5305
        %v5307 = vpop.f32.mrb[0].mxu0
        %5308 = vdwg.mxu0
        %v5309 = vadd.f32 %v5108, %v5247
        %v5310 = vadd.f32 %v5109, %v5250
        %v5311 = vadd.f32 %v5110, %v5255
        %v5312 = vadd.f32 %v5111, %v5258
        %v5313 = vadd.f32 %v5112, %v5263
        %v5314 = vadd.f32 %v5113, %v5266
        %v5315 = vadd.f32 %v5114, %v5271
        %v5316 = vadd.f32 %v5115, %v5274
        %v5317 = vadd.f32 %v5116, %v5279
        %v5318 = vadd.f32 %v5117, %v5282
        %v5319 = vadd.f32 %v5118, %v5287
        %v5320 = vadd.f32 %v5119, %v5290
        %v5321 = vadd.f32 %v5120, %v5295
        %v5322 = vadd.f32 %v5121, %v5298
        %v5323 = vadd.f32 %v5122, %v5303
        %v5324 = vadd.f32 %v5123, %v5306
        %v5325 = vrcp.pop %v3510
        %v5326 = vrcp.pop %v3511
        %v5327 = vrcp.pop %v3512
        %v5328 = vrcp.pop %v3513
        %v5329 = vrcp.pop %v3514
        %v5330 = vrcp.pop %v3515
        %v5331 = vrcp.pop %v3516
        %v5332 = vrcp.pop %v3517
        %v5333 = vrcp.pop %v3518
        %v5334 = vrcp.pop %v3519
        %v5335 = vrcp.pop %v3520
        %v5336 = vrcp.pop %v3521
        %v5337 = vrcp.pop %v3522
        %v5338 = vrcp.pop %v3523
        %v5339 = vrcp.pop %v3524
        %v5340 = vrcp.pop %v3525
        %v5341 = vmul.f32 %v3631, %v5325
        %v5342 = vmul.f32 %v3632, %v5326
        %v5343 = vmul.f32 %v3633, %v5327
        %v5344 = vmul.f32 %v3634, %v5328
        %v5345 = vmul.f32 %v3635, %v5329
        %v5346 = vmul.f32 %v3636, %v5330
        %v5347 = vmul.f32 %v3637, %v5331
        %v5348 = vmul.f32 %v3638, %v5332
        %v5349 = vmul.f32 %v3639, %v5333
        %v5350 = vmul.f32 %v3640, %v5334
        %v5351 = vmul.f32 %v3641, %v5335
        %v5352 = vmul.f32 %v3642, %v5336
        %v5353 = vmul.f32 %v3643, %v5337
        %v5354 = vmul.f32 %v3644, %v5338
        %v5355 = vmul.f32 %v3645, %v5339
        %v5356 = vmul.f32 %v3646, %v5340
        %v5357 = vpack.c.bf16 %v5342, %v5341
        %v5358 = vpack.c.bf16 %v5344, %v5343
        %v5359 = vpack.c.bf16 %v5346, %v5345
        %v5360 = vpack.c.bf16 %v5348, %v5347
        %v5361 = vpack.c.bf16 %v5350, %v5349
        %v5362 = vpack.c.bf16 %v5352, %v5351
        %v5363 = vpack.c.bf16 %v5354, %v5353
        %v5364 = vpack.c.bf16 %v5356, %v5355
        %5365 = vst.msk [vmem:[#allocation4] sm:$0xff] %vm3138, %v5357
        %5366 = vst.msk [vmem:[#allocation4 + $0x10] sm:$0xff] %vm3138, %v5358
        %5367 = vst.msk [vmem:[#allocation4 + $0x20] sm:$0xff] %vm3138, %v5359
        %5368 = vst.msk [vmem:[#allocation4 + $0x30] sm:$0xff] %vm3138, %v5360
        %5369 = vst.msk [vmem:[#allocation4 + $0x40] sm:$0xff] %vm3138, %v5361
        %5370 = vst.msk [vmem:[#allocation4 + $0x50] sm:$0xff] %vm3138, %v5362
        %5371 = vst.msk [vmem:[#allocation4 + $0x60] sm:$0xff] %vm3138, %v5363
        %5372 = vst.msk [vmem:[#allocation4 + $0x70] sm:$0xff] %vm3138, %v5364
        %v5373 = vrcp.pop %v4064
        %v5374 = vrcp.pop %v4065
        %v5375 = vrcp.pop %v4066
        %v5376 = vrcp.pop %v4067
        %v5377 = vrcp.pop %v4068
        %v5378 = vrcp.pop %v4069
        %v5379 = vrcp.pop %v4070
        %v5380 = vrcp.pop %v4071
        %v5381 = vrcp.pop %v4072
        %v5382 = vrcp.pop %v4073
        %v5383 = vrcp.pop %v4074
        %v5384 = vrcp.pop %v4075
        %v5385 = vrcp.pop %v4076
        %v5386 = vrcp.pop %v4077
        %v5387 = vrcp.pop %v4078
        %v5388 = vrcp.pop %v4079
        %v5389 = vmul.f32 %v4217, %v5373
        %v5390 = vmul.f32 %v4218, %v5374
        %v5391 = vmul.f32 %v4219, %v5375
        %v5392 = vmul.f32 %v4220, %v5376
        %v5393 = vmul.f32 %v4221, %v5377
        %v5394 = vmul.f32 %v4222, %v5378
        %v5395 = vmul.f32 %v4223, %v5379
        %v5396 = vmul.f32 %v4224, %v5380
        %v5397 = vmul.f32 %v4225, %v5381
        %v5398 = vmul.f32 %v4226, %v5382
        %v5399 = vmul.f32 %v4227, %v5383
        %v5400 = vmul.f32 %v4228, %v5384
        %v5401 = vmul.f32 %v4229, %v5385
        %v5402 = vmul.f32 %v4230, %v5386
        %v5403 = vmul.f32 %v4231, %v5387
        %v5404 = vmul.f32 %v4232, %v5388
        %v5405 = vpack.c.bf16 %v5390, %v5389
        %v5406 = vpack.c.bf16 %v5392, %v5391
        %v5407 = vpack.c.bf16 %v5394, %v5393
        %v5408 = vpack.c.bf16 %v5396, %v5395
        %v5409 = vpack.c.bf16 %v5398, %v5397
        %v5410 = vpack.c.bf16 %v5400, %v5399
        %v5411 = vpack.c.bf16 %v5402, %v5401
        %v5412 = vpack.c.bf16 %v5404, %v5403
        %5421 = vrot.lane.b32.xlu0 %v5405, 64
        %v5422 = vpop.permute.xlu0 %5421
        %5423 = vrot.lane.b32.xlu0 %v5406, 64
        %v5424 = vpop.permute.xlu0 %5423
        %5425 = vrot.lane.b32.xlu0 %v5407, 64
        %v5426 = vpop.permute.xlu0 %5425
        %5427 = vrot.lane.b32.xlu0 %v5408, 64
        %v5428 = vpop.permute.xlu0 %5427
        %5429 = vrot.lane.b32.xlu0 %v5409, 64
        %v5430 = vpop.permute.xlu0 %5429
        %5431 = vrot.lane.b32.xlu0 %v5410, 64
        %v5432 = vpop.permute.xlu0 %5431
        %5433 = vrot.lane.b32.xlu0 %v5411, 64
        %v5434 = vpop.permute.xlu0 %5433
        %5435 = vrot.lane.b32.xlu0 %v5412, 64
        %v5436 = vpop.permute.xlu0 %5435
        %vm5445 = vcmask 1048064
        %5446 = vst.msk [vmem:[#allocation4] sm:$0xff] %vm5445, %v5422
        %5447 = vst.msk [vmem:[#allocation4 + $0x10] sm:$0xff] %vm5445, %v5424
        %5448 = vst.msk [vmem:[#allocation4 + $0x20] sm:$0xff] %vm5445, %v5426
        %5449 = vst.msk [vmem:[#allocation4 + $0x30] sm:$0xff] %vm5445, %v5428
        %5450 = vst.msk [vmem:[#allocation4 + $0x40] sm:$0xff] %vm5445, %v5430
        %5451 = vst.msk [vmem:[#allocation4 + $0x50] sm:$0xff] %vm5445, %v5432
        %5452 = vst.msk [vmem:[#allocation4 + $0x60] sm:$0xff] %vm5445, %v5434
        %5453 = vst.msk [vmem:[#allocation4 + $0x70] sm:$0xff] %vm5445, %v5436
        %v5454 = vrcp.pop %v4602
        %v5455 = vrcp.pop %v4603
        %v5456 = vrcp.pop %v4604
        %v5457 = vrcp.pop %v4605
        %v5458 = vrcp.pop %v4606
        %v5459 = vrcp.pop %v4607
        %v5460 = vrcp.pop %v4608
        %v5461 = vrcp.pop %v4609
        %v5462 = vrcp.pop %v4610
        %v5463 = vrcp.pop %v4611
        %v5464 = vrcp.pop %v4612
        %v5465 = vrcp.pop %v4613
        %v5466 = vrcp.pop %v4614
        %v5467 = vrcp.pop %v4615
        %v5468 = vrcp.pop %v4616
        %v5469 = vrcp.pop %v4617
        %v5470 = vmul.f32 %v4723, %v5454
        %v5471 = vmul.f32 %v4724, %v5455
        %v5472 = vmul.f32 %v4725, %v5456
        %v5473 = vmul.f32 %v4726, %v5457
        %v5474 = vmul.f32 %v4727, %v5458
        %v5475 = vmul.f32 %v4728, %v5459
        %v5476 = vmul.f32 %v4729, %v5460
        %v5477 = vmul.f32 %v4730, %v5461
        %v5478 = vmul.f32 %v4731, %v5462
        %v5479 = vmul.f32 %v4732, %v5463
        %v5480 = vmul.f32 %v4733, %v5464
        %v5481 = vmul.f32 %v4734, %v5465
        %v5482 = vmul.f32 %v4735, %v5466
        %v5483 = vmul.f32 %v4736, %v5467
        %v5484 = vmul.f32 %v4737, %v5468
        %v5485 = vmul.f32 %v4738, %v5469
        %v5486 = vpack.c.bf16 %v5471, %v5470
        %v5487 = vpack.c.bf16 %v5473, %v5472
        %v5488 = vpack.c.bf16 %v5475, %v5474
        %v5489 = vpack.c.bf16 %v5477, %v5476
        %v5490 = vpack.c.bf16 %v5479, %v5478
        %v5491 = vpack.c.bf16 %v5481, %v5480
        %v5492 = vpack.c.bf16 %v5483, %v5482
        %v5493 = vpack.c.bf16 %v5485, %v5484
        %5494 = vst.msk [vmem:[#allocation4 + $0x8] sm:$0xff] %vm3138, %v5486
        %5495 = vst.msk [vmem:[#allocation4 + $0x18] sm:$0xff] %vm3138, %v5487
        %5496 = vst.msk [vmem:[#allocation4 + $0x28] sm:$0xff] %vm3138, %v5488
        %5497 = vst.msk [vmem:[#allocation4 + $0x38] sm:$0xff] %vm3138, %v5489
        %5498 = vst.msk [vmem:[#allocation4 + $0x48] sm:$0xff] %vm3138, %v5490
        %5499 = vst.msk [vmem:[#allocation4 + $0x58] sm:$0xff] %vm3138, %v5491
        %5500 = vst.msk [vmem:[#allocation4 + $0x68] sm:$0xff] %vm3138, %v5492
        %5501 = vst.msk [vmem:[#allocation4 + $0x78] sm:$0xff] %vm3138, %v5493
        %v5502 = vrcp.pop %v5156
        %v5503 = vrcp.pop %v5157
        %v5504 = vrcp.pop %v5158
        %v5505 = vrcp.pop %v5159
        %v5506 = vrcp.pop %v5160
        %v5507 = vrcp.pop %v5161
        %v5508 = vrcp.pop %v5162
        %v5509 = vrcp.pop %v5163
        %v5510 = vrcp.pop %v5164
        %v5511 = vrcp.pop %v5165
        %v5512 = vrcp.pop %v5166
        %v5513 = vrcp.pop %v5167
        %v5514 = vrcp.pop %v5168
        %v5515 = vrcp.pop %v5169
        %v5516 = vrcp.pop %v5170
        %v5517 = vrcp.pop %v5171
        %v5518 = vmul.f32 %v5309, %v5502
        %v5519 = vmul.f32 %v5310, %v5503
        %v5520 = vmul.f32 %v5311, %v5504
        %v5521 = vmul.f32 %v5312, %v5505
        %v5522 = vmul.f32 %v5313, %v5506
        %v5523 = vmul.f32 %v5314, %v5507
        %v5524 = vmul.f32 %v5315, %v5508
        %v5525 = vmul.f32 %v5316, %v5509
        %v5526 = vmul.f32 %v5317, %v5510
        %v5527 = vmul.f32 %v5318, %v5511
        %v5528 = vmul.f32 %v5319, %v5512
        %v5529 = vmul.f32 %v5320, %v5513
        %v5530 = vmul.f32 %v5321, %v5514
        %v5531 = vmul.f32 %v5322, %v5515
        %v5532 = vmul.f32 %v5323, %v5516
        %v5533 = vmul.f32 %v5324, %v5517
        %v5534 = vpack.c.bf16 %v5519, %v5518
        %v5535 = vpack.c.bf16 %v5521, %v5520
        %v5536 = vpack.c.bf16 %v5523, %v5522
        %v5537 = vpack.c.bf16 %v5525, %v5524
        %v5538 = vpack.c.bf16 %v5527, %v5526
        %v5539 = vpack.c.bf16 %v5529, %v5528
        %v5540 = vpack.c.bf16 %v5531, %v5530
        %v5541 = vpack.c.bf16 %v5533, %v5532
        %5550 = vrot.lane.b32.xlu0 %v5534, 64
        %v5551 = vpop.permute.xlu0 %5550
        %5552 = vrot.lane.b32.xlu0 %v5535, 64
        %v5553 = vpop.permute.xlu0 %5552
        %5554 = vrot.lane.b32.xlu0 %v5536, 64
        %v5555 = vpop.permute.xlu0 %5554
        %5556 = vrot.lane.b32.xlu0 %v5537, 64
        %v5557 = vpop.permute.xlu0 %5556
        %5558 = vrot.lane.b32.xlu0 %v5538, 64
        %v5559 = vpop.permute.xlu0 %5558
        %5560 = vrot.lane.b32.xlu0 %v5539, 64
        %v5561 = vpop.permute.xlu0 %5560
        %5562 = vrot.lane.b32.xlu0 %v5540, 64
        %v5563 = vpop.permute.xlu0 %5562
        %5564 = vrot.lane.b32.xlu0 %v5541, 64
        %v5565 = vpop.permute.xlu0 %5564
        %5574 = vst.msk [vmem:[#allocation4 + $0x8] sm:$0xff] %vm5445, %v5551
        %5575 = vst.msk [vmem:[#allocation4 + $0x18] sm:$0xff] %vm5445, %v5553
        %5576 = vst.msk [vmem:[#allocation4 + $0x28] sm:$0xff] %vm5445, %v5555
        %5577 = vst.msk [vmem:[#allocation4 + $0x38] sm:$0xff] %vm5445, %v5557
        %5578 = vst.msk [vmem:[#allocation4 + $0x48] sm:$0xff] %vm5445, %v5559
        %5579 = vst.msk [vmem:[#allocation4 + $0x58] sm:$0xff] %vm5445, %v5561
        %5580 = vst.msk [vmem:[#allocation4 + $0x68] sm:$0xff] %vm5445, %v5563
        %5581 = vst.msk [vmem:[#allocation4 + $0x78] sm:$0xff] %vm5445, %v5565
        %v5582 = vld [vmem:[%s1990] sm:$0xff]
        %v5583 = vld [vmem:[%s1990 + $0x8] sm:$0xff]
        %v5584 = vld [vmem:[%s1990 + $0x10] sm:$0xff]
        %v5585 = vld [vmem:[%s1990 + $0x18] sm:$0xff]
        %v5586 = vld [vmem:[%s1990 + $0x20] sm:$0xff]
        %v5587 = vld [vmem:[%s1990 + $0x28] sm:$0xff]
        %v5588 = vld [vmem:[%s1990 + $0x30] sm:$0xff]
        %v5589 = vld [vmem:[%s1990 + $0x38] sm:$0xff]
        %v5590 = vld [vmem:[%s1990 + $0x40] sm:$0xff]
        %v5591 = vld [vmem:[%s1990 + $0x48] sm:$0xff]
        %v5592 = vld [vmem:[%s1990 + $0x50] sm:$0xff]
        %v5593 = vld [vmem:[%s1990 + $0x58] sm:$0xff]
        %v5594 = vld [vmem:[%s1990 + $0x60] sm:$0xff]
        %v5595 = vld [vmem:[%s1990 + $0x68] sm:$0xff]
        %v5596 = vld [vmem:[%s1990 + $0x70] sm:$0xff]
        %v5597 = vld [vmem:[%s1990 + $0x78] sm:$0xff]
        %v5598 = vld [vmem:[%s1990 + $0x80] sm:$0xff]
        %v5599 = vld [vmem:[%s1990 + $0x88] sm:$0xff]
        %v5600 = vld [vmem:[%s1990 + $0x90] sm:$0xff]
        %v5601 = vld [vmem:[%s1990 + $0x98] sm:$0xff]
        %v5602 = vld [vmem:[%s1990 + $0xa0] sm:$0xff]
        %v5603 = vld [vmem:[%s1990 + $0xa8] sm:$0xff]
        %v5604 = vld [vmem:[%s1990 + $0xb0] sm:$0xff]
        %v5605 = vld [vmem:[%s1990 + $0xb8] sm:$0xff]
        %v5606 = vld [vmem:[%s1990 + $0xc0] sm:$0xff]
        %v5607 = vld [vmem:[%s1990 + $0xc8] sm:$0xff]
        %v5608 = vld [vmem:[%s1990 + $0xd0] sm:$0xff]
        %v5609 = vld [vmem:[%s1990 + $0xd8] sm:$0xff]
        %v5610 = vld [vmem:[%s1990 + $0xe0] sm:$0xff]
        %v5611 = vld [vmem:[%s1990 + $0xe8] sm:$0xff]
        %v5612 = vld [vmem:[%s1990 + $0xf0] sm:$0xff]
        %v5613 = vld [vmem:[%s1990 + $0xf8] sm:$0xff]
        %s5614 = smul.u32 0, 2
        %s5615 = smul.addr %s5614, 8
        %s5616 = scalar_lea.vmem [#allocation4], %s5615
        %v5617 = vld [vmem:[%s5616] sm:$0xff]
        %v5618 = vld [vmem:[%s5616 + $0x8] sm:$0xff]
        %v5619 = vld [vmem:[%s5616 + $0x10] sm:$0xff]
        %v5620 = vld [vmem:[%s5616 + $0x18] sm:$0xff]
        %v5621 = vld [vmem:[%s5616 + $0x20] sm:$0xff]
        %v5622 = vld [vmem:[%s5616 + $0x28] sm:$0xff]
        %v5623 = vld [vmem:[%s5616 + $0x30] sm:$0xff]
        %v5624 = vld [vmem:[%s5616 + $0x38] sm:$0xff]
        %v5625 = vld [vmem:[%s5616 + $0x40] sm:$0xff]
        %v5626 = vld [vmem:[%s5616 + $0x48] sm:$0xff]
        %v5627 = vld [vmem:[%s5616 + $0x50] sm:$0xff]
        %v5628 = vld [vmem:[%s5616 + $0x58] sm:$0xff]
        %v5629 = vld [vmem:[%s5616 + $0x60] sm:$0xff]
        %v5630 = vld [vmem:[%s5616 + $0x68] sm:$0xff]
        %v5631 = vld [vmem:[%s5616 + $0x70] sm:$0xff]
        %v5632 = vld [vmem:[%s5616 + $0x78] sm:$0xff]
        %v5633 = vld [vmem:[%s773] sm:$0xff]
        %v5634 = vld [vmem:[%s773 + $0x8] sm:$0xff]
        %v5635 = vld [vmem:[%s773 + $0x10] sm:$0xff]
        %v5636 = vld [vmem:[%s773 + $0x18] sm:$0xff]
        %v5637 = vld [vmem:[%s773 + $0x20] sm:$0xff]
        %v5638 = vld [vmem:[%s773 + $0x28] sm:$0xff]
        %v5639 = vld [vmem:[%s773 + $0x30] sm:$0xff]
        %v5640 = vld [vmem:[%s773 + $0x38] sm:$0xff]
        %v5641 = vld [vmem:[%s773 + $0x40] sm:$0xff]
        %v5642 = vld [vmem:[%s773 + $0x48] sm:$0xff]
        %v5643 = vld [vmem:[%s773 + $0x50] sm:$0xff]
        %v5644 = vld [vmem:[%s773 + $0x58] sm:$0xff]
        %v5645 = vld [vmem:[%s773 + $0x60] sm:$0xff]
        %v5646 = vld [vmem:[%s773 + $0x68] sm:$0xff]
        %v5647 = vld [vmem:[%s773 + $0x70] sm:$0xff]
        %v5648 = vld [vmem:[%s773 + $0x78] sm:$0xff]
        %v5649 = vld [vmem:[%s773 + $0x80] sm:$0xff]
        %v5650 = vld [vmem:[%s773 + $0x88] sm:$0xff]
        %v5651 = vld [vmem:[%s773 + $0x90] sm:$0xff]
        %v5652 = vld [vmem:[%s773 + $0x98] sm:$0xff]
        %v5653 = vld [vmem:[%s773 + $0xa0] sm:$0xff]
        %v5654 = vld [vmem:[%s773 + $0xa8] sm:$0xff]
        %v5655 = vld [vmem:[%s773 + $0xb0] sm:$0xff]
        %v5656 = vld [vmem:[%s773 + $0xb8] sm:$0xff]
        %v5657 = vld [vmem:[%s773 + $0xc0] sm:$0xff]
        %v5658 = vld [vmem:[%s773 + $0xc8] sm:$0xff]
        %v5659 = vld [vmem:[%s773 + $0xd0] sm:$0xff]
        %v5660 = vld [vmem:[%s773 + $0xd8] sm:$0xff]
        %v5661 = vld [vmem:[%s773 + $0xe0] sm:$0xff]
        %v5662 = vld [vmem:[%s773 + $0xe8] sm:$0xff]
        %v5663 = vld [vmem:[%s773 + $0xf0] sm:$0xff]
        %v5664 = vld [vmem:[%s773 + $0xf8] sm:$0xff]
        %v5665 = vld [vmem:[%s777] sm:$0x3]
        %v5667 = vlaneseq
        %v5668 = vshrl.u32 %v5667, 7
        %v5669 = vsub.s32 0, %v5668
        %v5670 = vrot.slane %v5665, %v5669
        %v5671 = vlaneseq
        %v5672 = vshrl.u32 %v5671, 7
        %v5673 = vsub.s32 1, %v5672
        %v5674 = vrot.slane %v5665, %v5673
        %v5709 = vunpack.c.l.b16 %v5633
        %v5710 = vunpack.c.h.b16 %v5633
        %v5711 = vunpack.c.l.b16 %v5634
        %v5712 = vunpack.c.h.b16 %v5634
        %v5713 = vunpack.c.l.b16 %v5635
        %v5714 = vunpack.c.h.b16 %v5635
        %v5715 = vunpack.c.l.b16 %v5636
        %v5716 = vunpack.c.h.b16 %v5636
        %v5717 = vunpack.c.l.b16 %v5637
        %v5718 = vunpack.c.h.b16 %v5637
        %v5719 = vunpack.c.l.b16 %v5638
        %v5720 = vunpack.c.h.b16 %v5638
        %v5721 = vunpack.c.l.b16 %v5639
        %v5722 = vunpack.c.h.b16 %v5639
        %v5723 = vunpack.c.l.b16 %v5640
        %v5724 = vunpack.c.h.b16 %v5640
        %v5725 = vunpack.c.l.b16 %v5641
        %v5726 = vunpack.c.h.b16 %v5641
        %v5727 = vunpack.c.l.b16 %v5642
        %v5728 = vunpack.c.h.b16 %v5642
        %v5729 = vunpack.c.l.b16 %v5643
        %v5730 = vunpack.c.h.b16 %v5643
        %v5731 = vunpack.c.l.b16 %v5644
        %v5732 = vunpack.c.h.b16 %v5644
        %v5733 = vunpack.c.l.b16 %v5645
        %v5734 = vunpack.c.h.b16 %v5645
        %v5735 = vunpack.c.l.b16 %v5646
        %v5736 = vunpack.c.h.b16 %v5646
        %v5737 = vunpack.c.l.b16 %v5647
        %v5738 = vunpack.c.h.b16 %v5647
        %v5739 = vunpack.c.l.b16 %v5648
        %v5740 = vunpack.c.h.b16 %v5648
        %v5741 = vunpack.c.l.b16 %v5649
        %v5742 = vunpack.c.h.b16 %v5649
        %v5743 = vunpack.c.l.b16 %v5650
        %v5744 = vunpack.c.h.b16 %v5650
        %v5745 = vunpack.c.l.b16 %v5651
        %v5746 = vunpack.c.h.b16 %v5651
        %v5747 = vunpack.c.l.b16 %v5652
        %v5748 = vunpack.c.h.b16 %v5652
        %v5749 = vunpack.c.l.b16 %v5653
        %v5750 = vunpack.c.h.b16 %v5653
        %v5751 = vunpack.c.l.b16 %v5654
        %v5752 = vunpack.c.h.b16 %v5654
        %v5753 = vunpack.c.l.b16 %v5655
        %v5754 = vunpack.c.h.b16 %v5655
        %v5755 = vunpack.c.l.b16 %v5656
        %v5756 = vunpack.c.h.b16 %v5656
        %v5757 = vunpack.c.l.b16 %v5657
        %v5758 = vunpack.c.h.b16 %v5657
        %v5759 = vunpack.c.l.b16 %v5658
        %v5760 = vunpack.c.h.b16 %v5658
        %v5761 = vunpack.c.l.b16 %v5659
        %v5762 = vunpack.c.h.b16 %v5659
        %v5763 = vunpack.c.l.b16 %v5660
        %v5764 = vunpack.c.h.b16 %v5660
        %v5765 = vunpack.c.l.b16 %v5661
        %v5766 = vunpack.c.h.b16 %v5661
        %v5767 = vunpack.c.l.b16 %v5662
        %v5768 = vunpack.c.h.b16 %v5662
        %v5769 = vunpack.c.l.b16 %v5663
        %v5770 = vunpack.c.h.b16 %v5663
        %v5771 = vunpack.c.l.b16 %v5664
        %v5772 = vunpack.c.h.b16 %v5664
        %v5773 = vpack.c.b16 %v5711, %v5709
        %v5774 = vpack.c.b16 %v5712, %v5710
        %v5775 = vpack.c.b16 %v5715, %v5713
        %v5776 = vpack.c.b16 %v5716, %v5714
        %v5777 = vpack.c.b16 %v5719, %v5717
        %v5778 = vpack.c.b16 %v5720, %v5718
        %v5779 = vpack.c.b16 %v5723, %v5721
        %v5780 = vpack.c.b16 %v5724, %v5722
        %v5781 = vpack.c.b16 %v5727, %v5725
        %v5782 = vpack.c.b16 %v5728, %v5726
        %v5783 = vpack.c.b16 %v5731, %v5729
        %v5784 = vpack.c.b16 %v5732, %v5730
        %v5785 = vpack.c.b16 %v5735, %v5733
        %v5786 = vpack.c.b16 %v5736, %v5734
        %v5787 = vpack.c.b16 %v5739, %v5737
        %v5788 = vpack.c.b16 %v5740, %v5738
        %v5789 = vpack.c.b16 %v5743, %v5741
        %v5790 = vpack.c.b16 %v5744, %v5742
        %v5791 = vpack.c.b16 %v5747, %v5745
        %v5792 = vpack.c.b16 %v5748, %v5746
        %v5793 = vpack.c.b16 %v5751, %v5749
        %v5794 = vpack.c.b16 %v5752, %v5750
        %v5795 = vpack.c.b16 %v5755, %v5753
        %v5796 = vpack.c.b16 %v5756, %v5754
        %v5797 = vpack.c.b16 %v5759, %v5757
        %v5798 = vpack.c.b16 %v5760, %v5758
        %v5799 = vpack.c.b16 %v5763, %v5761
        %v5800 = vpack.c.b16 %v5764, %v5762
        %v5801 = vpack.c.b16 %v5767, %v5765
        %v5802 = vpack.c.b16 %v5768, %v5766
        %v5803 = vpack.c.b16 %v5771, %v5769
        %v5804 = vpack.c.b16 %v5772, %v5770
        %5837 = vmatprep.subr.bf16.mxu0 %v5774
        %5838 = vmatpush1.bf16.msra.mxu0 %v5773
        %5839 = vmatprep.subr.bf16.mxu0 %v5776
        %5840 = vmatpush1.bf16.msra.mxu0 %v5775
        %5841 = vmatprep.subr.bf16.mxu0 %v5778
        %5842 = vmatpush1.bf16.msra.mxu0 %v5777
        %5843 = vmatprep.subr.bf16.mxu0 %v5780
        %5844 = vmatpush1.bf16.msra.mxu0 %v5779
        %5845 = vmatprep.subr.bf16.mxu0 %v5782
        %5846 = vmatpush1.bf16.msra.mxu0 %v5781
        %5847 = vmatprep.subr.bf16.mxu0 %v5784
        %5848 = vmatpush1.bf16.msra.mxu0 %v5783
        %5849 = vmatprep.subr.bf16.mxu0 %v5786
        %5850 = vmatpush1.bf16.msra.mxu0 %v5785
        %5851 = vmatprep.subr.bf16.mxu0 %v5788
        %5852 = vmatpush1.bf16.msra.mxu0 %v5787
        %5853 = vmatprep.subr.bf16.mxu0 %v5790
        %5854 = vmatpush1.bf16.msra.mxu0 %v5789
        %5855 = vmatprep.subr.bf16.mxu0 %v5792
        %5856 = vmatpush1.bf16.msra.mxu0 %v5791
        %5857 = vmatprep.subr.bf16.mxu0 %v5794
        %5858 = vmatpush1.bf16.msra.mxu0 %v5793
        %5859 = vmatprep.subr.bf16.mxu0 %v5796
        %5860 = vmatpush1.bf16.msra.mxu0 %v5795
        %5861 = vmatprep.subr.bf16.mxu0 %v5798
        %5862 = vmatpush1.bf16.msra.mxu0 %v5797
        %5863 = vmatprep.subr.bf16.mxu0 %v5800
        %5864 = vmatpush1.bf16.msra.mxu0 %v5799
        %5865 = vmatprep.subr.bf16.mxu0 %v5802
        %5866 = vmatpush1.bf16.msra.mxu0 %v5801
        %5867 = vmatprep.subr.bf16.mxu0 %v5804
        %5868 = vmatpush1.bf16.msra.mxu0 %v5803
        %5869 = vmatprep.mubr.bf16.mxu0 %v5618
        %5870 = vmatmul.mubr.bf16.gmra.mrb[0].mxu0 %v5617
        %v5871 = vpop.f32.mrb[0].mxu0
        %v5872 = vadd.f32 %v5670, %v5871
        %v5873 = vpop.f32.mrb[0].mxu0
        %v5874 = vadd.f32 %v5674, %v5873
        %v5875 = vpop.f32.mrb[0].mxu0
        %v5876 = vadd.f32 %v5670, %v5875
        %v5877 = vpop.f32.mrb[0].mxu0
        %v5878 = vadd.f32 %v5674, %v5877
        %5879 = vmatprep.mubr.bf16.mxu0 %v5620
        %5880 = vmatmul.mubr.bf16.gmra.mrb[0].mxu0 %v5619
        %v5881 = vpop.f32.mrb[0].mxu0
        %v5882 = vadd.f32 %v5670, %v5881
        %v5883 = vpop.f32.mrb[0].mxu0
        %v5884 = vadd.f32 %v5674, %v5883
        %v5885 = vpop.f32.mrb[0].mxu0
        %v5886 = vadd.f32 %v5670, %v5885
        %v5887 = vpop.f32.mrb[0].mxu0
        %v5888 = vadd.f32 %v5674, %v5887
        %5889 = vmatprep.mubr.bf16.mxu0 %v5622
        %5890 = vmatmul.mubr.bf16.gmra.mrb[0].mxu0 %v5621
        %v5891 = vpop.f32.mrb[0].mxu0
        %v5892 = vadd.f32 %v5670, %v5891
        %v5893 = vpop.f32.mrb[0].mxu0
        %v5894 = vadd.f32 %v5674, %v5893
        %v5895 = vpop.f32.mrb[0].mxu0
        %v5896 = vadd.f32 %v5670, %v5895
        %v5897 = vpop.f32.mrb[0].mxu0
        %v5898 = vadd.f32 %v5674, %v5897
        %5899 = vmatprep.mubr.bf16.mxu0 %v5624
        %5900 = vmatmul.mubr.bf16.gmra.mrb[0].mxu0 %v5623
        %v5901 = vpop.f32.mrb[0].mxu0
        %v5902 = vadd.f32 %v5670, %v5901
        %v5903 = vpop.f32.mrb[0].mxu0
        %v5904 = vadd.f32 %v5674, %v5903
        %v5905 = vpop.f32.mrb[0].mxu0
        %v5906 = vadd.f32 %v5670, %v5905
        %v5907 = vpop.f32.mrb[0].mxu0
        %v5908 = vadd.f32 %v5674, %v5907
        %5909 = vmatprep.mubr.bf16.mxu0 %v5626
        %5910 = vmatmul.mubr.bf16.gmra.mrb[0].mxu0 %v5625
        %v5911 = vpop.f32.mrb[0].mxu0
        %v5912 = vadd.f32 %v5670, %v5911
        %v5913 = vpop.f32.mrb[0].mxu0
        %v5914 = vadd.f32 %v5674, %v5913
        %v5915 = vpop.f32.mrb[0].mxu0
        %v5916 = vadd.f32 %v5670, %v5915
        %v5917 = vpop.f32.mrb[0].mxu0
        %v5918 = vadd.f32 %v5674, %v5917
        %5919 = vmatprep.mubr.bf16.mxu0 %v5628
        %5920 = vmatmul.mubr.bf16.gmra.mrb[0].mxu0 %v5627
        %v5921 = vpop.f32.mrb[0].mxu0
        %v5922 = vadd.f32 %v5670, %v5921
        %v5923 = vpop.f32.mrb[0].mxu0
        %v5924 = vadd.f32 %v5674, %v5923
        %v5925 = vpop.f32.mrb[0].mxu0
        %v5926 = vadd.f32 %v5670, %v5925
        %v5927 = vpop.f32.mrb[0].mxu0
        %v5928 = vadd.f32 %v5674, %v5927
        %5929 = vmatprep.mubr.bf16.mxu0 %v5630
        %5930 = vmatmul.mubr.bf16.gmra.mrb[0].mxu0 %v5629
        %v5931 = vpop.f32.mrb[0].mxu0
        %v5932 = vadd.f32 %v5670, %v5931
        %v5933 = vpop.f32.mrb[0].mxu0
        %v5934 = vadd.f32 %v5674, %v5933
        %v5935 = vpop.f32.mrb[0].mxu0
        %v5936 = vadd.f32 %v5670, %v5935
        %v5937 = vpop.f32.mrb[0].mxu0
        %v5938 = vadd.f32 %v5674, %v5937
        %5939 = vmatprep.mubr.bf16.mxu0 %v5632
        %5940 = vmatmul.mubr.bf16.gmra.mrb[0].mxu0 %v5631
        %v5941 = vpop.f32.mrb[0].mxu0
        %v5942 = vadd.f32 %v5670, %v5941
        %v5943 = vpop.f32.mrb[0].mxu0
        %v5944 = vadd.f32 %v5674, %v5943
        %v5945 = vpop.f32.mrb[0].mxu0
        %v5946 = vadd.f32 %v5670, %v5945
        %v5947 = vpop.f32.mrb[0].mxu0
        %v5948 = vadd.f32 %v5674, %v5947
        %5949 = vdwg.mxu0
        %v5950 = vadd.f32 %v5582, %v5872
        %v5951 = vadd.f32 %v5583, %v5874
        %v5952 = vadd.f32 %v5584, %v5876
        %v5953 = vadd.f32 %v5585, %v5878
        %v5954 = vadd.f32 %v5586, %v5882
        %v5955 = vadd.f32 %v5587, %v5884
        %v5956 = vadd.f32 %v5588, %v5886
        %v5957 = vadd.f32 %v5589, %v5888
        %v5958 = vadd.f32 %v5590, %v5892
        %v5959 = vadd.f32 %v5591, %v5894
        %v5960 = vadd.f32 %v5592, %v5896
        %v5961 = vadd.f32 %v5593, %v5898
        %v5962 = vadd.f32 %v5594, %v5902
        %v5963 = vadd.f32 %v5595, %v5904
        %v5964 = vadd.f32 %v5596, %v5906
        %v5965 = vadd.f32 %v5597, %v5908
        %v5966 = vadd.f32 %v5598, %v5912
        %v5967 = vadd.f32 %v5599, %v5914
        %v5968 = vadd.f32 %v5600, %v5916
        %v5969 = vadd.f32 %v5601, %v5918
        %v5970 = vadd.f32 %v5602, %v5922
        %v5971 = vadd.f32 %v5603, %v5924
        %v5972 = vadd.f32 %v5604, %v5926
        %v5973 = vadd.f32 %v5605, %v5928
        %v5974 = vadd.f32 %v5606, %v5932
        %v5975 = vadd.f32 %v5607, %v5934
        %v5976 = vadd.f32 %v5608, %v5936
        %v5977 = vadd.f32 %v5609, %v5938
        %v5978 = vadd.f32 %v5610, %v5942
        %v5979 = vadd.f32 %v5611, %v5944
        %v5980 = vadd.f32 %v5612, %v5946
        %v5981 = vadd.f32 %v5613, %v5948
        %v5982 = vld [vmem:[%s781] sm:$0x3]
        %v5983 = vld [vmem:[%s785] sm:$0x3]
        %v5984 = vadd.f32 %v5950, %v5951
        %5985 = vadd.xlane.f32.xlu0 %v5984
        %v5986 = vpop.xlane.xlu0 %5985
        %v5987 = vadd.f32 %v5952, %v5953
        %5988 = vadd.xlane.f32.xlu0 %v5987
        %v5989 = vpop.xlane.xlu0 %5988
        %v5990 = vadd.f32 %v5954, %v5955
        %5991 = vadd.xlane.f32.xlu0 %v5990
        %v5992 = vpop.xlane.xlu0 %5991
        %v5993 = vadd.f32 %v5956, %v5957
        %5994 = vadd.xlane.f32.xlu0 %v5993
        %v5995 = vpop.xlane.xlu0 %5994
        %v5996 = vadd.f32 %v5958, %v5959
        %5997 = vadd.xlane.f32.xlu0 %v5996
        %v5998 = vpop.xlane.xlu0 %5997
        %v5999 = vadd.f32 %v5960, %v5961
        %6000 = vadd.xlane.f32.xlu0 %v5999
        %v6001 = vpop.xlane.xlu0 %6000
        %v6002 = vadd.f32 %v5962, %v5963
        %6003 = vadd.xlane.f32.xlu0 %v6002
        %v6004 = vpop.xlane.xlu0 %6003
        %v6005 = vadd.f32 %v5964, %v5965
        %6006 = vadd.xlane.f32.xlu0 %v6005
        %v6007 = vpop.xlane.xlu0 %6006
        %v6008 = vadd.f32 %v5966, %v5967
        %6009 = vadd.xlane.f32.xlu0 %v6008
        %v6010 = vpop.xlane.xlu0 %6009
        %v6011 = vadd.f32 %v5968, %v5969
        %6012 = vadd.xlane.f32.xlu0 %v6011
        %v6013 = vpop.xlane.xlu0 %6012
        %v6014 = vadd.f32 %v5970, %v5971
        %6015 = vadd.xlane.f32.xlu0 %v6014
        %v6016 = vpop.xlane.xlu0 %6015
        %v6017 = vadd.f32 %v5972, %v5973
        %6018 = vadd.xlane.f32.xlu0 %v6017
        %v6019 = vpop.xlane.xlu0 %6018
        %v6020 = vadd.f32 %v5974, %v5975
        %6021 = vadd.xlane.f32.xlu0 %v6020
        %v6022 = vpop.xlane.xlu0 %6021
        %v6023 = vadd.f32 %v5976, %v5977
        %6024 = vadd.xlane.f32.xlu0 %v6023
        %v6025 = vpop.xlane.xlu0 %6024
        %v6026 = vadd.f32 %v5978, %v5979
        %6027 = vadd.xlane.f32.xlu0 %v6026
        %v6028 = vpop.xlane.xlu0 %6027
        %v6029 = vadd.f32 %v5980, %v5981
        %6030 = vadd.xlane.f32.xlu0 %v6029
        %v6031 = vpop.xlane.xlu0 %6030
        %v6032 = vrcp.pop 256.0
        %v6033 = vmul.f32 %v5986, %v6032
        %v6034 = vmul.f32 %v5989, %v6032
        %v6035 = vmul.f32 %v5992, %v6032
        %v6036 = vmul.f32 %v5995, %v6032
        %v6037 = vmul.f32 %v5998, %v6032
        %v6038 = vmul.f32 %v6001, %v6032
        %v6039 = vmul.f32 %v6004, %v6032
        %v6040 = vmul.f32 %v6007, %v6032
        %v6041 = vmul.f32 %v6010, %v6032
        %v6042 = vmul.f32 %v6013, %v6032
        %v6043 = vmul.f32 %v6016, %v6032
        %v6044 = vmul.f32 %v6019, %v6032
        %v6045 = vmul.f32 %v6022, %v6032
        %v6046 = vmul.f32 %v6025, %v6032
        %v6047 = vmul.f32 %v6028, %v6032
        %v6048 = vmul.f32 %v6031, %v6032
        %v6049 = vsub.f32 %v5950, %v6033
        %v6050 = vsub.f32 %v5951, %v6033
        %v6051 = vsub.f32 %v5952, %v6034
        %v6052 = vsub.f32 %v5953, %v6034
        %v6053 = vsub.f32 %v5954, %v6035
        %v6054 = vsub.f32 %v5955, %v6035
        %v6055 = vsub.f32 %v5956, %v6036
        %v6056 = vsub.f32 %v5957, %v6036
        %v6057 = vsub.f32 %v5958, %v6037
        %v6058 = vsub.f32 %v5959, %v6037
        %v6059 = vsub.f32 %v5960, %v6038
        %v6060 = vsub.f32 %v5961, %v6038
        %v6061 = vsub.f32 %v5962, %v6039
        %v6062 = vsub.f32 %v5963, %v6039
        %v6063 = vsub.f32 %v5964, %v6040
        %v6064 = vsub.f32 %v5965, %v6040
        %v6065 = vsub.f32 %v5966, %v6041
        %v6066 = vsub.f32 %v5967, %v6041
        %v6067 = vsub.f32 %v5968, %v6042
        %v6068 = vsub.f32 %v5969, %v6042
        %v6069 = vsub.f32 %v5970, %v6043
        %v6070 = vsub.f32 %v5971, %v6043
        %v6071 = vsub.f32 %v5972, %v6044
        %v6072 = vsub.f32 %v5973, %v6044
        %v6073 = vsub.f32 %v5974, %v6045
        %v6074 = vsub.f32 %v5975, %v6045
        %v6075 = vsub.f32 %v5976, %v6046
        %v6076 = vsub.f32 %v5977, %v6046
        %v6077 = vsub.f32 %v5978, %v6047
        %v6078 = vsub.f32 %v5979, %v6047
        %v6079 = vsub.f32 %v5980, %v6048
        %v6080 = vsub.f32 %v5981, %v6048
        %v6081 = vmul.f32 %v6049, %v6049
        %v6082 = vmul.f32 %v6050, %v6050
        %v6083 = vmul.f32 %v6051, %v6051
        %v6084 = vmul.f32 %v6052, %v6052
        %v6085 = vmul.f32 %v6053, %v6053
        %v6086 = vmul.f32 %v6054, %v6054
        %v6087 = vmul.f32 %v6055, %v6055
        %v6088 = vmul.f32 %v6056, %v6056
        %v6089 = vmul.f32 %v6057, %v6057
        %v6090 = vmul.f32 %v6058, %v6058
        %v6091 = vmul.f32 %v6059, %v6059
        %v6092 = vmul.f32 %v6060, %v6060
        %v6093 = vmul.f32 %v6061, %v6061
        %v6094 = vmul.f32 %v6062, %v6062
        %v6095 = vmul.f32 %v6063, %v6063
        %v6096 = vmul.f32 %v6064, %v6064
        %v6097 = vmul.f32 %v6065, %v6065
        %v6098 = vmul.f32 %v6066, %v6066
        %v6099 = vmul.f32 %v6067, %v6067
        %v6100 = vmul.f32 %v6068, %v6068
        %v6101 = vmul.f32 %v6069, %v6069
        %v6102 = vmul.f32 %v6070, %v6070
        %v6103 = vmul.f32 %v6071, %v6071
        %v6104 = vmul.f32 %v6072, %v6072
        %v6105 = vmul.f32 %v6073, %v6073
        %v6106 = vmul.f32 %v6074, %v6074
        %v6107 = vmul.f32 %v6075, %v6075
        %v6108 = vmul.f32 %v6076, %v6076
        %v6109 = vmul.f32 %v6077, %v6077
        %v6110 = vmul.f32 %v6078, %v6078
        %v6111 = vmul.f32 %v6079, %v6079
        %v6112 = vmul.f32 %v6080, %v6080
        %v6113 = vadd.f32 %v6081, %v6082
        %6114 = vadd.xlane.f32.xlu0 %v6113
        %v6115 = vpop.xlane.xlu0 %6114
        %v6116 = vadd.f32 %v6083, %v6084
        %6117 = vadd.xlane.f32.xlu0 %v6116
        %v6118 = vpop.xlane.xlu0 %6117
        %v6119 = vadd.f32 %v6085, %v6086
        %6120 = vadd.xlane.f32.xlu0 %v6119
        %v6121 = vpop.xlane.xlu0 %6120
        %v6122 = vadd.f32 %v6087, %v6088
        %6123 = vadd.xlane.f32.xlu0 %v6122
        %v6124 = vpop.xlane.xlu0 %6123
        %v6125 = vadd.f32 %v6089, %v6090
        %6126 = vadd.xlane.f32.xlu0 %v6125
        %v6127 = vpop.xlane.xlu0 %6126
        %v6128 = vadd.f32 %v6091, %v6092
        %6129 = vadd.xlane.f32.xlu0 %v6128
        %v6130 = vpop.xlane.xlu0 %6129
        %v6131 = vadd.f32 %v6093, %v6094
        %6132 = vadd.xlane.f32.xlu0 %v6131
        %v6133 = vpop.xlane.xlu0 %6132
        %v6134 = vadd.f32 %v6095, %v6096
        %6135 = vadd.xlane.f32.xlu0 %v6134
        %v6136 = vpop.xlane.xlu0 %6135
        %v6137 = vadd.f32 %v6097, %v6098
        %6138 = vadd.xlane.f32.xlu0 %v6137
        %v6139 = vpop.xlane.xlu0 %6138
        %v6140 = vadd.f32 %v6099, %v6100
        %6141 = vadd.xlane.f32.xlu0 %v6140
        %v6142 = vpop.xlane.xlu0 %6141
        %v6143 = vadd.f32 %v6101, %v6102
        %6144 = vadd.xlane.f32.xlu0 %v6143
        %v6145 = vpop.xlane.xlu0 %6144
        %v6146 = vadd.f32 %v6103, %v6104
        %6147 = vadd.xlane.f32.xlu0 %v6146
        %v6148 = vpop.xlane.xlu0 %6147
        %v6149 = vadd.f32 %v6105, %v6106
        %6150 = vadd.xlane.f32.xlu0 %v6149
        %v6151 = vpop.xlane.xlu0 %6150
        %v6152 = vadd.f32 %v6107, %v6108
        %6153 = vadd.xlane.f32.xlu0 %v6152
        %v6154 = vpop.xlane.xlu0 %6153
        %v6155 = vadd.f32 %v6109, %v6110
        %6156 = vadd.xlane.f32.xlu0 %v6155
        %v6157 = vpop.xlane.xlu0 %6156
        %v6158 = vadd.f32 %v6111, %v6112
        %6159 = vadd.xlane.f32.xlu0 %v6158
        %v6160 = vpop.xlane.xlu0 %6159
        %v6161 = vmul.f32 %v6115, %v6032
        %v6162 = vmul.f32 %v6118, %v6032
        %v6163 = vmul.f32 %v6121, %v6032
        %v6164 = vmul.f32 %v6124, %v6032
        %v6165 = vmul.f32 %v6127, %v6032
        %v6166 = vmul.f32 %v6130, %v6032
        %v6167 = vmul.f32 %v6133, %v6032
        %v6168 = vmul.f32 %v6136, %v6032
        %v6169 = vmul.f32 %v6139, %v6032
        %v6170 = vmul.f32 %v6142, %v6032
        %v6171 = vmul.f32 %v6145, %v6032
        %v6172 = vmul.f32 %v6148, %v6032
        %v6173 = vmul.f32 %v6151, %v6032
        %v6174 = vmul.f32 %v6154, %v6032
        %v6175 = vmul.f32 %v6157, %v6032
        %v6176 = vmul.f32 %v6160, %v6032
        %v6177 = vadd.f32 %v6161, 1e-05
        %v6178 = vadd.f32 %v6162, 1e-05
        %v6179 = vadd.f32 %v6163, 1e-05
        %v6180 = vadd.f32 %v6164, 1e-05
        %v6181 = vadd.f32 %v6165, 1e-05
        %v6182 = vadd.f32 %v6166, 1e-05
        %v6183 = vadd.f32 %v6167, 1e-05
        %v6184 = vadd.f32 %v6168, 1e-05
        %v6185 = vadd.f32 %v6169, 1e-05
        %v6186 = vadd.f32 %v6170, 1e-05
        %v6187 = vadd.f32 %v6171, 1e-05
        %v6188 = vadd.f32 %v6172, 1e-05
        %v6189 = vadd.f32 %v6173, 1e-05
        %v6190 = vadd.f32 %v6174, 1e-05
        %v6191 = vadd.f32 %v6175, 1e-05
        %v6192 = vadd.f32 %v6176, 1e-05
        %v6193 = vrsqrt.pop %v6177
        %v6194 = vrsqrt.pop %v6178
        %v6195 = vrsqrt.pop %v6179
        %v6196 = vrsqrt.pop %v6180
        %v6197 = vrsqrt.pop %v6181
        %v6198 = vrsqrt.pop %v6182
        %v6199 = vrsqrt.pop %v6183
        %v6200 = vrsqrt.pop %v6184
        %v6201 = vrsqrt.pop %v6185
        %v6202 = vrsqrt.pop %v6186
        %v6203 = vrsqrt.pop %v6187
        %v6204 = vrsqrt.pop %v6188
        %v6205 = vrsqrt.pop %v6189
        %v6206 = vrsqrt.pop %v6190
        %v6207 = vrsqrt.pop %v6191
        %v6208 = vrsqrt.pop %v6192
        %v6209 = vmul.f32 %v6049, %v6193
        %v6210 = vmul.f32 %v6050, %v6193
        %v6211 = vmul.f32 %v6051, %v6194
        %v6212 = vmul.f32 %v6052, %v6194
        %v6213 = vmul.f32 %v6053, %v6195
        %v6214 = vmul.f32 %v6054, %v6195
        %v6215 = vmul.f32 %v6055, %v6196
        %v6216 = vmul.f32 %v6056, %v6196
        %v6217 = vmul.f32 %v6057, %v6197
        %v6218 = vmul.f32 %v6058, %v6197
        %v6219 = vmul.f32 %v6059, %v6198
        %v6220 = vmul.f32 %v6060, %v6198
        %v6221 = vmul.f32 %v6061, %v6199
        %v6222 = vmul.f32 %v6062, %v6199
        %v6223 = vmul.f32 %v6063, %v6200
        %v6224 = vmul.f32 %v6064, %v6200
        %v6225 = vmul.f32 %v6065, %v6201
        %v6226 = vmul.f32 %v6066, %v6201
        %v6227 = vmul.f32 %v6067, %v6202
        %v6228 = vmul.f32 %v6068, %v6202
        %v6229 = vmul.f32 %v6069, %v6203
        %v6230 = vmul.f32 %v6070, %v6203
        %v6231 = vmul.f32 %v6071, %v6204
        %v6232 = vmul.f32 %v6072, %v6204
        %v6233 = vmul.f32 %v6073, %v6205
        %v6234 = vmul.f32 %v6074, %v6205
        %v6235 = vmul.f32 %v6075, %v6206
        %v6236 = vmul.f32 %v6076, %v6206
        %v6237 = vmul.f32 %v6077, %v6207
        %v6238 = vmul.f32 %v6078, %v6207
        %v6239 = vmul.f32 %v6079, %v6208
        %v6240 = vmul.f32 %v6080, %v6208
        %v6242 = vlaneseq
        %v6243 = vshrl.u32 %v6242, 7
        %v6244 = vsub.s32 0, %v6243
        %v6245 = vrot.slane %v5982, %v6244
        %v6246 = vlaneseq
        %v6247 = vshrl.u32 %v6246, 7
        %v6248 = vsub.s32 1, %v6247
        %v6249 = vrot.slane %v5982, %v6248
        %v6252 = vmul.f32 %v6209, %v6245
        %v6253 = vmul.f32 %v6210, %v6249
        %v6254 = vmul.f32 %v6211, %v6245
        %v6255 = vmul.f32 %v6212, %v6249
        %v6256 = vmul.f32 %v6213, %v6245
        %v6257 = vmul.f32 %v6214, %v6249
        %v6258 = vmul.f32 %v6215, %v6245
        %v6259 = vmul.f32 %v6216, %v6249
        %v6260 = vmul.f32 %v6217, %v6245
        %v6261 = vmul.f32 %v6218, %v6249
        %v6262 = vmul.f32 %v6219, %v6245
        %v6263 = vmul.f32 %v6220, %v6249
        %v6264 = vmul.f32 %v6221, %v6245
        %v6265 = vmul.f32 %v6222, %v6249
        %v6266 = vmul.f32 %v6223, %v6245
        %v6267 = vmul.f32 %v6224, %v6249
        %v6268 = vmul.f32 %v6225, %v6245
        %v6269 = vmul.f32 %v6226, %v6249
        %v6270 = vmul.f32 %v6227, %v6245
        %v6271 = vmul.f32 %v6228, %v6249
        %v6272 = vmul.f32 %v6229, %v6245
        %v6273 = vmul.f32 %v6230, %v6249
        %v6274 = vmul.f32 %v6231, %v6245
        %v6275 = vmul.f32 %v6232, %v6249
        %v6276 = vmul.f32 %v6233, %v6245
        %v6277 = vmul.f32 %v6234, %v6249
        %v6278 = vmul.f32 %v6235, %v6245
        %v6279 = vmul.f32 %v6236, %v6249
        %v6280 = vmul.f32 %v6237, %v6245
        %v6281 = vmul.f32 %v6238, %v6249
        %v6282 = vmul.f32 %v6239, %v6245
        %v6283 = vmul.f32 %v6240, %v6249
        %v6285 = vlaneseq
        %v6286 = vshrl.u32 %v6285, 7
        %v6287 = vsub.s32 0, %v6286
        %v6288 = vrot.slane %v5983, %v6287
        %v6289 = vlaneseq
        %v6290 = vshrl.u32 %v6289, 7
        %v6291 = vsub.s32 1, %v6290
        %v6292 = vrot.slane %v5983, %v6291
        %v6295 = vadd.f32 %v6252, %v6288
        %v6296 = vadd.f32 %v6253, %v6292
        %v6297 = vadd.f32 %v6254, %v6288
        %v6298 = vadd.f32 %v6255, %v6292
        %v6299 = vadd.f32 %v6256, %v6288
        %v6300 = vadd.f32 %v6257, %v6292
        %v6301 = vadd.f32 %v6258, %v6288
        %v6302 = vadd.f32 %v6259, %v6292
        %v6303 = vadd.f32 %v6260, %v6288
        %v6304 = vadd.f32 %v6261, %v6292
        %v6305 = vadd.f32 %v6262, %v6288
        %v6306 = vadd.f32 %v6263, %v6292
        %v6307 = vadd.f32 %v6264, %v6288
        %v6308 = vadd.f32 %v6265, %v6292
        %v6309 = vadd.f32 %v6266, %v6288
        %v6310 = vadd.f32 %v6267, %v6292
        %v6311 = vadd.f32 %v6268, %v6288
        %v6312 = vadd.f32 %v6269, %v6292
        %v6313 = vadd.f32 %v6270, %v6288
        %v6314 = vadd.f32 %v6271, %v6292
        %v6315 = vadd.f32 %v6272, %v6288
        %v6316 = vadd.f32 %v6273, %v6292
        %v6317 = vadd.f32 %v6274, %v6288
        %v6318 = vadd.f32 %v6275, %v6292
        %v6319 = vadd.f32 %v6276, %v6288
        %v6320 = vadd.f32 %v6277, %v6292
        %v6321 = vadd.f32 %v6278, %v6288
        %v6322 = vadd.f32 %v6279, %v6292
        %v6323 = vadd.f32 %v6280, %v6288
        %v6324 = vadd.f32 %v6281, %v6292
        %v6325 = vadd.f32 %v6282, %v6288
        %v6326 = vadd.f32 %v6283, %v6292
        %v6327 = vpack.c.bf16 %v6297, %v6295
        %v6328 = vpack.c.bf16 %v6298, %v6296
        %v6329 = vpack.c.bf16 %v6301, %v6299
        %v6330 = vpack.c.bf16 %v6302, %v6300
        %v6331 = vpack.c.bf16 %v6305, %v6303
        %v6332 = vpack.c.bf16 %v6306, %v6304
        %v6333 = vpack.c.bf16 %v6309, %v6307
        %v6334 = vpack.c.bf16 %v6310, %v6308
        %v6335 = vpack.c.bf16 %v6313, %v6311
        %v6336 = vpack.c.bf16 %v6314, %v6312
        %v6337 = vpack.c.bf16 %v6317, %v6315
        %v6338 = vpack.c.bf16 %v6318, %v6316
        %v6339 = vpack.c.bf16 %v6321, %v6319
        %v6340 = vpack.c.bf16 %v6322, %v6320
        %v6341 = vpack.c.bf16 %v6325, %v6323
        %v6342 = vpack.c.bf16 %v6326, %v6324
        %v6343 = vld [vmem:[%s790] sm:$0xff]
        %v6344 = vld [vmem:[%s790 + $0x8] sm:$0xff]
        %v6345 = vld [vmem:[%s790 + $0x10] sm:$0xff]
        %v6346 = vld [vmem:[%s790 + $0x18] sm:$0xff]
        %v6347 = vld [vmem:[%s790 + $0x20] sm:$0xff]
        %v6348 = vld [vmem:[%s790 + $0x28] sm:$0xff]
        %v6349 = vld [vmem:[%s790 + $0x30] sm:$0xff]
        %v6350 = vld [vmem:[%s790 + $0x38] sm:$0xff]
        %v6351 = vld [vmem:[%s790 + $0x40] sm:$0xff]
        %v6352 = vld [vmem:[%s790 + $0x48] sm:$0xff]
        %v6353 = vld [vmem:[%s790 + $0x50] sm:$0xff]
        %v6354 = vld [vmem:[%s790 + $0x58] sm:$0xff]
        %v6355 = vld [vmem:[%s790 + $0x60] sm:$0xff]
        %v6356 = vld [vmem:[%s790 + $0x68] sm:$0xff]
        %v6357 = vld [vmem:[%s790 + $0x70] sm:$0xff]
        %v6358 = vld [vmem:[%s790 + $0x78] sm:$0xff]
        %v6359 = vld [vmem:[%s790 + $0x80] sm:$0xff]
        %v6360 = vld [vmem:[%s790 + $0x88] sm:$0xff]
        %v6361 = vld [vmem:[%s790 + $0x90] sm:$0xff]
        %v6362 = vld [vmem:[%s790 + $0x98] sm:$0xff]
        %v6363 = vld [vmem:[%s790 + $0xa0] sm:$0xff]
        %v6364 = vld [vmem:[%s790 + $0xa8] sm:$0xff]
        %v6365 = vld [vmem:[%s790 + $0xb0] sm:$0xff]
        %v6366 = vld [vmem:[%s790 + $0xb8] sm:$0xff]
        %v6367 = vld [vmem:[%s790 + $0xc0] sm:$0xff]
        %v6368 = vld [vmem:[%s790 + $0xc8] sm:$0xff]
        %v6369 = vld [vmem:[%s790 + $0xd0] sm:$0xff]
        %v6370 = vld [vmem:[%s790 + $0xd8] sm:$0xff]
        %v6371 = vld [vmem:[%s790 + $0xe0] sm:$0xff]
        %v6372 = vld [vmem:[%s790 + $0xe8] sm:$0xff]
        %v6373 = vld [vmem:[%s790 + $0xf0] sm:$0xff]
        %v6374 = vld [vmem:[%s790 + $0xf8] sm:$0xff]
        %v6375 = vld [vmem:[%s790 + $0x100] sm:$0xff]
        %v6376 = vld [vmem:[%s790 + $0x108] sm:$0xff]
        %v6377 = vld [vmem:[%s790 + $0x110] sm:$0xff]
        %v6378 = vld [vmem:[%s790 + $0x118] sm:$0xff]
        %v6379 = vld [vmem:[%s790 + $0x120] sm:$0xff]
        %v6380 = vld [vmem:[%s790 + $0x128] sm:$0xff]
        %v6381 = vld [vmem:[%s790 + $0x130] sm:$0xff]
        %v6382 = vld [vmem:[%s790 + $0x138] sm:$0xff]
        %v6383 = vld [vmem:[%s790 + $0x140] sm:$0xff]
        %v6384 = vld [vmem:[%s790 + $0x148] sm:$0xff]
        %v6385 = vld [vmem:[%s790 + $0x150] sm:$0xff]
        %v6386 = vld [vmem:[%s790 + $0x158] sm:$0xff]
        %v6387 = vld [vmem:[%s790 + $0x160] sm:$0xff]
        %v6388 = vld [vmem:[%s790 + $0x168] sm:$0xff]
        %v6389 = vld [vmem:[%s790 + $0x170] sm:$0xff]
        %v6390 = vld [vmem:[%s790 + $0x178] sm:$0xff]
        %v6391 = vld [vmem:[%s790 + $0x180] sm:$0xff]
        %v6392 = vld [vmem:[%s790 + $0x188] sm:$0xff]
        %v6393 = vld [vmem:[%s790 + $0x190] sm:$0xff]
        %v6394 = vld [vmem:[%s790 + $0x198] sm:$0xff]
        %v6395 = vld [vmem:[%s790 + $0x1a0] sm:$0xff]
        %v6396 = vld [vmem:[%s790 + $0x1a8] sm:$0xff]
        %v6397 = vld [vmem:[%s790 + $0x1b0] sm:$0xff]
        %v6398 = vld [vmem:[%s790 + $0x1b8] sm:$0xff]
        %v6399 = vld [vmem:[%s790 + $0x1c0] sm:$0xff]
        %v6400 = vld [vmem:[%s790 + $0x1c8] sm:$0xff]
        %v6401 = vld [vmem:[%s790 + $0x1d0] sm:$0xff]
        %v6402 = vld [vmem:[%s790 + $0x1d8] sm:$0xff]
        %v6403 = vld [vmem:[%s790 + $0x1e0] sm:$0xff]
        %v6404 = vld [vmem:[%s790 + $0x1e8] sm:$0xff]
        %v6405 = vld [vmem:[%s790 + $0x1f0] sm:$0xff]
        %v6406 = vld [vmem:[%s790 + $0x1f8] sm:$0xff]
        %v6407 = vld [vmem:[%s790 + $0x200] sm:$0xff]
        %v6408 = vld [vmem:[%s790 + $0x208] sm:$0xff]
        %v6409 = vld [vmem:[%s790 + $0x210] sm:$0xff]
        %v6410 = vld [vmem:[%s790 + $0x218] sm:$0xff]
        %v6411 = vld [vmem:[%s790 + $0x220] sm:$0xff]
        %v6412 = vld [vmem:[%s790 + $0x228] sm:$0xff]
        %v6413 = vld [vmem:[%s790 + $0x230] sm:$0xff]
        %v6414 = vld [vmem:[%s790 + $0x238] sm:$0xff]
        %v6415 = vld [vmem:[%s790 + $0x240] sm:$0xff]
        %v6416 = vld [vmem:[%s790 + $0x248] sm:$0xff]
        %v6417 = vld [vmem:[%s790 + $0x250] sm:$0xff]
        %v6418 = vld [vmem:[%s790 + $0x258] sm:$0xff]
        %v6419 = vld [vmem:[%s790 + $0x260] sm:$0xff]
        %v6420 = vld [vmem:[%s790 + $0x268] sm:$0xff]
        %v6421 = vld [vmem:[%s790 + $0x270] sm:$0xff]
        %v6422 = vld [vmem:[%s790 + $0x278] sm:$0xff]
        %v6423 = vld [vmem:[%s790 + $0x280] sm:$0xff]
        %v6424 = vld [vmem:[%s790 + $0x288] sm:$0xff]
        %v6425 = vld [vmem:[%s790 + $0x290] sm:$0xff]
        %v6426 = vld [vmem:[%s790 + $0x298] sm:$0xff]
        %v6427 = vld [vmem:[%s790 + $0x2a0] sm:$0xff]
        %v6428 = vld [vmem:[%s790 + $0x2a8] sm:$0xff]
        %v6429 = vld [vmem:[%s790 + $0x2b0] sm:$0xff]
        %v6430 = vld [vmem:[%s790 + $0x2b8] sm:$0xff]
        %v6431 = vld [vmem:[%s790 + $0x2c0] sm:$0xff]
        %v6432 = vld [vmem:[%s790 + $0x2c8] sm:$0xff]
        %v6433 = vld [vmem:[%s790 + $0x2d0] sm:$0xff]
        %v6434 = vld [vmem:[%s790 + $0x2d8] sm:$0xff]
        %v6435 = vld [vmem:[%s790 + $0x2e0] sm:$0xff]
        %v6436 = vld [vmem:[%s790 + $0x2e8] sm:$0xff]
        %v6437 = vld [vmem:[%s790 + $0x2f0] sm:$0xff]
        %v6438 = vld [vmem:[%s790 + $0x2f8] sm:$0xff]
        %v6439 = vld [vmem:[%s790 + $0x300] sm:$0xff]
        %v6440 = vld [vmem:[%s790 + $0x308] sm:$0xff]
        %v6441 = vld [vmem:[%s790 + $0x310] sm:$0xff]
        %v6442 = vld [vmem:[%s790 + $0x318] sm:$0xff]
        %v6443 = vld [vmem:[%s790 + $0x320] sm:$0xff]
        %v6444 = vld [vmem:[%s790 + $0x328] sm:$0xff]
        %v6445 = vld [vmem:[%s790 + $0x330] sm:$0xff]
        %v6446 = vld [vmem:[%s790 + $0x338] sm:$0xff]
        %v6447 = vld [vmem:[%s790 + $0x340] sm:$0xff]
        %v6448 = vld [vmem:[%s790 + $0x348] sm:$0xff]
        %v6449 = vld [vmem:[%s790 + $0x350] sm:$0xff]
        %v6450 = vld [vmem:[%s790 + $0x358] sm:$0xff]
        %v6451 = vld [vmem:[%s790 + $0x360] sm:$0xff]
        %v6452 = vld [vmem:[%s790 + $0x368] sm:$0xff]
        %v6453 = vld [vmem:[%s790 + $0x370] sm:$0xff]
        %v6454 = vld [vmem:[%s790 + $0x378] sm:$0xff]
        %v6455 = vld [vmem:[%s790 + $0x380] sm:$0xff]
        %v6456 = vld [vmem:[%s790 + $0x388] sm:$0xff]
        %v6457 = vld [vmem:[%s790 + $0x390] sm:$0xff]
        %v6458 = vld [vmem:[%s790 + $0x398] sm:$0xff]
        %v6459 = vld [vmem:[%s790 + $0x3a0] sm:$0xff]
        %v6460 = vld [vmem:[%s790 + $0x3a8] sm:$0xff]
        %v6461 = vld [vmem:[%s790 + $0x3b0] sm:$0xff]
        %v6462 = vld [vmem:[%s790 + $0x3b8] sm:$0xff]
        %v6463 = vld [vmem:[%s790 + $0x3c0] sm:$0xff]
        %v6464 = vld [vmem:[%s790 + $0x3c8] sm:$0xff]
        %v6465 = vld [vmem:[%s790 + $0x3d0] sm:$0xff]
        %v6466 = vld [vmem:[%s790 + $0x3d8] sm:$0xff]
        %v6467 = vld [vmem:[%s790 + $0x3e0] sm:$0xff]
        %v6468 = vld [vmem:[%s790 + $0x3e8] sm:$0xff]
        %v6469 = vld [vmem:[%s790 + $0x3f0] sm:$0xff]
        %v6470 = vld [vmem:[%s790 + $0x3f8] sm:$0xff]
        %v6471 = vld [vmem:[%s794] sm:$0xff]
        %v6473 = vlaneseq
        %v6474 = vshrl.u32 %v6473, 7
        %v6475 = vsub.s32 0, %v6474
        %v6476 = vrot.slane %v6471, %v6475
        %v6477 = vlaneseq
        %v6478 = vshrl.u32 %v6477, 7
        %v6479 = vsub.s32 1, %v6478
        %v6480 = vrot.slane %v6471, %v6479
        %v6481 = vlaneseq
        %v6482 = vshrl.u32 %v6481, 7
        %v6483 = vsub.s32 2, %v6482
        %v6484 = vrot.slane %v6471, %v6483
        %v6485 = vlaneseq
        %v6486 = vshrl.u32 %v6485, 7
        %v6487 = vsub.s32 3, %v6486
        %v6488 = vrot.slane %v6471, %v6487
        %v6489 = vlaneseq
        %v6490 = vshrl.u32 %v6489, 7
        %v6491 = vsub.s32 4, %v6490
        %v6492 = vrot.slane %v6471, %v6491
        %v6493 = vlaneseq
        %v6494 = vshrl.u32 %v6493, 7
        %v6495 = vsub.s32 5, %v6494
        %v6496 = vrot.slane %v6471, %v6495
        %v6497 = vlaneseq
        %v6498 = vshrl.u32 %v6497, 7
        %v6499 = vsub.s32 6, %v6498
        %v6500 = vrot.slane %v6471, %v6499
        %v6501 = vlaneseq
        %v6502 = vshrl.u32 %v6501, 7
        %v6503 = vsub.s32 7, %v6502
        %v6504 = vrot.slane %v6471, %v6503
        %v6641 = vunpack.c.l.b16 %v6343
        %v6642 = vunpack.c.h.b16 %v6343
        %v6643 = vunpack.c.l.b16 %v6344
        %v6644 = vunpack.c.h.b16 %v6344
        %v6645 = vunpack.c.l.b16 %v6345
        %v6646 = vunpack.c.h.b16 %v6345
        %v6647 = vunpack.c.l.b16 %v6346
        %v6648 = vunpack.c.h.b16 %v6346
        %v6649 = vunpack.c.l.b16 %v6347
        %v6650 = vunpack.c.h.b16 %v6347
        %v6651 = vunpack.c.l.b16 %v6348
        %v6652 = vunpack.c.h.b16 %v6348
        %v6653 = vunpack.c.l.b16 %v6349
        %v6654 = vunpack.c.h.b16 %v6349
        %v6655 = vunpack.c.l.b16 %v6350
        %v6656 = vunpack.c.h.b16 %v6350
        %v6657 = vunpack.c.l.b16 %v6351
        %v6658 = vunpack.c.h.b16 %v6351
        %v6659 = vunpack.c.l.b16 %v6352
        %v6660 = vunpack.c.h.b16 %v6352
        %v6661 = vunpack.c.l.b16 %v6353
        %v6662 = vunpack.c.h.b16 %v6353
        %v6663 = vunpack.c.l.b16 %v6354
        %v6664 = vunpack.c.h.b16 %v6354
        %v6665 = vunpack.c.l.b16 %v6355
        %v6666 = vunpack.c.h.b16 %v6355
        %v6667 = vunpack.c.l.b16 %v6356
        %v6668 = vunpack.c.h.b16 %v6356
        %v6669 = vunpack.c.l.b16 %v6357
        %v6670 = vunpack.c.h.b16 %v6357
        %v6671 = vunpack.c.l.b16 %v6358
        %v6672 = vunpack.c.h.b16 %v6358
        %v6673 = vunpack.c.l.b16 %v6359
        %v6674 = vunpack.c.h.b16 %v6359
        %v6675 = vunpack.c.l.b16 %v6360
        %v6676 = vunpack.c.h.b16 %v6360
        %v6677 = vunpack.c.l.b16 %v6361
        %v6678 = vunpack.c.h.b16 %v6361
        %v6679 = vunpack.c.l.b16 %v6362
        %v6680 = vunpack.c.h.b16 %v6362
        %v6681 = vunpack.c.l.b16 %v6363
        %v6682 = vunpack.c.h.b16 %v6363
        %v6683 = vunpack.c.l.b16 %v6364
        %v6684 = vunpack.c.h.b16 %v6364
        %v6685 = vunpack.c.l.b16 %v6365
        %v6686 = vunpack.c.h.b16 %v6365
        %v6687 = vunpack.c.l.b16 %v6366
        %v6688 = vunpack.c.h.b16 %v6366
        %v6689 = vunpack.c.l.b16 %v6367
        %v6690 = vunpack.c.h.b16 %v6367
        %v6691 = vunpack.c.l.b16 %v6368
        %v6692 = vunpack.c.h.b16 %v6368
        %v6693 = vunpack.c.l.b16 %v6369
        %v6694 = vunpack.c.h.b16 %v6369
        %v6695 = vunpack.c.l.b16 %v6370
        %v6696 = vunpack.c.h.b16 %v6370
        %v6697 = vunpack.c.l.b16 %v6371
        %v6698 = vunpack.c.h.b16 %v6371
        %v6699 = vunpack.c.l.b16 %v6372
        %v6700 = vunpack.c.h.b16 %v6372
        %v6701 = vunpack.c.l.b16 %v6373
        %v6702 = vunpack.c.h.b16 %v6373
        %v6703 = vunpack.c.l.b16 %v6374
        %v6704 = vunpack.c.h.b16 %v6374
        %v6705 = vunpack.c.l.b16 %v6375
        %v6706 = vunpack.c.h.b16 %v6375
        %v6707 = vunpack.c.l.b16 %v6376
        %v6708 = vunpack.c.h.b16 %v6376
        %v6709 = vunpack.c.l.b16 %v6377
        %v6710 = vunpack.c.h.b16 %v6377
        %v6711 = vunpack.c.l.b16 %v6378
        %v6712 = vunpack.c.h.b16 %v6378
        %v6713 = vunpack.c.l.b16 %v6379
        %v6714 = vunpack.c.h.b16 %v6379
        %v6715 = vunpack.c.l.b16 %v6380
        %v6716 = vunpack.c.h.b16 %v6380
        %v6717 = vunpack.c.l.b16 %v6381
        %v6718 = vunpack.c.h.b16 %v6381
        %v6719 = vunpack.c.l.b16 %v6382
        %v6720 = vunpack.c.h.b16 %v6382
        %v6721 = vunpack.c.l.b16 %v6383
        %v6722 = vunpack.c.h.b16 %v6383
        %v6723 = vunpack.c.l.b16 %v6384
        %v6724 = vunpack.c.h.b16 %v6384
        %v6725 = vunpack.c.l.b16 %v6385
        %v6726 = vunpack.c.h.b16 %v6385
        %v6727 = vunpack.c.l.b16 %v6386
        %v6728 = vunpack.c.h.b16 %v6386
        %v6729 = vunpack.c.l.b16 %v6387
        %v6730 = vunpack.c.h.b16 %v6387
        %v6731 = vunpack.c.l.b16 %v6388
        %v6732 = vunpack.c.h.b16 %v6388
        %v6733 = vunpack.c.l.b16 %v6389
        %v6734 = vunpack.c.h.b16 %v6389
        %v6735 = vunpack.c.l.b16 %v6390
        %v6736 = vunpack.c.h.b16 %v6390
        %v6737 = vunpack.c.l.b16 %v6391
        %v6738 = vunpack.c.h.b16 %v6391
        %v6739 = vunpack.c.l.b16 %v6392
        %v6740 = vunpack.c.h.b16 %v6392
        %v6741 = vunpack.c.l.b16 %v6393
        %v6742 = vunpack.c.h.b16 %v6393
        %v6743 = vunpack.c.l.b16 %v6394
        %v6744 = vunpack.c.h.b16 %v6394
        %v6745 = vunpack.c.l.b16 %v6395
        %v6746 = vunpack.c.h.b16 %v6395
        %v6747 = vunpack.c.l.b16 %v6396
        %v6748 = vunpack.c.h.b16 %v6396
        %v6749 = vunpack.c.l.b16 %v6397
        %v6750 = vunpack.c.h.b16 %v6397
        %v6751 = vunpack.c.l.b16 %v6398
        %v6752 = vunpack.c.h.b16 %v6398
        %v6753 = vunpack.c.l.b16 %v6399
        %v6754 = vunpack.c.h.b16 %v6399
        %v6755 = vunpack.c.l.b16 %v6400
        %v6756 = vunpack.c.h.b16 %v6400
        %v6757 = vunpack.c.l.b16 %v6401
        %v6758 = vunpack.c.h.b16 %v6401
        %v6759 = vunpack.c.l.b16 %v6402
        %v6760 = vunpack.c.h.b16 %v6402
        %v6761 = vunpack.c.l.b16 %v6403
        %v6762 = vunpack.c.h.b16 %v6403
        %v6763 = vunpack.c.l.b16 %v6404
        %v6764 = vunpack.c.h.b16 %v6404
        %v6765 = vunpack.c.l.b16 %v6405
        %v6766 = vunpack.c.h.b16 %v6405
        %v6767 = vunpack.c.l.b16 %v6406
        %v6768 = vunpack.c.h.b16 %v6406
        %v6769 = vunpack.c.l.b16 %v6407
        %v6770 = vunpack.c.h.b16 %v6407
        %v6771 = vunpack.c.l.b16 %v6408
        %v6772 = vunpack.c.h.b16 %v6408
        %v6773 = vunpack.c.l.b16 %v6409
        %v6774 = vunpack.c.h.b16 %v6409
        %v6775 = vunpack.c.l.b16 %v6410
        %v6776 = vunpack.c.h.b16 %v6410
        %v6777 = vunpack.c.l.b16 %v6411
        %v6778 = vunpack.c.h.b16 %v6411
        %v6779 = vunpack.c.l.b16 %v6412
        %v6780 = vunpack.c.h.b16 %v6412
        %v6781 = vunpack.c.l.b16 %v6413
        %v6782 = vunpack.c.h.b16 %v6413
        %v6783 = vunpack.c.l.b16 %v6414
        %v6784 = vunpack.c.h.b16 %v6414
        %v6785 = vunpack.c.l.b16 %v6415
        %v6786 = vunpack.c.h.b16 %v6415
        %v6787 = vunpack.c.l.b16 %v6416
        %v6788 = vunpack.c.h.b16 %v6416
        %v6789 = vunpack.c.l.b16 %v6417
        %v6790 = vunpack.c.h.b16 %v6417
        %v6791 = vunpack.c.l.b16 %v6418
        %v6792 = vunpack.c.h.b16 %v6418
        %v6793 = vunpack.c.l.b16 %v6419
        %v6794 = vunpack.c.h.b16 %v6419
        %v6795 = vunpack.c.l.b16 %v6420
        %v6796 = vunpack.c.h.b16 %v6420
        %v6797 = vunpack.c.l.b16 %v6421
        %v6798 = vunpack.c.h.b16 %v6421
        %v6799 = vunpack.c.l.b16 %v6422
        %v6800 = vunpack.c.h.b16 %v6422
        %v6801 = vunpack.c.l.b16 %v6423
        %v6802 = vunpack.c.h.b16 %v6423
        %v6803 = vunpack.c.l.b16 %v6424
        %v6804 = vunpack.c.h.b16 %v6424
        %v6805 = vunpack.c.l.b16 %v6425
        %v6806 = vunpack.c.h.b16 %v6425
        %v6807 = vunpack.c.l.b16 %v6426
        %v6808 = vunpack.c.h.b16 %v6426
        %v6809 = vunpack.c.l.b16 %v6427
        %v6810 = vunpack.c.h.b16 %v6427
        %v6811 = vunpack.c.l.b16 %v6428
        %v6812 = vunpack.c.h.b16 %v6428
        %v6813 = vunpack.c.l.b16 %v6429
        %v6814 = vunpack.c.h.b16 %v6429
        %v6815 = vunpack.c.l.b16 %v6430
        %v6816 = vunpack.c.h.b16 %v6430
        %v6817 = vunpack.c.l.b16 %v6431
        %v6818 = vunpack.c.h.b16 %v6431
        %v6819 = vunpack.c.l.b16 %v6432
        %v6820 = vunpack.c.h.b16 %v6432
        %v6821 = vunpack.c.l.b16 %v6433
        %v6822 = vunpack.c.h.b16 %v6433
        %v6823 = vunpack.c.l.b16 %v6434
        %v6824 = vunpack.c.h.b16 %v6434
        %v6825 = vunpack.c.l.b16 %v6435
        %v6826 = vunpack.c.h.b16 %v6435
        %v6827 = vunpack.c.l.b16 %v6436
        %v6828 = vunpack.c.h.b16 %v6436
        %v6829 = vunpack.c.l.b16 %v6437
        %v6830 = vunpack.c.h.b16 %v6437
        %v6831 = vunpack.c.l.b16 %v6438
        %v6832 = vunpack.c.h.b16 %v6438
        %v6833 = vunpack.c.l.b16 %v6439
        %v6834 = vunpack.c.h.b16 %v6439
        %v6835 = vunpack.c.l.b16 %v6440
        %v6836 = vunpack.c.h.b16 %v6440
        %v6837 = vunpack.c.l.b16 %v6441
        %v6838 = vunpack.c.h.b16 %v6441
        %v6839 = vunpack.c.l.b16 %v6442
        %v6840 = vunpack.c.h.b16 %v6442
        %v6841 = vunpack.c.l.b16 %v6443
        %v6842 = vunpack.c.h.b16 %v6443
        %v6843 = vunpack.c.l.b16 %v6444
        %v6844 = vunpack.c.h.b16 %v6444
        %v6845 = vunpack.c.l.b16 %v6445
        %v6846 = vunpack.c.h.b16 %v6445
        %v6847 = vunpack.c.l.b16 %v6446
        %v6848 = vunpack.c.h.b16 %v6446
        %v6849 = vunpack.c.l.b16 %v6447
        %v6850 = vunpack.c.h.b16 %v6447
        %v6851 = vunpack.c.l.b16 %v6448
        %v6852 = vunpack.c.h.b16 %v6448
        %v6853 = vunpack.c.l.b16 %v6449
        %v6854 = vunpack.c.h.b16 %v6449
        %v6855 = vunpack.c.l.b16 %v6450
        %v6856 = vunpack.c.h.b16 %v6450
        %v6857 = vunpack.c.l.b16 %v6451
        %v6858 = vunpack.c.h.b16 %v6451
        %v6859 = vunpack.c.l.b16 %v6452
        %v6860 = vunpack.c.h.b16 %v6452
        %v6861 = vunpack.c.l.b16 %v6453
        %v6862 = vunpack.c.h.b16 %v6453
        %v6863 = vunpack.c.l.b16 %v6454
        %v6864 = vunpack.c.h.b16 %v6454
        %v6865 = vunpack.c.l.b16 %v6455
        %v6866 = vunpack.c.h.b16 %v6455
        %v6867 = vunpack.c.l.b16 %v6456
        %v6868 = vunpack.c.h.b16 %v6456
        %v6869 = vunpack.c.l.b16 %v6457
        %v6870 = vunpack.c.h.b16 %v6457
        %v6871 = vunpack.c.l.b16 %v6458
        %v6872 = vunpack.c.h.b16 %v6458
        %v6873 = vunpack.c.l.b16 %v6459
        %v6874 = vunpack.c.h.b16 %v6459
        %v6875 = vunpack.c.l.b16 %v6460
        %v6876 = vunpack.c.h.b16 %v6460
        %v6877 = vunpack.c.l.b16 %v6461
        %v6878 = vunpack.c.h.b16 %v6461
        %v6879 = vunpack.c.l.b16 %v6462
        %v6880 = vunpack.c.h.b16 %v6462
        %v6881 = vunpack.c.l.b16 %v6463
        %v6882 = vunpack.c.h.b16 %v6463
        %v6883 = vunpack.c.l.b16 %v6464
        %v6884 = vunpack.c.h.b16 %v6464
        %v6885 = vunpack.c.l.b16 %v6465
        %v6886 = vunpack.c.h.b16 %v6465
        %v6887 = vunpack.c.l.b16 %v6466
        %v6888 = vunpack.c.h.b16 %v6466
        %v6889 = vunpack.c.l.b16 %v6467
        %v6890 = vunpack.c.h.b16 %v6467
        %v6891 = vunpack.c.l.b16 %v6468
        %v6892 = vunpack.c.h.b16 %v6468
        %v6893 = vunpack.c.l.b16 %v6469
        %v6894 = vunpack.c.h.b16 %v6469
        %v6895 = vunpack.c.l.b16 %v6470
        %v6896 = vunpack.c.h.b16 %v6470
        %v6897 = vpack.c.b16 %v6649, %v6641
        %v6898 = vpack.c.b16 %v6650, %v6642
        %v6899 = vpack.c.b16 %v6651, %v6643
        %v6900 = vpack.c.b16 %v6652, %v6644
        %v6901 = vpack.c.b16 %v6653, %v6645
        %v6902 = vpack.c.b16 %v6654, %v6646
        %v6903 = vpack.c.b16 %v6655, %v6647
        %v6904 = vpack.c.b16 %v6656, %v6648
        %v6905 = vpack.c.b16 %v6665, %v6657
        %v6906 = vpack.c.b16 %v6666, %v6658
        %v6907 = vpack.c.b16 %v6667, %v6659
        %v6908 = vpack.c.b16 %v6668, %v6660
        %v6909 = vpack.c.b16 %v6669, %v6661
        %v6910 = vpack.c.b16 %v6670, %v6662
        %v6911 = vpack.c.b16 %v6671, %v6663
        %v6912 = vpack.c.b16 %v6672, %v6664
        %v6913 = vpack.c.b16 %v6681, %v6673
        %v6914 = vpack.c.b16 %v6682, %v6674
        %v6915 = vpack.c.b16 %v6683, %v6675
        %v6916 = vpack.c.b16 %v6684, %v6676
        %v6917 = vpack.c.b16 %v6685, %v6677
        %v6918 = vpack.c.b16 %v6686, %v6678
        %v6919 = vpack.c.b16 %v6687, %v6679
        %v6920 = vpack.c.b16 %v6688, %v6680
        %v6921 = vpack.c.b16 %v6697, %v6689
        %v6922 = vpack.c.b16 %v6698, %v6690
        %v6923 = vpack.c.b16 %v6699, %v6691
        %v6924 = vpack.c.b16 %v6700, %v6692
        %v6925 = vpack.c.b16 %v6701, %v6693
        %v6926 = vpack.c.b16 %v6702, %v6694
        %v6927 = vpack.c.b16 %v6703, %v6695
        %v6928 = vpack.c.b16 %v6704, %v6696
        %v6929 = vpack.c.b16 %v6713, %v6705
        %v6930 = vpack.c.b16 %v6714, %v6706
        %v6931 = vpack.c.b16 %v6715, %v6707
        %v6932 = vpack.c.b16 %v6716, %v6708
        %v6933 = vpack.c.b16 %v6717, %v6709
        %v6934 = vpack.c.b16 %v6718, %v6710
        %v6935 = vpack.c.b16 %v6719, %v6711
        %v6936 = vpack.c.b16 %v6720, %v6712
        %v6937 = vpack.c.b16 %v6729, %v6721
        %v6938 = vpack.c.b16 %v6730, %v6722
        %v6939 = vpack.c.b16 %v6731, %v6723
        %v6940 = vpack.c.b16 %v6732, %v6724
        %v6941 = vpack.c.b16 %v6733, %v6725
        %v6942 = vpack.c.b16 %v6734, %v6726
        %v6943 = vpack.c.b16 %v6735, %v6727
        %v6944 = vpack.c.b16 %v6736, %v6728
        %v6945 = vpack.c.b16 %v6745, %v6737
        %v6946 = vpack.c.b16 %v6746, %v6738
        %v6947 = vpack.c.b16 %v6747, %v6739
        %v6948 = vpack.c.b16 %v6748, %v6740
        %v6949 = vpack.c.b16 %v6749, %v6741
        %v6950 = vpack.c.b16 %v6750, %v6742
        %v6951 = vpack.c.b16 %v6751, %v6743
        %v6952 = vpack.c.b16 %v6752, %v6744
        %v6953 = vpack.c.b16 %v6761, %v6753
        %v6954 = vpack.c.b16 %v6762, %v6754
        %v6955 = vpack.c.b16 %v6763, %v6755
        %v6956 = vpack.c.b16 %v6764, %v6756
        %v6957 = vpack.c.b16 %v6765, %v6757
        %v6958 = vpack.c.b16 %v6766, %v6758
        %v6959 = vpack.c.b16 %v6767, %v6759
        %v6960 = vpack.c.b16 %v6768, %v6760
        %v6961 = vpack.c.b16 %v6777, %v6769
        %v6962 = vpack.c.b16 %v6778, %v6770
        %v6963 = vpack.c.b16 %v6779, %v6771
        %v6964 = vpack.c.b16 %v6780, %v6772
        %v6965 = vpack.c.b16 %v6781, %v6773
        %v6966 = vpack.c.b16 %v6782, %v6774
        %v6967 = vpack.c.b16 %v6783, %v6775
        %v6968 = vpack.c.b16 %v6784, %v6776
        %v6969 = vpack.c.b16 %v6793, %v6785
        %v6970 = vpack.c.b16 %v6794, %v6786
        %v6971 = vpack.c.b16 %v6795, %v6787
        %v6972 = vpack.c.b16 %v6796, %v6788
        %v6973 = vpack.c.b16 %v6797, %v6789
        %v6974 = vpack.c.b16 %v6798, %v6790
        %v6975 = vpack.c.b16 %v6799, %v6791
        %v6976 = vpack.c.b16 %v6800, %v6792
        %v6977 = vpack.c.b16 %v6809, %v6801
        %v6978 = vpack.c.b16 %v6810, %v6802
        %v6979 = vpack.c.b16 %v6811, %v6803
        %v6980 = vpack.c.b16 %v6812, %v6804
        %v6981 = vpack.c.b16 %v6813, %v6805
        %v6982 = vpack.c.b16 %v6814, %v6806
        %v6983 = vpack.c.b16 %v6815, %v6807
        %v6984 = vpack.c.b16 %v6816, %v6808
        %v6985 = vpack.c.b16 %v6825, %v6817
        %v6986 = vpack.c.b16 %v6826, %v6818
        %v6987 = vpack.c.b16 %v6827, %v6819
        %v6988 = vpack.c.b16 %v6828, %v6820
        %v6989 = vpack.c.b16 %v6829, %v6821
        %v6990 = vpack.c.b16 %v6830, %v6822
        %v6991 = vpack.c.b16 %v6831, %v6823
        %v6992 = vpack.c.b16 %v6832, %v6824
        %v6993 = vpack.c.b16 %v6841, %v6833
        %v6994 = vpack.c.b16 %v6842, %v6834
        %v6995 = vpack.c.b16 %v6843, %v6835
        %v6996 = vpack.c.b16 %v6844, %v6836
        %v6997 = vpack.c.b16 %v6845, %v6837
        %v6998 = vpack.c.b16 %v6846, %v6838
        %v6999 = vpack.c.b16 %v6847, %v6839
        %v7000 = vpack.c.b16 %v6848, %v6840
        %v7001 = vpack.c.b16 %v6857, %v6849
        %v7002 = vpack.c.b16 %v6858, %v6850
        %v7003 = vpack.c.b16 %v6859, %v6851
        %v7004 = vpack.c.b16 %v6860, %v6852
        %v7005 = vpack.c.b16 %v6861, %v6853
        %v7006 = vpack.c.b16 %v6862, %v6854
        %v7007 = vpack.c.b16 %v6863, %v6855
        %v7008 = vpack.c.b16 %v6864, %v6856
        %v7009 = vpack.c.b16 %v6873, %v6865
        %v7010 = vpack.c.b16 %v6874, %v6866
        %v7011 = vpack.c.b16 %v6875, %v6867
        %v7012 = vpack.c.b16 %v6876, %v6868
        %v7013 = vpack.c.b16 %v6877, %v6869
        %v7014 = vpack.c.b16 %v6878, %v6870
        %v7015 = vpack.c.b16 %v6879, %v6871
        %v7016 = vpack.c.b16 %v6880, %v6872
        %v7017 = vpack.c.b16 %v6889, %v6881
        %v7018 = vpack.c.b16 %v6890, %v6882
        %v7019 = vpack.c.b16 %v6891, %v6883
        %v7020 = vpack.c.b16 %v6892, %v6884
        %v7021 = vpack.c.b16 %v6893, %v6885
        %v7022 = vpack.c.b16 %v6894, %v6886
        %v7023 = vpack.c.b16 %v6895, %v6887
        %v7024 = vpack.c.b16 %v6896, %v6888
        %7153 = vmatprep.subr.bf16.mxu0 %v6898
        %7154 = vmatpush1.bf16.msra.mxu0 %v6897
        %7155 = vmatprep.subr.bf16.mxu0 %v6906
        %7156 = vmatpush1.bf16.msra.mxu0 %v6905
        %7157 = vmatprep.subr.bf16.mxu0 %v6914
        %7158 = vmatpush1.bf16.msra.mxu0 %v6913
        %7159 = vmatprep.subr.bf16.mxu0 %v6922
        %7160 = vmatpush1.bf16.msra.mxu0 %v6921
        %7161 = vmatprep.subr.bf16.mxu0 %v6930
        %7162 = vmatpush1.bf16.msra.mxu0 %v6929
        %7163 = vmatprep.subr.bf16.mxu0 %v6938
        %7164 = vmatpush1.bf16.msra.mxu0 %v6937
        %7165 = vmatprep.subr.bf16.mxu0 %v6946
        %7166 = vmatpush1.bf16.msra.mxu0 %v6945
        %7167 = vmatprep.subr.bf16.mxu0 %v6954
        %7168 = vmatpush1.bf16.msra.mxu0 %v6953
        %7169 = vmatprep.subr.bf16.mxu0 %v6962
        %7170 = vmatpush1.bf16.msra.mxu0 %v6961
        %7171 = vmatprep.subr.bf16.mxu0 %v6970
        %7172 = vmatpush1.bf16.msra.mxu0 %v6969
        %7173 = vmatprep.subr.bf16.mxu0 %v6978
        %7174 = vmatpush1.bf16.msra.mxu0 %v6977
        %7175 = vmatprep.subr.bf16.mxu0 %v6986
        %7176 = vmatpush1.bf16.msra.mxu0 %v6985
        %7177 = vmatprep.subr.bf16.mxu0 %v6994
        %7178 = vmatpush1.bf16.msra.mxu0 %v6993
        %7179 = vmatprep.subr.bf16.mxu0 %v7002
        %7180 = vmatpush1.bf16.msra.mxu0 %v7001
        %7181 = vmatprep.subr.bf16.mxu0 %v7010
        %7182 = vmatpush1.bf16.msra.mxu0 %v7009
        %7183 = vmatprep.subr.bf16.mxu0 %v7018
        %7184 = vmatpush1.bf16.msra.mxu0 %v7017
        %7185 = vmatprep.mubr.bf16.mxu0 %v6328
        %7186 = vmatmul.mubr.bf16.gmra.mrb[0].mxu0 %v6327
        %v7187 = vpop.f32.mrb[0].mxu0
        %v7188 = vadd.f32 %v6476, %v7187
        %v7189 = vpop.f32.mrb[0].mxu0
        %v7190 = vadd.f32 %v6480, %v7189
        %v7191 = vpop.f32.mrb[0].mxu0
        %v7192 = vadd.f32 %v6476, %v7191
        %v7193 = vpop.f32.mrb[0].mxu0
        %v7194 = vadd.f32 %v6480, %v7193
        %7195 = vmatprep.mubr.bf16.mxu0 %v6330
        %7196 = vmatmul.mubr.bf16.gmra.mrb[0].mxu0 %v6329
        %v7197 = vpop.f32.mrb[0].mxu0
        %v7198 = vadd.f32 %v6476, %v7197
        %v7199 = vpop.f32.mrb[0].mxu0
        %v7200 = vadd.f32 %v6480, %v7199
        %v7201 = vpop.f32.mrb[0].mxu0
        %v7202 = vadd.f32 %v6476, %v7201
        %v7203 = vpop.f32.mrb[0].mxu0
        %v7204 = vadd.f32 %v6480, %v7203
        %7205 = vmatprep.mubr.bf16.mxu0 %v6332
        %7206 = vmatmul.mubr.bf16.gmra.mrb[0].mxu0 %v6331
        %v7207 = vpop.f32.mrb[0].mxu0
        %v7208 = vadd.f32 %v6476, %v7207
        %v7209 = vpop.f32.mrb[0].mxu0
        %v7210 = vadd.f32 %v6480, %v7209
        %v7211 = vpop.f32.mrb[0].mxu0
        %v7212 = vadd.f32 %v6476, %v7211
        %v7213 = vpop.f32.mrb[0].mxu0
        %v7214 = vadd.f32 %v6480, %v7213
        %7215 = vmatprep.mubr.bf16.mxu0 %v6334
        %7216 = vmatmul.mubr.bf16.gmra.mrb[0].mxu0 %v6333
        %v7217 = vpop.f32.mrb[0].mxu0
        %v7218 = vadd.f32 %v6476, %v7217
        %v7219 = vpop.f32.mrb[0].mxu0
        %v7220 = vadd.f32 %v6480, %v7219
        %v7221 = vpop.f32.mrb[0].mxu0
        %v7222 = vadd.f32 %v6476, %v7221
        %v7223 = vpop.f32.mrb[0].mxu0
        %v7224 = vadd.f32 %v6480, %v7223
        %7225 = vmatprep.mubr.bf16.mxu0 %v6336
        %7226 = vmatmul.mubr.bf16.gmra.mrb[0].mxu0 %v6335
        %v7227 = vpop.f32.mrb[0].mxu0
        %v7228 = vadd.f32 %v6476, %v7227
        %v7229 = vpop.f32.mrb[0].mxu0
        %v7230 = vadd.f32 %v6480, %v7229
        %v7231 = vpop.f32.mrb[0].mxu0
        %v7232 = vadd.f32 %v6476, %v7231
        %v7233 = vpop.f32.mrb[0].mxu0
        %v7234 = vadd.f32 %v6480, %v7233
        %7235 = vmatprep.mubr.bf16.mxu0 %v6338
        %7236 = vmatmul.mubr.bf16.gmra.mrb[0].mxu0 %v6337
        %v7237 = vpop.f32.mrb[0].mxu0
        %v7238 = vadd.f32 %v6476, %v7237
        %v7239 = vpop.f32.mrb[0].mxu0
        %v7240 = vadd.f32 %v6480, %v7239
        %v7241 = vpop.f32.mrb[0].mxu0
        %v7242 = vadd.f32 %v6476, %v7241
        %v7243 = vpop.f32.mrb[0].mxu0
        %v7244 = vadd.f32 %v6480, %v7243
        %7245 = vmatprep.mubr.bf16.mxu0 %v6340
        %7246 = vmatmul.mubr.bf16.gmra.mrb[0].mxu0 %v6339
        %v7247 = vpop.f32.mrb[0].mxu0
        %v7248 = vadd.f32 %v6476, %v7247
        %v7249 = vpop.f32.mrb[0].mxu0
        %v7250 = vadd.f32 %v6480, %v7249
        %v7251 = vpop.f32.mrb[0].mxu0
        %v7252 = vadd.f32 %v6476, %v7251
        %v7253 = vpop.f32.mrb[0].mxu0
        %v7254 = vadd.f32 %v6480, %v7253
        %7255 = vmatprep.mubr.bf16.mxu0 %v6342
        %7256 = vmatmul.mubr.bf16.gmra.mrb[0].mxu0 %v6341
        %v7257 = vpop.f32.mrb[0].mxu0
        %v7258 = vadd.f32 %v6476, %v7257
        %v7259 = vpop.f32.mrb[0].mxu0
        %v7260 = vadd.f32 %v6480, %v7259
        %v7261 = vpop.f32.mrb[0].mxu0
        %v7262 = vadd.f32 %v6476, %v7261
        %v7263 = vpop.f32.mrb[0].mxu0
        %v7264 = vadd.f32 %v6480, %v7263
        %7265 = vdwg.mxu0
        %7266 = vmatprep.subr.bf16.mxu0 %v6900
        %7267 = vmatpush1.bf16.msra.mxu0 %v6899
        %7268 = vmatprep.subr.bf16.mxu0 %v6908
        %7269 = vmatpush1.bf16.msra.mxu0 %v6907
        %7270 = vmatprep.subr.bf16.mxu0 %v6916
        %7271 = vmatpush1.bf16.msra.mxu0 %v6915
        %7272 = vmatprep.subr.bf16.mxu0 %v6924
        %7273 = vmatpush1.bf16.msra.mxu0 %v6923
        %7274 = vmatprep.subr.bf16.mxu0 %v6932
        %7275 = vmatpush1.bf16.msra.mxu0 %v6931
        %7276 = vmatprep.subr.bf16.mxu0 %v6940
        %7277 = vmatpush1.bf16.msra.mxu0 %v6939
        %7278 = vmatprep.subr.bf16.mxu0 %v6948
        %7279 = vmatpush1.bf16.msra.mxu0 %v6947
        %7280 = vmatprep.subr.bf16.mxu0 %v6956
        %7281 = vmatpush1.bf16.msra.mxu0 %v6955
        %7282 = vmatprep.subr.bf16.mxu0 %v6964
        %7283 = vmatpush1.bf16.msra.mxu0 %v6963
        %7284 = vmatprep.subr.bf16.mxu0 %v6972
        %7285 = vmatpush1.bf16.msra.mxu0 %v6971
        %7286 = vmatprep.subr.bf16.mxu0 %v6980
        %7287 = vmatpush1.bf16.msra.mxu0 %v6979
        %7288 = vmatprep.subr.bf16.mxu0 %v6988
        %7289 = vmatpush1.bf16.msra.mxu0 %v6987
        %7290 = vmatprep.subr.bf16.mxu0 %v6996
        %7291 = vmatpush1.bf16.msra.mxu0 %v6995
        %7292 = vmatprep.subr.bf16.mxu0 %v7004
        %7293 = vmatpush1.bf16.msra.mxu0 %v7003
        %7294 = vmatprep.subr.bf16.mxu0 %v7012
        %7295 = vmatpush1.bf16.msra.mxu0 %v7011
        %7296 = vmatprep.subr.bf16.mxu0 %v7020
        %7297 = vmatpush1.bf16.msra.mxu0 %v7019
        %7298 = vmatprep.mubr.bf16.mxu0 %v6328
        %7299 = vmatmul.mubr.bf16.gmra.mrb[0].mxu0 %v6327
        %v7300 = vpop.f32.mrb[0].mxu0
        %v7301 = vadd.f32 %v6484, %v7300
        %v7302 = vpop.f32.mrb[0].mxu0
        %v7303 = vadd.f32 %v6488, %v7302
        %v7304 = vpop.f32.mrb[0].mxu0
        %v7305 = vadd.f32 %v6484, %v7304
        %v7306 = vpop.f32.mrb[0].mxu0
        %v7307 = vadd.f32 %v6488, %v7306
        %7308 = vmatprep.mubr.bf16.mxu0 %v6330
        %7309 = vmatmul.mubr.bf16.gmra.mrb[0].mxu0 %v6329
        %v7310 = vpop.f32.mrb[0].mxu0
        %v7311 = vadd.f32 %v6484, %v7310
        %v7312 = vpop.f32.mrb[0].mxu0
        %v7313 = vadd.f32 %v6488, %v7312
        %v7314 = vpop.f32.mrb[0].mxu0
        %v7315 = vadd.f32 %v6484, %v7314
        %v7316 = vpop.f32.mrb[0].mxu0
        %v7317 = vadd.f32 %v6488, %v7316
        %7318 = vmatprep.mubr.bf16.mxu0 %v6332
        %7319 = vmatmul.mubr.bf16.gmra.mrb[0].mxu0 %v6331
        %v7320 = vpop.f32.mrb[0].mxu0
        %v7321 = vadd.f32 %v6484, %v7320
        %v7322 = vpop.f32.mrb[0].mxu0
        %v7323 = vadd.f32 %v6488, %v7322
        %v7324 = vpop.f32.mrb[0].mxu0
        %v7325 = vadd.f32 %v6484, %v7324
        %v7326 = vpop.f32.mrb[0].mxu0
        %v7327 = vadd.f32 %v6488, %v7326
        %7328 = vmatprep.mubr.bf16.mxu0 %v6334
        %7329 = vmatmul.mubr.bf16.gmra.mrb[0].mxu0 %v6333
        %v7330 = vpop.f32.mrb[0].mxu0
        %v7331 = vadd.f32 %v6484, %v7330
        %v7332 = vpop.f32.mrb[0].mxu0
        %v7333 = vadd.f32 %v6488, %v7332
        %v7334 = vpop.f32.mrb[0].mxu0
        %v7335 = vadd.f32 %v6484, %v7334
        %v7336 = vpop.f32.mrb[0].mxu0
        %v7337 = vadd.f32 %v6488, %v7336
        %7338 = vmatprep.mubr.bf16.mxu0 %v6336
        %7339 = vmatmul.mubr.bf16.gmra.mrb[0].mxu0 %v6335
        %v7340 = vpop.f32.mrb[0].mxu0
        %v7341 = vadd.f32 %v6484, %v7340
        %v7342 = vpop.f32.mrb[0].mxu0
        %v7343 = vadd.f32 %v6488, %v7342
        %v7344 = vpop.f32.mrb[0].mxu0
        %v7345 = vadd.f32 %v6484, %v7344
        %v7346 = vpop.f32.mrb[0].mxu0
        %v7347 = vadd.f32 %v6488, %v7346
        %7348 = vmatprep.mubr.bf16.mxu0 %v6338
        %7349 = vmatmul.mubr.bf16.gmra.mrb[0].mxu0 %v6337
        %v7350 = vpop.f32.mrb[0].mxu0
        %v7351 = vadd.f32 %v6484, %v7350
        %v7352 = vpop.f32.mrb[0].mxu0
        %v7353 = vadd.f32 %v6488, %v7352
        %v7354 = vpop.f32.mrb[0].mxu0
        %v7355 = vadd.f32 %v6484, %v7354
        %v7356 = vpop.f32.mrb[0].mxu0
        %v7357 = vadd.f32 %v6488, %v7356
        %7358 = vmatprep.mubr.bf16.mxu0 %v6340
        %7359 = vmatmul.mubr.bf16.gmra.mrb[0].mxu0 %v6339
        %v7360 = vpop.f32.mrb[0].mxu0
        %v7361 = vadd.f32 %v6484, %v7360
        %v7362 = vpop.f32.mrb[0].mxu0
        %v7363 = vadd.f32 %v6488, %v7362
        %v7364 = vpop.f32.mrb[0].mxu0
        %v7365 = vadd.f32 %v6484, %v7364
        %v7366 = vpop.f32.mrb[0].mxu0
        %v7367 = vadd.f32 %v6488, %v7366
        %7368 = vmatprep.mubr.bf16.mxu0 %v6342
        %7369 = vmatmul.mubr.bf16.gmra.mrb[0].mxu0 %v6341
        %v7370 = vpop.f32.mrb[0].mxu0
        %v7371 = vadd.f32 %v6484, %v7370
        %v7372 = vpop.f32.mrb[0].mxu0
        %v7373 = vadd.f32 %v6488, %v7372
        %v7374 = vpop.f32.mrb[0].mxu0
        %v7375 = vadd.f32 %v6484, %v7374
        %v7376 = vpop.f32.mrb[0].mxu0
        %v7377 = vadd.f32 %v6488, %v7376
        %7378 = vdwg.mxu0
        %7379 = vmatprep.subr.bf16.mxu0 %v6902
        %7380 = vmatpush1.bf16.msra.mxu0 %v6901
        %7381 = vmatprep.subr.bf16.mxu0 %v6910
        %7382 = vmatpush1.bf16.msra.mxu0 %v6909
        %7383 = vmatprep.subr.bf16.mxu0 %v6918
        %7384 = vmatpush1.bf16.msra.mxu0 %v6917
        %7385 = vmatprep.subr.bf16.mxu0 %v6926
        %7386 = vmatpush1.bf16.msra.mxu0 %v6925
        %7387 = vmatprep.subr.bf16.mxu0 %v6934
        %7388 = vmatpush1.bf16.msra.mxu0 %v6933
        %7389 = vmatprep.subr.bf16.mxu0 %v6942
        %7390 = vmatpush1.bf16.msra.mxu0 %v6941
        %7391 = vmatprep.subr.bf16.mxu0 %v6950
        %7392 = vmatpush1.bf16.msra.mxu0 %v6949
        %7393 = vmatprep.subr.bf16.mxu0 %v6958
        %7394 = vmatpush1.bf16.msra.mxu0 %v6957
        %7395 = vmatprep.subr.bf16.mxu0 %v6966
        %7396 = vmatpush1.bf16.msra.mxu0 %v6965
        %7397 = vmatprep.subr.bf16.mxu0 %v6974
        %7398 = vmatpush1.bf16.msra.mxu0 %v6973
        %7399 = vmatprep.subr.bf16.mxu0 %v6982
        %7400 = vmatpush1.bf16.msra.mxu0 %v6981
        %7401 = vmatprep.subr.bf16.mxu0 %v6990
        %7402 = vmatpush1.bf16.msra.mxu0 %v6989
        %7403 = vmatprep.subr.bf16.mxu0 %v6998
        %7404 = vmatpush1.bf16.msra.mxu0 %v6997
        %7405 = vmatprep.subr.bf16.mxu0 %v7006
        %7406 = vmatpush1.bf16.msra.mxu0 %v7005
        %7407 = vmatprep.subr.bf16.mxu0 %v7014
        %7408 = vmatpush1.bf16.msra.mxu0 %v7013
        %7409 = vmatprep.subr.bf16.mxu0 %v7022
        %7410 = vmatpush1.bf16.msra.mxu0 %v7021
        %7411 = vmatprep.mubr.bf16.mxu0 %v6328
        %7412 = vmatmul.mubr.bf16.gmra.mrb[0].mxu0 %v6327
        %v7413 = vpop.f32.mrb[0].mxu0
        %v7414 = vadd.f32 %v6492, %v7413
        %v7415 = vpop.f32.mrb[0].mxu0
        %v7416 = vadd.f32 %v6496, %v7415
        %v7417 = vpop.f32.mrb[0].mxu0
        %v7418 = vadd.f32 %v6492, %v7417
        %v7419 = vpop.f32.mrb[0].mxu0
        %v7420 = vadd.f32 %v6496, %v7419
        %7421 = vmatprep.mubr.bf16.mxu0 %v6330
        %7422 = vmatmul.mubr.bf16.gmra.mrb[0].mxu0 %v6329
        %v7423 = vpop.f32.mrb[0].mxu0
        %v7424 = vadd.f32 %v6492, %v7423
        %v7425 = vpop.f32.mrb[0].mxu0
        %v7426 = vadd.f32 %v6496, %v7425
        %v7427 = vpop.f32.mrb[0].mxu0
        %v7428 = vadd.f32 %v6492, %v7427
        %v7429 = vpop.f32.mrb[0].mxu0
        %v7430 = vadd.f32 %v6496, %v7429
        %7431 = vmatprep.mubr.bf16.mxu0 %v6332
        %7432 = vmatmul.mubr.bf16.gmra.mrb[0].mxu0 %v6331
        %v7433 = vpop.f32.mrb[0].mxu0
        %v7434 = vadd.f32 %v6492, %v7433
        %v7435 = vpop.f32.mrb[0].mxu0
        %v7436 = vadd.f32 %v6496, %v7435
        %v7437 = vpop.f32.mrb[0].mxu0
        %v7438 = vadd.f32 %v6492, %v7437
        %v7439 = vpop.f32.mrb[0].mxu0
        %v7440 = vadd.f32 %v6496, %v7439
        %7441 = vmatprep.mubr.bf16.mxu0 %v6334
        %7442 = vmatmul.mubr.bf16.gmra.mrb[0].mxu0 %v6333
        %v7443 = vpop.f32.mrb[0].mxu0
        %v7444 = vadd.f32 %v6492, %v7443
        %v7445 = vpop.f32.mrb[0].mxu0
        %v7446 = vadd.f32 %v6496, %v7445
        %v7447 = vpop.f32.mrb[0].mxu0
        %v7448 = vadd.f32 %v6492, %v7447
        %v7449 = vpop.f32.mrb[0].mxu0
        %v7450 = vadd.f32 %v6496, %v7449
        %7451 = vmatprep.mubr.bf16.mxu0 %v6336
        %7452 = vmatmul.mubr.bf16.gmra.mrb[0].mxu0 %v6335
        %v7453 = vpop.f32.mrb[0].mxu0
        %v7454 = vadd.f32 %v6492, %v7453
        %v7455 = vpop.f32.mrb[0].mxu0
        %v7456 = vadd.f32 %v6496, %v7455
        %v7457 = vpop.f32.mrb[0].mxu0
        %v7458 = vadd.f32 %v6492, %v7457
        %v7459 = vpop.f32.mrb[0].mxu0
        %v7460 = vadd.f32 %v6496, %v7459
        %7461 = vmatprep.mubr.bf16.mxu0 %v6338
        %7462 = vmatmul.mubr.bf16.gmra.mrb[0].mxu0 %v6337
        %v7463 = vpop.f32.mrb[0].mxu0
        %v7464 = vadd.f32 %v6492, %v7463
        %v7465 = vpop.f32.mrb[0].mxu0
        %v7466 = vadd.f32 %v6496, %v7465
        %v7467 = vpop.f32.mrb[0].mxu0
        %v7468 = vadd.f32 %v6492, %v7467
        %v7469 = vpop.f32.mrb[0].mxu0
        %v7470 = vadd.f32 %v6496, %v7469
        %7471 = vmatprep.mubr.bf16.mxu0 %v6340
        %7472 = vmatmul.mubr.bf16.gmra.mrb[0].mxu0 %v6339
        %v7473 = vpop.f32.mrb[0].mxu0
        %v7474 = vadd.f32 %v6492, %v7473
        %v7475 = vpop.f32.mrb[0].mxu0
        %v7476 = vadd.f32 %v6496, %v7475
        %v7477 = vpop.f32.mrb[0].mxu0
        %v7478 = vadd.f32 %v6492, %v7477
        %v7479 = vpop.f32.mrb[0].mxu0
        %v7480 = vadd.f32 %v6496, %v7479
        %7481 = vmatprep.mubr.bf16.mxu0 %v6342
        %7482 = vmatmul.mubr.bf16.gmra.mrb[0].mxu0 %v6341
        %v7483 = vpop.f32.mrb[0].mxu0
        %v7484 = vadd.f32 %v6492, %v7483
        %v7485 = vpop.f32.mrb[0].mxu0
        %v7486 = vadd.f32 %v6496, %v7485
        %v7487 = vpop.f32.mrb[0].mxu0
        %v7488 = vadd.f32 %v6492, %v7487
        %v7489 = vpop.f32.mrb[0].mxu0
        %v7490 = vadd.f32 %v6496, %v7489
        %7491 = vdwg.mxu0
        %7492 = vmatprep.subr.bf16.mxu0 %v6904
        %7493 = vmatpush1.bf16.msra.mxu0 %v6903
        %7494 = vmatprep.subr.bf16.mxu0 %v6912
        %7495 = vmatpush1.bf16.msra.mxu0 %v6911
        %7496 = vmatprep.subr.bf16.mxu0 %v6920
        %7497 = vmatpush1.bf16.msra.mxu0 %v6919
        %7498 = vmatprep.subr.bf16.mxu0 %v6928
        %7499 = vmatpush1.bf16.msra.mxu0 %v6927
        %7500 = vmatprep.subr.bf16.mxu0 %v6936
        %7501 = vmatpush1.bf16.msra.mxu0 %v6935
        %7502 = vmatprep.subr.bf16.mxu0 %v6944
        %7503 = vmatpush1.bf16.msra.mxu0 %v6943
        %7504 = vmatprep.subr.bf16.mxu0 %v6952
        %7505 = vmatpush1.bf16.msra.mxu0 %v6951
        %7506 = vmatprep.subr.bf16.mxu0 %v6960
        %7507 = vmatpush1.bf16.msra.mxu0 %v6959
        %7508 = vmatprep.subr.bf16.mxu0 %v6968
        %7509 = vmatpush1.bf16.msra.mxu0 %v6967
        %7510 = vmatprep.subr.bf16.mxu0 %v6976
        %7511 = vmatpush1.bf16.msra.mxu0 %v6975
        %7512 = vmatprep.subr.bf16.mxu0 %v6984
        %7513 = vmatpush1.bf16.msra.mxu0 %v6983
        %7514 = vmatprep.subr.bf16.mxu0 %v6992
        %7515 = vmatpush1.bf16.msra.mxu0 %v6991
        %7516 = vmatprep.subr.bf16.mxu0 %v7000
        %7517 = vmatpush1.bf16.msra.mxu0 %v6999
        %7518 = vmatprep.subr.bf16.mxu0 %v7008
        %7519 = vmatpush1.bf16.msra.mxu0 %v7007
        %7520 = vmatprep.subr.bf16.mxu0 %v7016
        %7521 = vmatpush1.bf16.msra.mxu0 %v7015
        %7522 = vmatprep.subr.bf16.mxu0 %v7024
        %7523 = vmatpush1.bf16.msra.mxu0 %v7023
        %7524 = vmatprep.mubr.bf16.mxu0 %v6328
        %7525 = vmatmul.mubr.bf16.gmra.mrb[0].mxu0 %v6327
        %v7526 = vpop.f32.mrb[0].mxu0
        %v7527 = vadd.f32 %v6500, %v7526
        %v7528 = vpop.f32.mrb[0].mxu0
        %v7529 = vadd.f32 %v6504, %v7528
        %v7530 = vpop.f32.mrb[0].mxu0
        %v7531 = vadd.f32 %v6500, %v7530
        %v7532 = vpop.f32.mrb[0].mxu0
        %v7533 = vadd.f32 %v6504, %v7532
        %7534 = vmatprep.mubr.bf16.mxu0 %v6330
        %7535 = vmatmul.mubr.bf16.gmra.mrb[0].mxu0 %v6329
        %v7536 = vpop.f32.mrb[0].mxu0
        %v7537 = vadd.f32 %v6500, %v7536
        %v7538 = vpop.f32.mrb[0].mxu0
        %v7539 = vadd.f32 %v6504, %v7538
        %v7540 = vpop.f32.mrb[0].mxu0
        %v7541 = vadd.f32 %v6500, %v7540
        %v7542 = vpop.f32.mrb[0].mxu0
        %v7543 = vadd.f32 %v6504, %v7542
        %7544 = vmatprep.mubr.bf16.mxu0 %v6332
        %7545 = vmatmul.mubr.bf16.gmra.mrb[0].mxu0 %v6331
        %v7546 = vpop.f32.mrb[0].mxu0
        %v7547 = vadd.f32 %v6500, %v7546
        %v7548 = vpop.f32.mrb[0].mxu0
        %v7549 = vadd.f32 %v6504, %v7548
        %v7550 = vpop.f32.mrb[0].mxu0
        %v7551 = vadd.f32 %v6500, %v7550
        %v7552 = vpop.f32.mrb[0].mxu0
        %v7553 = vadd.f32 %v6504, %v7552
        %7554 = vmatprep.mubr.bf16.mxu0 %v6334
        %7555 = vmatmul.mubr.bf16.gmra.mrb[0].mxu0 %v6333
        %v7556 = vpop.f32.mrb[0].mxu0
        %v7557 = vadd.f32 %v6500, %v7556
        %v7558 = vpop.f32.mrb[0].mxu0
        %v7559 = vadd.f32 %v6504, %v7558
        %v7560 = vpop.f32.mrb[0].mxu0
        %v7561 = vadd.f32 %v6500, %v7560
        %v7562 = vpop.f32.mrb[0].mxu0
        %v7563 = vadd.f32 %v6504, %v7562
        %7564 = vmatprep.mubr.bf16.mxu0 %v6336
        %7565 = vmatmul.mubr.bf16.gmra.mrb[0].mxu0 %v6335
        %v7566 = vpop.f32.mrb[0].mxu0
        %v7567 = vadd.f32 %v6500, %v7566
        %v7568 = vpop.f32.mrb[0].mxu0
        %v7569 = vadd.f32 %v6504, %v7568
        %v7570 = vpop.f32.mrb[0].mxu0
        %v7571 = vadd.f32 %v6500, %v7570
        %v7572 = vpop.f32.mrb[0].mxu0
        %v7573 = vadd.f32 %v6504, %v7572
        %7574 = vmatprep.mubr.bf16.mxu0 %v6338
        %7575 = vmatmul.mubr.bf16.gmra.mrb[0].mxu0 %v6337
        %v7576 = vpop.f32.mrb[0].mxu0
        %v7577 = vadd.f32 %v6500, %v7576
        %v7578 = vpop.f32.mrb[0].mxu0
        %v7579 = vadd.f32 %v6504, %v7578
        %v7580 = vpop.f32.mrb[0].mxu0
        %v7581 = vadd.f32 %v6500, %v7580
        %v7582 = vpop.f32.mrb[0].mxu0
        %v7583 = vadd.f32 %v6504, %v7582
        %7584 = vmatprep.mubr.bf16.mxu0 %v6340
        %7585 = vmatmul.mubr.bf16.gmra.mrb[0].mxu0 %v6339
        %v7586 = vpop.f32.mrb[0].mxu0
        %v7587 = vadd.f32 %v6500, %v7586
        %v7588 = vpop.f32.mrb[0].mxu0
        %v7589 = vadd.f32 %v6504, %v7588
        %v7590 = vpop.f32.mrb[0].mxu0
        %v7591 = vadd.f32 %v6500, %v7590
        %v7592 = vpop.f32.mrb[0].mxu0
        %v7593 = vadd.f32 %v6504, %v7592
        %7594 = vmatprep.mubr.bf16.mxu0 %v6342
        %7595 = vmatmul.mubr.bf16.gmra.mrb[0].mxu0 %v6341
        %v7596 = vpop.f32.mrb[0].mxu0
        %v7597 = vadd.f32 %v6500, %v7596
        %v7598 = vpop.f32.mrb[0].mxu0
        %v7599 = vadd.f32 %v6504, %v7598
        %v7600 = vpop.f32.mrb[0].mxu0
        %v7601 = vadd.f32 %v6500, %v7600
        %v7602 = vpop.f32.mrb[0].mxu0
        %v7603 = vadd.f32 %v6504, %v7602
        %7604 = vdwg.mxu0
        %v7605 = vmax.f32 %v7188, 0.0
        %v7606 = vmax.f32 %v7190, 0.0
        %v7607 = vmax.f32 %v7301, 0.0
        %v7608 = vmax.f32 %v7303, 0.0
        %v7609 = vmax.f32 %v7414, 0.0
        %v7610 = vmax.f32 %v7416, 0.0
        %v7611 = vmax.f32 %v7527, 0.0
        %v7612 = vmax.f32 %v7529, 0.0
        %v7613 = vmax.f32 %v7192, 0.0
        %v7614 = vmax.f32 %v7194, 0.0
        %v7615 = vmax.f32 %v7305, 0.0
        %v7616 = vmax.f32 %v7307, 0.0
        %v7617 = vmax.f32 %v7418, 0.0
        %v7618 = vmax.f32 %v7420, 0.0
        %v7619 = vmax.f32 %v7531, 0.0
        %v7620 = vmax.f32 %v7533, 0.0
        %v7621 = vmax.f32 %v7198, 0.0
        %v7622 = vmax.f32 %v7200, 0.0
        %v7623 = vmax.f32 %v7311, 0.0
        %v7624 = vmax.f32 %v7313, 0.0
        %v7625 = vmax.f32 %v7424, 0.0
        %v7626 = vmax.f32 %v7426, 0.0
        %v7627 = vmax.f32 %v7537, 0.0
        %v7628 = vmax.f32 %v7539, 0.0
        %v7629 = vmax.f32 %v7202, 0.0
        %v7630 = vmax.f32 %v7204, 0.0
        %v7631 = vmax.f32 %v7315, 0.0
        %v7632 = vmax.f32 %v7317, 0.0
        %v7633 = vmax.f32 %v7428, 0.0
        %v7634 = vmax.f32 %v7430, 0.0
        %v7635 = vmax.f32 %v7541, 0.0
        %v7636 = vmax.f32 %v7543, 0.0
        %v7637 = vmax.f32 %v7208, 0.0
        %v7638 = vmax.f32 %v7210, 0.0
        %v7639 = vmax.f32 %v7321, 0.0
        %v7640 = vmax.f32 %v7323, 0.0
        %v7641 = vmax.f32 %v7434, 0.0
        %v7642 = vmax.f32 %v7436, 0.0
        %v7643 = vmax.f32 %v7547, 0.0
        %v7644 = vmax.f32 %v7549, 0.0
        %v7645 = vmax.f32 %v7212, 0.0
        %v7646 = vmax.f32 %v7214, 0.0
        %v7647 = vmax.f32 %v7325, 0.0
        %v7648 = vmax.f32 %v7327, 0.0
        %v7649 = vmax.f32 %v7438, 0.0
        %v7650 = vmax.f32 %v7440, 0.0
        %v7651 = vmax.f32 %v7551, 0.0
        %v7652 = vmax.f32 %v7553, 0.0
        %v7653 = vmax.f32 %v7218, 0.0
        %v7654 = vmax.f32 %v7220, 0.0
        %v7655 = vmax.f32 %v7331, 0.0
        %v7656 = vmax.f32 %v7333, 0.0
        %v7657 = vmax.f32 %v7444, 0.0
        %v7658 = vmax.f32 %v7446, 0.0
        %v7659 = vmax.f32 %v7557, 0.0
        %v7660 = vmax.f32 %v7559, 0.0
        %v7661 = vmax.f32 %v7222, 0.0
        %v7662 = vmax.f32 %v7224, 0.0
        %v7663 = vmax.f32 %v7335, 0.0
        %v7664 = vmax.f32 %v7337, 0.0
        %v7665 = vmax.f32 %v7448, 0.0
        %v7666 = vmax.f32 %v7450, 0.0
        %v7667 = vmax.f32 %v7561, 0.0
        %v7668 = vmax.f32 %v7563, 0.0
        %v7669 = vmax.f32 %v7228, 0.0
        %v7670 = vmax.f32 %v7230, 0.0
        %v7671 = vmax.f32 %v7341, 0.0
        %v7672 = vmax.f32 %v7343, 0.0
        %v7673 = vmax.f32 %v7454, 0.0
        %v7674 = vmax.f32 %v7456, 0.0
        %v7675 = vmax.f32 %v7567, 0.0
        %v7676 = vmax.f32 %v7569, 0.0
        %v7677 = vmax.f32 %v7232, 0.0
        %v7678 = vmax.f32 %v7234, 0.0
        %v7679 = vmax.f32 %v7345, 0.0
        %v7680 = vmax.f32 %v7347, 0.0
        %v7681 = vmax.f32 %v7458, 0.0
        %v7682 = vmax.f32 %v7460, 0.0
        %v7683 = vmax.f32 %v7571, 0.0
        %v7684 = vmax.f32 %v7573, 0.0
        %v7685 = vmax.f32 %v7238, 0.0
        %v7686 = vmax.f32 %v7240, 0.0
        %v7687 = vmax.f32 %v7351, 0.0
        %v7688 = vmax.f32 %v7353, 0.0
        %v7689 = vmax.f32 %v7464, 0.0
        %v7690 = vmax.f32 %v7466, 0.0
        %v7691 = vmax.f32 %v7577, 0.0
        %v7692 = vmax.f32 %v7579, 0.0
        %v7693 = vmax.f32 %v7242, 0.0
        %v7694 = vmax.f32 %v7244, 0.0
        %v7695 = vmax.f32 %v7355, 0.0
        %v7696 = vmax.f32 %v7357, 0.0
        %v7697 = vmax.f32 %v7468, 0.0
        %v7698 = vmax.f32 %v7470, 0.0
        %v7699 = vmax.f32 %v7581, 0.0
        %v7700 = vmax.f32 %v7583, 0.0
        %v7701 = vmax.f32 %v7248, 0.0
        %v7702 = vmax.f32 %v7250, 0.0
        %v7703 = vmax.f32 %v7361, 0.0
        %v7704 = vmax.f32 %v7363, 0.0
        %v7705 = vmax.f32 %v7474, 0.0
        %v7706 = vmax.f32 %v7476, 0.0
        %v7707 = vmax.f32 %v7587, 0.0
        %v7708 = vmax.f32 %v7589, 0.0
        %v7709 = vmax.f32 %v7252, 0.0
        %v7710 = vmax.f32 %v7254, 0.0
        %v7711 = vmax.f32 %v7365, 0.0
        %v7712 = vmax.f32 %v7367, 0.0
        %v7713 = vmax.f32 %v7478, 0.0
        %v7714 = vmax.f32 %v7480, 0.0
        %v7715 = vmax.f32 %v7591, 0.0
        %v7716 = vmax.f32 %v7593, 0.0
        %v7717 = vmax.f32 %v7258, 0.0
        %v7718 = vmax.f32 %v7260, 0.0
        %v7719 = vmax.f32 %v7371, 0.0
        %v7720 = vmax.f32 %v7373, 0.0
        %v7721 = vmax.f32 %v7484, 0.0
        %v7722 = vmax.f32 %v7486, 0.0
        %v7723 = vmax.f32 %v7597, 0.0
        %v7724 = vmax.f32 %v7599, 0.0
        %v7725 = vmax.f32 %v7262, 0.0
        %v7726 = vmax.f32 %v7264, 0.0
        %v7727 = vmax.f32 %v7375, 0.0
        %v7728 = vmax.f32 %v7377, 0.0
        %v7729 = vmax.f32 %v7488, 0.0
        %v7730 = vmax.f32 %v7490, 0.0
        %v7731 = vmax.f32 %v7601, 0.0
        %v7732 = vmax.f32 %v7603, 0.0
        %v7733 = vpack.c.bf16 %v7613, %v7605
        %v7734 = vpack.c.bf16 %v7614, %v7606
        %v7735 = vpack.c.bf16 %v7615, %v7607
        %v7736 = vpack.c.bf16 %v7616, %v7608
        %v7737 = vpack.c.bf16 %v7617, %v7609
        %v7738 = vpack.c.bf16 %v7618, %v7610
        %v7739 = vpack.c.bf16 %v7619, %v7611
        %v7740 = vpack.c.bf16 %v7620, %v7612
        %v7741 = vpack.c.bf16 %v7629, %v7621
        %v7742 = vpack.c.bf16 %v7630, %v7622
        %v7743 = vpack.c.bf16 %v7631, %v7623
        %v7744 = vpack.c.bf16 %v7632, %v7624
        %v7745 = vpack.c.bf16 %v7633, %v7625
        %v7746 = vpack.c.bf16 %v7634, %v7626
        %v7747 = vpack.c.bf16 %v7635, %v7627
        %v7748 = vpack.c.bf16 %v7636, %v7628
        %v7749 = vpack.c.bf16 %v7645, %v7637
        %v7750 = vpack.c.bf16 %v7646, %v7638
        %v7751 = vpack.c.bf16 %v7647, %v7639
        %v7752 = vpack.c.bf16 %v7648, %v7640
        %v7753 = vpack.c.bf16 %v7649, %v7641
        %v7754 = vpack.c.bf16 %v7650, %v7642
        %v7755 = vpack.c.bf16 %v7651, %v7643
        %v7756 = vpack.c.bf16 %v7652, %v7644
        %v7757 = vpack.c.bf16 %v7661, %v7653
        %v7758 = vpack.c.bf16 %v7662, %v7654
        %v7759 = vpack.c.bf16 %v7663, %v7655
        %v7760 = vpack.c.bf16 %v7664, %v7656
        %v7761 = vpack.c.bf16 %v7665, %v7657
        %v7762 = vpack.c.bf16 %v7666, %v7658
        %v7763 = vpack.c.bf16 %v7667, %v7659
        %v7764 = vpack.c.bf16 %v7668, %v7660
        %v7765 = vpack.c.bf16 %v7677, %v7669
        %v7766 = vpack.c.bf16 %v7678, %v7670
        %v7767 = vpack.c.bf16 %v7679, %v7671
        %v7768 = vpack.c.bf16 %v7680, %v7672
        %v7769 = vpack.c.bf16 %v7681, %v7673
        %v7770 = vpack.c.bf16 %v7682, %v7674
        %v7771 = vpack.c.bf16 %v7683, %v7675
        %v7772 = vpack.c.bf16 %v7684, %v7676
        %v7773 = vpack.c.bf16 %v7693, %v7685
        %v7774 = vpack.c.bf16 %v7694, %v7686
        %v7775 = vpack.c.bf16 %v7695, %v7687
        %v7776 = vpack.c.bf16 %v7696, %v7688
        %v7777 = vpack.c.bf16 %v7697, %v7689
        %v7778 = vpack.c.bf16 %v7698, %v7690
        %v7779 = vpack.c.bf16 %v7699, %v7691
        %v7780 = vpack.c.bf16 %v7700, %v7692
        %v7781 = vpack.c.bf16 %v7709, %v7701
        %v7782 = vpack.c.bf16 %v7710, %v7702
        %v7783 = vpack.c.bf16 %v7711, %v7703
        %v7784 = vpack.c.bf16 %v7712, %v7704
        %v7785 = vpack.c.bf16 %v7713, %v7705
        %v7786 = vpack.c.bf16 %v7714, %v7706
        %v7787 = vpack.c.bf16 %v7715, %v7707
        %v7788 = vpack.c.bf16 %v7716, %v7708
        %v7789 = vpack.c.bf16 %v7725, %v7717
        %v7790 = vpack.c.bf16 %v7726, %v7718
        %v7791 = vpack.c.bf16 %v7727, %v7719
        %v7792 = vpack.c.bf16 %v7728, %v7720
        %v7793 = vpack.c.bf16 %v7729, %v7721
        %v7794 = vpack.c.bf16 %v7730, %v7722
        %v7795 = vpack.c.bf16 %v7731, %v7723
        %v7796 = vpack.c.bf16 %v7732, %v7724
        %v7797 = vld [vmem:[%s649] sm:$0xff]
        %v7798 = vld [vmem:[%s649 + $0x8] sm:$0xff]
        %v7799 = vld [vmem:[%s649 + $0x10] sm:$0xff]
        %v7800 = vld [vmem:[%s649 + $0x18] sm:$0xff]
        %v7801 = vld [vmem:[%s649 + $0x20] sm:$0xff]
        %v7802 = vld [vmem:[%s649 + $0x28] sm:$0xff]
        %v7803 = vld [vmem:[%s649 + $0x30] sm:$0xff]
        %v7804 = vld [vmem:[%s649 + $0x38] sm:$0xff]
        %v7805 = vld [vmem:[%s649 + $0x40] sm:$0xff]
        %v7806 = vld [vmem:[%s649 + $0x48] sm:$0xff]
        %v7807 = vld [vmem:[%s649 + $0x50] sm:$0xff]
        %v7808 = vld [vmem:[%s649 + $0x58] sm:$0xff]
        %v7809 = vld [vmem:[%s649 + $0x60] sm:$0xff]
        %v7810 = vld [vmem:[%s649 + $0x68] sm:$0xff]
        %v7811 = vld [vmem:[%s649 + $0x70] sm:$0xff]
        %v7812 = vld [vmem:[%s649 + $0x78] sm:$0xff]
        %v7813 = vld [vmem:[%s649 + $0x80] sm:$0xff]
        %v7814 = vld [vmem:[%s649 + $0x88] sm:$0xff]
        %v7815 = vld [vmem:[%s649 + $0x90] sm:$0xff]
        %v7816 = vld [vmem:[%s649 + $0x98] sm:$0xff]
        %v7817 = vld [vmem:[%s649 + $0xa0] sm:$0xff]
        %v7818 = vld [vmem:[%s649 + $0xa8] sm:$0xff]
        %v7819 = vld [vmem:[%s649 + $0xb0] sm:$0xff]
        %v7820 = vld [vmem:[%s649 + $0xb8] sm:$0xff]
        %v7821 = vld [vmem:[%s649 + $0xc0] sm:$0xff]
        %v7822 = vld [vmem:[%s649 + $0xc8] sm:$0xff]
        %v7823 = vld [vmem:[%s649 + $0xd0] sm:$0xff]
        %v7824 = vld [vmem:[%s649 + $0xd8] sm:$0xff]
        %v7825 = vld [vmem:[%s649 + $0xe0] sm:$0xff]
        %v7826 = vld [vmem:[%s649 + $0xe8] sm:$0xff]
        %v7827 = vld [vmem:[%s649 + $0xf0] sm:$0xff]
        %v7828 = vld [vmem:[%s649 + $0xf8] sm:$0xff]
        %v7829 = vld [vmem:[%s649 + $0x100] sm:$0xff]
        %v7830 = vld [vmem:[%s649 + $0x108] sm:$0xff]
        %v7831 = vld [vmem:[%s649 + $0x110] sm:$0xff]
        %v7832 = vld [vmem:[%s649 + $0x118] sm:$0xff]
        %v7833 = vld [vmem:[%s649 + $0x120] sm:$0xff]
        %v7834 = vld [vmem:[%s649 + $0x128] sm:$0xff]
        %v7835 = vld [vmem:[%s649 + $0x130] sm:$0xff]
        %v7836 = vld [vmem:[%s649 + $0x138] sm:$0xff]
        %v7837 = vld [vmem:[%s649 + $0x140] sm:$0xff]
        %v7838 = vld [vmem:[%s649 + $0x148] sm:$0xff]
        %v7839 = vld [vmem:[%s649 + $0x150] sm:$0xff]
        %v7840 = vld [vmem:[%s649 + $0x158] sm:$0xff]
        %v7841 = vld [vmem:[%s649 + $0x160] sm:$0xff]
        %v7842 = vld [vmem:[%s649 + $0x168] sm:$0xff]
        %v7843 = vld [vmem:[%s649 + $0x170] sm:$0xff]
        %v7844 = vld [vmem:[%s649 + $0x178] sm:$0xff]
        %v7845 = vld [vmem:[%s649 + $0x180] sm:$0xff]
        %v7846 = vld [vmem:[%s649 + $0x188] sm:$0xff]
        %v7847 = vld [vmem:[%s649 + $0x190] sm:$0xff]
        %v7848 = vld [vmem:[%s649 + $0x198] sm:$0xff]
        %v7849 = vld [vmem:[%s649 + $0x1a0] sm:$0xff]
        %v7850 = vld [vmem:[%s649 + $0x1a8] sm:$0xff]
        %v7851 = vld [vmem:[%s649 + $0x1b0] sm:$0xff]
        %v7852 = vld [vmem:[%s649 + $0x1b8] sm:$0xff]
        %v7853 = vld [vmem:[%s649 + $0x1c0] sm:$0xff]
        %v7854 = vld [vmem:[%s649 + $0x1c8] sm:$0xff]
        %v7855 = vld [vmem:[%s649 + $0x1d0] sm:$0xff]
        %v7856 = vld [vmem:[%s649 + $0x1d8] sm:$0xff]
        %v7857 = vld [vmem:[%s649 + $0x1e0] sm:$0xff]
        %v7858 = vld [vmem:[%s649 + $0x1e8] sm:$0xff]
        %v7859 = vld [vmem:[%s649 + $0x1f0] sm:$0xff]
        %v7860 = vld [vmem:[%s649 + $0x1f8] sm:$0xff]
        %v7861 = vld [vmem:[%s649 + $0x200] sm:$0xff]
        %v7862 = vld [vmem:[%s649 + $0x208] sm:$0xff]
        %v7863 = vld [vmem:[%s649 + $0x210] sm:$0xff]
        %v7864 = vld [vmem:[%s649 + $0x218] sm:$0xff]
        %v7865 = vld [vmem:[%s649 + $0x220] sm:$0xff]
        %v7866 = vld [vmem:[%s649 + $0x228] sm:$0xff]
        %v7867 = vld [vmem:[%s649 + $0x230] sm:$0xff]
        %v7868 = vld [vmem:[%s649 + $0x238] sm:$0xff]
        %v7869 = vld [vmem:[%s649 + $0x240] sm:$0xff]
        %v7870 = vld [vmem:[%s649 + $0x248] sm:$0xff]
        %v7871 = vld [vmem:[%s649 + $0x250] sm:$0xff]
        %v7872 = vld [vmem:[%s649 + $0x258] sm:$0xff]
        %v7873 = vld [vmem:[%s649 + $0x260] sm:$0xff]
        %v7874 = vld [vmem:[%s649 + $0x268] sm:$0xff]
        %v7875 = vld [vmem:[%s649 + $0x270] sm:$0xff]
        %v7876 = vld [vmem:[%s649 + $0x278] sm:$0xff]
        %v7877 = vld [vmem:[%s649 + $0x280] sm:$0xff]
        %v7878 = vld [vmem:[%s649 + $0x288] sm:$0xff]
        %v7879 = vld [vmem:[%s649 + $0x290] sm:$0xff]
        %v7880 = vld [vmem:[%s649 + $0x298] sm:$0xff]
        %v7881 = vld [vmem:[%s649 + $0x2a0] sm:$0xff]
        %v7882 = vld [vmem:[%s649 + $0x2a8] sm:$0xff]
        %v7883 = vld [vmem:[%s649 + $0x2b0] sm:$0xff]
        %v7884 = vld [vmem:[%s649 + $0x2b8] sm:$0xff]
        %v7885 = vld [vmem:[%s649 + $0x2c0] sm:$0xff]
        %v7886 = vld [vmem:[%s649 + $0x2c8] sm:$0xff]
        %v7887 = vld [vmem:[%s649 + $0x2d0] sm:$0xff]
        %v7888 = vld [vmem:[%s649 + $0x2d8] sm:$0xff]
        %v7889 = vld [vmem:[%s649 + $0x2e0] sm:$0xff]
        %v7890 = vld [vmem:[%s649 + $0x2e8] sm:$0xff]
        %v7891 = vld [vmem:[%s649 + $0x2f0] sm:$0xff]
        %v7892 = vld [vmem:[%s649 + $0x2f8] sm:$0xff]
        %v7893 = vld [vmem:[%s649 + $0x300] sm:$0xff]
        %v7894 = vld [vmem:[%s649 + $0x308] sm:$0xff]
        %v7895 = vld [vmem:[%s649 + $0x310] sm:$0xff]
        %v7896 = vld [vmem:[%s649 + $0x318] sm:$0xff]
        %v7897 = vld [vmem:[%s649 + $0x320] sm:$0xff]
        %v7898 = vld [vmem:[%s649 + $0x328] sm:$0xff]
        %v7899 = vld [vmem:[%s649 + $0x330] sm:$0xff]
        %v7900 = vld [vmem:[%s649 + $0x338] sm:$0xff]
        %v7901 = vld [vmem:[%s649 + $0x340] sm:$0xff]
        %v7902 = vld [vmem:[%s649 + $0x348] sm:$0xff]
        %v7903 = vld [vmem:[%s649 + $0x350] sm:$0xff]
        %v7904 = vld [vmem:[%s649 + $0x358] sm:$0xff]
        %v7905 = vld [vmem:[%s649 + $0x360] sm:$0xff]
        %v7906 = vld [vmem:[%s649 + $0x368] sm:$0xff]
        %v7907 = vld [vmem:[%s649 + $0x370] sm:$0xff]
        %v7908 = vld [vmem:[%s649 + $0x378] sm:$0xff]
        %v7909 = vld [vmem:[%s649 + $0x380] sm:$0xff]
        %v7910 = vld [vmem:[%s649 + $0x388] sm:$0xff]
        %v7911 = vld [vmem:[%s649 + $0x390] sm:$0xff]
        %v7912 = vld [vmem:[%s649 + $0x398] sm:$0xff]
        %v7913 = vld [vmem:[%s649 + $0x3a0] sm:$0xff]
        %v7914 = vld [vmem:[%s649 + $0x3a8] sm:$0xff]
        %v7915 = vld [vmem:[%s649 + $0x3b0] sm:$0xff]
        %v7916 = vld [vmem:[%s649 + $0x3b8] sm:$0xff]
        %v7917 = vld [vmem:[%s649 + $0x3c0] sm:$0xff]
        %v7918 = vld [vmem:[%s649 + $0x3c8] sm:$0xff]
        %v7919 = vld [vmem:[%s649 + $0x3d0] sm:$0xff]
        %v7920 = vld [vmem:[%s649 + $0x3d8] sm:$0xff]
        %v7921 = vld [vmem:[%s649 + $0x3e0] sm:$0xff]
        %v7922 = vld [vmem:[%s649 + $0x3e8] sm:$0xff]
        %v7923 = vld [vmem:[%s649 + $0x3f0] sm:$0xff]
        %v7924 = vld [vmem:[%s649 + $0x3f8] sm:$0xff]
        %v7925 = vld [vmem:[%s798] sm:$0x3]
        %v7927 = vlaneseq
        %v7928 = vshrl.u32 %v7927, 7
        %v7929 = vsub.s32 0, %v7928
        %v7930 = vrot.slane %v7925, %v7929
        %v7931 = vlaneseq
        %v7932 = vshrl.u32 %v7931, 7
        %v7933 = vsub.s32 1, %v7932
        %v7934 = vrot.slane %v7925, %v7933
        %v8065 = vunpack.c.l.b16 %v7797
        %v8066 = vunpack.c.h.b16 %v7797
        %v8067 = vunpack.c.l.b16 %v7798
        %v8068 = vunpack.c.h.b16 %v7798
        %v8069 = vunpack.c.l.b16 %v7799
        %v8070 = vunpack.c.h.b16 %v7799
        %v8071 = vunpack.c.l.b16 %v7800
        %v8072 = vunpack.c.h.b16 %v7800
        %v8073 = vunpack.c.l.b16 %v7801
        %v8074 = vunpack.c.h.b16 %v7801
        %v8075 = vunpack.c.l.b16 %v7802
        %v8076 = vunpack.c.h.b16 %v7802
        %v8077 = vunpack.c.l.b16 %v7803
        %v8078 = vunpack.c.h.b16 %v7803
        %v8079 = vunpack.c.l.b16 %v7804
        %v8080 = vunpack.c.h.b16 %v7804
        %v8081 = vunpack.c.l.b16 %v7805
        %v8082 = vunpack.c.h.b16 %v7805
        %v8083 = vunpack.c.l.b16 %v7806
        %v8084 = vunpack.c.h.b16 %v7806
        %v8085 = vunpack.c.l.b16 %v7807
        %v8086 = vunpack.c.h.b16 %v7807
        %v8087 = vunpack.c.l.b16 %v7808
        %v8088 = vunpack.c.h.b16 %v7808
        %v8089 = vunpack.c.l.b16 %v7809
        %v8090 = vunpack.c.h.b16 %v7809
        %v8091 = vunpack.c.l.b16 %v7810
        %v8092 = vunpack.c.h.b16 %v7810
        %v8093 = vunpack.c.l.b16 %v7811
        %v8094 = vunpack.c.h.b16 %v7811
        %v8095 = vunpack.c.l.b16 %v7812
        %v8096 = vunpack.c.h.b16 %v7812
        %v8097 = vunpack.c.l.b16 %v7813
        %v8098 = vunpack.c.h.b16 %v7813
        %v8099 = vunpack.c.l.b16 %v7814
        %v8100 = vunpack.c.h.b16 %v7814
        %v8101 = vunpack.c.l.b16 %v7815
        %v8102 = vunpack.c.h.b16 %v7815
        %v8103 = vunpack.c.l.b16 %v7816
        %v8104 = vunpack.c.h.b16 %v7816
        %v8105 = vunpack.c.l.b16 %v7817
        %v8106 = vunpack.c.h.b16 %v7817
        %v8107 = vunpack.c.l.b16 %v7818
        %v8108 = vunpack.c.h.b16 %v7818
        %v8109 = vunpack.c.l.b16 %v7819
        %v8110 = vunpack.c.h.b16 %v7819
        %v8111 = vunpack.c.l.b16 %v7820
        %v8112 = vunpack.c.h.b16 %v7820
        %v8113 = vunpack.c.l.b16 %v7821
        %v8114 = vunpack.c.h.b16 %v7821
        %v8115 = vunpack.c.l.b16 %v7822
        %v8116 = vunpack.c.h.b16 %v7822
        %v8117 = vunpack.c.l.b16 %v7823
        %v8118 = vunpack.c.h.b16 %v7823
        %v8119 = vunpack.c.l.b16 %v7824
        %v8120 = vunpack.c.h.b16 %v7824
        %v8121 = vunpack.c.l.b16 %v7825
        %v8122 = vunpack.c.h.b16 %v7825
        %v8123 = vunpack.c.l.b16 %v7826
        %v8124 = vunpack.c.h.b16 %v7826
        %v8125 = vunpack.c.l.b16 %v7827
        %v8126 = vunpack.c.h.b16 %v7827
        %v8127 = vunpack.c.l.b16 %v7828
        %v8128 = vunpack.c.h.b16 %v7828
        %v8129 = vunpack.c.l.b16 %v7829
        %v8130 = vunpack.c.h.b16 %v7829
        %v8131 = vunpack.c.l.b16 %v7830
        %v8132 = vunpack.c.h.b16 %v7830
        %v8133 = vunpack.c.l.b16 %v7831
        %v8134 = vunpack.c.h.b16 %v7831
        %v8135 = vunpack.c.l.b16 %v7832
        %v8136 = vunpack.c.h.b16 %v7832
        %v8137 = vunpack.c.l.b16 %v7833
        %v8138 = vunpack.c.h.b16 %v7833
        %v8139 = vunpack.c.l.b16 %v7834
        %v8140 = vunpack.c.h.b16 %v7834
        %v8141 = vunpack.c.l.b16 %v7835
        %v8142 = vunpack.c.h.b16 %v7835
        %v8143 = vunpack.c.l.b16 %v7836
        %v8144 = vunpack.c.h.b16 %v7836
        %v8145 = vunpack.c.l.b16 %v7837
        %v8146 = vunpack.c.h.b16 %v7837
        %v8147 = vunpack.c.l.b16 %v7838
        %v8148 = vunpack.c.h.b16 %v7838
        %v8149 = vunpack.c.l.b16 %v7839
        %v8150 = vunpack.c.h.b16 %v7839
        %v8151 = vunpack.c.l.b16 %v7840
        %v8152 = vunpack.c.h.b16 %v7840
        %v8153 = vunpack.c.l.b16 %v7841
        %v8154 = vunpack.c.h.b16 %v7841
        %v8155 = vunpack.c.l.b16 %v7842
        %v8156 = vunpack.c.h.b16 %v7842
        %v8157 = vunpack.c.l.b16 %v7843
        %v8158 = vunpack.c.h.b16 %v7843
        %v8159 = vunpack.c.l.b16 %v7844
        %v8160 = vunpack.c.h.b16 %v7844
        %v8161 = vunpack.c.l.b16 %v7845
        %v8162 = vunpack.c.h.b16 %v7845
        %v8163 = vunpack.c.l.b16 %v7846
        %v8164 = vunpack.c.h.b16 %v7846
        %v8165 = vunpack.c.l.b16 %v7847
        %v8166 = vunpack.c.h.b16 %v7847
        %v8167 = vunpack.c.l.b16 %v7848
        %v8168 = vunpack.c.h.b16 %v7848
        %v8169 = vunpack.c.l.b16 %v7849
        %v8170 = vunpack.c.h.b16 %v7849
        %v8171 = vunpack.c.l.b16 %v7850
        %v8172 = vunpack.c.h.b16 %v7850
        %v8173 = vunpack.c.l.b16 %v7851
        %v8174 = vunpack.c.h.b16 %v7851
        %v8175 = vunpack.c.l.b16 %v7852
        %v8176 = vunpack.c.h.b16 %v7852
        %v8177 = vunpack.c.l.b16 %v7853
        %v8178 = vunpack.c.h.b16 %v7853
        %v8179 = vunpack.c.l.b16 %v7854
        %v8180 = vunpack.c.h.b16 %v7854
        %v8181 = vunpack.c.l.b16 %v7855
        %v8182 = vunpack.c.h.b16 %v7855
        %v8183 = vunpack.c.l.b16 %v7856
        %v8184 = vunpack.c.h.b16 %v7856
        %v8185 = vunpack.c.l.b16 %v7857
        %v8186 = vunpack.c.h.b16 %v7857
        %v8187 = vunpack.c.l.b16 %v7858
        %v8188 = vunpack.c.h.b16 %v7858
        %v8189 = vunpack.c.l.b16 %v7859
        %v8190 = vunpack.c.h.b16 %v7859
        %v8191 = vunpack.c.l.b16 %v7860
        %v8192 = vunpack.c.h.b16 %v7860
        %v8193 = vunpack.c.l.b16 %v7861
        %v8194 = vunpack.c.h.b16 %v7861
        %v8195 = vunpack.c.l.b16 %v7862
        %v8196 = vunpack.c.h.b16 %v7862
        %v8197 = vunpack.c.l.b16 %v7863
        %v8198 = vunpack.c.h.b16 %v7863
        %v8199 = vunpack.c.l.b16 %v7864
        %v8200 = vunpack.c.h.b16 %v7864
        %v8201 = vunpack.c.l.b16 %v7865
        %v8202 = vunpack.c.h.b16 %v7865
        %v8203 = vunpack.c.l.b16 %v7866
        %v8204 = vunpack.c.h.b16 %v7866
        %v8205 = vunpack.c.l.b16 %v7867
        %v8206 = vunpack.c.h.b16 %v7867
        %v8207 = vunpack.c.l.b16 %v7868
        %v8208 = vunpack.c.h.b16 %v7868
        %v8209 = vunpack.c.l.b16 %v7869
        %v8210 = vunpack.c.h.b16 %v7869
        %v8211 = vunpack.c.l.b16 %v7870
        %v8212 = vunpack.c.h.b16 %v7870
        %v8213 = vunpack.c.l.b16 %v7871
        %v8214 = vunpack.c.h.b16 %v7871
        %v8215 = vunpack.c.l.b16 %v7872
        %v8216 = vunpack.c.h.b16 %v7872
        %v8217 = vunpack.c.l.b16 %v7873
        %v8218 = vunpack.c.h.b16 %v7873
        %v8219 = vunpack.c.l.b16 %v7874
        %v8220 = vunpack.c.h.b16 %v7874
        %v8221 = vunpack.c.l.b16 %v7875
        %v8222 = vunpack.c.h.b16 %v7875
        %v8223 = vunpack.c.l.b16 %v7876
        %v8224 = vunpack.c.h.b16 %v7876
        %v8225 = vunpack.c.l.b16 %v7877
        %v8226 = vunpack.c.h.b16 %v7877
        %v8227 = vunpack.c.l.b16 %v7878
        %v8228 = vunpack.c.h.b16 %v7878
        %v8229 = vunpack.c.l.b16 %v7879
        %v8230 = vunpack.c.h.b16 %v7879
        %v8231 = vunpack.c.l.b16 %v7880
        %v8232 = vunpack.c.h.b16 %v7880
        %v8233 = vunpack.c.l.b16 %v7881
        %v8234 = vunpack.c.h.b16 %v7881
        %v8235 = vunpack.c.l.b16 %v7882
        %v8236 = vunpack.c.h.b16 %v7882
        %v8237 = vunpack.c.l.b16 %v7883
        %v8238 = vunpack.c.h.b16 %v7883
        %v8239 = vunpack.c.l.b16 %v7884
        %v8240 = vunpack.c.h.b16 %v7884
        %v8241 = vunpack.c.l.b16 %v7885
        %v8242 = vunpack.c.h.b16 %v7885
        %v8243 = vunpack.c.l.b16 %v7886
        %v8244 = vunpack.c.h.b16 %v7886
        %v8245 = vunpack.c.l.b16 %v7887
        %v8246 = vunpack.c.h.b16 %v7887
        %v8247 = vunpack.c.l.b16 %v7888
        %v8248 = vunpack.c.h.b16 %v7888
        %v8249 = vunpack.c.l.b16 %v7889
        %v8250 = vunpack.c.h.b16 %v7889
        %v8251 = vunpack.c.l.b16 %v7890
        %v8252 = vunpack.c.h.b16 %v7890
        %v8253 = vunpack.c.l.b16 %v7891
        %v8254 = vunpack.c.h.b16 %v7891
        %v8255 = vunpack.c.l.b16 %v7892
        %v8256 = vunpack.c.h.b16 %v7892
        %v8257 = vunpack.c.l.b16 %v7893
        %v8258 = vunpack.c.h.b16 %v7893
        %v8259 = vunpack.c.l.b16 %v7894
        %v8260 = vunpack.c.h.b16 %v7894
        %v8261 = vunpack.c.l.b16 %v7895
        %v8262 = vunpack.c.h.b16 %v7895
        %v8263 = vunpack.c.l.b16 %v7896
        %v8264 = vunpack.c.h.b16 %v7896
        %v8265 = vunpack.c.l.b16 %v7897
        %v8266 = vunpack.c.h.b16 %v7897
        %v8267 = vunpack.c.l.b16 %v7898
        %v8268 = vunpack.c.h.b16 %v7898
        %v8269 = vunpack.c.l.b16 %v7899
        %v8270 = vunpack.c.h.b16 %v7899
        %v8271 = vunpack.c.l.b16 %v7900
        %v8272 = vunpack.c.h.b16 %v7900
        %v8273 = vunpack.c.l.b16 %v7901
        %v8274 = vunpack.c.h.b16 %v7901
        %v8275 = vunpack.c.l.b16 %v7902
        %v8276 = vunpack.c.h.b16 %v7902
        %v8277 = vunpack.c.l.b16 %v7903
        %v8278 = vunpack.c.h.b16 %v7903
        %v8279 = vunpack.c.l.b16 %v7904
        %v8280 = vunpack.c.h.b16 %v7904
        %v8281 = vunpack.c.l.b16 %v7905
        %v8282 = vunpack.c.h.b16 %v7905
        %v8283 = vunpack.c.l.b16 %v7906
        %v8284 = vunpack.c.h.b16 %v7906
        %v8285 = vunpack.c.l.b16 %v7907
        %v8286 = vunpack.c.h.b16 %v7907
        %v8287 = vunpack.c.l.b16 %v7908
        %v8288 = vunpack.c.h.b16 %v7908
        %v8289 = vunpack.c.l.b16 %v7909
        %v8290 = vunpack.c.h.b16 %v7909
        %v8291 = vunpack.c.l.b16 %v7910
        %v8292 = vunpack.c.h.b16 %v7910
        %v8293 = vunpack.c.l.b16 %v7911
        %v8294 = vunpack.c.h.b16 %v7911
        %v8295 = vunpack.c.l.b16 %v7912
        %v8296 = vunpack.c.h.b16 %v7912
        %v8297 = vunpack.c.l.b16 %v7913
        %v8298 = vunpack.c.h.b16 %v7913
        %v8299 = vunpack.c.l.b16 %v7914
        %v8300 = vunpack.c.h.b16 %v7914
        %v8301 = vunpack.c.l.b16 %v7915
        %v8302 = vunpack.c.h.b16 %v7915
        %v8303 = vunpack.c.l.b16 %v7916
        %v8304 = vunpack.c.h.b16 %v7916
        %v8305 = vunpack.c.l.b16 %v7917
        %v8306 = vunpack.c.h.b16 %v7917
        %v8307 = vunpack.c.l.b16 %v7918
        %v8308 = vunpack.c.h.b16 %v7918
        %v8309 = vunpack.c.l.b16 %v7919
        %v8310 = vunpack.c.h.b16 %v7919
        %v8311 = vunpack.c.l.b16 %v7920
        %v8312 = vunpack.c.h.b16 %v7920
        %v8313 = vunpack.c.l.b16 %v7921
        %v8314 = vunpack.c.h.b16 %v7921
        %v8315 = vunpack.c.l.b16 %v7922
        %v8316 = vunpack.c.h.b16 %v7922
        %v8317 = vunpack.c.l.b16 %v7923
        %v8318 = vunpack.c.h.b16 %v7923
        %v8319 = vunpack.c.l.b16 %v7924
        %v8320 = vunpack.c.h.b16 %v7924
        %v8321 = vpack.c.b16 %v8067, %v8065
        %v8322 = vpack.c.b16 %v8068, %v8066
        %v8323 = vpack.c.b16 %v8071, %v8069
        %v8324 = vpack.c.b16 %v8072, %v8070
        %v8325 = vpack.c.b16 %v8075, %v8073
        %v8326 = vpack.c.b16 %v8076, %v8074
        %v8327 = vpack.c.b16 %v8079, %v8077
        %v8328 = vpack.c.b16 %v8080, %v8078
        %v8329 = vpack.c.b16 %v8083, %v8081
        %v8330 = vpack.c.b16 %v8084, %v8082
        %v8331 = vpack.c.b16 %v8087, %v8085
        %v8332 = vpack.c.b16 %v8088, %v8086
        %v8333 = vpack.c.b16 %v8091, %v8089
        %v8334 = vpack.c.b16 %v8092, %v8090
        %v8335 = vpack.c.b16 %v8095, %v8093
        %v8336 = vpack.c.b16 %v8096, %v8094
        %v8337 = vpack.c.b16 %v8099, %v8097
        %v8338 = vpack.c.b16 %v8100, %v8098
        %v8339 = vpack.c.b16 %v8103, %v8101
        %v8340 = vpack.c.b16 %v8104, %v8102
        %v8341 = vpack.c.b16 %v8107, %v8105
        %v8342 = vpack.c.b16 %v8108, %v8106
        %v8343 = vpack.c.b16 %v8111, %v8109
        %v8344 = vpack.c.b16 %v8112, %v8110
        %v8345 = vpack.c.b16 %v8115, %v8113
        %v8346 = vpack.c.b16 %v8116, %v8114
        %v8347 = vpack.c.b16 %v8119, %v8117
        %v8348 = vpack.c.b16 %v8120, %v8118
        %v8349 = vpack.c.b16 %v8123, %v8121
        %v8350 = vpack.c.b16 %v8124, %v8122
        %v8351 = vpack.c.b16 %v8127, %v8125
        %v8352 = vpack.c.b16 %v8128, %v8126
        %v8353 = vpack.c.b16 %v8131, %v8129
        %v8354 = vpack.c.b16 %v8132, %v8130
        %v8355 = vpack.c.b16 %v8135, %v8133
        %v8356 = vpack.c.b16 %v8136, %v8134
        %v8357 = vpack.c.b16 %v8139, %v8137
        %v8358 = vpack.c.b16 %v8140, %v8138
        %v8359 = vpack.c.b16 %v8143, %v8141
        %v8360 = vpack.c.b16 %v8144, %v8142
        %v8361 = vpack.c.b16 %v8147, %v8145
        %v8362 = vpack.c.b16 %v8148, %v8146
        %v8363 = vpack.c.b16 %v8151, %v8149
        %v8364 = vpack.c.b16 %v8152, %v8150
        %v8365 = vpack.c.b16 %v8155, %v8153
        %v8366 = vpack.c.b16 %v8156, %v8154
        %v8367 = vpack.c.b16 %v8159, %v8157
        %v8368 = vpack.c.b16 %v8160, %v8158
        %v8369 = vpack.c.b16 %v8163, %v8161
        %v8370 = vpack.c.b16 %v8164, %v8162
        %v8371 = vpack.c.b16 %v8167, %v8165
        %v8372 = vpack.c.b16 %v8168, %v8166
        %v8373 = vpack.c.b16 %v8171, %v8169
        %v8374 = vpack.c.b16 %v8172, %v8170
        %v8375 = vpack.c.b16 %v8175, %v8173
        %v8376 = vpack.c.b16 %v8176, %v8174
        %v8377 = vpack.c.b16 %v8179, %v8177
        %v8378 = vpack.c.b16 %v8180, %v8178
        %v8379 = vpack.c.b16 %v8183, %v8181
        %v8380 = vpack.c.b16 %v8184, %v8182
        %v8381 = vpack.c.b16 %v8187, %v8185
        %v8382 = vpack.c.b16 %v8188, %v8186
        %v8383 = vpack.c.b16 %v8191, %v8189
        %v8384 = vpack.c.b16 %v8192, %v8190
        %v8385 = vpack.c.b16 %v8195, %v8193
        %v8386 = vpack.c.b16 %v8196, %v8194
        %v8387 = vpack.c.b16 %v8199, %v8197
        %v8388 = vpack.c.b16 %v8200, %v8198
        %v8389 = vpack.c.b16 %v8203, %v8201
        %v8390 = vpack.c.b16 %v8204, %v8202
        %v8391 = vpack.c.b16 %v8207, %v8205
        %v8392 = vpack.c.b16 %v8208, %v8206
        %v8393 = vpack.c.b16 %v8211, %v8209
        %v8394 = vpack.c.b16 %v8212, %v8210
        %v8395 = vpack.c.b16 %v8215, %v8213
        %v8396 = vpack.c.b16 %v8216, %v8214
        %v8397 = vpack.c.b16 %v8219, %v8217
        %v8398 = vpack.c.b16 %v8220, %v8218
        %v8399 = vpack.c.b16 %v8223, %v8221
        %v8400 = vpack.c.b16 %v8224, %v8222
        %v8401 = vpack.c.b16 %v8227, %v8225
        %v8402 = vpack.c.b16 %v8228, %v8226
        %v8403 = vpack.c.b16 %v8231, %v8229
        %v8404 = vpack.c.b16 %v8232, %v8230
        %v8405 = vpack.c.b16 %v8235, %v8233
        %v8406 = vpack.c.b16 %v8236, %v8234
        %v8407 = vpack.c.b16 %v8239, %v8237
        %v8408 = vpack.c.b16 %v8240, %v8238
        %v8409 = vpack.c.b16 %v8243, %v8241
        %v8410 = vpack.c.b16 %v8244, %v8242
        %v8411 = vpack.c.b16 %v8247, %v8245
        %v8412 = vpack.c.b16 %v8248, %v8246
        %v8413 = vpack.c.b16 %v8251, %v8249
        %v8414 = vpack.c.b16 %v8252, %v8250
        %v8415 = vpack.c.b16 %v8255, %v8253
        %v8416 = vpack.c.b16 %v8256, %v8254
        %v8417 = vpack.c.b16 %v8259, %v8257
        %v8418 = vpack.c.b16 %v8260, %v8258
        %v8419 = vpack.c.b16 %v8263, %v8261
        %v8420 = vpack.c.b16 %v8264, %v8262
        %v8421 = vpack.c.b16 %v8267, %v8265
        %v8422 = vpack.c.b16 %v8268, %v8266
        %v8423 = vpack.c.b16 %v8271, %v8269
        %v8424 = vpack.c.b16 %v8272, %v8270
        %v8425 = vpack.c.b16 %v8275, %v8273
        %v8426 = vpack.c.b16 %v8276, %v8274
        %v8427 = vpack.c.b16 %v8279, %v8277
        %v8428 = vpack.c.b16 %v8280, %v8278
        %v8429 = vpack.c.b16 %v8283, %v8281
        %v8430 = vpack.c.b16 %v8284, %v8282
        %v8431 = vpack.c.b16 %v8287, %v8285
        %v8432 = vpack.c.b16 %v8288, %v8286
        %v8433 = vpack.c.b16 %v8291, %v8289
        %v8434 = vpack.c.b16 %v8292, %v8290
        %v8435 = vpack.c.b16 %v8295, %v8293
        %v8436 = vpack.c.b16 %v8296, %v8294
        %v8437 = vpack.c.b16 %v8299, %v8297
        %v8438 = vpack.c.b16 %v8300, %v8298
        %v8439 = vpack.c.b16 %v8303, %v8301
        %v8440 = vpack.c.b16 %v8304, %v8302
        %v8441 = vpack.c.b16 %v8307, %v8305
        %v8442 = vpack.c.b16 %v8308, %v8306
        %v8443 = vpack.c.b16 %v8311, %v8309
        %v8444 = vpack.c.b16 %v8312, %v8310
        %v8445 = vpack.c.b16 %v8315, %v8313
        %v8446 = vpack.c.b16 %v8316, %v8314
        %v8447 = vpack.c.b16 %v8319, %v8317
        %v8448 = vpack.c.b16 %v8320, %v8318
        %8577 = vmatprep.subr.bf16.mxu0 %v8322
        %8578 = vmatpush1.bf16.msra.mxu0 %v8321
        %8579 = vmatprep.subr.bf16.mxu0 %v8324
        %8580 = vmatpush1.bf16.msra.mxu0 %v8323
        %8581 = vmatprep.subr.bf16.mxu0 %v8326
        %8582 = vmatpush1.bf16.msra.mxu0 %v8325
        %8583 = vmatprep.subr.bf16.mxu0 %v8328
        %8584 = vmatpush1.bf16.msra.mxu0 %v8327
        %8585 = vmatprep.subr.bf16.mxu0 %v8330
        %8586 = vmatpush1.bf16.msra.mxu0 %v8329
        %8587 = vmatprep.subr.bf16.mxu0 %v8332
        %8588 = vmatpush1.bf16.msra.mxu0 %v8331
        %8589 = vmatprep.subr.bf16.mxu0 %v8334
        %8590 = vmatpush1.bf16.msra.mxu0 %v8333
        %8591 = vmatprep.subr.bf16.mxu0 %v8336
        %8592 = vmatpush1.bf16.msra.mxu0 %v8335
        %8593 = vmatprep.subr.bf16.mxu0 %v8338
        %8594 = vmatpush1.bf16.msra.mxu0 %v8337
        %8595 = vmatprep.subr.bf16.mxu0 %v8340
        %8596 = vmatpush1.bf16.msra.mxu0 %v8339
        %8597 = vmatprep.subr.bf16.mxu0 %v8342
        %8598 = vmatpush1.bf16.msra.mxu0 %v8341
        %8599 = vmatprep.subr.bf16.mxu0 %v8344
        %8600 = vmatpush1.bf16.msra.mxu0 %v8343
        %8601 = vmatprep.subr.bf16.mxu0 %v8346
        %8602 = vmatpush1.bf16.msra.mxu0 %v8345
        %8603 = vmatprep.subr.bf16.mxu0 %v8348
        %8604 = vmatpush1.bf16.msra.mxu0 %v8347
        %8605 = vmatprep.subr.bf16.mxu0 %v8350
        %8606 = vmatpush1.bf16.msra.mxu0 %v8349
        %8607 = vmatprep.subr.bf16.mxu0 %v8352
        %8608 = vmatpush1.bf16.msra.mxu0 %v8351
        %8609 = vmatprep.mubr.bf16.mxu0 %v7734
        %8610 = vmatmul.mubr.bf16.gmra.mrb[0].mxu0 %v7733
        %v8611 = vpop.f32.mrb[0].mxu0
        %v8612 = vadd.f32 %v7930, %v8611
        %v8613 = vpop.f32.mrb[0].mxu0
        %v8614 = vadd.f32 %v7934, %v8613
        %v8615 = vpop.f32.mrb[0].mxu0
        %v8616 = vadd.f32 %v7930, %v8615
        %v8617 = vpop.f32.mrb[0].mxu0
        %v8618 = vadd.f32 %v7934, %v8617
        %8619 = vmatprep.mubr.bf16.mxu0 %v7742
        %8620 = vmatmul.mubr.bf16.gmra.mrb[0].mxu0 %v7741
        %v8621 = vpop.f32.mrb[0].mxu0
        %v8622 = vadd.f32 %v7930, %v8621
        %v8623 = vpop.f32.mrb[0].mxu0
        %v8624 = vadd.f32 %v7934, %v8623
        %v8625 = vpop.f32.mrb[0].mxu0
        %v8626 = vadd.f32 %v7930, %v8625
        %v8627 = vpop.f32.mrb[0].mxu0
        %v8628 = vadd.f32 %v7934, %v8627
        %8629 = vmatprep.mubr.bf16.mxu0 %v7750
        %8630 = vmatmul.mubr.bf16.gmra.mrb[0].mxu0 %v7749
        %v8631 = vpop.f32.mrb[0].mxu0
        %v8632 = vadd.f32 %v7930, %v8631
        %v8633 = vpop.f32.mrb[0].mxu0
        %v8634 = vadd.f32 %v7934, %v8633
        %v8635 = vpop.f32.mrb[0].mxu0
        %v8636 = vadd.f32 %v7930, %v8635
        %v8637 = vpop.f32.mrb[0].mxu0
        %v8638 = vadd.f32 %v7934, %v8637
        %8639 = vmatprep.mubr.bf16.mxu0 %v7758
        %8640 = vmatmul.mubr.bf16.gmra.mrb[0].mxu0 %v7757
        %v8641 = vpop.f32.mrb[0].mxu0
        %v8642 = vadd.f32 %v7930, %v8641
        %v8643 = vpop.f32.mrb[0].mxu0
        %v8644 = vadd.f32 %v7934, %v8643
        %v8645 = vpop.f32.mrb[0].mxu0
        %v8646 = vadd.f32 %v7930, %v8645
        %v8647 = vpop.f32.mrb[0].mxu0
        %v8648 = vadd.f32 %v7934, %v8647
        %8649 = vmatprep.mubr.bf16.mxu0 %v7766
        %8650 = vmatmul.mubr.bf16.gmra.mrb[0].mxu0 %v7765
        %v8651 = vpop.f32.mrb[0].mxu0
        %v8652 = vadd.f32 %v7930, %v8651
        %v8653 = vpop.f32.mrb[0].mxu0
        %v8654 = vadd.f32 %v7934, %v8653
        %v8655 = vpop.f32.mrb[0].mxu0
        %v8656 = vadd.f32 %v7930, %v8655
        %v8657 = vpop.f32.mrb[0].mxu0
        %v8658 = vadd.f32 %v7934, %v8657
        %8659 = vmatprep.mubr.bf16.mxu0 %v7774
        %8660 = vmatmul.mubr.bf16.gmra.mrb[0].mxu0 %v7773
        %v8661 = vpop.f32.mrb[0].mxu0
        %v8662 = vadd.f32 %v7930, %v8661
        %v8663 = vpop.f32.mrb[0].mxu0
        %v8664 = vadd.f32 %v7934, %v8663
        %v8665 = vpop.f32.mrb[0].mxu0
        %v8666 = vadd.f32 %v7930, %v8665
        %v8667 = vpop.f32.mrb[0].mxu0
        %v8668 = vadd.f32 %v7934, %v8667
        %8669 = vmatprep.mubr.bf16.mxu0 %v7782
        %8670 = vmatmul.mubr.bf16.gmra.mrb[0].mxu0 %v7781
        %v8671 = vpop.f32.mrb[0].mxu0
        %v8672 = vadd.f32 %v7930, %v8671
        %v8673 = vpop.f32.mrb[0].mxu0
        %v8674 = vadd.f32 %v7934, %v8673
        %v8675 = vpop.f32.mrb[0].mxu0
        %v8676 = vadd.f32 %v7930, %v8675
        %v8677 = vpop.f32.mrb[0].mxu0
        %v8678 = vadd.f32 %v7934, %v8677
        %8679 = vmatprep.mubr.bf16.mxu0 %v7790
        %8680 = vmatmul.mubr.bf16.gmra.mrb[0].mxu0 %v7789
        %v8681 = vpop.f32.mrb[0].mxu0
        %v8682 = vadd.f32 %v7930, %v8681
        %v8683 = vpop.f32.mrb[0].mxu0
        %v8684 = vadd.f32 %v7934, %v8683
        %v8685 = vpop.f32.mrb[0].mxu0
        %v8686 = vadd.f32 %v7930, %v8685
        %v8687 = vpop.f32.mrb[0].mxu0
        %v8688 = vadd.f32 %v7934, %v8687
        %8689 = vdwg.mxu0
        %8690 = vmatprep.subr.bf16.mxu0 %v8354
        %8691 = vmatpush1.bf16.msra.mxu0 %v8353
        %8692 = vmatprep.subr.bf16.mxu0 %v8356
        %8693 = vmatpush1.bf16.msra.mxu0 %v8355
        %8694 = vmatprep.subr.bf16.mxu0 %v8358
        %8695 = vmatpush1.bf16.msra.mxu0 %v8357
        %8696 = vmatprep.subr.bf16.mxu0 %v8360
        %8697 = vmatpush1.bf16.msra.mxu0 %v8359
        %8698 = vmatprep.subr.bf16.mxu0 %v8362
        %8699 = vmatpush1.bf16.msra.mxu0 %v8361
        %8700 = vmatprep.subr.bf16.mxu0 %v8364
        %8701 = vmatpush1.bf16.msra.mxu0 %v8363
        %8702 = vmatprep.subr.bf16.mxu0 %v8366
        %8703 = vmatpush1.bf16.msra.mxu0 %v8365
        %8704 = vmatprep.subr.bf16.mxu0 %v8368
        %8705 = vmatpush1.bf16.msra.mxu0 %v8367
        %8706 = vmatprep.subr.bf16.mxu0 %v8370
        %8707 = vmatpush1.bf16.msra.mxu0 %v8369
        %8708 = vmatprep.subr.bf16.mxu0 %v8372
        %8709 = vmatpush1.bf16.msra.mxu0 %v8371
        %8710 = vmatprep.subr.bf16.mxu0 %v8374
        %8711 = vmatpush1.bf16.msra.mxu0 %v8373
        %8712 = vmatprep.subr.bf16.mxu0 %v8376
        %8713 = vmatpush1.bf16.msra.mxu0 %v8375
        %8714 = vmatprep.subr.bf16.mxu0 %v8378
        %8715 = vmatpush1.bf16.msra.mxu0 %v8377
        %8716 = vmatprep.subr.bf16.mxu0 %v8380
        %8717 = vmatpush1.bf16.msra.mxu0 %v8379
        %8718 = vmatprep.subr.bf16.mxu0 %v8382
        %8719 = vmatpush1.bf16.msra.mxu0 %v8381
        %8720 = vmatprep.subr.bf16.mxu0 %v8384
        %8721 = vmatpush1.bf16.msra.mxu0 %v8383
        %8722 = vmatprep.mubr.bf16.mxu0 %v7736
        %8723 = vmatmul.mubr.bf16.gmra.mrb[0].mxu0 %v7735
        %v8724 = vpop.f32.mrb[0].mxu0
        %v8725 = vadd.f32 %v8612, %v8724
        %v8726 = vpop.f32.mrb[0].mxu0
        %v8727 = vadd.f32 %v8614, %v8726
        %v8728 = vpop.f32.mrb[0].mxu0
        %v8729 = vadd.f32 %v8616, %v8728
        %v8730 = vpop.f32.mrb[0].mxu0
        %v8731 = vadd.f32 %v8618, %v8730
        %8732 = vmatprep.mubr.bf16.mxu0 %v7744
        %8733 = vmatmul.mubr.bf16.gmra.mrb[0].mxu0 %v7743
        %v8734 = vpop.f32.mrb[0].mxu0
        %v8735 = vadd.f32 %v8622, %v8734
        %v8736 = vpop.f32.mrb[0].mxu0
        %v8737 = vadd.f32 %v8624, %v8736
        %v8738 = vpop.f32.mrb[0].mxu0
        %v8739 = vadd.f32 %v8626, %v8738
        %v8740 = vpop.f32.mrb[0].mxu0
        %v8741 = vadd.f32 %v8628, %v8740
        %8742 = vmatprep.mubr.bf16.mxu0 %v7752
        %8743 = vmatmul.mubr.bf16.gmra.mrb[0].mxu0 %v7751
        %v8744 = vpop.f32.mrb[0].mxu0
        %v8745 = vadd.f32 %v8632, %v8744
        %v8746 = vpop.f32.mrb[0].mxu0
        %v8747 = vadd.f32 %v8634, %v8746
        %v8748 = vpop.f32.mrb[0].mxu0
        %v8749 = vadd.f32 %v8636, %v8748
        %v8750 = vpop.f32.mrb[0].mxu0
        %v8751 = vadd.f32 %v8638, %v8750
        %8752 = vmatprep.mubr.bf16.mxu0 %v7760
        %8753 = vmatmul.mubr.bf16.gmra.mrb[0].mxu0 %v7759
        %v8754 = vpop.f32.mrb[0].mxu0
        %v8755 = vadd.f32 %v8642, %v8754
        %v8756 = vpop.f32.mrb[0].mxu0
        %v8757 = vadd.f32 %v8644, %v8756
        %v8758 = vpop.f32.mrb[0].mxu0
        %v8759 = vadd.f32 %v8646, %v8758
        %v8760 = vpop.f32.mrb[0].mxu0
        %v8761 = vadd.f32 %v8648, %v8760
        %8762 = vmatprep.mubr.bf16.mxu0 %v7768
        %8763 = vmatmul.mubr.bf16.gmra.mrb[0].mxu0 %v7767
        %v8764 = vpop.f32.mrb[0].mxu0
        %v8765 = vadd.f32 %v8652, %v8764
        %v8766 = vpop.f32.mrb[0].mxu0
        %v8767 = vadd.f32 %v8654, %v8766
        %v8768 = vpop.f32.mrb[0].mxu0
        %v8769 = vadd.f32 %v8656, %v8768
        %v8770 = vpop.f32.mrb[0].mxu0
        %v8771 = vadd.f32 %v8658, %v8770
        %8772 = vmatprep.mubr.bf16.mxu0 %v7776
        %8773 = vmatmul.mubr.bf16.gmra.mrb[0].mxu0 %v7775
        %v8774 = vpop.f32.mrb[0].mxu0
        %v8775 = vadd.f32 %v8662, %v8774
        %v8776 = vpop.f32.mrb[0].mxu0
        %v8777 = vadd.f32 %v8664, %v8776
        %v8778 = vpop.f32.mrb[0].mxu0
        %v8779 = vadd.f32 %v8666, %v8778
        %v8780 = vpop.f32.mrb[0].mxu0
        %v8781 = vadd.f32 %v8668, %v8780
        %8782 = vmatprep.mubr.bf16.mxu0 %v7784
        %8783 = vmatmul.mubr.bf16.gmra.mrb[0].mxu0 %v7783
        %v8784 = vpop.f32.mrb[0].mxu0
        %v8785 = vadd.f32 %v8672, %v8784
        %v8786 = vpop.f32.mrb[0].mxu0
        %v8787 = vadd.f32 %v8674, %v8786
        %v8788 = vpop.f32.mrb[0].mxu0
        %v8789 = vadd.f32 %v8676, %v8788
        %v8790 = vpop.f32.mrb[0].mxu0
        %v8791 = vadd.f32 %v8678, %v8790
        %8792 = vmatprep.mubr.bf16.mxu0 %v7792
        %8793 = vmatmul.mubr.bf16.gmra.mrb[0].mxu0 %v7791
        %v8794 = vpop.f32.mrb[0].mxu0
        %v8795 = vadd.f32 %v8682, %v8794
        %v8796 = vpop.f32.mrb[0].mxu0
        %v8797 = vadd.f32 %v8684, %v8796
        %v8798 = vpop.f32.mrb[0].mxu0
        %v8799 = vadd.f32 %v8686, %v8798
        %v8800 = vpop.f32.mrb[0].mxu0
        %v8801 = vadd.f32 %v8688, %v8800
        %8802 = vdwg.mxu0
        %8803 = vmatprep.subr.bf16.mxu0 %v8386
        %8804 = vmatpush1.bf16.msra.mxu0 %v8385
        %8805 = vmatprep.subr.bf16.mxu0 %v8388
        %8806 = vmatpush1.bf16.msra.mxu0 %v8387
        %8807 = vmatprep.subr.bf16.mxu0 %v8390
        %8808 = vmatpush1.bf16.msra.mxu0 %v8389
        %8809 = vmatprep.subr.bf16.mxu0 %v8392
        %8810 = vmatpush1.bf16.msra.mxu0 %v8391
        %8811 = vmatprep.subr.bf16.mxu0 %v8394
        %8812 = vmatpush1.bf16.msra.mxu0 %v8393
        %8813 = vmatprep.subr.bf16.mxu0 %v8396
        %8814 = vmatpush1.bf16.msra.mxu0 %v8395
        %8815 = vmatprep.subr.bf16.mxu0 %v8398
        %8816 = vmatpush1.bf16.msra.mxu0 %v8397
        %8817 = vmatprep.subr.bf16.mxu0 %v8400
        %8818 = vmatpush1.bf16.msra.mxu0 %v8399
        %8819 = vmatprep.subr.bf16.mxu0 %v8402
        %8820 = vmatpush1.bf16.msra.mxu0 %v8401
        %8821 = vmatprep.subr.bf16.mxu0 %v8404
        %8822 = vmatpush1.bf16.msra.mxu0 %v8403
        %8823 = vmatprep.subr.bf16.mxu0 %v8406
        %8824 = vmatpush1.bf16.msra.mxu0 %v8405
        %8825 = vmatprep.subr.bf16.mxu0 %v8408
        %8826 = vmatpush1.bf16.msra.mxu0 %v8407
        %8827 = vmatprep.subr.bf16.mxu0 %v8410
        %8828 = vmatpush1.bf16.msra.mxu0 %v8409
        %8829 = vmatprep.subr.bf16.mxu0 %v8412
        %8830 = vmatpush1.bf16.msra.mxu0 %v8411
        %8831 = vmatprep.subr.bf16.mxu0 %v8414
        %8832 = vmatpush1.bf16.msra.mxu0 %v8413
        %8833 = vmatprep.subr.bf16.mxu0 %v8416
        %8834 = vmatpush1.bf16.msra.mxu0 %v8415
        %8835 = vmatprep.mubr.bf16.mxu0 %v7738
        %8836 = vmatmul.mubr.bf16.gmra.mrb[0].mxu0 %v7737
        %v8837 = vpop.f32.mrb[0].mxu0
        %v8838 = vadd.f32 %v8725, %v8837
        %v8839 = vpop.f32.mrb[0].mxu0
        %v8840 = vadd.f32 %v8727, %v8839
        %v8841 = vpop.f32.mrb[0].mxu0
        %v8842 = vadd.f32 %v8729, %v8841
        %v8843 = vpop.f32.mrb[0].mxu0
        %v8844 = vadd.f32 %v8731, %v8843
        %8845 = vmatprep.mubr.bf16.mxu0 %v7746
        %8846 = vmatmul.mubr.bf16.gmra.mrb[0].mxu0 %v7745
        %v8847 = vpop.f32.mrb[0].mxu0
        %v8848 = vadd.f32 %v8735, %v8847
        %v8849 = vpop.f32.mrb[0].mxu0
        %v8850 = vadd.f32 %v8737, %v8849
        %v8851 = vpop.f32.mrb[0].mxu0
        %v8852 = vadd.f32 %v8739, %v8851
        %v8853 = vpop.f32.mrb[0].mxu0
        %v8854 = vadd.f32 %v8741, %v8853
        %8855 = vmatprep.mubr.bf16.mxu0 %v7754
        %8856 = vmatmul.mubr.bf16.gmra.mrb[0].mxu0 %v7753
        %v8857 = vpop.f32.mrb[0].mxu0
        %v8858 = vadd.f32 %v8745, %v8857
        %v8859 = vpop.f32.mrb[0].mxu0
        %v8860 = vadd.f32 %v8747, %v8859
        %v8861 = vpop.f32.mrb[0].mxu0
        %v8862 = vadd.f32 %v8749, %v8861
        %v8863 = vpop.f32.mrb[0].mxu0
        %v8864 = vadd.f32 %v8751, %v8863
        %8865 = vmatprep.mubr.bf16.mxu0 %v7762
        %8866 = vmatmul.mubr.bf16.gmra.mrb[0].mxu0 %v7761
        %v8867 = vpop.f32.mrb[0].mxu0
        %v8868 = vadd.f32 %v8755, %v8867
        %v8869 = vpop.f32.mrb[0].mxu0
        %v8870 = vadd.f32 %v8757, %v8869
        %v8871 = vpop.f32.mrb[0].mxu0
        %v8872 = vadd.f32 %v8759, %v8871
        %v8873 = vpop.f32.mrb[0].mxu0
        %v8874 = vadd.f32 %v8761, %v8873
        %8875 = vmatprep.mubr.bf16.mxu0 %v7770
        %8876 = vmatmul.mubr.bf16.gmra.mrb[0].mxu0 %v7769
        %v8877 = vpop.f32.mrb[0].mxu0
        %v8878 = vadd.f32 %v8765, %v8877
        %v8879 = vpop.f32.mrb[0].mxu0
        %v8880 = vadd.f32 %v8767, %v8879
        %v8881 = vpop.f32.mrb[0].mxu0
        %v8882 = vadd.f32 %v8769, %v8881
        %v8883 = vpop.f32.mrb[0].mxu0
        %v8884 = vadd.f32 %v8771, %v8883
        %8885 = vmatprep.mubr.bf16.mxu0 %v7778
        %8886 = vmatmul.mubr.bf16.gmra.mrb[0].mxu0 %v7777
        %v8887 = vpop.f32.mrb[0].mxu0
        %v8888 = vadd.f32 %v8775, %v8887
        %v8889 = vpop.f32.mrb[0].mxu0
        %v8890 = vadd.f32 %v8777, %v8889
        %v8891 = vpop.f32.mrb[0].mxu0
        %v8892 = vadd.f32 %v8779, %v8891
        %v8893 = vpop.f32.mrb[0].mxu0
        %v8894 = vadd.f32 %v8781, %v8893
        %8895 = vmatprep.mubr.bf16.mxu0 %v7786
        %8896 = vmatmul.mubr.bf16.gmra.mrb[0].mxu0 %v7785
        %v8897 = vpop.f32.mrb[0].mxu0
        %v8898 = vadd.f32 %v8785, %v8897
        %v8899 = vpop.f32.mrb[0].mxu0
        %v8900 = vadd.f32 %v8787, %v8899
        %v8901 = vpop.f32.mrb[0].mxu0
        %v8902 = vadd.f32 %v8789, %v8901
        %v8903 = vpop.f32.mrb[0].mxu0
        %v8904 = vadd.f32 %v8791, %v8903
        %8905 = vmatprep.mubr.bf16.mxu0 %v7794
        %8906 = vmatmul.mubr.bf16.gmra.mrb[0].mxu0 %v7793
        %v8907 = vpop.f32.mrb[0].mxu0
        %v8908 = vadd.f32 %v8795, %v8907
        %v8909 = vpop.f32.mrb[0].mxu0
        %v8910 = vadd.f32 %v8797, %v8909
        %v8911 = vpop.f32.mrb[0].mxu0
        %v8912 = vadd.f32 %v8799, %v8911
        %v8913 = vpop.f32.mrb[0].mxu0
        %v8914 = vadd.f32 %v8801, %v8913
        %8915 = vdwg.mxu0
        %8916 = vmatprep.subr.bf16.mxu0 %v8418
        %8917 = vmatpush1.bf16.msra.mxu0 %v8417
        %8918 = vmatprep.subr.bf16.mxu0 %v8420
        %8919 = vmatpush1.bf16.msra.mxu0 %v8419
        %8920 = vmatprep.subr.bf16.mxu0 %v8422
        %8921 = vmatpush1.bf16.msra.mxu0 %v8421
        %8922 = vmatprep.subr.bf16.mxu0 %v8424
        %8923 = vmatpush1.bf16.msra.mxu0 %v8423
        %8924 = vmatprep.subr.bf16.mxu0 %v8426
        %8925 = vmatpush1.bf16.msra.mxu0 %v8425
        %8926 = vmatprep.subr.bf16.mxu0 %v8428
        %8927 = vmatpush1.bf16.msra.mxu0 %v8427
        %8928 = vmatprep.subr.bf16.mxu0 %v8430
        %8929 = vmatpush1.bf16.msra.mxu0 %v8429
        %8930 = vmatprep.subr.bf16.mxu0 %v8432
        %8931 = vmatpush1.bf16.msra.mxu0 %v8431
        %8932 = vmatprep.subr.bf16.mxu0 %v8434
        %8933 = vmatpush1.bf16.msra.mxu0 %v8433
        %8934 = vmatprep.subr.bf16.mxu0 %v8436
        %8935 = vmatpush1.bf16.msra.mxu0 %v8435
        %8936 = vmatprep.subr.bf16.mxu0 %v8438
        %8937 = vmatpush1.bf16.msra.mxu0 %v8437
        %8938 = vmatprep.subr.bf16.mxu0 %v8440
        %8939 = vmatpush1.bf16.msra.mxu0 %v8439
        %8940 = vmatprep.subr.bf16.mxu0 %v8442
        %8941 = vmatpush1.bf16.msra.mxu0 %v8441
        %8942 = vmatprep.subr.bf16.mxu0 %v8444
        %8943 = vmatpush1.bf16.msra.mxu0 %v8443
        %8944 = vmatprep.subr.bf16.mxu0 %v8446
        %8945 = vmatpush1.bf16.msra.mxu0 %v8445
        %8946 = vmatprep.subr.bf16.mxu0 %v8448
        %8947 = vmatpush1.bf16.msra.mxu0 %v8447
        %8948 = vmatprep.mubr.bf16.mxu0 %v7740
        %8949 = vmatmul.mubr.bf16.gmra.mrb[0].mxu0 %v7739
        %v8950 = vpop.f32.mrb[0].mxu0
        %v8951 = vadd.f32 %v8838, %v8950
        %v8952 = vpop.f32.mrb[0].mxu0
        %v8953 = vadd.f32 %v8840, %v8952
        %v8954 = vpop.f32.mrb[0].mxu0
        %v8955 = vadd.f32 %v8842, %v8954
        %v8956 = vpop.f32.mrb[0].mxu0
        %v8957 = vadd.f32 %v8844, %v8956
        %8958 = vmatprep.mubr.bf16.mxu0 %v7748
        %8959 = vmatmul.mubr.bf16.gmra.mrb[0].mxu0 %v7747
        %v8960 = vpop.f32.mrb[0].mxu0
        %v8961 = vadd.f32 %v8848, %v8960
        %v8962 = vpop.f32.mrb[0].mxu0
        %v8963 = vadd.f32 %v8850, %v8962
        %v8964 = vpop.f32.mrb[0].mxu0
        %v8965 = vadd.f32 %v8852, %v8964
        %v8966 = vpop.f32.mrb[0].mxu0
        %v8967 = vadd.f32 %v8854, %v8966
        %8968 = vmatprep.mubr.bf16.mxu0 %v7756
        %8969 = vmatmul.mubr.bf16.gmra.mrb[0].mxu0 %v7755
        %v8970 = vpop.f32.mrb[0].mxu0
        %v8971 = vadd.f32 %v8858, %v8970
        %v8972 = vpop.f32.mrb[0].mxu0
        %v8973 = vadd.f32 %v8860, %v8972
        %v8974 = vpop.f32.mrb[0].mxu0
        %v8975 = vadd.f32 %v8862, %v8974
        %v8976 = vpop.f32.mrb[0].mxu0
        %v8977 = vadd.f32 %v8864, %v8976
        %8978 = vmatprep.mubr.bf16.mxu0 %v7764
        %8979 = vmatmul.mubr.bf16.gmra.mrb[0].mxu0 %v7763
        %v8980 = vpop.f32.mrb[0].mxu0
        %v8981 = vadd.f32 %v8868, %v8980
        %v8982 = vpop.f32.mrb[0].mxu0
        %v8983 = vadd.f32 %v8870, %v8982
        %v8984 = vpop.f32.mrb[0].mxu0
        %v8985 = vadd.f32 %v8872, %v8984
        %v8986 = vpop.f32.mrb[0].mxu0
        %v8987 = vadd.f32 %v8874, %v8986
        %8988 = vmatprep.mubr.bf16.mxu0 %v7772
        %8989 = vmatmul.mubr.bf16.gmra.mrb[0].mxu0 %v7771
        %v8990 = vpop.f32.mrb[0].mxu0
        %v8991 = vadd.f32 %v8878, %v8990
        %v8992 = vpop.f32.mrb[0].mxu0
        %v8993 = vadd.f32 %v8880, %v8992
        %v8994 = vpop.f32.mrb[0].mxu0
        %v8995 = vadd.f32 %v8882, %v8994
        %v8996 = vpop.f32.mrb[0].mxu0
        %v8997 = vadd.f32 %v8884, %v8996
        %8998 = vmatprep.mubr.bf16.mxu0 %v7780
        %8999 = vmatmul.mubr.bf16.gmra.mrb[0].mxu0 %v7779
        %v9000 = vpop.f32.mrb[0].mxu0
        %v9001 = vadd.f32 %v8888, %v9000
        %v9002 = vpop.f32.mrb[0].mxu0
        %v9003 = vadd.f32 %v8890, %v9002
        %v9004 = vpop.f32.mrb[0].mxu0
        %v9005 = vadd.f32 %v8892, %v9004
        %v9006 = vpop.f32.mrb[0].mxu0
        %v9007 = vadd.f32 %v8894, %v9006
        %9008 = vmatprep.mubr.bf16.mxu0 %v7788
        %9009 = vmatmul.mubr.bf16.gmra.mrb[0].mxu0 %v7787
        %v9010 = vpop.f32.mrb[0].mxu0
        %v9011 = vadd.f32 %v8898, %v9010
        %v9012 = vpop.f32.mrb[0].mxu0
        %v9013 = vadd.f32 %v8900, %v9012
        %v9014 = vpop.f32.mrb[0].mxu0
        %v9015 = vadd.f32 %v8902, %v9014
        %v9016 = vpop.f32.mrb[0].mxu0
        %v9017 = vadd.f32 %v8904, %v9016
        %9018 = vmatprep.mubr.bf16.mxu0 %v7796
        %9019 = vmatmul.mubr.bf16.gmra.mrb[0].mxu0 %v7795
        %v9020 = vpop.f32.mrb[0].mxu0
        %v9021 = vadd.f32 %v8908, %v9020
        %v9022 = vpop.f32.mrb[0].mxu0
        %v9023 = vadd.f32 %v8910, %v9022
        %v9024 = vpop.f32.mrb[0].mxu0
        %v9025 = vadd.f32 %v8912, %v9024
        %v9026 = vpop.f32.mrb[0].mxu0
        %v9027 = vadd.f32 %v8914, %v9026
        %9028 = vdwg.mxu0
        %v9029 = vadd.f32 %v6295, %v8951
        %v9030 = vadd.f32 %v6296, %v8953
        %v9031 = vadd.f32 %v6297, %v8955
        %v9032 = vadd.f32 %v6298, %v8957
        %v9033 = vadd.f32 %v6299, %v8961
        %v9034 = vadd.f32 %v6300, %v8963
        %v9035 = vadd.f32 %v6301, %v8965
        %v9036 = vadd.f32 %v6302, %v8967
        %v9037 = vadd.f32 %v6303, %v8971
        %v9038 = vadd.f32 %v6304, %v8973
        %v9039 = vadd.f32 %v6305, %v8975
        %v9040 = vadd.f32 %v6306, %v8977
        %v9041 = vadd.f32 %v6307, %v8981
        %v9042 = vadd.f32 %v6308, %v8983
        %v9043 = vadd.f32 %v6309, %v8985
        %v9044 = vadd.f32 %v6310, %v8987
        %v9045 = vadd.f32 %v6311, %v8991
        %v9046 = vadd.f32 %v6312, %v8993
        %v9047 = vadd.f32 %v6313, %v8995
        %v9048 = vadd.f32 %v6314, %v8997
        %v9049 = vadd.f32 %v6315, %v9001
        %v9050 = vadd.f32 %v6316, %v9003
        %v9051 = vadd.f32 %v6317, %v9005
        %v9052 = vadd.f32 %v6318, %v9007
        %v9053 = vadd.f32 %v6319, %v9011
        %v9054 = vadd.f32 %v6320, %v9013
        %v9055 = vadd.f32 %v6321, %v9015
        %v9056 = vadd.f32 %v6322, %v9017
        %v9057 = vadd.f32 %v6323, %v9021
        %v9058 = vadd.f32 %v6324, %v9023
        %v9059 = vadd.f32 %v6325, %v9025
        %v9060 = vadd.f32 %v6326, %v9027
        %v9061 = vld [vmem:[%s802] sm:$0x3]
        %v9062 = vld [vmem:[%s658] sm:$0x3]
        %v9063 = vadd.f32 %v9029, %v9030
        %9064 = vadd.xlane.f32.xlu0 %v9063
        %v9065 = vpop.xlane.xlu0 %9064
        %v9066 = vadd.f32 %v9031, %v9032
        %9067 = vadd.xlane.f32.xlu0 %v9066
        %v9068 = vpop.xlane.xlu0 %9067
        %v9069 = vadd.f32 %v9033, %v9034
        %9070 = vadd.xlane.f32.xlu0 %v9069
        %v9071 = vpop.xlane.xlu0 %9070
        %v9072 = vadd.f32 %v9035, %v9036
        %9073 = vadd.xlane.f32.xlu0 %v9072
        %v9074 = vpop.xlane.xlu0 %9073
        %v9075 = vadd.f32 %v9037, %v9038
        %9076 = vadd.xlane.f32.xlu0 %v9075
        %v9077 = vpop.xlane.xlu0 %9076
        %v9078 = vadd.f32 %v9039, %v9040
        %9079 = vadd.xlane.f32.xlu0 %v9078
        %v9080 = vpop.xlane.xlu0 %9079
        %v9081 = vadd.f32 %v9041, %v9042
        %9082 = vadd.xlane.f32.xlu0 %v9081
        %v9083 = vpop.xlane.xlu0 %9082
        %v9084 = vadd.f32 %v9043, %v9044
        %9085 = vadd.xlane.f32.xlu0 %v9084
        %v9086 = vpop.xlane.xlu0 %9085
        %v9087 = vadd.f32 %v9045, %v9046
        %9088 = vadd.xlane.f32.xlu0 %v9087
        %v9089 = vpop.xlane.xlu0 %9088
        %v9090 = vadd.f32 %v9047, %v9048
        %9091 = vadd.xlane.f32.xlu0 %v9090
        %v9092 = vpop.xlane.xlu0 %9091
        %v9093 = vadd.f32 %v9049, %v9050
        %9094 = vadd.xlane.f32.xlu0 %v9093
        %v9095 = vpop.xlane.xlu0 %9094
        %v9096 = vadd.f32 %v9051, %v9052
        %9097 = vadd.xlane.f32.xlu0 %v9096
        %v9098 = vpop.xlane.xlu0 %9097
        %v9099 = vadd.f32 %v9053, %v9054
        %9100 = vadd.xlane.f32.xlu0 %v9099
        %v9101 = vpop.xlane.xlu0 %9100
        %v9102 = vadd.f32 %v9055, %v9056
        %9103 = vadd.xlane.f32.xlu0 %v9102
        %v9104 = vpop.xlane.xlu0 %9103
        %v9105 = vadd.f32 %v9057, %v9058
        %9106 = vadd.xlane.f32.xlu0 %v9105
        %v9107 = vpop.xlane.xlu0 %9106
        %v9108 = vadd.f32 %v9059, %v9060
        %9109 = vadd.xlane.f32.xlu0 %v9108
        %v9110 = vpop.xlane.xlu0 %9109
        %v9111 = vmul.f32 %v9065, %v6032
        %v9112 = vmul.f32 %v9068, %v6032
        %v9113 = vmul.f32 %v9071, %v6032
        %v9114 = vmul.f32 %v9074, %v6032
        %v9115 = vmul.f32 %v9077, %v6032
        %v9116 = vmul.f32 %v9080, %v6032
        %v9117 = vmul.f32 %v9083, %v6032
        %v9118 = vmul.f32 %v9086, %v6032
        %v9119 = vmul.f32 %v9089, %v6032
        %v9120 = vmul.f32 %v9092, %v6032
        %v9121 = vmul.f32 %v9095, %v6032
        %v9122 = vmul.f32 %v9098, %v6032
        %v9123 = vmul.f32 %v9101, %v6032
        %v9124 = vmul.f32 %v9104, %v6032
        %v9125 = vmul.f32 %v9107, %v6032
        %v9126 = vmul.f32 %v9110, %v6032
        %v9127 = vsub.f32 %v9029, %v9111
        %v9128 = vsub.f32 %v9030, %v9111
        %v9129 = vsub.f32 %v9031, %v9112
        %v9130 = vsub.f32 %v9032, %v9112
        %v9131 = vsub.f32 %v9033, %v9113
        %v9132 = vsub.f32 %v9034, %v9113
        %v9133 = vsub.f32 %v9035, %v9114
        %v9134 = vsub.f32 %v9036, %v9114
        %v9135 = vsub.f32 %v9037, %v9115
        %v9136 = vsub.f32 %v9038, %v9115
        %v9137 = vsub.f32 %v9039, %v9116
        %v9138 = vsub.f32 %v9040, %v9116
        %v9139 = vsub.f32 %v9041, %v9117
        %v9140 = vsub.f32 %v9042, %v9117
        %v9141 = vsub.f32 %v9043, %v9118
        %v9142 = vsub.f32 %v9044, %v9118
        %v9143 = vsub.f32 %v9045, %v9119
        %v9144 = vsub.f32 %v9046, %v9119
        %v9145 = vsub.f32 %v9047, %v9120
        %v9146 = vsub.f32 %v9048, %v9120
        %v9147 = vsub.f32 %v9049, %v9121
        %v9148 = vsub.f32 %v9050, %v9121
        %v9149 = vsub.f32 %v9051, %v9122
        %v9150 = vsub.f32 %v9052, %v9122
        %v9151 = vsub.f32 %v9053, %v9123
        %v9152 = vsub.f32 %v9054, %v9123
        %v9153 = vsub.f32 %v9055, %v9124
        %v9154 = vsub.f32 %v9056, %v9124
        %v9155 = vsub.f32 %v9057, %v9125
        %v9156 = vsub.f32 %v9058, %v9125
        %v9157 = vsub.f32 %v9059, %v9126
        %v9158 = vsub.f32 %v9060, %v9126
        %v9159 = vmul.f32 %v9127, %v9127
        %v9160 = vmul.f32 %v9128, %v9128
        %v9161 = vmul.f32 %v9129, %v9129
        %v9162 = vmul.f32 %v9130, %v9130
        %v9163 = vmul.f32 %v9131, %v9131
        %v9164 = vmul.f32 %v9132, %v9132
        %v9165 = vmul.f32 %v9133, %v9133
        %v9166 = vmul.f32 %v9134, %v9134
        %v9167 = vmul.f32 %v9135, %v9135
        %v9168 = vmul.f32 %v9136, %v9136
        %v9169 = vmul.f32 %v9137, %v9137
        %v9170 = vmul.f32 %v9138, %v9138
        %v9171 = vmul.f32 %v9139, %v9139
        %v9172 = vmul.f32 %v9140, %v9140
        %v9173 = vmul.f32 %v9141, %v9141
        %v9174 = vmul.f32 %v9142, %v9142
        %v9175 = vmul.f32 %v9143, %v9143
        %v9176 = vmul.f32 %v9144, %v9144
        %v9177 = vmul.f32 %v9145, %v9145
        %v9178 = vmul.f32 %v9146, %v9146
        %v9179 = vmul.f32 %v9147, %v9147
        %v9180 = vmul.f32 %v9148, %v9148
        %v9181 = vmul.f32 %v9149, %v9149
        %v9182 = vmul.f32 %v9150, %v9150
        %v9183 = vmul.f32 %v9151, %v9151
        %v9184 = vmul.f32 %v9152, %v9152
        %v9185 = vmul.f32 %v9153, %v9153
        %v9186 = vmul.f32 %v9154, %v9154
        %v9187 = vmul.f32 %v9155, %v9155
        %v9188 = vmul.f32 %v9156, %v9156
        %v9189 = vmul.f32 %v9157, %v9157
        %v9190 = vmul.f32 %v9158, %v9158
        %v9191 = vadd.f32 %v9159, %v9160
        %9192 = vadd.xlane.f32.xlu0 %v9191
        %v9193 = vpop.xlane.xlu0 %9192
        %v9194 = vadd.f32 %v9161, %v9162
        %9195 = vadd.xlane.f32.xlu0 %v9194
        %v9196 = vpop.xlane.xlu0 %9195
        %v9197 = vadd.f32 %v9163, %v9164
        %9198 = vadd.xlane.f32.xlu0 %v9197
        %v9199 = vpop.xlane.xlu0 %9198
        %v9200 = vadd.f32 %v9165, %v9166
        %9201 = vadd.xlane.f32.xlu0 %v9200
        %v9202 = vpop.xlane.xlu0 %9201
        %v9203 = vadd.f32 %v9167, %v9168
        %9204 = vadd.xlane.f32.xlu0 %v9203
        %v9205 = vpop.xlane.xlu0 %9204
        %v9206 = vadd.f32 %v9169, %v9170
        %9207 = vadd.xlane.f32.xlu0 %v9206
        %v9208 = vpop.xlane.xlu0 %9207
        %v9209 = vadd.f32 %v9171, %v9172
        %9210 = vadd.xlane.f32.xlu0 %v9209
        %v9211 = vpop.xlane.xlu0 %9210
        %v9212 = vadd.f32 %v9173, %v9174
        %9213 = vadd.xlane.f32.xlu0 %v9212
        %v9214 = vpop.xlane.xlu0 %9213
        %v9215 = vadd.f32 %v9175, %v9176
        %9216 = vadd.xlane.f32.xlu0 %v9215
        %v9217 = vpop.xlane.xlu0 %9216
        %v9218 = vadd.f32 %v9177, %v9178
        %9219 = vadd.xlane.f32.xlu0 %v9218
        %v9220 = vpop.xlane.xlu0 %9219
        %v9221 = vadd.f32 %v9179, %v9180
        %9222 = vadd.xlane.f32.xlu0 %v9221
        %v9223 = vpop.xlane.xlu0 %9222
        %v9224 = vadd.f32 %v9181, %v9182
        %9225 = vadd.xlane.f32.xlu0 %v9224
        %v9226 = vpop.xlane.xlu0 %9225
        %v9227 = vadd.f32 %v9183, %v9184
        %9228 = vadd.xlane.f32.xlu0 %v9227
        %v9229 = vpop.xlane.xlu0 %9228
        %v9230 = vadd.f32 %v9185, %v9186
        %9231 = vadd.xlane.f32.xlu0 %v9230
        %v9232 = vpop.xlane.xlu0 %9231
        %v9233 = vadd.f32 %v9187, %v9188
        %9234 = vadd.xlane.f32.xlu0 %v9233
        %v9235 = vpop.xlane.xlu0 %9234
        %v9236 = vadd.f32 %v9189, %v9190
        %9237 = vadd.xlane.f32.xlu0 %v9236
        %v9238 = vpop.xlane.xlu0 %9237
        %v9239 = vmul.f32 %v9193, %v6032
        %v9240 = vmul.f32 %v9196, %v6032
        %v9241 = vmul.f32 %v9199, %v6032
        %v9242 = vmul.f32 %v9202, %v6032
        %v9243 = vmul.f32 %v9205, %v6032
        %v9244 = vmul.f32 %v9208, %v6032
        %v9245 = vmul.f32 %v9211, %v6032
        %v9246 = vmul.f32 %v9214, %v6032
        %v9247 = vmul.f32 %v9217, %v6032
        %v9248 = vmul.f32 %v9220, %v6032
        %v9249 = vmul.f32 %v9223, %v6032
        %v9250 = vmul.f32 %v9226, %v6032
        %v9251 = vmul.f32 %v9229, %v6032
        %v9252 = vmul.f32 %v9232, %v6032
        %v9253 = vmul.f32 %v9235, %v6032
        %v9254 = vmul.f32 %v9238, %v6032
        %v9255 = vadd.f32 %v9239, 1e-05
        %v9256 = vadd.f32 %v9240, 1e-05
        %v9257 = vadd.f32 %v9241, 1e-05
        %v9258 = vadd.f32 %v9242, 1e-05
        %v9259 = vadd.f32 %v9243, 1e-05
        %v9260 = vadd.f32 %v9244, 1e-05
        %v9261 = vadd.f32 %v9245, 1e-05
        %v9262 = vadd.f32 %v9246, 1e-05
        %v9263 = vadd.f32 %v9247, 1e-05
        %v9264 = vadd.f32 %v9248, 1e-05
        %v9265 = vadd.f32 %v9249, 1e-05
        %v9266 = vadd.f32 %v9250, 1e-05
        %v9267 = vadd.f32 %v9251, 1e-05
        %v9268 = vadd.f32 %v9252, 1e-05
        %v9269 = vadd.f32 %v9253, 1e-05
        %v9270 = vadd.f32 %v9254, 1e-05
        %v9271 = vrsqrt.pop %v9255
        %v9272 = vrsqrt.pop %v9256
        %v9273 = vrsqrt.pop %v9257
        %v9274 = vrsqrt.pop %v9258
        %v9275 = vrsqrt.pop %v9259
        %v9276 = vrsqrt.pop %v9260
        %v9277 = vrsqrt.pop %v9261
        %v9278 = vrsqrt.pop %v9262
        %v9279 = vrsqrt.pop %v9263
        %v9280 = vrsqrt.pop %v9264
        %v9281 = vrsqrt.pop %v9265
        %v9282 = vrsqrt.pop %v9266
        %v9283 = vrsqrt.pop %v9267
        %v9284 = vrsqrt.pop %v9268
        %v9285 = vrsqrt.pop %v9269
        %v9286 = vrsqrt.pop %v9270
        %v9287 = vmul.f32 %v9127, %v9271
        %v9288 = vmul.f32 %v9128, %v9271
        %v9289 = vmul.f32 %v9129, %v9272
        %v9290 = vmul.f32 %v9130, %v9272
        %v9291 = vmul.f32 %v9131, %v9273
        %v9292 = vmul.f32 %v9132, %v9273
        %v9293 = vmul.f32 %v9133, %v9274
        %v9294 = vmul.f32 %v9134, %v9274
        %v9295 = vmul.f32 %v9135, %v9275
        %v9296 = vmul.f32 %v9136, %v9275
        %v9297 = vmul.f32 %v9137, %v9276
        %v9298 = vmul.f32 %v9138, %v9276
        %v9299 = vmul.f32 %v9139, %v9277
        %v9300 = vmul.f32 %v9140, %v9277
        %v9301 = vmul.f32 %v9141, %v9278
        %v9302 = vmul.f32 %v9142, %v9278
        %v9303 = vmul.f32 %v9143, %v9279
        %v9304 = vmul.f32 %v9144, %v9279
        %v9305 = vmul.f32 %v9145, %v9280
        %v9306 = vmul.f32 %v9146, %v9280
        %v9307 = vmul.f32 %v9147, %v9281
        %v9308 = vmul.f32 %v9148, %v9281
        %v9309 = vmul.f32 %v9149, %v9282
        %v9310 = vmul.f32 %v9150, %v9282
        %v9311 = vmul.f32 %v9151, %v9283
        %v9312 = vmul.f32 %v9152, %v9283
        %v9313 = vmul.f32 %v9153, %v9284
        %v9314 = vmul.f32 %v9154, %v9284
        %v9315 = vmul.f32 %v9155, %v9285
        %v9316 = vmul.f32 %v9156, %v9285
        %v9317 = vmul.f32 %v9157, %v9286
        %v9318 = vmul.f32 %v9158, %v9286
        %v9320 = vlaneseq
        %v9321 = vshrl.u32 %v9320, 7
        %v9322 = vsub.s32 0, %v9321
        %v9323 = vrot.slane %v9061, %v9322
        %v9324 = vlaneseq
        %v9325 = vshrl.u32 %v9324, 7
        %v9326 = vsub.s32 1, %v9325
        %v9327 = vrot.slane %v9061, %v9326
        %v9330 = vmul.f32 %v9287, %v9323
        %v9331 = vmul.f32 %v9288, %v9327
        %v9332 = vmul.f32 %v9289, %v9323
        %v9333 = vmul.f32 %v9290, %v9327
        %v9334 = vmul.f32 %v9291, %v9323
        %v9335 = vmul.f32 %v9292, %v9327
        %v9336 = vmul.f32 %v9293, %v9323
        %v9337 = vmul.f32 %v9294, %v9327
        %v9338 = vmul.f32 %v9295, %v9323
        %v9339 = vmul.f32 %v9296, %v9327
        %v9340 = vmul.f32 %v9297, %v9323
        %v9341 = vmul.f32 %v9298, %v9327
        %v9342 = vmul.f32 %v9299, %v9323
        %v9343 = vmul.f32 %v9300, %v9327
        %v9344 = vmul.f32 %v9301, %v9323
        %v9345 = vmul.f32 %v9302, %v9327
        %v9346 = vmul.f32 %v9303, %v9323
        %v9347 = vmul.f32 %v9304, %v9327
        %v9348 = vmul.f32 %v9305, %v9323
        %v9349 = vmul.f32 %v9306, %v9327
        %v9350 = vmul.f32 %v9307, %v9323
        %v9351 = vmul.f32 %v9308, %v9327
        %v9352 = vmul.f32 %v9309, %v9323
        %v9353 = vmul.f32 %v9310, %v9327
        %v9354 = vmul.f32 %v9311, %v9323
        %v9355 = vmul.f32 %v9312, %v9327
        %v9356 = vmul.f32 %v9313, %v9323
        %v9357 = vmul.f32 %v9314, %v9327
        %v9358 = vmul.f32 %v9315, %v9323
        %v9359 = vmul.f32 %v9316, %v9327
        %v9360 = vmul.f32 %v9317, %v9323
        %v9361 = vmul.f32 %v9318, %v9327
        %v9363 = vlaneseq
        %v9364 = vshrl.u32 %v9363, 7
        %v9365 = vsub.s32 0, %v9364
        %v9366 = vrot.slane %v9062, %v9365
        %v9367 = vlaneseq
        %v9368 = vshrl.u32 %v9367, 7
        %v9369 = vsub.s32 1, %v9368
        %v9370 = vrot.slane %v9062, %v9369
        %v9373 = vadd.f32 %v9330, %v9366
        %v9374 = vadd.f32 %v9331, %v9370
        %v9375 = vadd.f32 %v9332, %v9366
        %v9376 = vadd.f32 %v9333, %v9370
        %v9377 = vadd.f32 %v9334, %v9366
        %v9378 = vadd.f32 %v9335, %v9370
        %v9379 = vadd.f32 %v9336, %v9366
        %v9380 = vadd.f32 %v9337, %v9370
        %v9381 = vadd.f32 %v9338, %v9366
        %v9382 = vadd.f32 %v9339, %v9370
        %v9383 = vadd.f32 %v9340, %v9366
        %v9384 = vadd.f32 %v9341, %v9370
        %v9385 = vadd.f32 %v9342, %v9366
        %v9386 = vadd.f32 %v9343, %v9370
        %v9387 = vadd.f32 %v9344, %v9366
        %v9388 = vadd.f32 %v9345, %v9370
        %v9389 = vadd.f32 %v9346, %v9366
        %v9390 = vadd.f32 %v9347, %v9370
        %v9391 = vadd.f32 %v9348, %v9366
        %v9392 = vadd.f32 %v9349, %v9370
        %v9393 = vadd.f32 %v9350, %v9366
        %v9394 = vadd.f32 %v9351, %v9370
        %v9395 = vadd.f32 %v9352, %v9366
        %v9396 = vadd.f32 %v9353, %v9370
        %v9397 = vadd.f32 %v9354, %v9366
        %v9398 = vadd.f32 %v9355, %v9370
        %v9399 = vadd.f32 %v9356, %v9366
        %v9400 = vadd.f32 %v9357, %v9370
        %v9401 = vadd.f32 %v9358, %v9366
        %v9402 = vadd.f32 %v9359, %v9370
        %v9403 = vadd.f32 %v9360, %v9366
        %v9404 = vadd.f32 %v9361, %v9370
        %9405 = vst [vmem:[%s1990] sm:$0xff] %v9373
        %9406 = vst [vmem:[%s1990 + $0x8] sm:$0xff] %v9374
        %9407 = vst [vmem:[%s1990 + $0x10] sm:$0xff] %v9375
        %9408 = vst [vmem:[%s1990 + $0x18] sm:$0xff] %v9376
        %9409 = vst [vmem:[%s1990 + $0x20] sm:$0xff] %v9377
        %9410 = vst [vmem:[%s1990 + $0x28] sm:$0xff] %v9378
        %9411 = vst [vmem:[%s1990 + $0x30] sm:$0xff] %v9379
        %9412 = vst [vmem:[%s1990 + $0x38] sm:$0xff] %v9380
        %9413 = vst [vmem:[%s1990 + $0x40] sm:$0xff] %v9381
        %9414 = vst [vmem:[%s1990 + $0x48] sm:$0xff] %v9382
        %9415 = vst [vmem:[%s1990 + $0x50] sm:$0xff] %v9383
        %9416 = vst [vmem:[%s1990 + $0x58] sm:$0xff] %v9384
        %9417 = vst [vmem:[%s1990 + $0x60] sm:$0xff] %v9385
        %9418 = vst [vmem:[%s1990 + $0x68] sm:$0xff] %v9386
        %9419 = vst [vmem:[%s1990 + $0x70] sm:$0xff] %v9387
        %9420 = vst [vmem:[%s1990 + $0x78] sm:$0xff] %v9388
        %9421 = vst [vmem:[%s1990 + $0x80] sm:$0xff] %v9389
        %9422 = vst [vmem:[%s1990 + $0x88] sm:$0xff] %v9390
        %9423 = vst [vmem:[%s1990 + $0x90] sm:$0xff] %v9391
        %9424 = vst [vmem:[%s1990 + $0x98] sm:$0xff] %v9392
        %9425 = vst [vmem:[%s1990 + $0xa0] sm:$0xff] %v9393
        %9426 = vst [vmem:[%s1990 + $0xa8] sm:$0xff] %v9394
        %9427 = vst [vmem:[%s1990 + $0xb0] sm:$0xff] %v9395
        %9428 = vst [vmem:[%s1990 + $0xb8] sm:$0xff] %v9396
        %9429 = vst [vmem:[%s1990 + $0xc0] sm:$0xff] %v9397
        %9430 = vst [vmem:[%s1990 + $0xc8] sm:$0xff] %v9398
        %9431 = vst [vmem:[%s1990 + $0xd0] sm:$0xff] %v9399
        %9432 = vst [vmem:[%s1990 + $0xd8] sm:$0xff] %v9400
        %9433 = vst [vmem:[%s1990 + $0xe0] sm:$0xff] %v9401
        %9434 = vst [vmem:[%s1990 + $0xe8] sm:$0xff] %v9402
        %9435 = vst [vmem:[%s1990 + $0xf0] sm:$0xff] %v9403
        %9436 = vst [vmem:[%s1990 + $0xf8] sm:$0xff] %v9404
        %p9437 = scmp.eq.s32.totalorder %s38, 3
        // Predicated region
        $region101: #{forward.2} parent=83 // pred_check
          %p9438 = pneg %p9437
        $region102: #{forward.2} parent=83 // pred_check_branch
          %9440 = sbr.rel (%p9438) target = $region104
        $region103: #{forward.2} parent=83 // pred_region
          %v9441 = vld [vmem:[#allocation2] sm:$0xff]
          %v9442 = vld [vmem:[#allocation2 + $0x8] sm:$0xff]
          %v9443 = vld [vmem:[#allocation2 + $0x10] sm:$0xff]
          %v9444 = vld [vmem:[#allocation2 + $0x18] sm:$0xff]
          %v9445 = vld [vmem:[#allocation2 + $0x20] sm:$0xff]
          %v9446 = vld [vmem:[#allocation2 + $0x28] sm:$0xff]
          %v9447 = vld [vmem:[#allocation2 + $0x30] sm:$0xff]
          %v9448 = vld [vmem:[#allocation2 + $0x38] sm:$0xff]
          %v9449 = vld [vmem:[#allocation2 + $0x40] sm:$0xff]
          %v9450 = vld [vmem:[#allocation2 + $0x48] sm:$0xff]
          %v9451 = vld [vmem:[#allocation2 + $0x50] sm:$0xff]
          %v9452 = vld [vmem:[#allocation2 + $0x58] sm:$0xff]
          %v9453 = vld [vmem:[#allocation2 + $0x60] sm:$0xff]
          %v9454 = vld [vmem:[#allocation2 + $0x68] sm:$0xff]
          %v9455 = vld [vmem:[#allocation2 + $0x70] sm:$0xff]
          %v9456 = vld [vmem:[#allocation2 + $0x78] sm:$0xff]
          %v9457 = vld [vmem:[#allocation2 + $0x80] sm:$0xff]
          %v9458 = vld [vmem:[#allocation2 + $0x88] sm:$0xff]
          %v9459 = vld [vmem:[#allocation2 + $0x90] sm:$0xff]
          %v9460 = vld [vmem:[#allocation2 + $0x98] sm:$0xff]
          %v9461 = vld [vmem:[#allocation2 + $0xa0] sm:$0xff]
          %v9462 = vld [vmem:[#allocation2 + $0xa8] sm:$0xff]
          %v9463 = vld [vmem:[#allocation2 + $0xb0] sm:$0xff]
          %v9464 = vld [vmem:[#allocation2 + $0xb8] sm:$0xff]
          %v9465 = vld [vmem:[#allocation2 + $0xc0] sm:$0xff]
          %v9466 = vld [vmem:[#allocation2 + $0xc8] sm:$0xff]
          %v9467 = vld [vmem:[#allocation2 + $0xd0] sm:$0xff]
          %v9468 = vld [vmem:[#allocation2 + $0xd8] sm:$0xff]
          %v9469 = vld [vmem:[#allocation2 + $0xe0] sm:$0xff]
          %v9470 = vld [vmem:[#allocation2 + $0xe8] sm:$0xff]
          %v9471 = vld [vmem:[#allocation2 + $0xf0] sm:$0xff]
          %v9472 = vld [vmem:[#allocation2 + $0xf8] sm:$0xff]
          %v9473 = vpack.c.bf16 %v9443, %v9441
          %v9474 = vpack.c.bf16 %v9444, %v9442
          %v9475 = vpack.c.bf16 %v9447, %v9445
          %v9476 = vpack.c.bf16 %v9448, %v9446
          %v9477 = vpack.c.bf16 %v9451, %v9449
          %v9478 = vpack.c.bf16 %v9452, %v9450
          %v9479 = vpack.c.bf16 %v9455, %v9453
          %v9480 = vpack.c.bf16 %v9456, %v9454
          %v9481 = vpack.c.bf16 %v9459, %v9457
          %v9482 = vpack.c.bf16 %v9460, %v9458
          %v9483 = vpack.c.bf16 %v9463, %v9461
          %v9484 = vpack.c.bf16 %v9464, %v9462
          %v9485 = vpack.c.bf16 %v9467, %v9465
          %v9486 = vpack.c.bf16 %v9468, %v9466
          %v9487 = vpack.c.bf16 %v9471, %v9469
          %v9488 = vpack.c.bf16 %v9472, %v9470
          %v9505 = vunpack.c.l.b16 %v9473
          %v9506 = vunpack.c.l.b16 %v9474
          %v9507 = vunpack.c.h.b16 %v9473
          %v9508 = vunpack.c.h.b16 %v9474
          %v9509 = vunpack.c.l.b16 %v9475
          %v9510 = vunpack.c.l.b16 %v9476
          %v9511 = vunpack.c.h.b16 %v9475
          %v9512 = vunpack.c.h.b16 %v9476
          %v9513 = vunpack.c.l.b16 %v9477
          %v9514 = vunpack.c.l.b16 %v9478
          %v9515 = vunpack.c.h.b16 %v9477
          %v9516 = vunpack.c.h.b16 %v9478
          %v9517 = vunpack.c.l.b16 %v9479
          %v9518 = vunpack.c.l.b16 %v9480
          %v9519 = vunpack.c.h.b16 %v9479
          %v9520 = vunpack.c.h.b16 %v9480
          %v9521 = vunpack.c.l.b16 %v9481
          %v9522 = vunpack.c.l.b16 %v9482
          %v9523 = vunpack.c.h.b16 %v9481
          %v9524 = vunpack.c.h.b16 %v9482
          %v9525 = vunpack.c.l.b16 %v9483
          %v9526 = vunpack.c.l.b16 %v9484
          %v9527 = vunpack.c.h.b16 %v9483
          %v9528 = vunpack.c.h.b16 %v9484
          %v9529 = vunpack.c.l.b16 %v9485
          %v9530 = vunpack.c.l.b16 %v9486
          %v9531 = vunpack.c.h.b16 %v9485
          %v9532 = vunpack.c.h.b16 %v9486
          %v9533 = vunpack.c.l.b16 %v9487
          %v9534 = vunpack.c.l.b16 %v9488
          %v9535 = vunpack.c.h.b16 %v9487
          %v9536 = vunpack.c.h.b16 %v9488
          %v9537 = vpack.c.b16 %v9506, %v9505
          %v9538 = vpack.c.b16 %v9508, %v9507
          %v9539 = vpack.c.b16 %v9510, %v9509
          %v9540 = vpack.c.b16 %v9512, %v9511
          %v9541 = vpack.c.b16 %v9514, %v9513
          %v9542 = vpack.c.b16 %v9516, %v9515
          %v9543 = vpack.c.b16 %v9518, %v9517
          %v9544 = vpack.c.b16 %v9520, %v9519
          %v9545 = vpack.c.b16 %v9522, %v9521
          %v9546 = vpack.c.b16 %v9524, %v9523
          %v9547 = vpack.c.b16 %v9526, %v9525
          %v9548 = vpack.c.b16 %v9528, %v9527
          %v9549 = vpack.c.b16 %v9530, %v9529
          %v9550 = vpack.c.b16 %v9532, %v9531
          %v9551 = vpack.c.b16 %v9534, %v9533
          %v9552 = vpack.c.b16 %v9536, %v9535
          %9569 = vst [vmem:[%s807] sm:$0xff] %v9537
          %9570 = vst [vmem:[%s807 + $0x8] sm:$0xff] %v9538
          %9571 = vst [vmem:[%s807 + $0x10] sm:$0xff] %v9539
          %9572 = vst [vmem:[%s807 + $0x18] sm:$0xff] %v9540
          %9573 = vst [vmem:[%s807 + $0x20] sm:$0xff] %v9541
          %9574 = vst [vmem:[%s807 + $0x28] sm:$0xff] %v9542
          %9575 = vst [vmem:[%s807 + $0x30] sm:$0xff] %v9543
          %9576 = vst [vmem:[%s807 + $0x38] sm:$0xff] %v9544
          %9577 = vst [vmem:[%s807 + $0x40] sm:$0xff] %v9545
          %9578 = vst [vmem:[%s807 + $0x48] sm:$0xff] %v9546
          %9579 = vst [vmem:[%s807 + $0x50] sm:$0xff] %v9547
          %9580 = vst [vmem:[%s807 + $0x58] sm:$0xff] %v9548
          %9581 = vst [vmem:[%s807 + $0x60] sm:$0xff] %v9549
          %9582 = vst [vmem:[%s807 + $0x68] sm:$0xff] %v9550
          %9583 = vst [vmem:[%s807 + $0x70] sm:$0xff] %v9551
          %9584 = vst [vmem:[%s807 + $0x78] sm:$0xff] %v9552
        $region104: #{forward.2} parent=83 // pred_fallthru
          _
        %p9585 = scmp.lt.s32.totalorder %s37, 1
        %s9586 = scalar_select %p9585, %s37, 1
        %s9587 = smul.addr %s9586, 32
        %s9588 = smul.addr %s9587, 4
        %s9589 = scalar_lea.vmem %s16, %s9588
        // Predicated region
        $region105: #{forward.2} parent=83 // pred_check
          %p9590 = pneg %p464
        $region106: #{forward.2} parent=83 // pred_check_branch
          %9592 = sbr.rel (%p9590) target = $region108
        $region107: #{forward.2} parent=83 // pred_region
          _
        $region108: #{forward.2} parent=83 // pred_fallthru
          _
      $region84: #{forward.2} parent=5 // pred_fallthru
        _
      %p9593 = scmp.le.s32.totalorder 2, %s28
      // Predicated region
      $region109: #{forward.2} parent=5 // pred_check
        %p9594 = pneg %p9593
      $region110: #{forward.2} parent=5 // pred_check_branch
        %9596 = sbr.rel (%p9594) target = $region112
      $region111: #{forward.2} parent=5 // pred_region
        %s9597 = ssub.s32 %s28, 2
        // Predicated region
        $region113: #{forward.2} parent=111 // pred_check
          %p9598 = pneg %p470
        $region114: #{forward.2} parent=111 // pred_check_branch
          %9600 = sbr.rel (%p9598) target = $region116
        $region115: #{forward.2} parent=111 // pred_region
          %p9601 = scmp.lt.s32.totalorder %s39, 1
          %s9602 = scalar_select %p9601, %s39, 1
          %s9603 = smul.addr %s9602, 32
          %s9604 = smul.addr %s9603, 4
          %s9605 = scalar_lea.vmem %s16, %s9604
        $region116: #{forward.2} parent=111 // pred_fallthru
          _
      $region112: #{forward.2} parent=5 // pred_fallthru
        _
    $region6: #{forward.2} parent=1 // loop_footer
      %s32 = sadd.s32 1, %s28
    $region7: #{forward.2} parent=1 // loop_footer_branch
      %27 = sbr.rel target = $region3
    $region8: #{forward.2} parent=1 // loop_exit
      _
    %9606 = vsyncpa [#allocation6], 1
    %s9607 = scalar_lea.sflag [#allocation6], 1
    %9608 = vsyncpa %s9607, 1
    %9609 = vsyncpa [#allocation8], 1
    %s9610 = scalar_lea.sflag [#allocation8], 1
    %9611 = vsyncpa %s9610, 1

</llo_original>
